<compile_context>
chip_gen: v6e
topology: v6e:2x2x1
jax: 0.10.0
libtpu: 0.0.40
codegen_flags: <defaults>
</compile_context>

<pallas_src>
import math

import jax
import jax.numpy as jnp
from jax.experimental import pallas as pl
from jax.experimental.pallas import tpu as pltpu


# ----------------------------------------------------------------------------
# Kernel
# ----------------------------------------------------------------------------
def _make_siren_kernel(layer_kinds):
    """Build the fused SIREN kernel body.

    layer_kinds: tuple of "first" | "plain" | "res" describing each sine layer.
    Parameter ref order (all 2-D):
      per "first"/"plain" layer : w [K, H], b [1, H]
      per "res" layer           : w_h [H, H], w_x0 [E, H], b [1, H]
      output layer              : w_out [H, out], b_out [1, out]
    Weights may be pre-cast to bf16 on the host; biases stay f32.
    """
    n_params = sum(3 if k == "res" else 2 for k in layer_kinds) + 2

    def mm(a, w_ref):
        w = w_ref[...]
        if w.dtype == jnp.bfloat16:
            # Weight is already bf16 (pre-cast on host); only the activation needs a cast.
            a = a.astype(jnp.bfloat16)
        return jnp.dot(a, w, preferred_element_type=jnp.float32)

    def kernel(*refs):
        x_ref = refs[0]
        param_refs = refs[1:1 + n_params]
        o_ref = refs[1 + n_params]

        x0 = x_ref[...].astype(jnp.float32)   # (tm, E) encoded coords
        h = x0
        p = 0
        for kind in layer_kinds:
            if kind == "res":
                w_h, w_x, b = param_refs[p], param_refs[p + 1], param_refs[p + 2]
                p += 3
                pre = mm(h, w_h) + mm(x0, w_x) + b[...]
            else:
                w, b = param_refs[p], param_refs[p + 1]
                p += 2
                pre = mm(h, w) + b[...]
            # omega_0 is already folded into w and b; sine stays f32 for accuracy.
            # TODO(synk): bf16 sine path (2x VALU width on v6e/v7x) gated on a profile.
            h = jnp.sin(pre)

        w_out, b_out = param_refs[p], param_refs[p + 1]
        o_ref[...] = (mm(h, w_out) + b_out[...]).astype(o_ref.dtype)

    return kernel, n_params


def _choose_tm(M, *, cap=2048, min_steps=4):
    """Largest row tile (<= cap) giving >= min_steps grid steps when possible.

    >= 4 steps keeps both v7x TensorCores busy with >= 2 pipelined steps each;
    on v5e/v6e (single TC) more steps just means a shorter serial loop, which is
    harmless.  Falls back to one (possibly partial) block for tiny batches.
    """
    tiles = (cap, 1024, 512, 256, 128)
    for tm in tiles:
        if M >= min_steps * tm:
            return tm
    for tm in tiles:
        if M >= tm:
            return tm
    return 128


def siren_forward(x, layer_kinds, flat_params, out_dim):
    """x: [M, E] float32 encoded features -> [M, out_dim]. No host-side padding."""
    M, E = x.shape
    tm = _choose_tm(M)
    grid_m = pl.cdiv(M, tm)

    kernel, n_params = _make_siren_kernel(tuple(layer_kinds))
    assert n_params == len(flat_params)

    in_specs = [pl.BlockSpec((tm, E), lambda i: (i, 0))]
    for p in flat_params:
        # Weights/biases: full-extent block, constant index -> resident in VMEM,
        # no re-DMA across grid steps.
        in_specs.append(pl.BlockSpec(p.shape, lambda i: (0, 0)))
    # Output kept at its natural (narrow) width: padding out_dim to 128 lanes would
    # multiply HBM writeback bytes by ~64x, far costlier than masked narrow stores.
    out_specs = pl.BlockSpec((tm, out_dim), lambda i: (i, 0))

    # Advisory cost estimate (helps XLA schedule surrounding ops). Uses unpadded M
    # and actual parameter byte counts (bf16 weights count as 2 bytes).
    flops = 0
    sine_outputs = 0
    idx = 0
    for kind in layer_kinds:
        n = 3 if kind == "res" else 2
        for w in flat_params[idx: idx + n - 1]:
            flops += 2 * M * int(w.shape[0]) * int(w.shape[1])
        sine_outputs += int(flat_params[idx + n - 1].shape[1])
        idx += n
    w_out = flat_params[idx]
    flops += 2 * M * int(w_out.shape[0]) * int(w_out.shape[1])
    bytes_accessed = (int(x.size) * x.dtype.itemsize
                      + M * out_dim * x.dtype.itemsize
                      + sum(int(p.size) * p.dtype.itemsize for p in flat_params))

    return pl.pallas_call(
        kernel,
        out_shape=jax.ShapeDtypeStruct((M, out_dim), x.dtype),
        grid_spec=pltpu.PrefetchScalarGridSpec(
            num_scalar_prefetch=0,
            grid=(grid_m,),
            in_specs=in_specs,
            out_specs=out_specs,
        ),
        compiler_params=pltpu.CompilerParams(
            dimension_semantics=("parallel",),
            # VMEM at tm=2048/H=128 is only a few MiB -> scoped default is plenty on
            # all generations; vmem_limit_bytes only needed for very wide variants.
        ),
        cost_estimate=pl.CostEstimate(
            flops=int(flops),
            transcendentals=int(M * sine_outputs),
            bytes_accessed=int(bytes_accessed),
        ),
    )(x, *flat_params)


# ----------------------------------------------------------------------------
# Parameter init (mirrors the PyTorch Siren.__init__) + kernel-layout prep
# ----------------------------------------------------------------------------
def _uniform(key, shape, bound):
    return jax.random.uniform(key, shape, jnp.float32, minval=-bound, maxval=bound)


def init_siren_params(key, coord_encoding_dim, hidden_dim, n_layers, out_dim, omega_0):
    """Returns PyTorch-layout params: [(W[out,in], b[out]) per sine layer],
    (W_out, b_out), and res_layer_idx."""
    E, H = coord_encoding_dim, hidden_dim
    res_layer_idx = n_layers // 2           # layer that receives cat([h, x0])

    in_dims = []
    for idx in range(n_layers):
        if idx == 0:
            in_dims.append(E)
        elif idx == res_layer_idx:
            in_dims.append(H + E)
        else:
            in_dims.append(H)

    sine_params = []
    for idx in range(n_layers):
        key, wk, bk = jax.random.split(key, 3)
        fan_in = in_dims[idx]
        if idx == 0:
            w_bound = 1.0 / fan_in                           # is_first init
        else:
            w_bound = math.sqrt(6.0 / fan_in) / omega_0      # SIREN hidden init
        w = _uniform(wk, (H, fan_in), w_bound)               # torch layout [out, in]
        b = _uniform(bk, (H,), 1.0 / math.sqrt(fan_in))      # nn.Linear default bias
        sine_params.append((w, b))

    key, wk, bk = jax.random.split(key, 3)
    w_out = _uniform(wk, (out_dim, H), math.sqrt(6.0 / H) / omega_0)
    b_out = _uniform(bk, (out_dim,), 1.0 / math.sqrt(H))
    return sine_params, (w_out, b_out), res_layer_idx


def prepare_kernel_params(sine_params, out_params, res_layer_idx, hidden_dim, omega_0,
                          *, use_bf16_matmul=True):
    """Fold omega_0 into sine-layer params, transpose to [in, out], split the residual
    layer weight into its h / x0 halves, and pre-cast hidden/output weights to bf16
    (one-time host transform). First layer weight stays f32 (omega-amplified); biases f32."""
    H = hidden_dim
    kinds = []
    flat = []
    for idx, (w, b) in enumerate(sine_params):
        w_t = (omega_0 * w).T                      # [in, out]
        b_s = (omega_0 * b).reshape(1, -1)         # [1, out], f32
        if use_bf16_matmul and idx != 0:
            w_t = w_t.astype(jnp.bfloat16)
        if idx == res_layer_idx:
            kinds.append("res")
            flat += [w_t[:H, :], w_t[H:, :], b_s]  # h-part, x0-part, bias
        else:
            kinds.append("first" if idx == 0 else "plain")
            flat += [w_t, b_s]
    w_out, b_out = out_params
    w_out_t = w_out.T                              # output layer, NOT omega-scaled
    if use_bf16_matmul:
        w_out_t = w_out_t.astype(jnp.bfloat16)
    flat += [w_out_t, b_out.reshape(1, -1)]
    return kinds, flat


# ----------------------------------------------------------------------------
# Demo / correctness check
# ----------------------------------------------------------------------------
if __name__ == "__main__":
    key = jax.random.PRNGKey(0)
    kx, kp = jax.random.split(key)

    # Small shapes consistent with the module defaults:
    # coord_encoding_dim = levels*n_features + coord_dim - 2 = 10*2 + 3 - 2 = 21.
    # hidden_dim kept small (module default is 512) for a quick demo.
    batch = 1000                 # deliberately NOT a multiple of the row tile (ragged tail)
    coord_encoding_dim = 21
    hidden_dim = 128
    n_layers = 4
    out_dim = 2
    omega_0 = 30.0

    # Stand-in for hash_encoder(coords) output (see TODO at top of file).
    x = jax.random.uniform(kx, (batch, coord_encoding_dim), jnp.float32,
                           minval=-1.0, maxval=1.0)

    sine_params, out_params, res_layer_idx = init_siren_params(
        kp, coord_encoding_dim, hidden_dim, n_layers, out_dim, omega_0)

    # Pure-JAX reference mirroring the PyTorch forward (explicit omega_0, concat).
    hp = jax.lax.Precision.HIGHEST

    def reference(x):
        h = x
        x0 = x
        for idx, (w, b) in enumerate(sine_params):
            if idx == res_layer_idx:
                h = jnp.concatenate([h, x0], axis=-1)
            h = jnp.sin(omega_0 * (jnp.dot(h, w.T, precision=hp) + b))
        w_o, b_o = out_params
        return jnp.dot(h, w_o.T, precision=hp) + b_o

    ref = reference(x)

    # 1) f32-operand path: tight correctness check against the HIGHEST-precision ref.
    kinds_f32, flat_f32 = prepare_kernel_params(
        sine_params, out_params, res_layer_idx, hidden_dim, omega_0,
        use_bf16_matmul=False)
    out_f32 = jax.block_until_ready(
        siren_forward(x, kinds_f32, flat_f32, out_dim))
    assert out_f32.shape == (batch, out_dim)
    err_f32 = float(jnp.max(jnp.abs(out_f32 - ref)))
    assert jnp.allclose(out_f32, ref, atol=1e-3, rtol=1e-3), f"f32 max abs err {err_f32}"

    # 2) bf16 hidden/output-weight path (the fast MXU path per the review);
    #    first layer stays f32, accumulation f32 -> looser but still tight tolerance.
    kinds_bf, flat_bf = prepare_kernel_params(
        sine_params, out_params, res_layer_idx, hidden_dim, omega_0,
        use_bf16_matmul=True)
    out_bf = jax.block_until_ready(
        siren_forward(x, kinds_bf, flat_bf, out_dim))
    assert out_bf.shape == (batch, out_dim)
    err_bf = float(jnp.max(jnp.abs(out_bf - ref)))
    assert jnp.allclose(out_bf, ref, atol=1e-2), f"bf16 max abs err {err_bf}"

    print("KERNEL_OK")
</pallas_src>

<mosaic_0001>
module attributes {stable_mosaic.version = 11 : i64} {
  func.func @kernel(%arg0: i32, %arg1: memref<128x21xf32, #tpu.memory_space<vmem>>, %arg2: memref<21x128xf32, #tpu.memory_space<vmem>>, %arg3: memref<1x128xf32, #tpu.memory_space<vmem>>, %arg4: memref<128x128xf32, #tpu.memory_space<vmem>>, %arg5: memref<1x128xf32, #tpu.memory_space<vmem>>, %arg6: memref<128x128xf32, #tpu.memory_space<vmem>>, %arg7: memref<21x128xf32, #tpu.memory_space<vmem>>, %arg8: memref<1x128xf32, #tpu.memory_space<vmem>>, %arg9: memref<128x128xf32, #tpu.memory_space<vmem>>, %arg10: memref<1x128xf32, #tpu.memory_space<vmem>>, %arg11: memref<128x2xf32, #tpu.memory_space<vmem>>, %arg12: memref<1x2xf32, #tpu.memory_space<vmem>>, %arg13: memref<128x2xf32, #tpu.memory_space<vmem>>) attributes {dimension_semantics = [#tpu.dimension_semantics<parallel>], iteration_bounds = array<i64: 8>, scalar_prefetch = 0 : i64, scratch_operands = 0 : i64, tpu.core_type = #tpu.core_type<tc>, window_params = [{transform_indices = @transform_0, window_bounds = array<i64: 128, 21>}, {pipeline_mode = #tpu.pipeline_mode<synchronous>, transform_indices = @transform_1, window_bounds = array<i64: 21, 128>}, {pipeline_mode = #tpu.pipeline_mode<synchronous>, transform_indices = @transform_2, window_bounds = array<i64: 1, 128>}, {pipeline_mode = #tpu.pipeline_mode<synchronous>, transform_indices = @transform_3, window_bounds = array<i64: 128, 128>}, {pipeline_mode = #tpu.pipeline_mode<synchronous>, transform_indices = @transform_4, window_bounds = array<i64: 1, 128>}, {pipeline_mode = #tpu.pipeline_mode<synchronous>, transform_indices = @transform_5, window_bounds = array<i64: 128, 128>}, {pipeline_mode = #tpu.pipeline_mode<synchronous>, transform_indices = @transform_6, window_bounds = array<i64: 21, 128>}, {pipeline_mode = #tpu.pipeline_mode<synchronous>, transform_indices = @transform_7, window_bounds = array<i64: 1, 128>}, {pipeline_mode = #tpu.pipeline_mode<synchronous>, transform_indices = @transform_8, window_bounds = array<i64: 128, 128>}, {pipeline_mode = #tpu.pipeline_mode<synchronous>, transform_indices = @transform_9, window_bounds = array<i64: 1, 128>}, {pipeline_mode = #tpu.pipeline_mode<synchronous>, transform_indices = @transform_10, window_bounds = array<i64: 128, 2>}, {pipeline_mode = #tpu.pipeline_mode<synchronous>, transform_indices = @transform_11, window_bounds = array<i64: 1, 2>}, {transform_indices = @transform_12, window_bounds = array<i64: 128, 2>}]} {
    %c0 = arith.constant 0 : index
    %c0_0 = arith.constant 0 : index
    %0 = vector.load %arg1[%c0, %c0_0] : memref<128x21xf32, #tpu.memory_space<vmem>>, vector<128x21xf32>
    %c0_1 = arith.constant 0 : index
    %c0_2 = arith.constant 0 : index
    %1 = vector.load %arg2[%c0_1, %c0_2] : memref<21x128xf32, #tpu.memory_space<vmem>>, vector<21x128xf32>
    %cst = arith.constant dense<0.000000e+00> : vector<128x128xf32>
    %2 = tpu.matmul %0, %1, %cst {dimension_numbers = #tpu.dot_dimension_numbers<[1], [0], [0], [1], [0, 0, 1, 1], [], []>} : vector<128x21xf32>, vector<21x128xf32>, vector<128x128xf32> -> vector<128x128xf32>
    %c0_3 = arith.constant 0 : index
    %c0_4 = arith.constant 0 : index
    %3 = vector.load %arg3[%c0_3, %c0_4] : memref<1x128xf32, #tpu.memory_space<vmem>>, vector<1x128xf32>
    %4 = vector.broadcast %3 : vector<1x128xf32> to vector<128x128xf32>
    %5 = arith.addf %2, %4 : vector<128x128xf32>
    %6 = math.sin %5 : vector<128x128xf32>
    %c0_5 = arith.constant 0 : index
    %c0_6 = arith.constant 0 : index
    %7 = vector.load %arg4[%c0_5, %c0_6] : memref<128x128xf32, #tpu.memory_space<vmem>>, vector<128x128xf32>
    %cst_7 = arith.constant dense<0.000000e+00> : vector<128x128xf32>
    %8 = tpu.matmul %6, %7, %cst_7 {dimension_numbers = #tpu.dot_dimension_numbers<[1], [0], [0], [1], [0, 0, 1, 1], [], []>} : vector<128x128xf32>, vector<128x128xf32>, vector<128x128xf32> -> vector<128x128xf32>
    %c0_8 = arith.constant 0 : index
    %c0_9 = arith.constant 0 : index
    %9 = vector.load %arg5[%c0_8, %c0_9] : memref<1x128xf32, #tpu.memory_space<vmem>>, vector<1x128xf32>
    %10 = vector.broadcast %9 : vector<1x128xf32> to vector<128x128xf32>
    %11 = arith.addf %8, %10 : vector<128x128xf32>
    %12 = math.sin %11 : vector<128x128xf32>
    %c0_10 = arith.constant 0 : index
    %c0_11 = arith.constant 0 : index
    %13 = vector.load %arg6[%c0_10, %c0_11] : memref<128x128xf32, #tpu.memory_space<vmem>>, vector<128x128xf32>
    %cst_12 = arith.constant dense<0.000000e+00> : vector<128x128xf32>
    %14 = tpu.matmul %12, %13, %cst_12 {dimension_numbers = #tpu.dot_dimension_numbers<[1], [0], [0], [1], [0, 0, 1, 1], [], []>} : vector<128x128xf32>, vector<128x128xf32>, vector<128x128xf32> -> vector<128x128xf32>
    %c0_13 = arith.constant 0 : index
    %c0_14 = arith.constant 0 : index
    %15 = vector.load %arg7[%c0_13, %c0_14] : memref<21x128xf32, #tpu.memory_space<vmem>>, vector<21x128xf32>
    %cst_15 = arith.constant dense<0.000000e+00> : vector<128x128xf32>
    %16 = tpu.matmul %0, %15, %cst_15 {dimension_numbers = #tpu.dot_dimension_numbers<[1], [0], [0], [1], [0, 0, 1, 1], [], []>} : vector<128x21xf32>, vector<21x128xf32>, vector<128x128xf32> -> vector<128x128xf32>
    %17 = arith.addf %14, %16 : vector<128x128xf32>
    %c0_16 = arith.constant 0 : index
    %c0_17 = arith.constant 0 : index
    %18 = vector.load %arg8[%c0_16, %c0_17] : memref<1x128xf32, #tpu.memory_space<vmem>>, vector<1x128xf32>
    %19 = vector.broadcast %18 : vector<1x128xf32> to vector<128x128xf32>
    %20 = arith.addf %17, %19 : vector<128x128xf32>
    %21 = math.sin %20 : vector<128x128xf32>
    %c0_18 = arith.constant 0 : index
    %c0_19 = arith.constant 0 : index
    %22 = vector.load %arg9[%c0_18, %c0_19] : memref<128x128xf32, #tpu.memory_space<vmem>>, vector<128x128xf32>
    %cst_20 = arith.constant dense<0.000000e+00> : vector<128x128xf32>
    %23 = tpu.matmul %21, %22, %cst_20 {dimension_numbers = #tpu.dot_dimension_numbers<[1], [0], [0], [1], [0, 0, 1, 1], [], []>} : vector<128x128xf32>, vector<128x128xf32>, vector<128x128xf32> -> vector<128x128xf32>
    %c0_21 = arith.constant 0 : index
    %c0_22 = arith.constant 0 : index
    %24 = vector.load %arg10[%c0_21, %c0_22] : memref<1x128xf32, #tpu.memory_space<vmem>>, vector<1x128xf32>
    %25 = vector.broadcast %24 : vector<1x128xf32> to vector<128x128xf32>
    %26 = arith.addf %23, %25 : vector<128x128xf32>
    %27 = math.sin %26 : vector<128x128xf32>
    %c0_23 = arith.constant 0 : index
    %c0_24 = arith.constant 0 : index
    %28 = vector.load %arg11[%c0_23, %c0_24] : memref<128x2xf32, #tpu.memory_space<vmem>>, vector<128x2xf32>
    %cst_25 = arith.constant dense<0.000000e+00> : vector<128x2xf32>
    %29 = tpu.matmul %27, %28, %cst_25 {dimension_numbers = #tpu.dot_dimension_numbers<[1], [0], [0], [1], [0, 0, 1, 1], [], []>} : vector<128x128xf32>, vector<128x2xf32>, vector<128x2xf32> -> vector<128x2xf32>
    %c0_26 = arith.constant 0 : index
    %c0_27 = arith.constant 0 : index
    %30 = vector.load %arg12[%c0_26, %c0_27] : memref<1x2xf32, #tpu.memory_space<vmem>>, vector<1x2xf32>
    %31 = vector.broadcast %30 : vector<1x2xf32> to vector<128x2xf32>
    %32 = arith.addf %29, %31 : vector<128x2xf32>
    %c0_28 = arith.constant 0 : index
    %c0_29 = arith.constant 0 : index
    %33 = vector.load %arg13[%c0_28, %c0_29] : memref<128x2xf32, #tpu.memory_space<vmem>>, vector<128x2xf32>
    tpu.vector_store %arg13[%c0_28, %c0_29], %32 {strides = array<i32>} : memref<128x2xf32, #tpu.memory_space<vmem>>, vector<128x2xf32>,
    return
  }
  func.func @transform_0(%arg0: i32) -> (i32, i32) {
    %c0_i32 = arith.constant 0 : i32
    %c0_i32_0 = arith.constant 0 : i32
    return %arg0, %c0_i32 : i32, i32
  }
  func.func @transform_1(%arg0: i32) -> (i32, i32) {
    %c0_i32 = arith.constant 0 : i32
    %c0_i32_0 = arith.constant 0 : i32
    %c0_i32_1 = arith.constant 0 : i32
    return %c0_i32, %c0_i32_0 : i32, i32
  }
  func.func @transform_2(%arg0: i32) -> (i32, i32) {
    %c0_i32 = arith.constant 0 : i32
    %c0_i32_0 = arith.constant 0 : i32
    %c0_i32_1 = arith.constant 0 : i32
    return %c0_i32, %c0_i32_0 : i32, i32
  }
  func.func @transform_3(%arg0: i32) -> (i32, i32) {
    %c0_i32 = arith.constant 0 : i32
    %c0_i32_0 = arith.constant 0 : i32
    %c0_i32_1 = arith.constant 0 : i32
    return %c0_i32, %c0_i32_0 : i32, i32
  }
  func.func @transform_4(%arg0: i32) -> (i32, i32) {
    %c0_i32 = arith.constant 0 : i32
    %c0_i32_0 = arith.constant 0 : i32
    %c0_i32_1 = arith.constant 0 : i32
    return %c0_i32, %c0_i32_0 : i32, i32
  }
  func.func @transform_5(%arg0: i32) -> (i32, i32) {
    %c0_i32 = arith.constant 0 : i32
    %c0_i32_0 = arith.constant 0 : i32
    %c0_i32_1 = arith.constant 0 : i32
    return %c0_i32, %c0_i32_0 : i32, i32
  }
  func.func @transform_6(%arg0: i32) -> (i32, i32) {
    %c0_i32 = arith.constant 0 : i32
    %c0_i32_0 = arith.constant 0 : i32
    %c0_i32_1 = arith.constant 0 : i32
    return %c0_i32, %c0_i32_0 : i32, i32
  }
  func.func @transform_7(%arg0: i32) -> (i32, i32) {
    %c0_i32 = arith.constant 0 : i32
    %c0_i32_0 = arith.constant 0 : i32
    %c0_i32_1 = arith.constant 0 : i32
    return %c0_i32, %c0_i32_0 : i32, i32
  }
  func.func @transform_8(%arg0: i32) -> (i32, i32) {
    %c0_i32 = arith.constant 0 : i32
    %c0_i32_0 = arith.constant 0 : i32
    %c0_i32_1 = arith.constant 0 : i32
    return %c0_i32, %c0_i32_0 : i32, i32
  }
  func.func @transform_9(%arg0: i32) -> (i32, i32) {
    %c0_i32 = arith.constant 0 : i32
    %c0_i32_0 = arith.constant 0 : i32
    %c0_i32_1 = arith.constant 0 : i32
    return %c0_i32, %c0_i32_0 : i32, i32
  }
  func.func @transform_10(%arg0: i32) -> (i32, i32) {
    %c0_i32 = arith.constant 0 : i32
    %c0_i32_0 = arith.constant 0 : i32
    %c0_i32_1 = arith.constant 0 : i32
    return %c0_i32, %c0_i32_0 : i32, i32
  }
  func.func @transform_11(%arg0: i32) -> (i32, i32) {
    %c0_i32 = arith.constant 0 : i32
    %c0_i32_0 = arith.constant 0 : i32
    %c0_i32_1 = arith.constant 0 : i32
    return %c0_i32, %c0_i32_0 : i32, i32
  }
  func.func @transform_12(%arg0: i32) -> (i32, i32) {
    %c0_i32 = arith.constant 0 : i32
    %c0_i32_0 = arith.constant 0 : i32
    return %arg0, %c0_i32 : i32, i32
  }
}

</mosaic_0001>

<llo_original>
// kernel: tpu_custom_call.1
$region0: #{tpu_custom_call.1}
  #allocation0 [shape = 'u32[]', space=smem, size = 0x4, offset = 0x4, fixed_abs, tag = 'smem constant byte address 0x4 - core index']
  #allocation1 [shape = 'u32[144,128]{1,0:T(1,128)}', space=vmem, size = 0x12000, scoped, tag = 'internal scratch']
  %s0 = inlined_call_operand.vmem [shape: f32[1000,21], index: 0, kind: input, shape index: {}]
  %s1 = inlined_call_operand.vmem [shape: f32[21,128], index: 1, kind: input, shape index: {}]
  %s2 = inlined_call_operand.vmem [shape: f32[1,128], index: 2, kind: input, shape index: {}]
  %s3 = inlined_call_operand.vmem [shape: f32[128,128], index: 3, kind: input, shape index: {}]
  %s4 = inlined_call_operand.vmem [shape: f32[1,128], index: 4, kind: input, shape index: {}]
  %s5 = inlined_call_operand.vmem [shape: f32[128,128], index: 5, kind: input, shape index: {}]
  %s6 = inlined_call_operand.vmem [shape: f32[21,128], index: 6, kind: input, shape index: {}]
  %s7 = inlined_call_operand.vmem [shape: f32[1,128], index: 7, kind: input, shape index: {}]
  %s8 = inlined_call_operand.vmem [shape: f32[128,128], index: 8, kind: input, shape index: {}]
  %s9 = inlined_call_operand.vmem [shape: f32[1,128], index: 9, kind: input, shape index: {}]
  %s10 = inlined_call_operand.vmem [shape: f32[128,2], index: 10, kind: input, shape index: {}]
  %s11 = inlined_call_operand.vmem [shape: f32[1,2], index: 11, kind: input, shape index: {}]
  %s12 = inlined_call_operand.vmem [shape: f32[1000,2], index: 12, kind: output, shape index: {}]
  %s13 = sld [smem:[#allocation0]]
  $region129: #{tpu_custom_call.1} parent=0
    _
  %s15 = ssub.s32 1, %s13
  %s16 = scalar_select 0, %s15, %s13
  $region1: #{tpu_custom_call.1} parent=0
    #allocation2 [shape = 'u8[131072]{0}', space=vmem, size = 0x20000, scoped, tag = 'output window, operand 0']
    loop: start=0, step=1, limit=10
    $region2: #{tpu_custom_call.1} parent=1 // loop_pre_header
      _
    $region3: #{tpu_custom_call.1} parent=1 // loop_header
      %s18 = sphi 0, %s22
      %p19 = scmp.ge.s32.totalorder %s18, 10
      %s28 = sphi 0, %s30
      %s31 = sphi 0, %s28
      %s32 = sphi 0, %s31
      %s48 = sphi 0, %s32
      %s52 = sphi 0, %s52
      %s54 = sphi 0, %s52
      %s55 = sphi 0, %s54
      %s69 = sphi 0, %s55
      %s73 = sphi 0, %s73
      %s75 = sphi 0, %s73
      %s76 = sphi 0, %s75
      %s90 = sphi 0, %s76
      %s94 = sphi 0, %s94
      %s96 = sphi 0, %s94
      %s97 = sphi 0, %s96
      %s111 = sphi 0, %s97
      %s115 = sphi 0, %s115
      %s117 = sphi 0, %s115
      %s118 = sphi 0, %s117
      %s132 = sphi 0, %s118
      %s136 = sphi 0, %s136
      %s138 = sphi 0, %s136
      %s139 = sphi 0, %s138
      %s153 = sphi 0, %s139
      %s157 = sphi 0, %s157
      %s159 = sphi 0, %s157
      %s160 = sphi 0, %s159
      %s174 = sphi 0, %s160
      %s178 = sphi 0, %s178
      %s180 = sphi 0, %s178
      %s181 = sphi 0, %s180
      %s195 = sphi 0, %s181
      %s199 = sphi 0, %s199
      %s201 = sphi 0, %s199
      %s202 = sphi 0, %s201
      %s216 = sphi 0, %s202
      %s220 = sphi 0, %s220
      %s222 = sphi 0, %s220
      %s223 = sphi 0, %s222
      %s237 = sphi 0, %s223
      %s241 = sphi 0, %s241
      %s243 = sphi 0, %s241
      %s244 = sphi 0, %s243
      %s258 = sphi 0, %s244
      %s262 = sphi 0, %s262
      %s264 = sphi 0, %s262
      %s265 = sphi 0, %s264
      %s279 = sphi 0, %s265
      %s285 = sphi 0, %s287
      %s288 = sphi 0, %s285
      %s289 = sphi 0, %s288
      %s305 = sphi 0, %s289
    $region4: #{tpu_custom_call.1} parent=1 // loop_header_branch
      %21 = sbr.rel (%p19) target = $region8
    $region5: #{tpu_custom_call.1} parent=1 // loop_body
      %s23 = ssub.s32 %s18, 1
      %s24 = ssub.s32 %s18, 2
      %s25 = sadd.s32 %s18, 1
      %s26 = ssub.s32 %s18, %s25
      %p27 = scmp.eq.s32.totalorder %s26, 0
      %s29 = sadd.s32 %s28, 1
      %s30 = scalar_select %p27, %s28, %s29
      %p33 = pneg %p27
      %p34 = scmp.eq.s32.totalorder %s18, 7
      %p35 = por %p33, %p34
      %p36 = scmp.ne.s32.totalorder %s28, %s31
      %p37 = scmp.eq.s32.totalorder %s18, 0
      %p38 = por %p36, %p37
      %p39 = scmp.ne.s32.totalorder %s28, %s31
      %p40 = scmp.eq.s32.totalorder %s23, 7
      %p41 = por %p39, %p40
      %p42 = scmp.ne.s32.totalorder %s31, %s32
      %p43 = scmp.eq.s32.totalorder %s23, 0
      %p44 = por %p42, %p43
      %p45 = scmp.ne.s32.totalorder %s31, %s32
      %p46 = scmp.eq.s32.totalorder %s24, 7
      %p47 = por %p45, %p46
      %p49 = scmp.ne.s32.totalorder %s32, %s48
      %p50 = scmp.eq.s32.totalorder %s24, 0
      %p51 = por %p49, %p50
      %s53 = sadd.s32 %s52, 1
      %p56 = scmp.eq.s32.totalorder %s18, 7
      %p57 = scmp.ne.s32.totalorder %s52, %s54
      %p58 = scmp.eq.s32.totalorder %s18, 0
      %p59 = por %p57, %p58
      %p60 = scmp.ne.s32.totalorder %s52, %s54
      %p61 = scmp.eq.s32.totalorder %s23, 7
      %p62 = por %p60, %p61
      %p63 = scmp.ne.s32.totalorder %s54, %s55
      %p64 = scmp.eq.s32.totalorder %s23, 0
      %p65 = por %p63, %p64
      %p66 = scmp.ne.s32.totalorder %s54, %s55
      %p67 = scmp.eq.s32.totalorder %s24, 7
      %p68 = por %p66, %p67
      %p70 = scmp.ne.s32.totalorder %s55, %s69
      %p71 = scmp.eq.s32.totalorder %s24, 0
      %p72 = por %p70, %p71
      %s74 = sadd.s32 %s73, 1
      %p77 = scmp.eq.s32.totalorder %s18, 7
      %p78 = scmp.ne.s32.totalorder %s73, %s75
      %p79 = scmp.eq.s32.totalorder %s18, 0
      %p80 = por %p78, %p79
      %p81 = scmp.ne.s32.totalorder %s73, %s75
      %p82 = scmp.eq.s32.totalorder %s23, 7
      %p83 = por %p81, %p82
      %p84 = scmp.ne.s32.totalorder %s75, %s76
      %p85 = scmp.eq.s32.totalorder %s23, 0
      %p86 = por %p84, %p85
      %p87 = scmp.ne.s32.totalorder %s75, %s76
      %p88 = scmp.eq.s32.totalorder %s24, 7
      %p89 = por %p87, %p88
      %p91 = scmp.ne.s32.totalorder %s76, %s90
      %p92 = scmp.eq.s32.totalorder %s24, 0
      %p93 = por %p91, %p92
      %s95 = sadd.s32 %s94, 1
      %p98 = scmp.eq.s32.totalorder %s18, 7
      %p99 = scmp.ne.s32.totalorder %s94, %s96
      %p100 = scmp.eq.s32.totalorder %s18, 0
      %p101 = por %p99, %p100
      %p102 = scmp.ne.s32.totalorder %s94, %s96
      %p103 = scmp.eq.s32.totalorder %s23, 7
      %p104 = por %p102, %p103
      %p105 = scmp.ne.s32.totalorder %s96, %s97
      %p106 = scmp.eq.s32.totalorder %s23, 0
      %p107 = por %p105, %p106
      %p108 = scmp.ne.s32.totalorder %s96, %s97
      %p109 = scmp.eq.s32.totalorder %s24, 7
      %p110 = por %p108, %p109
      %p112 = scmp.ne.s32.totalorder %s97, %s111
      %p113 = scmp.eq.s32.totalorder %s24, 0
      %p114 = por %p112, %p113
      %s116 = sadd.s32 %s115, 1
      %p119 = scmp.eq.s32.totalorder %s18, 7
      %p120 = scmp.ne.s32.totalorder %s115, %s117
      %p121 = scmp.eq.s32.totalorder %s18, 0
      %p122 = por %p120, %p121
      %p123 = scmp.ne.s32.totalorder %s115, %s117
      %p124 = scmp.eq.s32.totalorder %s23, 7
      %p125 = por %p123, %p124
      %p126 = scmp.ne.s32.totalorder %s117, %s118
      %p127 = scmp.eq.s32.totalorder %s23, 0
      %p128 = por %p126, %p127
      %p129 = scmp.ne.s32.totalorder %s117, %s118
      %p130 = scmp.eq.s32.totalorder %s24, 7
      %p131 = por %p129, %p130
      %p133 = scmp.ne.s32.totalorder %s118, %s132
      %p134 = scmp.eq.s32.totalorder %s24, 0
      %p135 = por %p133, %p134
      %s137 = sadd.s32 %s136, 1
      %p140 = scmp.eq.s32.totalorder %s18, 7
      %p141 = scmp.ne.s32.totalorder %s136, %s138
      %p142 = scmp.eq.s32.totalorder %s18, 0
      %p143 = por %p141, %p142
      %p144 = scmp.ne.s32.totalorder %s136, %s138
      %p145 = scmp.eq.s32.totalorder %s23, 7
      %p146 = por %p144, %p145
      %p147 = scmp.ne.s32.totalorder %s138, %s139
      %p148 = scmp.eq.s32.totalorder %s23, 0
      %p149 = por %p147, %p148
      %p150 = scmp.ne.s32.totalorder %s138, %s139
      %p151 = scmp.eq.s32.totalorder %s24, 7
      %p152 = por %p150, %p151
      %p154 = scmp.ne.s32.totalorder %s139, %s153
      %p155 = scmp.eq.s32.totalorder %s24, 0
      %p156 = por %p154, %p155
      %s158 = sadd.s32 %s157, 1
      %p161 = scmp.eq.s32.totalorder %s18, 7
      %p162 = scmp.ne.s32.totalorder %s157, %s159
      %p163 = scmp.eq.s32.totalorder %s18, 0
      %p164 = por %p162, %p163
      %p165 = scmp.ne.s32.totalorder %s157, %s159
      %p166 = scmp.eq.s32.totalorder %s23, 7
      %p167 = por %p165, %p166
      %p168 = scmp.ne.s32.totalorder %s159, %s160
      %p169 = scmp.eq.s32.totalorder %s23, 0
      %p170 = por %p168, %p169
      %p171 = scmp.ne.s32.totalorder %s159, %s160
      %p172 = scmp.eq.s32.totalorder %s24, 7
      %p173 = por %p171, %p172
      %p175 = scmp.ne.s32.totalorder %s160, %s174
      %p176 = scmp.eq.s32.totalorder %s24, 0
      %p177 = por %p175, %p176
      %s179 = sadd.s32 %s178, 1
      %p182 = scmp.eq.s32.totalorder %s18, 7
      %p183 = scmp.ne.s32.totalorder %s178, %s180
      %p184 = scmp.eq.s32.totalorder %s18, 0
      %p185 = por %p183, %p184
      %p186 = scmp.ne.s32.totalorder %s178, %s180
      %p187 = scmp.eq.s32.totalorder %s23, 7
      %p188 = por %p186, %p187
      %p189 = scmp.ne.s32.totalorder %s180, %s181
      %p190 = scmp.eq.s32.totalorder %s23, 0
      %p191 = por %p189, %p190
      %p192 = scmp.ne.s32.totalorder %s180, %s181
      %p193 = scmp.eq.s32.totalorder %s24, 7
      %p194 = por %p192, %p193
      %p196 = scmp.ne.s32.totalorder %s181, %s195
      %p197 = scmp.eq.s32.totalorder %s24, 0
      %p198 = por %p196, %p197
      %s200 = sadd.s32 %s199, 1
      %p203 = scmp.eq.s32.totalorder %s18, 7
      %p204 = scmp.ne.s32.totalorder %s199, %s201
      %p205 = scmp.eq.s32.totalorder %s18, 0
      %p206 = por %p204, %p205
      %p207 = scmp.ne.s32.totalorder %s199, %s201
      %p208 = scmp.eq.s32.totalorder %s23, 7
      %p209 = por %p207, %p208
      %p210 = scmp.ne.s32.totalorder %s201, %s202
      %p211 = scmp.eq.s32.totalorder %s23, 0
      %p212 = por %p210, %p211
      %p213 = scmp.ne.s32.totalorder %s201, %s202
      %p214 = scmp.eq.s32.totalorder %s24, 7
      %p215 = por %p213, %p214
      %p217 = scmp.ne.s32.totalorder %s202, %s216
      %p218 = scmp.eq.s32.totalorder %s24, 0
      %p219 = por %p217, %p218
      %s221 = sadd.s32 %s220, 1
      %p224 = scmp.eq.s32.totalorder %s18, 7
      %p225 = scmp.ne.s32.totalorder %s220, %s222
      %p226 = scmp.eq.s32.totalorder %s18, 0
      %p227 = por %p225, %p226
      %p228 = scmp.ne.s32.totalorder %s220, %s222
      %p229 = scmp.eq.s32.totalorder %s23, 7
      %p230 = por %p228, %p229
      %p231 = scmp.ne.s32.totalorder %s222, %s223
      %p232 = scmp.eq.s32.totalorder %s23, 0
      %p233 = por %p231, %p232
      %p234 = scmp.ne.s32.totalorder %s222, %s223
      %p235 = scmp.eq.s32.totalorder %s24, 7
      %p236 = por %p234, %p235
      %p238 = scmp.ne.s32.totalorder %s223, %s237
      %p239 = scmp.eq.s32.totalorder %s24, 0
      %p240 = por %p238, %p239
      %s242 = sadd.s32 %s241, 1
      %p245 = scmp.eq.s32.totalorder %s18, 7
      %p246 = scmp.ne.s32.totalorder %s241, %s243
      %p247 = scmp.eq.s32.totalorder %s18, 0
      %p248 = por %p246, %p247
      %p249 = scmp.ne.s32.totalorder %s241, %s243
      %p250 = scmp.eq.s32.totalorder %s23, 7
      %p251 = por %p249, %p250
      %p252 = scmp.ne.s32.totalorder %s243, %s244
      %p253 = scmp.eq.s32.totalorder %s23, 0
      %p254 = por %p252, %p253
      %p255 = scmp.ne.s32.totalorder %s243, %s244
      %p256 = scmp.eq.s32.totalorder %s24, 7
      %p257 = por %p255, %p256
      %p259 = scmp.ne.s32.totalorder %s244, %s258
      %p260 = scmp.eq.s32.totalorder %s24, 0
      %p261 = por %p259, %p260
      %s263 = sadd.s32 %s262, 1
      %p266 = scmp.eq.s32.totalorder %s18, 7
      %p267 = scmp.ne.s32.totalorder %s262, %s264
      %p268 = scmp.eq.s32.totalorder %s18, 0
      %p269 = por %p267, %p268
      %p270 = scmp.ne.s32.totalorder %s262, %s264
      %p271 = scmp.eq.s32.totalorder %s23, 7
      %p272 = por %p270, %p271
      %p273 = scmp.ne.s32.totalorder %s264, %s265
      %p274 = scmp.eq.s32.totalorder %s23, 0
      %p275 = por %p273, %p274
      %p276 = scmp.ne.s32.totalorder %s264, %s265
      %p277 = scmp.eq.s32.totalorder %s24, 7
      %p278 = por %p276, %p277
      %p280 = scmp.ne.s32.totalorder %s265, %s279
      %p281 = scmp.eq.s32.totalorder %s24, 0
      %p282 = por %p280, %p281
      %s283 = ssub.s32 %s18, %s25
      %p284 = scmp.eq.s32.totalorder %s283, 0
      %s286 = sadd.s32 %s285, 1
      %s287 = scalar_select %p284, %s285, %s286
      %p290 = pneg %p284
      %p291 = scmp.eq.s32.totalorder %s18, 7
      %p292 = por %p290, %p291
      %p293 = scmp.ne.s32.totalorder %s285, %s288
      %p294 = scmp.eq.s32.totalorder %s18, 0
      %p295 = por %p293, %p294
      %p296 = scmp.ne.s32.totalorder %s285, %s288
      %p297 = scmp.eq.s32.totalorder %s23, 7
      %p298 = por %p296, %p297
      %p299 = scmp.ne.s32.totalorder %s288, %s289
      %p300 = scmp.eq.s32.totalorder %s23, 0
      %p301 = por %p299, %p300
      %p302 = scmp.ne.s32.totalorder %s288, %s289
      %p303 = scmp.eq.s32.totalorder %s24, 7
      %p304 = por %p302, %p303
      %p306 = scmp.ne.s32.totalorder %s289, %s305
      %p307 = scmp.eq.s32.totalorder %s24, 0
      %p308 = por %p306, %p307
      %p309 = scmp.le.s32.totalorder 1, %s18
      %p310 = scmp.lt.s32.totalorder %s18, 9
      %p311 = pnand %p309, %p310
      %p312 = pneg %p311
      // Predicated region
      $region9: #{tpu_custom_call.1} parent=5 // pred_check
        _
      $region10: #{tpu_custom_call.1} parent=5 // pred_check_branch
        %314 = sbr.rel (%p311) target = $region12
      $region11: #{tpu_custom_call.1} parent=5 // pred_region
        %s315 = ssub.s32 %s18, 1
        // Predicated region
        $region13: #{tpu_custom_call.1} parent=11 // pred_check
          %p316 = pneg %p65
        $region14: #{tpu_custom_call.1} parent=11 // pred_check_branch
          %318 = sbr.rel (%p316) target = $region16
        $region15: #{tpu_custom_call.1} parent=11 // pred_region
          _
        $region16: #{tpu_custom_call.1} parent=11 // pred_fallthru
          _
        // Predicated region
        $region17: #{tpu_custom_call.1} parent=11 // pred_check
          %p319 = pneg %p86
        $region18: #{tpu_custom_call.1} parent=11 // pred_check_branch
          %321 = sbr.rel (%p319) target = $region20
        $region19: #{tpu_custom_call.1} parent=11 // pred_region
          _
        $region20: #{tpu_custom_call.1} parent=11 // pred_fallthru
          _
        // Predicated region
        $region21: #{tpu_custom_call.1} parent=11 // pred_check
          %p322 = pneg %p107
        $region22: #{tpu_custom_call.1} parent=11 // pred_check_branch
          %324 = sbr.rel (%p322) target = $region24
        $region23: #{tpu_custom_call.1} parent=11 // pred_region
          _
        $region24: #{tpu_custom_call.1} parent=11 // pred_fallthru
          _
        // Predicated region
        $region25: #{tpu_custom_call.1} parent=11 // pred_check
          %p325 = pneg %p128
        $region26: #{tpu_custom_call.1} parent=11 // pred_check_branch
          %327 = sbr.rel (%p325) target = $region28
        $region27: #{tpu_custom_call.1} parent=11 // pred_region
          _
        $region28: #{tpu_custom_call.1} parent=11 // pred_fallthru
          _
        // Predicated region
        $region29: #{tpu_custom_call.1} parent=11 // pred_check
          %p328 = pneg %p149
        $region30: #{tpu_custom_call.1} parent=11 // pred_check_branch
          %330 = sbr.rel (%p328) target = $region32
        $region31: #{tpu_custom_call.1} parent=11 // pred_region
          _
        $region32: #{tpu_custom_call.1} parent=11 // pred_fallthru
          _
        // Predicated region
        $region33: #{tpu_custom_call.1} parent=11 // pred_check
          %p331 = pneg %p170
        $region34: #{tpu_custom_call.1} parent=11 // pred_check_branch
          %333 = sbr.rel (%p331) target = $region36
        $region35: #{tpu_custom_call.1} parent=11 // pred_region
          _
        $region36: #{tpu_custom_call.1} parent=11 // pred_fallthru
          _
        // Predicated region
        $region37: #{tpu_custom_call.1} parent=11 // pred_check
          %p334 = pneg %p191
        $region38: #{tpu_custom_call.1} parent=11 // pred_check_branch
          %336 = sbr.rel (%p334) target = $region40
        $region39: #{tpu_custom_call.1} parent=11 // pred_region
          _
        $region40: #{tpu_custom_call.1} parent=11 // pred_fallthru
          _
        // Predicated region
        $region41: #{tpu_custom_call.1} parent=11 // pred_check
          %p337 = pneg %p212
        $region42: #{tpu_custom_call.1} parent=11 // pred_check_branch
          %339 = sbr.rel (%p337) target = $region44
        $region43: #{tpu_custom_call.1} parent=11 // pred_region
          _
        $region44: #{tpu_custom_call.1} parent=11 // pred_fallthru
          _
        // Predicated region
        $region45: #{tpu_custom_call.1} parent=11 // pred_check
          %p340 = pneg %p233
        $region46: #{tpu_custom_call.1} parent=11 // pred_check_branch
          %342 = sbr.rel (%p340) target = $region48
        $region47: #{tpu_custom_call.1} parent=11 // pred_region
          _
        $region48: #{tpu_custom_call.1} parent=11 // pred_fallthru
          _
        // Predicated region
        $region49: #{tpu_custom_call.1} parent=11 // pred_check
          %p343 = pneg %p254
        $region50: #{tpu_custom_call.1} parent=11 // pred_check_branch
          %345 = sbr.rel (%p343) target = $region52
        $region51: #{tpu_custom_call.1} parent=11 // pred_region
          _
        $region52: #{tpu_custom_call.1} parent=11 // pred_fallthru
          _
        // Predicated region
        $region53: #{tpu_custom_call.1} parent=11 // pred_check
          %p346 = pneg %p275
        $region54: #{tpu_custom_call.1} parent=11 // pred_check_branch
          %348 = sbr.rel (%p346) target = $region56
        $region55: #{tpu_custom_call.1} parent=11 // pred_region
          _
        $region56: #{tpu_custom_call.1} parent=11 // pred_fallthru
          _
      $region12: #{tpu_custom_call.1} parent=5 // pred_fallthru
        _
      %p349 = scmp.lt.s32.totalorder %s18, 8
      // Predicated region
      $region57: #{tpu_custom_call.1} parent=5 // pred_check
        %p350 = pneg %p349
      $region58: #{tpu_custom_call.1} parent=5 // pred_check_branch
        %352 = sbr.rel (%p350) target = $region60
      $region59: #{tpu_custom_call.1} parent=5 // pred_region
        // Predicated region
        $region61: #{tpu_custom_call.1} parent=59 // pred_check
          %p353 = pneg %p38
        $region62: #{tpu_custom_call.1} parent=59 // pred_check_branch
          %355 = sbr.rel (%p353) target = $region64
        $region63: #{tpu_custom_call.1} parent=59 // pred_region
          %s356 = smul.u32 16, %s18
          %s357 = ssub.s32 125, %s356
          %p358 = scmp.lt.s32.totalorder %s357, 16
          %s359 = scalar_select %p358, %s357, 16
          %s360 = smul.u32 128, %s359
          %p361 = scmp.lt.s32.totalorder %s356, 124
          %s362 = scalar_select %p361, %s356, 124
          %s363 = smul.addr %s362, 8
          %s364 = scalar_lea.vmem %s0, %s363
          %s365 = smul.u32 16, %s18
          %s366 = ssub.s32 125, %s365
          %p367 = scmp.lt.s32.totalorder %s366, 16
          %s368 = scalar_select %p367, %s366, 16
          %s369 = smul.u32 128, %s368
        $region64: #{tpu_custom_call.1} parent=59 // pred_fallthru
          _
      $region60: #{tpu_custom_call.1} parent=5 // pred_fallthru
        _
      %p370 = scmp.le.s32.totalorder 1, %s18
      %p371 = scmp.lt.s32.totalorder %s18, 9
      %p372 = pnand %p370, %p371
      %p373 = pneg %p372
      // Predicated region
      $region65: #{tpu_custom_call.1} parent=5 // pred_check
        _
      $region66: #{tpu_custom_call.1} parent=5 // pred_check_branch
        %375 = sbr.rel (%p372) target = $region68
      $region67: #{tpu_custom_call.1} parent=5 // pred_region
        %s376 = ssub.s32 %s18, 1
        %s377 = smul.u32 16, %s23
        %s378 = ssub.s32 125, %s377
        %p379 = scmp.lt.s32.totalorder %s378, 16
        %s380 = scalar_select %p379, %s378, 16
        %s381 = smul.u32 128, %s380
        %p382 = scmp.lt.s32.totalorder %s377, 124
        %s383 = scalar_select %p382, %s377, 124
        %s384 = smul.addr %s383, 8
        %s385 = scalar_lea.vmem %s0, %s384
        %p386 = pneg %p44
        %p387 = pneg %p41
        %p388 = pneg %p65
        %p389 = pneg %p62
        %p390 = pneg %p86
        %p391 = pneg %p83
        %p392 = pneg %p107
        %p393 = pneg %p104
        %p394 = pneg %p128
        %p395 = pneg %p125
        %p396 = pneg %p149
        %p397 = pneg %p146
        %p398 = pneg %p170
        %p399 = pneg %p167
        %p400 = pneg %p191
        %p401 = pneg %p188
        %p402 = pneg %p212
        %p403 = pneg %p209
        %p404 = pneg %p233
        %p405 = pneg %p230
        %p406 = pneg %p254
        %p407 = pneg %p251
        %p408 = pneg %p275
        %p409 = pneg %p272
        %p410 = pneg %p301
        %p411 = pneg %p298
        %s412 = sand.u32 %s288, 1
        %s413 = sand.u32 %s288, 1
        %s414 = smul.addr %s413, 128
        %s415 = scalar_lea.vmem [#allocation2], %s414
        %s416 = smul.u32 16, %s23
        %s417 = ssub.s32 125, %s416
        %p418 = scmp.lt.s32.totalorder %s417, 16
        %s419 = scalar_select %p418, %s417, 16
        %s420 = smul.u32 128, %s419
        %p421 = scmp.lt.s32.totalorder %s416, 124
        %s422 = scalar_select %p421, %s416, 124
        %s423 = smul.addr %s422, 8
        %s424 = scalar_lea.vmem %s0, %s423
        %s425 = smul.u32 16, %s23
        %s426 = ssub.s32 125, %s425
        %p427 = scmp.lt.s32.totalorder %s426, 16
        %s428 = scalar_select %p427, %s426, 16
        %s429 = smul.u32 128, %s428
        %s430 = smul.u32 16, %s23
        %s431 = ssub.s32 125, %s430
        %p432 = scmp.lt.s32.totalorder %s431, 16
        %s433 = scalar_select %p432, %s431, 16
        %s434 = smul.u32 128, %s433
        %v435 = vld [vmem:[%s424] sm:$0xff]
        %v436 = vld [vmem:[%s424 + $0x8] sm:$0xff]
        %v437 = vld [vmem:[%s424 + $0x10] sm:$0xff]
        %v438 = vld [vmem:[%s424 + $0x18] sm:$0xff]
        %v439 = vld [vmem:[%s424 + $0x20] sm:$0xff]
        %v440 = vld [vmem:[%s424 + $0x28] sm:$0xff]
        %v441 = vld [vmem:[%s424 + $0x30] sm:$0xff]
        %v442 = vld [vmem:[%s424 + $0x38] sm:$0xff]
        %v443 = vld [vmem:[%s424 + $0x40] sm:$0xff]
        %v444 = vld [vmem:[%s424 + $0x48] sm:$0xff]
        %v445 = vld [vmem:[%s424 + $0x50] sm:$0xff]
        %v446 = vld [vmem:[%s424 + $0x58] sm:$0xff]
        %v447 = vld [vmem:[%s424 + $0x60] sm:$0xff]
        %v448 = vld [vmem:[%s424 + $0x68] sm:$0xff]
        %v449 = vld [vmem:[%s424 + $0x70] sm:$0xff]
        %v450 = vld [vmem:[%s424 + $0x78] sm:$0xff]
        %v451 = vld [vmem:[%s1] sm:$0xff]
        %v452 = vld [vmem:[%s1 + $0x8] sm:$0xff]
        %v453 = vld [vmem:[%s1 + $0x10] sm:$0x1f]
        %v454 = vld [vmem:[%s2] sm:$0x1]
        %v456 = vlaneseq
        %v457 = vshrl.u32 %v456, 7
        %v458 = vsub.s32 0, %v457
        %v459 = vrot.slane %v454, %v458
        %vm461 = vcmask 171008
        %v463 = vsel %vm461, %v435, 0
        %v466 = vsel %vm461, %v436, 0
        %v469 = vsel %vm461, %v437, 0
        %v472 = vsel %vm461, %v438, 0
        %v475 = vsel %vm461, %v439, 0
        %v478 = vsel %vm461, %v440, 0
        %v481 = vsel %vm461, %v441, 0
        %v484 = vsel %vm461, %v442, 0
        %v487 = vsel %vm461, %v443, 0
        %v490 = vsel %vm461, %v444, 0
        %v493 = vsel %vm461, %v445, 0
        %v496 = vsel %vm461, %v446, 0
        %v499 = vsel %vm461, %v447, 0
        %v502 = vsel %vm461, %v448, 0
        %v505 = vsel %vm461, %v449, 0
        %v508 = vsel %vm461, %v450, 0
        %vm510 = vcmask 1044480
        %v512 = vsel %vm510, %v453, 0
        %514 = vmatprep.subr.mxu0 0.0
        %515 = vmatpush1.msra.mxu0 0.0
        %516 = vmatprep.subr.mxu0 0.0
        %517 = vmatpush1.msra.mxu0 0.0
        %518 = vmatprep.subr.mxu0 0.0
        %519 = vmatpush1.msra.mxu0 0.0
        %520 = vmatprep.subr.mxu0 0.0
        %521 = vmatpush1.msra.mxu0 0.0
        %522 = vmatprep.subr.mxu0 0.0
        %523 = vmatpush1.msra.mxu0 0.0
        %524 = vmatprep.subr.mxu0 0.0
        %525 = vmatpush1.msra.mxu0 0.0
        %526 = vmatprep.subr.mxu0 0.0
        %527 = vmatpush1.msra.mxu0 0.0
        %528 = vmatprep.subr.mxu0 0.0
        %529 = vmatpush1.msra.mxu0 0.0
        %530 = vmatprep.subr.mxu0 0.0
        %531 = vmatpush1.msra.mxu0 0.0
        %532 = vmatprep.subr.mxu0 0.0
        %533 = vmatpush1.msra.mxu0 0.0
        %534 = vmatprep.subr.mxu0 0.0
        %535 = vmatpush1.msra.mxu0 0.0
        %536 = vmatprep.subr.mxu0 0.0
        %537 = vmatpush1.msra.mxu0 0.0
        %538 = vmatprep.subr.mxu0 0.0
        %539 = vmatpush1.msra.mxu0 0.0
        %540 = vmatprep.subr.mxu0 0.0
        %541 = vmatpush1.msra.mxu0 %v512
        %542 = vmatprep.subr.mxu0 0.0
        %543 = vmatpush1.msra.mxu0 %v452
        %544 = vmatprep.subr.mxu0 0.0
        %545 = vmatpush1.msra.mxu0 %v451
        %546 = vmatprep.subr.mxu0 0.0
        %547 = vmatpush2.msra.mxu0 0.0
        %548 = vmatprep.subr.mxu0 0.0
        %549 = vmatpush2.msra.mxu0 0.0
        %550 = vmatprep.subr.mxu0 0.0
        %551 = vmatpush2.msra.mxu0 0.0
        %552 = vmatprep.subr.mxu0 0.0
        %553 = vmatpush2.msra.mxu0 0.0
        %554 = vmatprep.subr.mxu0 0.0
        %555 = vmatpush2.msra.mxu0 0.0
        %556 = vmatprep.subr.mxu0 0.0
        %557 = vmatpush2.msra.mxu0 0.0
        %558 = vmatprep.subr.mxu0 0.0
        %559 = vmatpush2.msra.mxu0 0.0
        %560 = vmatprep.subr.mxu0 0.0
        %561 = vmatpush2.msra.mxu0 0.0
        %562 = vmatprep.subr.mxu0 0.0
        %563 = vmatpush2.msra.mxu0 0.0
        %564 = vmatprep.subr.mxu0 0.0
        %565 = vmatpush2.msra.mxu0 0.0
        %566 = vmatprep.subr.mxu0 0.0
        %567 = vmatpush2.msra.mxu0 0.0
        %568 = vmatprep.subr.mxu0 0.0
        %569 = vmatpush2.msra.mxu0 0.0
        %570 = vmatprep.subr.mxu0 0.0
        %571 = vmatpush2.msra.mxu0 0.0
        %572 = vmatprep.subr.mxu0 0.0
        %573 = vmatpush2.msra.mxu0 0.0
        %574 = vmatprep.subr.mxu0 0.0
        %575 = vmatpush2.msra.mxu0 0.0
        %576 = vmatprep.subr.mxu0 0.0
        %577 = vmatpush2.msra.mxu0 0.0
        %578 = vmatprep.mubr.f32.mxu0 0.0
        %579 = vmatmul.mubr.f32.gmra.mxu0 %v463
        %v580 = vpop.f32.mrf.mxu0
        %v581 = vadd.f32 %v459, %v580
        %v582 = vpop.f32.mrf.mxu0
        %583 = vmatprep.mubr.f32.mxu0 0.0
        %584 = vmatmul.mubr.f32.gmra.mxu0 %v466
        %v585 = vpop.f32.mrf.mxu0
        %v586 = vadd.f32 %v459, %v585
        %v587 = vpop.f32.mrf.mxu0
        %588 = vmatprep.mubr.f32.mxu0 0.0
        %589 = vmatmul.mubr.f32.gmra.mxu0 %v469
        %v590 = vpop.f32.mrf.mxu0
        %v591 = vadd.f32 %v459, %v590
        %v592 = vpop.f32.mrf.mxu0
        %593 = vmatprep.mubr.f32.mxu0 0.0
        %594 = vmatmul.mubr.f32.gmra.mxu0 %v472
        %v595 = vpop.f32.mrf.mxu0
        %v596 = vadd.f32 %v459, %v595
        %v597 = vpop.f32.mrf.mxu0
        %598 = vmatprep.mubr.f32.mxu0 0.0
        %599 = vmatmul.mubr.f32.gmra.mxu0 %v475
        %v600 = vpop.f32.mrf.mxu0
        %v601 = vadd.f32 %v459, %v600
        %v602 = vpop.f32.mrf.mxu0
        %603 = vmatprep.mubr.f32.mxu0 0.0
        %604 = vmatmul.mubr.f32.gmra.mxu0 %v478
        %v605 = vpop.f32.mrf.mxu0
        %v606 = vadd.f32 %v459, %v605
        %v607 = vpop.f32.mrf.mxu0
        %608 = vmatprep.mubr.f32.mxu0 0.0
        %609 = vmatmul.mubr.f32.gmra.mxu0 %v481
        %v610 = vpop.f32.mrf.mxu0
        %v611 = vadd.f32 %v459, %v610
        %v612 = vpop.f32.mrf.mxu0
        %613 = vmatprep.mubr.f32.mxu0 0.0
        %614 = vmatmul.mubr.f32.gmra.mxu0 %v484
        %v615 = vpop.f32.mrf.mxu0
        %v616 = vadd.f32 %v459, %v615
        %v617 = vpop.f32.mrf.mxu0
        %618 = vmatprep.mubr.f32.mxu0 0.0
        %619 = vmatmul.mubr.f32.gmra.mxu0 %v487
        %v620 = vpop.f32.mrf.mxu0
        %v621 = vadd.f32 %v459, %v620
        %v622 = vpop.f32.mrf.mxu0
        %623 = vmatprep.mubr.f32.mxu0 0.0
        %624 = vmatmul.mubr.f32.gmra.mxu0 %v490
        %v625 = vpop.f32.mrf.mxu0
        %v626 = vadd.f32 %v459, %v625
        %v627 = vpop.f32.mrf.mxu0
        %628 = vmatprep.mubr.f32.mxu0 0.0
        %629 = vmatmul.mubr.f32.gmra.mxu0 %v493
        %v630 = vpop.f32.mrf.mxu0
        %v631 = vadd.f32 %v459, %v630
        %v632 = vpop.f32.mrf.mxu0
        %633 = vmatprep.mubr.f32.mxu0 0.0
        %634 = vmatmul.mubr.f32.gmra.mxu0 %v496
        %v635 = vpop.f32.mrf.mxu0
        %v636 = vadd.f32 %v459, %v635
        %v637 = vpop.f32.mrf.mxu0
        %638 = vmatprep.mubr.f32.mxu0 0.0
        %639 = vmatmul.mubr.f32.gmra.mxu0 %v499
        %v640 = vpop.f32.mrf.mxu0
        %v641 = vadd.f32 %v459, %v640
        %v642 = vpop.f32.mrf.mxu0
        %643 = vmatprep.mubr.f32.mxu0 0.0
        %644 = vmatmul.mubr.f32.gmra.mxu0 %v502
        %v645 = vpop.f32.mrf.mxu0
        %v646 = vadd.f32 %v459, %v645
        %v647 = vpop.f32.mrf.mxu0
        %648 = vmatprep.mubr.f32.mxu0 0.0
        %649 = vmatmul.mubr.f32.gmra.mxu0 %v505
        %v650 = vpop.f32.mrf.mxu0
        %v651 = vadd.f32 %v459, %v650
        %v652 = vpop.f32.mrf.mxu0
        %653 = vmatprep.mubr.f32.mxu0 0.0
        %654 = vmatmul.mubr.f32.gmra.mxu0 %v508
        %v655 = vpop.f32.mrf.mxu0
        %v656 = vadd.f32 %v459, %v655
        %v657 = vpop.f32.mrf.mxu0
        %658 = vdwg.mxu0
        %v659 = vand.u32 2147483647, %v581
        %vm660 = vcmp.le.f32.partialorder %v659, 0.7853982
        %vm661 = vcmp.lt.s32.totalorder %v581, 0
        %v662 = vand.u32 %v581, 2139095040
        %v663 = vshrl.u32 %v662, 23
        %v664 = vsub.s32 %v663, 127
        %v665 = vand.u32 2147483647, %v581
        %v666 = vand.u32 %v665, 8388607
        %v667 = vor.u32 %v666, 8388608
        %v668 = vsub.s32 0, %v667
        %v669 = vadd.s32 %v664, 1
        %vm670 = vcmp.gt.s32.totalorder %v669, 0
        %v671 = vsel %vm670, %v669, 0
        %v672 = vshrl.u32 %v671, 5
        %v673 = vand.u32 %v671, 31
        %v674 = vsub.s32 32, %v673
        %v675 = vshrl.u32 683565275, %v674
        %v676 = vshll.u32 683565275, %v673
        %v677 = vshrl.u32 2475754826, %v674
        %v678 = vor.u32 %v676, %v677
        %v679 = vshll.u32 2475754826, %v673
        %v680 = vshrl.u32 2131351028, %v674
        %v681 = vor.u32 %v679, %v680
        %v682 = vshll.u32 2131351028, %v673
        %v683 = vshrl.u32 2102212464, %v674
        %v684 = vor.u32 %v682, %v683
        %v685 = vshll.u32 2102212464, %v673
        %v686 = vshrl.u32 920167782, %v674
        %v687 = vor.u32 %v685, %v686
        %v688 = vshll.u32 920167782, %v673
        %v689 = vshrl.u32 1326507024, %v674
        %v690 = vor.u32 %v688, %v689
        %vm691 = vcmp.lt.s32.totalorder %v672, 1
        %vm692 = vcmp.lt.s32.totalorder %v672, 2
        %vm693 = vcmp.lt.s32.totalorder %v672, 3
        %vm694 = vcmp.lt.s32.totalorder %v672, 4
        %v695 = vsel %vm691, %v675, %v678
        %v696 = vsel %vm694, %v684, 2102212464
        %v697 = vsel %vm693, %v681, %v696
        %v698 = vsel %vm692, %v695, %v697
        %v699 = vsel %vm691, %v678, %v681
        %v700 = vsel %vm694, %v687, 920167782
        %v701 = vsel %vm693, %v684, %v700
        %v702 = vsel %vm692, %v699, %v701
        %v703 = vsel %vm691, %v681, %v684
        %v704 = vsel %vm694, %v690, 1326507024
        %v705 = vsel %vm693, %v687, %v704
        %v706 = vsel %vm692, %v703, %v705
        %v707 = vshll.u32 %v667, 8
        %v708 = vmul.u32.u64.compose %v707, %v706
        %v709 = vextract.low.u32 %v708
        %v710 = vextract.high.u32 %v708
        %v711 = vmul.u32.u64.compose %v707, %v702
        %v712 = vextract.low.u32 %v711
        %v713 = vextract.high.u32 %v711
        %v714 = vmul.u32 %v707, %v698
        %v715 = vadd.s32 %v710, %v712
        %vm716 = vc.u32 %v710, %v712
        %v717 = vadd.s32 %v713, 1
        %v718 = vsel %vm716, %v717, %v713
        %v719 = vadd.s32 %v714, %v718
        %v720 = vadd.s32 %v719, 536870912
        %v721 = vshrl.u32 %v720, 30
        %v722 = vshll.u32 %v721, 30
        %v723 = vsub.s32 %v719, %v722
        %vm724 = vcmp.lt.s32.totalorder %v723, 0
        %v725 = vsub.s32 0, %v723
        %v726 = vsel %vm724, %v725, %v723
        %v727 = vclz %v726
        %v728 = vsub.s32 %v727, 2
        %vm729 = vcmp.gt.s32.totalorder 0, %v728
        %v730 = vsel %vm729, 0, %v728
        %v731 = vsub.s32 32, %v730
        %v732 = vshll.u32 %v723, %v730
        %v733 = vshrl.u32 %v715, %v731
        %v734 = vor.u32 %v732, %v733
        %v735 = vsub.s32 4294967266, %v730
        %v736 = vadd.s32 %v735, 127
        %v737 = vshll.u32 %v736, 23
        %v738 = vor.u32 4788187, %v737
        %v739 = vand.u32 2147483647, %v738
        %v741 = vcvt.s32.f32 %v734
        %v742 = vmul.f32 %v741, %v739
        %v743 = vxor.u32 %v742, 2147483648
        %v744 = vsel %vm661, %v743, %v742
        %v745 = vsub.s32 4, %v721
        %v746 = vsel %vm661, %v745, %v721
        %v747 = vsel %vm660, %v581, %v744
        %v748 = vsel %vm660, 0, %v746
        %v749 = vcosq.f32.pop %v747
        %v750 = vsinq.f32.pop %v747
        %vm751 = vweird.f32 %v581
        %v752 = vadd.s32 %v748, 3
        %v753 = vand.u32 %v752, 3
        %vm754 = vcmp.lt.s32.totalorder %v753, 2
        %vm755 = vcmp.eq.s32.totalorder %v753, 0
        %v756 = vxor.u32 %v750, 2147483648
        %v757 = vsel %vm755, %v749, %v756
        %vm758 = vcmp.eq.s32.totalorder %v753, 2
        %v759 = vxor.u32 %v749, 2147483648
        %v760 = vsel %vm758, %v759, %v750
        %v761 = vsel %vm754, %v757, %v760
        %v762 = vsel %vm751, nan, %v761
        %v763 = vand.u32 2147483647, %v586
        %vm764 = vcmp.le.f32.partialorder %v763, 0.7853982
        %vm765 = vcmp.lt.s32.totalorder %v586, 0
        %v766 = vand.u32 %v586, 2139095040
        %v767 = vshrl.u32 %v766, 23
        %v768 = vsub.s32 %v767, 127
        %v769 = vand.u32 2147483647, %v586
        %v770 = vand.u32 %v769, 8388607
        %v771 = vor.u32 %v770, 8388608
        %v772 = vsub.s32 0, %v771
        %v773 = vadd.s32 %v768, 1
        %vm774 = vcmp.gt.s32.totalorder %v773, 0
        %v775 = vsel %vm774, %v773, 0
        %v776 = vshrl.u32 %v775, 5
        %v777 = vand.u32 %v775, 31
        %v778 = vsub.s32 32, %v777
        %v779 = vshrl.u32 683565275, %v778
        %v780 = vshll.u32 683565275, %v777
        %v781 = vshrl.u32 2475754826, %v778
        %v782 = vor.u32 %v780, %v781
        %v783 = vshll.u32 2475754826, %v777
        %v784 = vshrl.u32 2131351028, %v778
        %v785 = vor.u32 %v783, %v784
        %v786 = vshll.u32 2131351028, %v777
        %v787 = vshrl.u32 2102212464, %v778
        %v788 = vor.u32 %v786, %v787
        %v789 = vshll.u32 2102212464, %v777
        %v790 = vshrl.u32 920167782, %v778
        %v791 = vor.u32 %v789, %v790
        %v792 = vshll.u32 920167782, %v777
        %v793 = vshrl.u32 1326507024, %v778
        %v794 = vor.u32 %v792, %v793
        %vm795 = vcmp.lt.s32.totalorder %v776, 1
        %vm796 = vcmp.lt.s32.totalorder %v776, 2
        %vm797 = vcmp.lt.s32.totalorder %v776, 3
        %vm798 = vcmp.lt.s32.totalorder %v776, 4
        %v799 = vsel %vm795, %v779, %v782
        %v800 = vsel %vm798, %v788, 2102212464
        %v801 = vsel %vm797, %v785, %v800
        %v802 = vsel %vm796, %v799, %v801
        %v803 = vsel %vm795, %v782, %v785
        %v804 = vsel %vm798, %v791, 920167782
        %v805 = vsel %vm797, %v788, %v804
        %v806 = vsel %vm796, %v803, %v805
        %v807 = vsel %vm795, %v785, %v788
        %v808 = vsel %vm798, %v794, 1326507024
        %v809 = vsel %vm797, %v791, %v808
        %v810 = vsel %vm796, %v807, %v809
        %v811 = vshll.u32 %v771, 8
        %v812 = vmul.u32.u64.compose %v811, %v810
        %v813 = vextract.low.u32 %v812
        %v814 = vextract.high.u32 %v812
        %v815 = vmul.u32.u64.compose %v811, %v806
        %v816 = vextract.low.u32 %v815
        %v817 = vextract.high.u32 %v815
        %v818 = vmul.u32 %v811, %v802
        %v819 = vadd.s32 %v814, %v816
        %vm820 = vc.u32 %v814, %v816
        %v821 = vadd.s32 %v817, 1
        %v822 = vsel %vm820, %v821, %v817
        %v823 = vadd.s32 %v818, %v822
        %v824 = vadd.s32 %v823, 536870912
        %v825 = vshrl.u32 %v824, 30
        %v826 = vshll.u32 %v825, 30
        %v827 = vsub.s32 %v823, %v826
        %vm828 = vcmp.lt.s32.totalorder %v827, 0
        %v829 = vsub.s32 0, %v827
        %v830 = vsel %vm828, %v829, %v827
        %v831 = vclz %v830
        %v832 = vsub.s32 %v831, 2
        %vm833 = vcmp.gt.s32.totalorder 0, %v832
        %v834 = vsel %vm833, 0, %v832
        %v835 = vsub.s32 32, %v834
        %v836 = vshll.u32 %v827, %v834
        %v837 = vshrl.u32 %v819, %v835
        %v838 = vor.u32 %v836, %v837
        %v839 = vsub.s32 4294967266, %v834
        %v840 = vadd.s32 %v839, 127
        %v841 = vshll.u32 %v840, 23
        %v842 = vor.u32 4788187, %v841
        %v843 = vand.u32 2147483647, %v842
        %v845 = vcvt.s32.f32 %v838
        %v846 = vmul.f32 %v845, %v843
        %v847 = vxor.u32 %v846, 2147483648
        %v848 = vsel %vm765, %v847, %v846
        %v849 = vsub.s32 4, %v825
        %v850 = vsel %vm765, %v849, %v825
        %v851 = vsel %vm764, %v586, %v848
        %v852 = vsel %vm764, 0, %v850
        %v853 = vcosq.f32.pop %v851
        %v854 = vsinq.f32.pop %v851
        %vm855 = vweird.f32 %v586
        %v856 = vadd.s32 %v852, 3
        %v857 = vand.u32 %v856, 3
        %vm858 = vcmp.lt.s32.totalorder %v857, 2
        %vm859 = vcmp.eq.s32.totalorder %v857, 0
        %v860 = vxor.u32 %v854, 2147483648
        %v861 = vsel %vm859, %v853, %v860
        %vm862 = vcmp.eq.s32.totalorder %v857, 2
        %v863 = vxor.u32 %v853, 2147483648
        %v864 = vsel %vm862, %v863, %v854
        %v865 = vsel %vm858, %v861, %v864
        %v866 = vsel %vm855, nan, %v865
        %v867 = vand.u32 2147483647, %v591
        %vm868 = vcmp.le.f32.partialorder %v867, 0.7853982
        %vm869 = vcmp.lt.s32.totalorder %v591, 0
        %v870 = vand.u32 %v591, 2139095040
        %v871 = vshrl.u32 %v870, 23
        %v872 = vsub.s32 %v871, 127
        %v873 = vand.u32 2147483647, %v591
        %v874 = vand.u32 %v873, 8388607
        %v875 = vor.u32 %v874, 8388608
        %v876 = vsub.s32 0, %v875
        %v877 = vadd.s32 %v872, 1
        %vm878 = vcmp.gt.s32.totalorder %v877, 0
        %v879 = vsel %vm878, %v877, 0
        %v880 = vshrl.u32 %v879, 5
        %v881 = vand.u32 %v879, 31
        %v882 = vsub.s32 32, %v881
        %v883 = vshrl.u32 683565275, %v882
        %v884 = vshll.u32 683565275, %v881
        %v885 = vshrl.u32 2475754826, %v882
        %v886 = vor.u32 %v884, %v885
        %v887 = vshll.u32 2475754826, %v881
        %v888 = vshrl.u32 2131351028, %v882
        %v889 = vor.u32 %v887, %v888
        %v890 = vshll.u32 2131351028, %v881
        %v891 = vshrl.u32 2102212464, %v882
        %v892 = vor.u32 %v890, %v891
        %v893 = vshll.u32 2102212464, %v881
        %v894 = vshrl.u32 920167782, %v882
        %v895 = vor.u32 %v893, %v894
        %v896 = vshll.u32 920167782, %v881
        %v897 = vshrl.u32 1326507024, %v882
        %v898 = vor.u32 %v896, %v897
        %vm899 = vcmp.lt.s32.totalorder %v880, 1
        %vm900 = vcmp.lt.s32.totalorder %v880, 2
        %vm901 = vcmp.lt.s32.totalorder %v880, 3
        %vm902 = vcmp.lt.s32.totalorder %v880, 4
        %v903 = vsel %vm899, %v883, %v886
        %v904 = vsel %vm902, %v892, 2102212464
        %v905 = vsel %vm901, %v889, %v904
        %v906 = vsel %vm900, %v903, %v905
        %v907 = vsel %vm899, %v886, %v889
        %v908 = vsel %vm902, %v895, 920167782
        %v909 = vsel %vm901, %v892, %v908
        %v910 = vsel %vm900, %v907, %v909
        %v911 = vsel %vm899, %v889, %v892
        %v912 = vsel %vm902, %v898, 1326507024
        %v913 = vsel %vm901, %v895, %v912
        %v914 = vsel %vm900, %v911, %v913
        %v915 = vshll.u32 %v875, 8
        %v916 = vmul.u32.u64.compose %v915, %v914
        %v917 = vextract.low.u32 %v916
        %v918 = vextract.high.u32 %v916
        %v919 = vmul.u32.u64.compose %v915, %v910
        %v920 = vextract.low.u32 %v919
        %v921 = vextract.high.u32 %v919
        %v922 = vmul.u32 %v915, %v906
        %v923 = vadd.s32 %v918, %v920
        %vm924 = vc.u32 %v918, %v920
        %v925 = vadd.s32 %v921, 1
        %v926 = vsel %vm924, %v925, %v921
        %v927 = vadd.s32 %v922, %v926
        %v928 = vadd.s32 %v927, 536870912
        %v929 = vshrl.u32 %v928, 30
        %v930 = vshll.u32 %v929, 30
        %v931 = vsub.s32 %v927, %v930
        %vm932 = vcmp.lt.s32.totalorder %v931, 0
        %v933 = vsub.s32 0, %v931
        %v934 = vsel %vm932, %v933, %v931
        %v935 = vclz %v934
        %v936 = vsub.s32 %v935, 2
        %vm937 = vcmp.gt.s32.totalorder 0, %v936
        %v938 = vsel %vm937, 0, %v936
        %v939 = vsub.s32 32, %v938
        %v940 = vshll.u32 %v931, %v938
        %v941 = vshrl.u32 %v923, %v939
        %v942 = vor.u32 %v940, %v941
        %v943 = vsub.s32 4294967266, %v938
        %v944 = vadd.s32 %v943, 127
        %v945 = vshll.u32 %v944, 23
        %v946 = vor.u32 4788187, %v945
        %v947 = vand.u32 2147483647, %v946
        %v949 = vcvt.s32.f32 %v942
        %v950 = vmul.f32 %v949, %v947
        %v951 = vxor.u32 %v950, 2147483648
        %v952 = vsel %vm869, %v951, %v950
        %v953 = vsub.s32 4, %v929
        %v954 = vsel %vm869, %v953, %v929
        %v955 = vsel %vm868, %v591, %v952
        %v956 = vsel %vm868, 0, %v954
        %v957 = vcosq.f32.pop %v955
        %v958 = vsinq.f32.pop %v955
        %vm959 = vweird.f32 %v591
        %v960 = vadd.s32 %v956, 3
        %v961 = vand.u32 %v960, 3
        %vm962 = vcmp.lt.s32.totalorder %v961, 2
        %vm963 = vcmp.eq.s32.totalorder %v961, 0
        %v964 = vxor.u32 %v958, 2147483648
        %v965 = vsel %vm963, %v957, %v964
        %vm966 = vcmp.eq.s32.totalorder %v961, 2
        %v967 = vxor.u32 %v957, 2147483648
        %v968 = vsel %vm966, %v967, %v958
        %v969 = vsel %vm962, %v965, %v968
        %v970 = vsel %vm959, nan, %v969
        %v971 = vand.u32 2147483647, %v596
        %vm972 = vcmp.le.f32.partialorder %v971, 0.7853982
        %vm973 = vcmp.lt.s32.totalorder %v596, 0
        %v974 = vand.u32 %v596, 2139095040
        %v975 = vshrl.u32 %v974, 23
        %v976 = vsub.s32 %v975, 127
        %v977 = vand.u32 2147483647, %v596
        %v978 = vand.u32 %v977, 8388607
        %v979 = vor.u32 %v978, 8388608
        %v980 = vsub.s32 0, %v979
        %v981 = vadd.s32 %v976, 1
        %vm982 = vcmp.gt.s32.totalorder %v981, 0
        %v983 = vsel %vm982, %v981, 0
        %v984 = vshrl.u32 %v983, 5
        %v985 = vand.u32 %v983, 31
        %v986 = vsub.s32 32, %v985
        %v987 = vshrl.u32 683565275, %v986
        %v988 = vshll.u32 683565275, %v985
        %v989 = vshrl.u32 2475754826, %v986
        %v990 = vor.u32 %v988, %v989
        %v991 = vshll.u32 2475754826, %v985
        %v992 = vshrl.u32 2131351028, %v986
        %v993 = vor.u32 %v991, %v992
        %v994 = vshll.u32 2131351028, %v985
        %v995 = vshrl.u32 2102212464, %v986
        %v996 = vor.u32 %v994, %v995
        %v997 = vshll.u32 2102212464, %v985
        %v998 = vshrl.u32 920167782, %v986
        %v999 = vor.u32 %v997, %v998
        %v1000 = vshll.u32 920167782, %v985
        %v1001 = vshrl.u32 1326507024, %v986
        %v1002 = vor.u32 %v1000, %v1001
        %vm1003 = vcmp.lt.s32.totalorder %v984, 1
        %vm1004 = vcmp.lt.s32.totalorder %v984, 2
        %vm1005 = vcmp.lt.s32.totalorder %v984, 3
        %vm1006 = vcmp.lt.s32.totalorder %v984, 4
        %v1007 = vsel %vm1003, %v987, %v990
        %v1008 = vsel %vm1006, %v996, 2102212464
        %v1009 = vsel %vm1005, %v993, %v1008
        %v1010 = vsel %vm1004, %v1007, %v1009
        %v1011 = vsel %vm1003, %v990, %v993
        %v1012 = vsel %vm1006, %v999, 920167782
        %v1013 = vsel %vm1005, %v996, %v1012
        %v1014 = vsel %vm1004, %v1011, %v1013
        %v1015 = vsel %vm1003, %v993, %v996
        %v1016 = vsel %vm1006, %v1002, 1326507024
        %v1017 = vsel %vm1005, %v999, %v1016
        %v1018 = vsel %vm1004, %v1015, %v1017
        %v1019 = vshll.u32 %v979, 8
        %v1020 = vmul.u32.u64.compose %v1019, %v1018
        %v1021 = vextract.low.u32 %v1020
        %v1022 = vextract.high.u32 %v1020
        %v1023 = vmul.u32.u64.compose %v1019, %v1014
        %v1024 = vextract.low.u32 %v1023
        %v1025 = vextract.high.u32 %v1023
        %v1026 = vmul.u32 %v1019, %v1010
        %v1027 = vadd.s32 %v1022, %v1024
        %vm1028 = vc.u32 %v1022, %v1024
        %v1029 = vadd.s32 %v1025, 1
        %v1030 = vsel %vm1028, %v1029, %v1025
        %v1031 = vadd.s32 %v1026, %v1030
        %v1032 = vadd.s32 %v1031, 536870912
        %v1033 = vshrl.u32 %v1032, 30
        %v1034 = vshll.u32 %v1033, 30
        %v1035 = vsub.s32 %v1031, %v1034
        %vm1036 = vcmp.lt.s32.totalorder %v1035, 0
        %v1037 = vsub.s32 0, %v1035
        %v1038 = vsel %vm1036, %v1037, %v1035
        %v1039 = vclz %v1038
        %v1040 = vsub.s32 %v1039, 2
        %vm1041 = vcmp.gt.s32.totalorder 0, %v1040
        %v1042 = vsel %vm1041, 0, %v1040
        %v1043 = vsub.s32 32, %v1042
        %v1044 = vshll.u32 %v1035, %v1042
        %v1045 = vshrl.u32 %v1027, %v1043
        %v1046 = vor.u32 %v1044, %v1045
        %v1047 = vsub.s32 4294967266, %v1042
        %v1048 = vadd.s32 %v1047, 127
        %v1049 = vshll.u32 %v1048, 23
        %v1050 = vor.u32 4788187, %v1049
        %v1051 = vand.u32 2147483647, %v1050
        %v1053 = vcvt.s32.f32 %v1046
        %v1054 = vmul.f32 %v1053, %v1051
        %v1055 = vxor.u32 %v1054, 2147483648
        %v1056 = vsel %vm973, %v1055, %v1054
        %v1057 = vsub.s32 4, %v1033
        %v1058 = vsel %vm973, %v1057, %v1033
        %v1059 = vsel %vm972, %v596, %v1056
        %v1060 = vsel %vm972, 0, %v1058
        %v1061 = vcosq.f32.pop %v1059
        %v1062 = vsinq.f32.pop %v1059
        %vm1063 = vweird.f32 %v596
        %v1064 = vadd.s32 %v1060, 3
        %v1065 = vand.u32 %v1064, 3
        %vm1066 = vcmp.lt.s32.totalorder %v1065, 2
        %vm1067 = vcmp.eq.s32.totalorder %v1065, 0
        %v1068 = vxor.u32 %v1062, 2147483648
        %v1069 = vsel %vm1067, %v1061, %v1068
        %vm1070 = vcmp.eq.s32.totalorder %v1065, 2
        %v1071 = vxor.u32 %v1061, 2147483648
        %v1072 = vsel %vm1070, %v1071, %v1062
        %v1073 = vsel %vm1066, %v1069, %v1072
        %v1074 = vsel %vm1063, nan, %v1073
        %v1075 = vand.u32 2147483647, %v601
        %vm1076 = vcmp.le.f32.partialorder %v1075, 0.7853982
        %vm1077 = vcmp.lt.s32.totalorder %v601, 0
        %v1078 = vand.u32 %v601, 2139095040
        %v1079 = vshrl.u32 %v1078, 23
        %v1080 = vsub.s32 %v1079, 127
        %v1081 = vand.u32 2147483647, %v601
        %v1082 = vand.u32 %v1081, 8388607
        %v1083 = vor.u32 %v1082, 8388608
        %v1084 = vsub.s32 0, %v1083
        %v1085 = vadd.s32 %v1080, 1
        %vm1086 = vcmp.gt.s32.totalorder %v1085, 0
        %v1087 = vsel %vm1086, %v1085, 0
        %v1088 = vshrl.u32 %v1087, 5
        %v1089 = vand.u32 %v1087, 31
        %v1090 = vsub.s32 32, %v1089
        %v1091 = vshrl.u32 683565275, %v1090
        %v1092 = vshll.u32 683565275, %v1089
        %v1093 = vshrl.u32 2475754826, %v1090
        %v1094 = vor.u32 %v1092, %v1093
        %v1095 = vshll.u32 2475754826, %v1089
        %v1096 = vshrl.u32 2131351028, %v1090
        %v1097 = vor.u32 %v1095, %v1096
        %v1098 = vshll.u32 2131351028, %v1089
        %v1099 = vshrl.u32 2102212464, %v1090
        %v1100 = vor.u32 %v1098, %v1099
        %v1101 = vshll.u32 2102212464, %v1089
        %v1102 = vshrl.u32 920167782, %v1090
        %v1103 = vor.u32 %v1101, %v1102
        %v1104 = vshll.u32 920167782, %v1089
        %v1105 = vshrl.u32 1326507024, %v1090
        %v1106 = vor.u32 %v1104, %v1105
        %vm1107 = vcmp.lt.s32.totalorder %v1088, 1
        %vm1108 = vcmp.lt.s32.totalorder %v1088, 2
        %vm1109 = vcmp.lt.s32.totalorder %v1088, 3
        %vm1110 = vcmp.lt.s32.totalorder %v1088, 4
        %v1111 = vsel %vm1107, %v1091, %v1094
        %v1112 = vsel %vm1110, %v1100, 2102212464
        %v1113 = vsel %vm1109, %v1097, %v1112
        %v1114 = vsel %vm1108, %v1111, %v1113
        %v1115 = vsel %vm1107, %v1094, %v1097
        %v1116 = vsel %vm1110, %v1103, 920167782
        %v1117 = vsel %vm1109, %v1100, %v1116
        %v1118 = vsel %vm1108, %v1115, %v1117
        %v1119 = vsel %vm1107, %v1097, %v1100
        %v1120 = vsel %vm1110, %v1106, 1326507024
        %v1121 = vsel %vm1109, %v1103, %v1120
        %v1122 = vsel %vm1108, %v1119, %v1121
        %v1123 = vshll.u32 %v1083, 8
        %v1124 = vmul.u32.u64.compose %v1123, %v1122
        %v1125 = vextract.low.u32 %v1124
        %v1126 = vextract.high.u32 %v1124
        %v1127 = vmul.u32.u64.compose %v1123, %v1118
        %v1128 = vextract.low.u32 %v1127
        %v1129 = vextract.high.u32 %v1127
        %v1130 = vmul.u32 %v1123, %v1114
        %v1131 = vadd.s32 %v1126, %v1128
        %vm1132 = vc.u32 %v1126, %v1128
        %v1133 = vadd.s32 %v1129, 1
        %v1134 = vsel %vm1132, %v1133, %v1129
        %v1135 = vadd.s32 %v1130, %v1134
        %v1136 = vadd.s32 %v1135, 536870912
        %v1137 = vshrl.u32 %v1136, 30
        %v1138 = vshll.u32 %v1137, 30
        %v1139 = vsub.s32 %v1135, %v1138
        %vm1140 = vcmp.lt.s32.totalorder %v1139, 0
        %v1141 = vsub.s32 0, %v1139
        %v1142 = vsel %vm1140, %v1141, %v1139
        %v1143 = vclz %v1142
        %v1144 = vsub.s32 %v1143, 2
        %vm1145 = vcmp.gt.s32.totalorder 0, %v1144
        %v1146 = vsel %vm1145, 0, %v1144
        %v1147 = vsub.s32 32, %v1146
        %v1148 = vshll.u32 %v1139, %v1146
        %v1149 = vshrl.u32 %v1131, %v1147
        %v1150 = vor.u32 %v1148, %v1149
        %v1151 = vsub.s32 4294967266, %v1146
        %v1152 = vadd.s32 %v1151, 127
        %v1153 = vshll.u32 %v1152, 23
        %v1154 = vor.u32 4788187, %v1153
        %v1155 = vand.u32 2147483647, %v1154
        %v1157 = vcvt.s32.f32 %v1150
        %v1158 = vmul.f32 %v1157, %v1155
        %v1159 = vxor.u32 %v1158, 2147483648
        %v1160 = vsel %vm1077, %v1159, %v1158
        %v1161 = vsub.s32 4, %v1137
        %v1162 = vsel %vm1077, %v1161, %v1137
        %v1163 = vsel %vm1076, %v601, %v1160
        %v1164 = vsel %vm1076, 0, %v1162
        %v1165 = vcosq.f32.pop %v1163
        %v1166 = vsinq.f32.pop %v1163
        %vm1167 = vweird.f32 %v601
        %v1168 = vadd.s32 %v1164, 3
        %v1169 = vand.u32 %v1168, 3
        %vm1170 = vcmp.lt.s32.totalorder %v1169, 2
        %vm1171 = vcmp.eq.s32.totalorder %v1169, 0
        %v1172 = vxor.u32 %v1166, 2147483648
        %v1173 = vsel %vm1171, %v1165, %v1172
        %vm1174 = vcmp.eq.s32.totalorder %v1169, 2
        %v1175 = vxor.u32 %v1165, 2147483648
        %v1176 = vsel %vm1174, %v1175, %v1166
        %v1177 = vsel %vm1170, %v1173, %v1176
        %v1178 = vsel %vm1167, nan, %v1177
        %v1179 = vand.u32 2147483647, %v606
        %vm1180 = vcmp.le.f32.partialorder %v1179, 0.7853982
        %vm1181 = vcmp.lt.s32.totalorder %v606, 0
        %v1182 = vand.u32 %v606, 2139095040
        %v1183 = vshrl.u32 %v1182, 23
        %v1184 = vsub.s32 %v1183, 127
        %v1185 = vand.u32 2147483647, %v606
        %v1186 = vand.u32 %v1185, 8388607
        %v1187 = vor.u32 %v1186, 8388608
        %v1188 = vsub.s32 0, %v1187
        %v1189 = vadd.s32 %v1184, 1
        %vm1190 = vcmp.gt.s32.totalorder %v1189, 0
        %v1191 = vsel %vm1190, %v1189, 0
        %v1192 = vshrl.u32 %v1191, 5
        %v1193 = vand.u32 %v1191, 31
        %v1194 = vsub.s32 32, %v1193
        %v1195 = vshrl.u32 683565275, %v1194
        %v1196 = vshll.u32 683565275, %v1193
        %v1197 = vshrl.u32 2475754826, %v1194
        %v1198 = vor.u32 %v1196, %v1197
        %v1199 = vshll.u32 2475754826, %v1193
        %v1200 = vshrl.u32 2131351028, %v1194
        %v1201 = vor.u32 %v1199, %v1200
        %v1202 = vshll.u32 2131351028, %v1193
        %v1203 = vshrl.u32 2102212464, %v1194
        %v1204 = vor.u32 %v1202, %v1203
        %v1205 = vshll.u32 2102212464, %v1193
        %v1206 = vshrl.u32 920167782, %v1194
        %v1207 = vor.u32 %v1205, %v1206
        %v1208 = vshll.u32 920167782, %v1193
        %v1209 = vshrl.u32 1326507024, %v1194
        %v1210 = vor.u32 %v1208, %v1209
        %vm1211 = vcmp.lt.s32.totalorder %v1192, 1
        %vm1212 = vcmp.lt.s32.totalorder %v1192, 2
        %vm1213 = vcmp.lt.s32.totalorder %v1192, 3
        %vm1214 = vcmp.lt.s32.totalorder %v1192, 4
        %v1215 = vsel %vm1211, %v1195, %v1198
        %v1216 = vsel %vm1214, %v1204, 2102212464
        %v1217 = vsel %vm1213, %v1201, %v1216
        %v1218 = vsel %vm1212, %v1215, %v1217
        %v1219 = vsel %vm1211, %v1198, %v1201
        %v1220 = vsel %vm1214, %v1207, 920167782
        %v1221 = vsel %vm1213, %v1204, %v1220
        %v1222 = vsel %vm1212, %v1219, %v1221
        %v1223 = vsel %vm1211, %v1201, %v1204
        %v1224 = vsel %vm1214, %v1210, 1326507024
        %v1225 = vsel %vm1213, %v1207, %v1224
        %v1226 = vsel %vm1212, %v1223, %v1225
        %v1227 = vshll.u32 %v1187, 8
        %v1228 = vmul.u32.u64.compose %v1227, %v1226
        %v1229 = vextract.low.u32 %v1228
        %v1230 = vextract.high.u32 %v1228
        %v1231 = vmul.u32.u64.compose %v1227, %v1222
        %v1232 = vextract.low.u32 %v1231
        %v1233 = vextract.high.u32 %v1231
        %v1234 = vmul.u32 %v1227, %v1218
        %v1235 = vadd.s32 %v1230, %v1232
        %vm1236 = vc.u32 %v1230, %v1232
        %v1237 = vadd.s32 %v1233, 1
        %v1238 = vsel %vm1236, %v1237, %v1233
        %v1239 = vadd.s32 %v1234, %v1238
        %v1240 = vadd.s32 %v1239, 536870912
        %v1241 = vshrl.u32 %v1240, 30
        %v1242 = vshll.u32 %v1241, 30
        %v1243 = vsub.s32 %v1239, %v1242
        %vm1244 = vcmp.lt.s32.totalorder %v1243, 0
        %v1245 = vsub.s32 0, %v1243
        %v1246 = vsel %vm1244, %v1245, %v1243
        %v1247 = vclz %v1246
        %v1248 = vsub.s32 %v1247, 2
        %vm1249 = vcmp.gt.s32.totalorder 0, %v1248
        %v1250 = vsel %vm1249, 0, %v1248
        %v1251 = vsub.s32 32, %v1250
        %v1252 = vshll.u32 %v1243, %v1250
        %v1253 = vshrl.u32 %v1235, %v1251
        %v1254 = vor.u32 %v1252, %v1253
        %v1255 = vsub.s32 4294967266, %v1250
        %v1256 = vadd.s32 %v1255, 127
        %v1257 = vshll.u32 %v1256, 23
        %v1258 = vor.u32 4788187, %v1257
        %v1259 = vand.u32 2147483647, %v1258
        %v1261 = vcvt.s32.f32 %v1254
        %v1262 = vmul.f32 %v1261, %v1259
        %v1263 = vxor.u32 %v1262, 2147483648
        %v1264 = vsel %vm1181, %v1263, %v1262
        %v1265 = vsub.s32 4, %v1241
        %v1266 = vsel %vm1181, %v1265, %v1241
        %v1267 = vsel %vm1180, %v606, %v1264
        %v1268 = vsel %vm1180, 0, %v1266
        %v1269 = vcosq.f32.pop %v1267
        %v1270 = vsinq.f32.pop %v1267
        %vm1271 = vweird.f32 %v606
        %v1272 = vadd.s32 %v1268, 3
        %v1273 = vand.u32 %v1272, 3
        %vm1274 = vcmp.lt.s32.totalorder %v1273, 2
        %vm1275 = vcmp.eq.s32.totalorder %v1273, 0
        %v1276 = vxor.u32 %v1270, 2147483648
        %v1277 = vsel %vm1275, %v1269, %v1276
        %vm1278 = vcmp.eq.s32.totalorder %v1273, 2
        %v1279 = vxor.u32 %v1269, 2147483648
        %v1280 = vsel %vm1278, %v1279, %v1270
        %v1281 = vsel %vm1274, %v1277, %v1280
        %v1282 = vsel %vm1271, nan, %v1281
        %v1283 = vand.u32 2147483647, %v611
        %vm1284 = vcmp.le.f32.partialorder %v1283, 0.7853982
        %vm1285 = vcmp.lt.s32.totalorder %v611, 0
        %v1286 = vand.u32 %v611, 2139095040
        %v1287 = vshrl.u32 %v1286, 23
        %v1288 = vsub.s32 %v1287, 127
        %v1289 = vand.u32 2147483647, %v611
        %v1290 = vand.u32 %v1289, 8388607
        %v1291 = vor.u32 %v1290, 8388608
        %v1292 = vsub.s32 0, %v1291
        %v1293 = vadd.s32 %v1288, 1
        %vm1294 = vcmp.gt.s32.totalorder %v1293, 0
        %v1295 = vsel %vm1294, %v1293, 0
        %v1296 = vshrl.u32 %v1295, 5
        %v1297 = vand.u32 %v1295, 31
        %v1298 = vsub.s32 32, %v1297
        %v1299 = vshrl.u32 683565275, %v1298
        %v1300 = vshll.u32 683565275, %v1297
        %v1301 = vshrl.u32 2475754826, %v1298
        %v1302 = vor.u32 %v1300, %v1301
        %v1303 = vshll.u32 2475754826, %v1297
        %v1304 = vshrl.u32 2131351028, %v1298
        %v1305 = vor.u32 %v1303, %v1304
        %v1306 = vshll.u32 2131351028, %v1297
        %v1307 = vshrl.u32 2102212464, %v1298
        %v1308 = vor.u32 %v1306, %v1307
        %v1309 = vshll.u32 2102212464, %v1297
        %v1310 = vshrl.u32 920167782, %v1298
        %v1311 = vor.u32 %v1309, %v1310
        %v1312 = vshll.u32 920167782, %v1297
        %v1313 = vshrl.u32 1326507024, %v1298
        %v1314 = vor.u32 %v1312, %v1313
        %vm1315 = vcmp.lt.s32.totalorder %v1296, 1
        %vm1316 = vcmp.lt.s32.totalorder %v1296, 2
        %vm1317 = vcmp.lt.s32.totalorder %v1296, 3
        %vm1318 = vcmp.lt.s32.totalorder %v1296, 4
        %v1319 = vsel %vm1315, %v1299, %v1302
        %v1320 = vsel %vm1318, %v1308, 2102212464
        %v1321 = vsel %vm1317, %v1305, %v1320
        %v1322 = vsel %vm1316, %v1319, %v1321
        %v1323 = vsel %vm1315, %v1302, %v1305
        %v1324 = vsel %vm1318, %v1311, 920167782
        %v1325 = vsel %vm1317, %v1308, %v1324
        %v1326 = vsel %vm1316, %v1323, %v1325
        %v1327 = vsel %vm1315, %v1305, %v1308
        %v1328 = vsel %vm1318, %v1314, 1326507024
        %v1329 = vsel %vm1317, %v1311, %v1328
        %v1330 = vsel %vm1316, %v1327, %v1329
        %v1331 = vshll.u32 %v1291, 8
        %v1332 = vmul.u32.u64.compose %v1331, %v1330
        %v1333 = vextract.low.u32 %v1332
        %v1334 = vextract.high.u32 %v1332
        %v1335 = vmul.u32.u64.compose %v1331, %v1326
        %v1336 = vextract.low.u32 %v1335
        %v1337 = vextract.high.u32 %v1335
        %v1338 = vmul.u32 %v1331, %v1322
        %v1339 = vadd.s32 %v1334, %v1336
        %vm1340 = vc.u32 %v1334, %v1336
        %v1341 = vadd.s32 %v1337, 1
        %v1342 = vsel %vm1340, %v1341, %v1337
        %v1343 = vadd.s32 %v1338, %v1342
        %v1344 = vadd.s32 %v1343, 536870912
        %v1345 = vshrl.u32 %v1344, 30
        %v1346 = vshll.u32 %v1345, 30
        %v1347 = vsub.s32 %v1343, %v1346
        %vm1348 = vcmp.lt.s32.totalorder %v1347, 0
        %v1349 = vsub.s32 0, %v1347
        %v1350 = vsel %vm1348, %v1349, %v1347
        %v1351 = vclz %v1350
        %v1352 = vsub.s32 %v1351, 2
        %vm1353 = vcmp.gt.s32.totalorder 0, %v1352
        %v1354 = vsel %vm1353, 0, %v1352
        %v1355 = vsub.s32 32, %v1354
        %v1356 = vshll.u32 %v1347, %v1354
        %v1357 = vshrl.u32 %v1339, %v1355
        %v1358 = vor.u32 %v1356, %v1357
        %v1359 = vsub.s32 4294967266, %v1354
        %v1360 = vadd.s32 %v1359, 127
        %v1361 = vshll.u32 %v1360, 23
        %v1362 = vor.u32 4788187, %v1361
        %v1363 = vand.u32 2147483647, %v1362
        %v1365 = vcvt.s32.f32 %v1358
        %v1366 = vmul.f32 %v1365, %v1363
        %v1367 = vxor.u32 %v1366, 2147483648
        %v1368 = vsel %vm1285, %v1367, %v1366
        %v1369 = vsub.s32 4, %v1345
        %v1370 = vsel %vm1285, %v1369, %v1345
        %v1371 = vsel %vm1284, %v611, %v1368
        %v1372 = vsel %vm1284, 0, %v1370
        %v1373 = vcosq.f32.pop %v1371
        %v1374 = vsinq.f32.pop %v1371
        %vm1375 = vweird.f32 %v611
        %v1376 = vadd.s32 %v1372, 3
        %v1377 = vand.u32 %v1376, 3
        %vm1378 = vcmp.lt.s32.totalorder %v1377, 2
        %vm1379 = vcmp.eq.s32.totalorder %v1377, 0
        %v1380 = vxor.u32 %v1374, 2147483648
        %v1381 = vsel %vm1379, %v1373, %v1380
        %vm1382 = vcmp.eq.s32.totalorder %v1377, 2
        %v1383 = vxor.u32 %v1373, 2147483648
        %v1384 = vsel %vm1382, %v1383, %v1374
        %v1385 = vsel %vm1378, %v1381, %v1384
        %v1386 = vsel %vm1375, nan, %v1385
        %v1387 = vand.u32 2147483647, %v616
        %vm1388 = vcmp.le.f32.partialorder %v1387, 0.7853982
        %vm1389 = vcmp.lt.s32.totalorder %v616, 0
        %v1390 = vand.u32 %v616, 2139095040
        %v1391 = vshrl.u32 %v1390, 23
        %v1392 = vsub.s32 %v1391, 127
        %v1393 = vand.u32 2147483647, %v616
        %v1394 = vand.u32 %v1393, 8388607
        %v1395 = vor.u32 %v1394, 8388608
        %v1396 = vsub.s32 0, %v1395
        %v1397 = vadd.s32 %v1392, 1
        %vm1398 = vcmp.gt.s32.totalorder %v1397, 0
        %v1399 = vsel %vm1398, %v1397, 0
        %v1400 = vshrl.u32 %v1399, 5
        %v1401 = vand.u32 %v1399, 31
        %v1402 = vsub.s32 32, %v1401
        %v1403 = vshrl.u32 683565275, %v1402
        %v1404 = vshll.u32 683565275, %v1401
        %v1405 = vshrl.u32 2475754826, %v1402
        %v1406 = vor.u32 %v1404, %v1405
        %v1407 = vshll.u32 2475754826, %v1401
        %v1408 = vshrl.u32 2131351028, %v1402
        %v1409 = vor.u32 %v1407, %v1408
        %v1410 = vshll.u32 2131351028, %v1401
        %v1411 = vshrl.u32 2102212464, %v1402
        %v1412 = vor.u32 %v1410, %v1411
        %v1413 = vshll.u32 2102212464, %v1401
        %v1414 = vshrl.u32 920167782, %v1402
        %v1415 = vor.u32 %v1413, %v1414
        %v1416 = vshll.u32 920167782, %v1401
        %v1417 = vshrl.u32 1326507024, %v1402
        %v1418 = vor.u32 %v1416, %v1417
        %vm1419 = vcmp.lt.s32.totalorder %v1400, 1
        %vm1420 = vcmp.lt.s32.totalorder %v1400, 2
        %vm1421 = vcmp.lt.s32.totalorder %v1400, 3
        %vm1422 = vcmp.lt.s32.totalorder %v1400, 4
        %v1423 = vsel %vm1419, %v1403, %v1406
        %v1424 = vsel %vm1422, %v1412, 2102212464
        %v1425 = vsel %vm1421, %v1409, %v1424
        %v1426 = vsel %vm1420, %v1423, %v1425
        %v1427 = vsel %vm1419, %v1406, %v1409
        %v1428 = vsel %vm1422, %v1415, 920167782
        %v1429 = vsel %vm1421, %v1412, %v1428
        %v1430 = vsel %vm1420, %v1427, %v1429
        %v1431 = vsel %vm1419, %v1409, %v1412
        %v1432 = vsel %vm1422, %v1418, 1326507024
        %v1433 = vsel %vm1421, %v1415, %v1432
        %v1434 = vsel %vm1420, %v1431, %v1433
        %v1435 = vshll.u32 %v1395, 8
        %v1436 = vmul.u32.u64.compose %v1435, %v1434
        %v1437 = vextract.low.u32 %v1436
        %v1438 = vextract.high.u32 %v1436
        %v1439 = vmul.u32.u64.compose %v1435, %v1430
        %v1440 = vextract.low.u32 %v1439
        %v1441 = vextract.high.u32 %v1439
        %v1442 = vmul.u32 %v1435, %v1426
        %v1443 = vadd.s32 %v1438, %v1440
        %vm1444 = vc.u32 %v1438, %v1440
        %v1445 = vadd.s32 %v1441, 1
        %v1446 = vsel %vm1444, %v1445, %v1441
        %v1447 = vadd.s32 %v1442, %v1446
        %v1448 = vadd.s32 %v1447, 536870912
        %v1449 = vshrl.u32 %v1448, 30
        %v1450 = vshll.u32 %v1449, 30
        %v1451 = vsub.s32 %v1447, %v1450
        %vm1452 = vcmp.lt.s32.totalorder %v1451, 0
        %v1453 = vsub.s32 0, %v1451
        %v1454 = vsel %vm1452, %v1453, %v1451
        %v1455 = vclz %v1454
        %v1456 = vsub.s32 %v1455, 2
        %vm1457 = vcmp.gt.s32.totalorder 0, %v1456
        %v1458 = vsel %vm1457, 0, %v1456
        %v1459 = vsub.s32 32, %v1458
        %v1460 = vshll.u32 %v1451, %v1458
        %v1461 = vshrl.u32 %v1443, %v1459
        %v1462 = vor.u32 %v1460, %v1461
        %v1463 = vsub.s32 4294967266, %v1458
        %v1464 = vadd.s32 %v1463, 127
        %v1465 = vshll.u32 %v1464, 23
        %v1466 = vor.u32 4788187, %v1465
        %v1467 = vand.u32 2147483647, %v1466
        %v1469 = vcvt.s32.f32 %v1462
        %v1470 = vmul.f32 %v1469, %v1467
        %v1471 = vxor.u32 %v1470, 2147483648
        %v1472 = vsel %vm1389, %v1471, %v1470
        %v1473 = vsub.s32 4, %v1449
        %v1474 = vsel %vm1389, %v1473, %v1449
        %v1475 = vsel %vm1388, %v616, %v1472
        %v1476 = vsel %vm1388, 0, %v1474
        %v1477 = vcosq.f32.pop %v1475
        %v1478 = vsinq.f32.pop %v1475
        %vm1479 = vweird.f32 %v616
        %v1480 = vadd.s32 %v1476, 3
        %v1481 = vand.u32 %v1480, 3
        %vm1482 = vcmp.lt.s32.totalorder %v1481, 2
        %vm1483 = vcmp.eq.s32.totalorder %v1481, 0
        %v1484 = vxor.u32 %v1478, 2147483648
        %v1485 = vsel %vm1483, %v1477, %v1484
        %vm1486 = vcmp.eq.s32.totalorder %v1481, 2
        %v1487 = vxor.u32 %v1477, 2147483648
        %v1488 = vsel %vm1486, %v1487, %v1478
        %v1489 = vsel %vm1482, %v1485, %v1488
        %v1490 = vsel %vm1479, nan, %v1489
        %v1491 = vand.u32 2147483647, %v621
        %vm1492 = vcmp.le.f32.partialorder %v1491, 0.7853982
        %vm1493 = vcmp.lt.s32.totalorder %v621, 0
        %v1494 = vand.u32 %v621, 2139095040
        %v1495 = vshrl.u32 %v1494, 23
        %v1496 = vsub.s32 %v1495, 127
        %v1497 = vand.u32 2147483647, %v621
        %v1498 = vand.u32 %v1497, 8388607
        %v1499 = vor.u32 %v1498, 8388608
        %v1500 = vsub.s32 0, %v1499
        %v1501 = vadd.s32 %v1496, 1
        %vm1502 = vcmp.gt.s32.totalorder %v1501, 0
        %v1503 = vsel %vm1502, %v1501, 0
        %v1504 = vshrl.u32 %v1503, 5
        %v1505 = vand.u32 %v1503, 31
        %v1506 = vsub.s32 32, %v1505
        %v1507 = vshrl.u32 683565275, %v1506
        %v1508 = vshll.u32 683565275, %v1505
        %v1509 = vshrl.u32 2475754826, %v1506
        %v1510 = vor.u32 %v1508, %v1509
        %v1511 = vshll.u32 2475754826, %v1505
        %v1512 = vshrl.u32 2131351028, %v1506
        %v1513 = vor.u32 %v1511, %v1512
        %v1514 = vshll.u32 2131351028, %v1505
        %v1515 = vshrl.u32 2102212464, %v1506
        %v1516 = vor.u32 %v1514, %v1515
        %v1517 = vshll.u32 2102212464, %v1505
        %v1518 = vshrl.u32 920167782, %v1506
        %v1519 = vor.u32 %v1517, %v1518
        %v1520 = vshll.u32 920167782, %v1505
        %v1521 = vshrl.u32 1326507024, %v1506
        %v1522 = vor.u32 %v1520, %v1521
        %vm1523 = vcmp.lt.s32.totalorder %v1504, 1
        %vm1524 = vcmp.lt.s32.totalorder %v1504, 2
        %vm1525 = vcmp.lt.s32.totalorder %v1504, 3
        %vm1526 = vcmp.lt.s32.totalorder %v1504, 4
        %v1527 = vsel %vm1523, %v1507, %v1510
        %v1528 = vsel %vm1526, %v1516, 2102212464
        %v1529 = vsel %vm1525, %v1513, %v1528
        %v1530 = vsel %vm1524, %v1527, %v1529
        %v1531 = vsel %vm1523, %v1510, %v1513
        %v1532 = vsel %vm1526, %v1519, 920167782
        %v1533 = vsel %vm1525, %v1516, %v1532
        %v1534 = vsel %vm1524, %v1531, %v1533
        %v1535 = vsel %vm1523, %v1513, %v1516
        %v1536 = vsel %vm1526, %v1522, 1326507024
        %v1537 = vsel %vm1525, %v1519, %v1536
        %v1538 = vsel %vm1524, %v1535, %v1537
        %v1539 = vshll.u32 %v1499, 8
        %v1540 = vmul.u32.u64.compose %v1539, %v1538
        %v1541 = vextract.low.u32 %v1540
        %v1542 = vextract.high.u32 %v1540
        %v1543 = vmul.u32.u64.compose %v1539, %v1534
        %v1544 = vextract.low.u32 %v1543
        %v1545 = vextract.high.u32 %v1543
        %v1546 = vmul.u32 %v1539, %v1530
        %v1547 = vadd.s32 %v1542, %v1544
        %vm1548 = vc.u32 %v1542, %v1544
        %v1549 = vadd.s32 %v1545, 1
        %v1550 = vsel %vm1548, %v1549, %v1545
        %v1551 = vadd.s32 %v1546, %v1550
        %v1552 = vadd.s32 %v1551, 536870912
        %v1553 = vshrl.u32 %v1552, 30
        %v1554 = vshll.u32 %v1553, 30
        %v1555 = vsub.s32 %v1551, %v1554
        %vm1556 = vcmp.lt.s32.totalorder %v1555, 0
        %v1557 = vsub.s32 0, %v1555
        %v1558 = vsel %vm1556, %v1557, %v1555
        %v1559 = vclz %v1558
        %v1560 = vsub.s32 %v1559, 2
        %vm1561 = vcmp.gt.s32.totalorder 0, %v1560
        %v1562 = vsel %vm1561, 0, %v1560
        %v1563 = vsub.s32 32, %v1562
        %v1564 = vshll.u32 %v1555, %v1562
        %v1565 = vshrl.u32 %v1547, %v1563
        %v1566 = vor.u32 %v1564, %v1565
        %v1567 = vsub.s32 4294967266, %v1562
        %v1568 = vadd.s32 %v1567, 127
        %v1569 = vshll.u32 %v1568, 23
        %v1570 = vor.u32 4788187, %v1569
        %v1571 = vand.u32 2147483647, %v1570
        %v1573 = vcvt.s32.f32 %v1566
        %v1574 = vmul.f32 %v1573, %v1571
        %v1575 = vxor.u32 %v1574, 2147483648
        %v1576 = vsel %vm1493, %v1575, %v1574
        %v1577 = vsub.s32 4, %v1553
        %v1578 = vsel %vm1493, %v1577, %v1553
        %v1579 = vsel %vm1492, %v621, %v1576
        %v1580 = vsel %vm1492, 0, %v1578
        %v1581 = vcosq.f32.pop %v1579
        %v1582 = vsinq.f32.pop %v1579
        %vm1583 = vweird.f32 %v621
        %v1584 = vadd.s32 %v1580, 3
        %v1585 = vand.u32 %v1584, 3
        %vm1586 = vcmp.lt.s32.totalorder %v1585, 2
        %vm1587 = vcmp.eq.s32.totalorder %v1585, 0
        %v1588 = vxor.u32 %v1582, 2147483648
        %v1589 = vsel %vm1587, %v1581, %v1588
        %vm1590 = vcmp.eq.s32.totalorder %v1585, 2
        %v1591 = vxor.u32 %v1581, 2147483648
        %v1592 = vsel %vm1590, %v1591, %v1582
        %v1593 = vsel %vm1586, %v1589, %v1592
        %v1594 = vsel %vm1583, nan, %v1593
        %v1595 = vand.u32 2147483647, %v626
        %vm1596 = vcmp.le.f32.partialorder %v1595, 0.7853982
        %vm1597 = vcmp.lt.s32.totalorder %v626, 0
        %v1598 = vand.u32 %v626, 2139095040
        %v1599 = vshrl.u32 %v1598, 23
        %v1600 = vsub.s32 %v1599, 127
        %v1601 = vand.u32 2147483647, %v626
        %v1602 = vand.u32 %v1601, 8388607
        %v1603 = vor.u32 %v1602, 8388608
        %v1604 = vsub.s32 0, %v1603
        %v1605 = vadd.s32 %v1600, 1
        %vm1606 = vcmp.gt.s32.totalorder %v1605, 0
        %v1607 = vsel %vm1606, %v1605, 0
        %v1608 = vshrl.u32 %v1607, 5
        %v1609 = vand.u32 %v1607, 31
        %v1610 = vsub.s32 32, %v1609
        %v1611 = vshrl.u32 683565275, %v1610
        %v1612 = vshll.u32 683565275, %v1609
        %v1613 = vshrl.u32 2475754826, %v1610
        %v1614 = vor.u32 %v1612, %v1613
        %v1615 = vshll.u32 2475754826, %v1609
        %v1616 = vshrl.u32 2131351028, %v1610
        %v1617 = vor.u32 %v1615, %v1616
        %v1618 = vshll.u32 2131351028, %v1609
        %v1619 = vshrl.u32 2102212464, %v1610
        %v1620 = vor.u32 %v1618, %v1619
        %v1621 = vshll.u32 2102212464, %v1609
        %v1622 = vshrl.u32 920167782, %v1610
        %v1623 = vor.u32 %v1621, %v1622
        %v1624 = vshll.u32 920167782, %v1609
        %v1625 = vshrl.u32 1326507024, %v1610
        %v1626 = vor.u32 %v1624, %v1625
        %vm1627 = vcmp.lt.s32.totalorder %v1608, 1
        %vm1628 = vcmp.lt.s32.totalorder %v1608, 2
        %vm1629 = vcmp.lt.s32.totalorder %v1608, 3
        %vm1630 = vcmp.lt.s32.totalorder %v1608, 4
        %v1631 = vsel %vm1627, %v1611, %v1614
        %v1632 = vsel %vm1630, %v1620, 2102212464
        %v1633 = vsel %vm1629, %v1617, %v1632
        %v1634 = vsel %vm1628, %v1631, %v1633
        %v1635 = vsel %vm1627, %v1614, %v1617
        %v1636 = vsel %vm1630, %v1623, 920167782
        %v1637 = vsel %vm1629, %v1620, %v1636
        %v1638 = vsel %vm1628, %v1635, %v1637
        %v1639 = vsel %vm1627, %v1617, %v1620
        %v1640 = vsel %vm1630, %v1626, 1326507024
        %v1641 = vsel %vm1629, %v1623, %v1640
        %v1642 = vsel %vm1628, %v1639, %v1641
        %v1643 = vshll.u32 %v1603, 8
        %v1644 = vmul.u32.u64.compose %v1643, %v1642
        %v1645 = vextract.low.u32 %v1644
        %v1646 = vextract.high.u32 %v1644
        %v1647 = vmul.u32.u64.compose %v1643, %v1638
        %v1648 = vextract.low.u32 %v1647
        %v1649 = vextract.high.u32 %v1647
        %v1650 = vmul.u32 %v1643, %v1634
        %v1651 = vadd.s32 %v1646, %v1648
        %vm1652 = vc.u32 %v1646, %v1648
        %v1653 = vadd.s32 %v1649, 1
        %v1654 = vsel %vm1652, %v1653, %v1649
        %v1655 = vadd.s32 %v1650, %v1654
        %v1656 = vadd.s32 %v1655, 536870912
        %v1657 = vshrl.u32 %v1656, 30
        %v1658 = vshll.u32 %v1657, 30
        %v1659 = vsub.s32 %v1655, %v1658
        %vm1660 = vcmp.lt.s32.totalorder %v1659, 0
        %v1661 = vsub.s32 0, %v1659
        %v1662 = vsel %vm1660, %v1661, %v1659
        %v1663 = vclz %v1662
        %v1664 = vsub.s32 %v1663, 2
        %vm1665 = vcmp.gt.s32.totalorder 0, %v1664
        %v1666 = vsel %vm1665, 0, %v1664
        %v1667 = vsub.s32 32, %v1666
        %v1668 = vshll.u32 %v1659, %v1666
        %v1669 = vshrl.u32 %v1651, %v1667
        %v1670 = vor.u32 %v1668, %v1669
        %v1671 = vsub.s32 4294967266, %v1666
        %v1672 = vadd.s32 %v1671, 127
        %v1673 = vshll.u32 %v1672, 23
        %v1674 = vor.u32 4788187, %v1673
        %v1675 = vand.u32 2147483647, %v1674
        %v1677 = vcvt.s32.f32 %v1670
        %v1678 = vmul.f32 %v1677, %v1675
        %v1679 = vxor.u32 %v1678, 2147483648
        %v1680 = vsel %vm1597, %v1679, %v1678
        %v1681 = vsub.s32 4, %v1657
        %v1682 = vsel %vm1597, %v1681, %v1657
        %v1683 = vsel %vm1596, %v626, %v1680
        %v1684 = vsel %vm1596, 0, %v1682
        %v1685 = vcosq.f32.pop %v1683
        %v1686 = vsinq.f32.pop %v1683
        %vm1687 = vweird.f32 %v626
        %v1688 = vadd.s32 %v1684, 3
        %v1689 = vand.u32 %v1688, 3
        %vm1690 = vcmp.lt.s32.totalorder %v1689, 2
        %vm1691 = vcmp.eq.s32.totalorder %v1689, 0
        %v1692 = vxor.u32 %v1686, 2147483648
        %v1693 = vsel %vm1691, %v1685, %v1692
        %vm1694 = vcmp.eq.s32.totalorder %v1689, 2
        %v1695 = vxor.u32 %v1685, 2147483648
        %v1696 = vsel %vm1694, %v1695, %v1686
        %v1697 = vsel %vm1690, %v1693, %v1696
        %v1698 = vsel %vm1687, nan, %v1697
        %v1699 = vand.u32 2147483647, %v631
        %vm1700 = vcmp.le.f32.partialorder %v1699, 0.7853982
        %vm1701 = vcmp.lt.s32.totalorder %v631, 0
        %v1702 = vand.u32 %v631, 2139095040
        %v1703 = vshrl.u32 %v1702, 23
        %v1704 = vsub.s32 %v1703, 127
        %v1705 = vand.u32 2147483647, %v631
        %v1706 = vand.u32 %v1705, 8388607
        %v1707 = vor.u32 %v1706, 8388608
        %v1708 = vsub.s32 0, %v1707
        %v1709 = vadd.s32 %v1704, 1
        %vm1710 = vcmp.gt.s32.totalorder %v1709, 0
        %v1711 = vsel %vm1710, %v1709, 0
        %v1712 = vshrl.u32 %v1711, 5
        %v1713 = vand.u32 %v1711, 31
        %v1714 = vsub.s32 32, %v1713
        %v1715 = vshrl.u32 683565275, %v1714
        %v1716 = vshll.u32 683565275, %v1713
        %v1717 = vshrl.u32 2475754826, %v1714
        %v1718 = vor.u32 %v1716, %v1717
        %v1719 = vshll.u32 2475754826, %v1713
        %v1720 = vshrl.u32 2131351028, %v1714
        %v1721 = vor.u32 %v1719, %v1720
        %v1722 = vshll.u32 2131351028, %v1713
        %v1723 = vshrl.u32 2102212464, %v1714
        %v1724 = vor.u32 %v1722, %v1723
        %v1725 = vshll.u32 2102212464, %v1713
        %v1726 = vshrl.u32 920167782, %v1714
        %v1727 = vor.u32 %v1725, %v1726
        %v1728 = vshll.u32 920167782, %v1713
        %v1729 = vshrl.u32 1326507024, %v1714
        %v1730 = vor.u32 %v1728, %v1729
        %vm1731 = vcmp.lt.s32.totalorder %v1712, 1
        %vm1732 = vcmp.lt.s32.totalorder %v1712, 2
        %vm1733 = vcmp.lt.s32.totalorder %v1712, 3
        %vm1734 = vcmp.lt.s32.totalorder %v1712, 4
        %v1735 = vsel %vm1731, %v1715, %v1718
        %v1736 = vsel %vm1734, %v1724, 2102212464
        %v1737 = vsel %vm1733, %v1721, %v1736
        %v1738 = vsel %vm1732, %v1735, %v1737
        %v1739 = vsel %vm1731, %v1718, %v1721
        %v1740 = vsel %vm1734, %v1727, 920167782
        %v1741 = vsel %vm1733, %v1724, %v1740
        %v1742 = vsel %vm1732, %v1739, %v1741
        %v1743 = vsel %vm1731, %v1721, %v1724
        %v1744 = vsel %vm1734, %v1730, 1326507024
        %v1745 = vsel %vm1733, %v1727, %v1744
        %v1746 = vsel %vm1732, %v1743, %v1745
        %v1747 = vshll.u32 %v1707, 8
        %v1748 = vmul.u32.u64.compose %v1747, %v1746
        %v1749 = vextract.low.u32 %v1748
        %v1750 = vextract.high.u32 %v1748
        %v1751 = vmul.u32.u64.compose %v1747, %v1742
        %v1752 = vextract.low.u32 %v1751
        %v1753 = vextract.high.u32 %v1751
        %v1754 = vmul.u32 %v1747, %v1738
        %v1755 = vadd.s32 %v1750, %v1752
        %vm1756 = vc.u32 %v1750, %v1752
        %v1757 = vadd.s32 %v1753, 1
        %v1758 = vsel %vm1756, %v1757, %v1753
        %v1759 = vadd.s32 %v1754, %v1758
        %v1760 = vadd.s32 %v1759, 536870912
        %v1761 = vshrl.u32 %v1760, 30
        %v1762 = vshll.u32 %v1761, 30
        %v1763 = vsub.s32 %v1759, %v1762
        %vm1764 = vcmp.lt.s32.totalorder %v1763, 0
        %v1765 = vsub.s32 0, %v1763
        %v1766 = vsel %vm1764, %v1765, %v1763
        %v1767 = vclz %v1766
        %v1768 = vsub.s32 %v1767, 2
        %vm1769 = vcmp.gt.s32.totalorder 0, %v1768
        %v1770 = vsel %vm1769, 0, %v1768
        %v1771 = vsub.s32 32, %v1770
        %v1772 = vshll.u32 %v1763, %v1770
        %v1773 = vshrl.u32 %v1755, %v1771
        %v1774 = vor.u32 %v1772, %v1773
        %v1775 = vsub.s32 4294967266, %v1770
        %v1776 = vadd.s32 %v1775, 127
        %v1777 = vshll.u32 %v1776, 23
        %v1778 = vor.u32 4788187, %v1777
        %v1779 = vand.u32 2147483647, %v1778
        %v1781 = vcvt.s32.f32 %v1774
        %v1782 = vmul.f32 %v1781, %v1779
        %v1783 = vxor.u32 %v1782, 2147483648
        %v1784 = vsel %vm1701, %v1783, %v1782
        %v1785 = vsub.s32 4, %v1761
        %v1786 = vsel %vm1701, %v1785, %v1761
        %v1787 = vsel %vm1700, %v631, %v1784
        %v1788 = vsel %vm1700, 0, %v1786
        %v1789 = vcosq.f32.pop %v1787
        %v1790 = vsinq.f32.pop %v1787
        %vm1791 = vweird.f32 %v631
        %v1792 = vadd.s32 %v1788, 3
        %v1793 = vand.u32 %v1792, 3
        %vm1794 = vcmp.lt.s32.totalorder %v1793, 2
        %vm1795 = vcmp.eq.s32.totalorder %v1793, 0
        %v1796 = vxor.u32 %v1790, 2147483648
        %v1797 = vsel %vm1795, %v1789, %v1796
        %vm1798 = vcmp.eq.s32.totalorder %v1793, 2
        %v1799 = vxor.u32 %v1789, 2147483648
        %v1800 = vsel %vm1798, %v1799, %v1790
        %v1801 = vsel %vm1794, %v1797, %v1800
        %v1802 = vsel %vm1791, nan, %v1801
        %v1803 = vand.u32 2147483647, %v636
        %vm1804 = vcmp.le.f32.partialorder %v1803, 0.7853982
        %vm1805 = vcmp.lt.s32.totalorder %v636, 0
        %v1806 = vand.u32 %v636, 2139095040
        %v1807 = vshrl.u32 %v1806, 23
        %v1808 = vsub.s32 %v1807, 127
        %v1809 = vand.u32 2147483647, %v636
        %v1810 = vand.u32 %v1809, 8388607
        %v1811 = vor.u32 %v1810, 8388608
        %v1812 = vsub.s32 0, %v1811
        %v1813 = vadd.s32 %v1808, 1
        %vm1814 = vcmp.gt.s32.totalorder %v1813, 0
        %v1815 = vsel %vm1814, %v1813, 0
        %v1816 = vshrl.u32 %v1815, 5
        %v1817 = vand.u32 %v1815, 31
        %v1818 = vsub.s32 32, %v1817
        %v1819 = vshrl.u32 683565275, %v1818
        %v1820 = vshll.u32 683565275, %v1817
        %v1821 = vshrl.u32 2475754826, %v1818
        %v1822 = vor.u32 %v1820, %v1821
        %v1823 = vshll.u32 2475754826, %v1817
        %v1824 = vshrl.u32 2131351028, %v1818
        %v1825 = vor.u32 %v1823, %v1824
        %v1826 = vshll.u32 2131351028, %v1817
        %v1827 = vshrl.u32 2102212464, %v1818
        %v1828 = vor.u32 %v1826, %v1827
        %v1829 = vshll.u32 2102212464, %v1817
        %v1830 = vshrl.u32 920167782, %v1818
        %v1831 = vor.u32 %v1829, %v1830
        %v1832 = vshll.u32 920167782, %v1817
        %v1833 = vshrl.u32 1326507024, %v1818
        %v1834 = vor.u32 %v1832, %v1833
        %vm1835 = vcmp.lt.s32.totalorder %v1816, 1
        %vm1836 = vcmp.lt.s32.totalorder %v1816, 2
        %vm1837 = vcmp.lt.s32.totalorder %v1816, 3
        %vm1838 = vcmp.lt.s32.totalorder %v1816, 4
        %v1839 = vsel %vm1835, %v1819, %v1822
        %v1840 = vsel %vm1838, %v1828, 2102212464
        %v1841 = vsel %vm1837, %v1825, %v1840
        %v1842 = vsel %vm1836, %v1839, %v1841
        %v1843 = vsel %vm1835, %v1822, %v1825
        %v1844 = vsel %vm1838, %v1831, 920167782
        %v1845 = vsel %vm1837, %v1828, %v1844
        %v1846 = vsel %vm1836, %v1843, %v1845
        %v1847 = vsel %vm1835, %v1825, %v1828
        %v1848 = vsel %vm1838, %v1834, 1326507024
        %v1849 = vsel %vm1837, %v1831, %v1848
        %v1850 = vsel %vm1836, %v1847, %v1849
        %v1851 = vshll.u32 %v1811, 8
        %v1852 = vmul.u32.u64.compose %v1851, %v1850
        %v1853 = vextract.low.u32 %v1852
        %v1854 = vextract.high.u32 %v1852
        %v1855 = vmul.u32.u64.compose %v1851, %v1846
        %v1856 = vextract.low.u32 %v1855
        %v1857 = vextract.high.u32 %v1855
        %v1858 = vmul.u32 %v1851, %v1842
        %v1859 = vadd.s32 %v1854, %v1856
        %vm1860 = vc.u32 %v1854, %v1856
        %v1861 = vadd.s32 %v1857, 1
        %v1862 = vsel %vm1860, %v1861, %v1857
        %v1863 = vadd.s32 %v1858, %v1862
        %v1864 = vadd.s32 %v1863, 536870912
        %v1865 = vshrl.u32 %v1864, 30
        %v1866 = vshll.u32 %v1865, 30
        %v1867 = vsub.s32 %v1863, %v1866
        %vm1868 = vcmp.lt.s32.totalorder %v1867, 0
        %v1869 = vsub.s32 0, %v1867
        %v1870 = vsel %vm1868, %v1869, %v1867
        %v1871 = vclz %v1870
        %v1872 = vsub.s32 %v1871, 2
        %vm1873 = vcmp.gt.s32.totalorder 0, %v1872
        %v1874 = vsel %vm1873, 0, %v1872
        %v1875 = vsub.s32 32, %v1874
        %v1876 = vshll.u32 %v1867, %v1874
        %v1877 = vshrl.u32 %v1859, %v1875
        %v1878 = vor.u32 %v1876, %v1877
        %v1879 = vsub.s32 4294967266, %v1874
        %v1880 = vadd.s32 %v1879, 127
        %v1881 = vshll.u32 %v1880, 23
        %v1882 = vor.u32 4788187, %v1881
        %v1883 = vand.u32 2147483647, %v1882
        %v1885 = vcvt.s32.f32 %v1878
        %v1886 = vmul.f32 %v1885, %v1883
        %v1887 = vxor.u32 %v1886, 2147483648
        %v1888 = vsel %vm1805, %v1887, %v1886
        %v1889 = vsub.s32 4, %v1865
        %v1890 = vsel %vm1805, %v1889, %v1865
        %v1891 = vsel %vm1804, %v636, %v1888
        %v1892 = vsel %vm1804, 0, %v1890
        %v1893 = vcosq.f32.pop %v1891
        %v1894 = vsinq.f32.pop %v1891
        %vm1895 = vweird.f32 %v636
        %v1896 = vadd.s32 %v1892, 3
        %v1897 = vand.u32 %v1896, 3
        %vm1898 = vcmp.lt.s32.totalorder %v1897, 2
        %vm1899 = vcmp.eq.s32.totalorder %v1897, 0
        %v1900 = vxor.u32 %v1894, 2147483648
        %v1901 = vsel %vm1899, %v1893, %v1900
        %vm1902 = vcmp.eq.s32.totalorder %v1897, 2
        %v1903 = vxor.u32 %v1893, 2147483648
        %v1904 = vsel %vm1902, %v1903, %v1894
        %v1905 = vsel %vm1898, %v1901, %v1904
        %v1906 = vsel %vm1895, nan, %v1905
        %v1907 = vand.u32 2147483647, %v641
        %vm1908 = vcmp.le.f32.partialorder %v1907, 0.7853982
        %vm1909 = vcmp.lt.s32.totalorder %v641, 0
        %v1910 = vand.u32 %v641, 2139095040
        %v1911 = vshrl.u32 %v1910, 23
        %v1912 = vsub.s32 %v1911, 127
        %v1913 = vand.u32 2147483647, %v641
        %v1914 = vand.u32 %v1913, 8388607
        %v1915 = vor.u32 %v1914, 8388608
        %v1916 = vsub.s32 0, %v1915
        %v1917 = vadd.s32 %v1912, 1
        %vm1918 = vcmp.gt.s32.totalorder %v1917, 0
        %v1919 = vsel %vm1918, %v1917, 0
        %v1920 = vshrl.u32 %v1919, 5
        %v1921 = vand.u32 %v1919, 31
        %v1922 = vsub.s32 32, %v1921
        %v1923 = vshrl.u32 683565275, %v1922
        %v1924 = vshll.u32 683565275, %v1921
        %v1925 = vshrl.u32 2475754826, %v1922
        %v1926 = vor.u32 %v1924, %v1925
        %v1927 = vshll.u32 2475754826, %v1921
        %v1928 = vshrl.u32 2131351028, %v1922
        %v1929 = vor.u32 %v1927, %v1928
        %v1930 = vshll.u32 2131351028, %v1921
        %v1931 = vshrl.u32 2102212464, %v1922
        %v1932 = vor.u32 %v1930, %v1931
        %v1933 = vshll.u32 2102212464, %v1921
        %v1934 = vshrl.u32 920167782, %v1922
        %v1935 = vor.u32 %v1933, %v1934
        %v1936 = vshll.u32 920167782, %v1921
        %v1937 = vshrl.u32 1326507024, %v1922
        %v1938 = vor.u32 %v1936, %v1937
        %vm1939 = vcmp.lt.s32.totalorder %v1920, 1
        %vm1940 = vcmp.lt.s32.totalorder %v1920, 2
        %vm1941 = vcmp.lt.s32.totalorder %v1920, 3
        %vm1942 = vcmp.lt.s32.totalorder %v1920, 4
        %v1943 = vsel %vm1939, %v1923, %v1926
        %v1944 = vsel %vm1942, %v1932, 2102212464
        %v1945 = vsel %vm1941, %v1929, %v1944
        %v1946 = vsel %vm1940, %v1943, %v1945
        %v1947 = vsel %vm1939, %v1926, %v1929
        %v1948 = vsel %vm1942, %v1935, 920167782
        %v1949 = vsel %vm1941, %v1932, %v1948
        %v1950 = vsel %vm1940, %v1947, %v1949
        %v1951 = vsel %vm1939, %v1929, %v1932
        %v1952 = vsel %vm1942, %v1938, 1326507024
        %v1953 = vsel %vm1941, %v1935, %v1952
        %v1954 = vsel %vm1940, %v1951, %v1953
        %v1955 = vshll.u32 %v1915, 8
        %v1956 = vmul.u32.u64.compose %v1955, %v1954
        %v1957 = vextract.low.u32 %v1956
        %v1958 = vextract.high.u32 %v1956
        %v1959 = vmul.u32.u64.compose %v1955, %v1950
        %v1960 = vextract.low.u32 %v1959
        %v1961 = vextract.high.u32 %v1959
        %v1962 = vmul.u32 %v1955, %v1946
        %v1963 = vadd.s32 %v1958, %v1960
        %vm1964 = vc.u32 %v1958, %v1960
        %v1965 = vadd.s32 %v1961, 1
        %v1966 = vsel %vm1964, %v1965, %v1961
        %v1967 = vadd.s32 %v1962, %v1966
        %v1968 = vadd.s32 %v1967, 536870912
        %v1969 = vshrl.u32 %v1968, 30
        %v1970 = vshll.u32 %v1969, 30
        %v1971 = vsub.s32 %v1967, %v1970
        %vm1972 = vcmp.lt.s32.totalorder %v1971, 0
        %v1973 = vsub.s32 0, %v1971
        %v1974 = vsel %vm1972, %v1973, %v1971
        %v1975 = vclz %v1974
        %v1976 = vsub.s32 %v1975, 2
        %vm1977 = vcmp.gt.s32.totalorder 0, %v1976
        %v1978 = vsel %vm1977, 0, %v1976
        %v1979 = vsub.s32 32, %v1978
        %v1980 = vshll.u32 %v1971, %v1978
        %v1981 = vshrl.u32 %v1963, %v1979
        %v1982 = vor.u32 %v1980, %v1981
        %v1983 = vsub.s32 4294967266, %v1978
        %v1984 = vadd.s32 %v1983, 127
        %v1985 = vshll.u32 %v1984, 23
        %v1986 = vor.u32 4788187, %v1985
        %v1987 = vand.u32 2147483647, %v1986
        %v1989 = vcvt.s32.f32 %v1982
        %v1990 = vmul.f32 %v1989, %v1987
        %v1991 = vxor.u32 %v1990, 2147483648
        %v1992 = vsel %vm1909, %v1991, %v1990
        %v1993 = vsub.s32 4, %v1969
        %v1994 = vsel %vm1909, %v1993, %v1969
        %v1995 = vsel %vm1908, %v641, %v1992
        %v1996 = vsel %vm1908, 0, %v1994
        %v1997 = vcosq.f32.pop %v1995
        %v1998 = vsinq.f32.pop %v1995
        %vm1999 = vweird.f32 %v641
        %v2000 = vadd.s32 %v1996, 3
        %v2001 = vand.u32 %v2000, 3
        %vm2002 = vcmp.lt.s32.totalorder %v2001, 2
        %vm2003 = vcmp.eq.s32.totalorder %v2001, 0
        %v2004 = vxor.u32 %v1998, 2147483648
        %v2005 = vsel %vm2003, %v1997, %v2004
        %vm2006 = vcmp.eq.s32.totalorder %v2001, 2
        %v2007 = vxor.u32 %v1997, 2147483648
        %v2008 = vsel %vm2006, %v2007, %v1998
        %v2009 = vsel %vm2002, %v2005, %v2008
        %v2010 = vsel %vm1999, nan, %v2009
        %v2011 = vand.u32 2147483647, %v646
        %vm2012 = vcmp.le.f32.partialorder %v2011, 0.7853982
        %vm2013 = vcmp.lt.s32.totalorder %v646, 0
        %v2014 = vand.u32 %v646, 2139095040
        %v2015 = vshrl.u32 %v2014, 23
        %v2016 = vsub.s32 %v2015, 127
        %v2017 = vand.u32 2147483647, %v646
        %v2018 = vand.u32 %v2017, 8388607
        %v2019 = vor.u32 %v2018, 8388608
        %v2020 = vsub.s32 0, %v2019
        %v2021 = vadd.s32 %v2016, 1
        %vm2022 = vcmp.gt.s32.totalorder %v2021, 0
        %v2023 = vsel %vm2022, %v2021, 0
        %v2024 = vshrl.u32 %v2023, 5
        %v2025 = vand.u32 %v2023, 31
        %v2026 = vsub.s32 32, %v2025
        %v2027 = vshrl.u32 683565275, %v2026
        %v2028 = vshll.u32 683565275, %v2025
        %v2029 = vshrl.u32 2475754826, %v2026
        %v2030 = vor.u32 %v2028, %v2029
        %v2031 = vshll.u32 2475754826, %v2025
        %v2032 = vshrl.u32 2131351028, %v2026
        %v2033 = vor.u32 %v2031, %v2032
        %v2034 = vshll.u32 2131351028, %v2025
        %v2035 = vshrl.u32 2102212464, %v2026
        %v2036 = vor.u32 %v2034, %v2035
        %v2037 = vshll.u32 2102212464, %v2025
        %v2038 = vshrl.u32 920167782, %v2026
        %v2039 = vor.u32 %v2037, %v2038
        %v2040 = vshll.u32 920167782, %v2025
        %v2041 = vshrl.u32 1326507024, %v2026
        %v2042 = vor.u32 %v2040, %v2041
        %vm2043 = vcmp.lt.s32.totalorder %v2024, 1
        %vm2044 = vcmp.lt.s32.totalorder %v2024, 2
        %vm2045 = vcmp.lt.s32.totalorder %v2024, 3
        %vm2046 = vcmp.lt.s32.totalorder %v2024, 4
        %v2047 = vsel %vm2043, %v2027, %v2030
        %v2048 = vsel %vm2046, %v2036, 2102212464
        %v2049 = vsel %vm2045, %v2033, %v2048
        %v2050 = vsel %vm2044, %v2047, %v2049
        %v2051 = vsel %vm2043, %v2030, %v2033
        %v2052 = vsel %vm2046, %v2039, 920167782
        %v2053 = vsel %vm2045, %v2036, %v2052
        %v2054 = vsel %vm2044, %v2051, %v2053
        %v2055 = vsel %vm2043, %v2033, %v2036
        %v2056 = vsel %vm2046, %v2042, 1326507024
        %v2057 = vsel %vm2045, %v2039, %v2056
        %v2058 = vsel %vm2044, %v2055, %v2057
        %v2059 = vshll.u32 %v2019, 8
        %v2060 = vmul.u32.u64.compose %v2059, %v2058
        %v2061 = vextract.low.u32 %v2060
        %v2062 = vextract.high.u32 %v2060
        %v2063 = vmul.u32.u64.compose %v2059, %v2054
        %v2064 = vextract.low.u32 %v2063
        %v2065 = vextract.high.u32 %v2063
        %v2066 = vmul.u32 %v2059, %v2050
        %v2067 = vadd.s32 %v2062, %v2064
        %vm2068 = vc.u32 %v2062, %v2064
        %v2069 = vadd.s32 %v2065, 1
        %v2070 = vsel %vm2068, %v2069, %v2065
        %v2071 = vadd.s32 %v2066, %v2070
        %v2072 = vadd.s32 %v2071, 536870912
        %v2073 = vshrl.u32 %v2072, 30
        %v2074 = vshll.u32 %v2073, 30
        %v2075 = vsub.s32 %v2071, %v2074
        %vm2076 = vcmp.lt.s32.totalorder %v2075, 0
        %v2077 = vsub.s32 0, %v2075
        %v2078 = vsel %vm2076, %v2077, %v2075
        %v2079 = vclz %v2078
        %v2080 = vsub.s32 %v2079, 2
        %vm2081 = vcmp.gt.s32.totalorder 0, %v2080
        %v2082 = vsel %vm2081, 0, %v2080
        %v2083 = vsub.s32 32, %v2082
        %v2084 = vshll.u32 %v2075, %v2082
        %v2085 = vshrl.u32 %v2067, %v2083
        %v2086 = vor.u32 %v2084, %v2085
        %v2087 = vsub.s32 4294967266, %v2082
        %v2088 = vadd.s32 %v2087, 127
        %v2089 = vshll.u32 %v2088, 23
        %v2090 = vor.u32 4788187, %v2089
        %v2091 = vand.u32 2147483647, %v2090
        %v2093 = vcvt.s32.f32 %v2086
        %v2094 = vmul.f32 %v2093, %v2091
        %v2095 = vxor.u32 %v2094, 2147483648
        %v2096 = vsel %vm2013, %v2095, %v2094
        %v2097 = vsub.s32 4, %v2073
        %v2098 = vsel %vm2013, %v2097, %v2073
        %v2099 = vsel %vm2012, %v646, %v2096
        %v2100 = vsel %vm2012, 0, %v2098
        %v2101 = vcosq.f32.pop %v2099
        %v2102 = vsinq.f32.pop %v2099
        %vm2103 = vweird.f32 %v646
        %v2104 = vadd.s32 %v2100, 3
        %v2105 = vand.u32 %v2104, 3
        %vm2106 = vcmp.lt.s32.totalorder %v2105, 2
        %vm2107 = vcmp.eq.s32.totalorder %v2105, 0
        %v2108 = vxor.u32 %v2102, 2147483648
        %v2109 = vsel %vm2107, %v2101, %v2108
        %vm2110 = vcmp.eq.s32.totalorder %v2105, 2
        %v2111 = vxor.u32 %v2101, 2147483648
        %v2112 = vsel %vm2110, %v2111, %v2102
        %v2113 = vsel %vm2106, %v2109, %v2112
        %v2114 = vsel %vm2103, nan, %v2113
        %v2115 = vand.u32 2147483647, %v651
        %vm2116 = vcmp.le.f32.partialorder %v2115, 0.7853982
        %vm2117 = vcmp.lt.s32.totalorder %v651, 0
        %v2118 = vand.u32 %v651, 2139095040
        %v2119 = vshrl.u32 %v2118, 23
        %v2120 = vsub.s32 %v2119, 127
        %v2121 = vand.u32 2147483647, %v651
        %v2122 = vand.u32 %v2121, 8388607
        %v2123 = vor.u32 %v2122, 8388608
        %v2124 = vsub.s32 0, %v2123
        %v2125 = vadd.s32 %v2120, 1
        %vm2126 = vcmp.gt.s32.totalorder %v2125, 0
        %v2127 = vsel %vm2126, %v2125, 0
        %v2128 = vshrl.u32 %v2127, 5
        %v2129 = vand.u32 %v2127, 31
        %v2130 = vsub.s32 32, %v2129
        %v2131 = vshrl.u32 683565275, %v2130
        %v2132 = vshll.u32 683565275, %v2129
        %v2133 = vshrl.u32 2475754826, %v2130
        %v2134 = vor.u32 %v2132, %v2133
        %v2135 = vshll.u32 2475754826, %v2129
        %v2136 = vshrl.u32 2131351028, %v2130
        %v2137 = vor.u32 %v2135, %v2136
        %v2138 = vshll.u32 2131351028, %v2129
        %v2139 = vshrl.u32 2102212464, %v2130
        %v2140 = vor.u32 %v2138, %v2139
        %v2141 = vshll.u32 2102212464, %v2129
        %v2142 = vshrl.u32 920167782, %v2130
        %v2143 = vor.u32 %v2141, %v2142
        %v2144 = vshll.u32 920167782, %v2129
        %v2145 = vshrl.u32 1326507024, %v2130
        %v2146 = vor.u32 %v2144, %v2145
        %vm2147 = vcmp.lt.s32.totalorder %v2128, 1
        %vm2148 = vcmp.lt.s32.totalorder %v2128, 2
        %vm2149 = vcmp.lt.s32.totalorder %v2128, 3
        %vm2150 = vcmp.lt.s32.totalorder %v2128, 4
        %v2151 = vsel %vm2147, %v2131, %v2134
        %v2152 = vsel %vm2150, %v2140, 2102212464
        %v2153 = vsel %vm2149, %v2137, %v2152
        %v2154 = vsel %vm2148, %v2151, %v2153
        %v2155 = vsel %vm2147, %v2134, %v2137
        %v2156 = vsel %vm2150, %v2143, 920167782
        %v2157 = vsel %vm2149, %v2140, %v2156
        %v2158 = vsel %vm2148, %v2155, %v2157
        %v2159 = vsel %vm2147, %v2137, %v2140
        %v2160 = vsel %vm2150, %v2146, 1326507024
        %v2161 = vsel %vm2149, %v2143, %v2160
        %v2162 = vsel %vm2148, %v2159, %v2161
        %v2163 = vshll.u32 %v2123, 8
        %v2164 = vmul.u32.u64.compose %v2163, %v2162
        %v2165 = vextract.low.u32 %v2164
        %v2166 = vextract.high.u32 %v2164
        %v2167 = vmul.u32.u64.compose %v2163, %v2158
        %v2168 = vextract.low.u32 %v2167
        %v2169 = vextract.high.u32 %v2167
        %v2170 = vmul.u32 %v2163, %v2154
        %v2171 = vadd.s32 %v2166, %v2168
        %vm2172 = vc.u32 %v2166, %v2168
        %v2173 = vadd.s32 %v2169, 1
        %v2174 = vsel %vm2172, %v2173, %v2169
        %v2175 = vadd.s32 %v2170, %v2174
        %v2176 = vadd.s32 %v2175, 536870912
        %v2177 = vshrl.u32 %v2176, 30
        %v2178 = vshll.u32 %v2177, 30
        %v2179 = vsub.s32 %v2175, %v2178
        %vm2180 = vcmp.lt.s32.totalorder %v2179, 0
        %v2181 = vsub.s32 0, %v2179
        %v2182 = vsel %vm2180, %v2181, %v2179
        %v2183 = vclz %v2182
        %v2184 = vsub.s32 %v2183, 2
        %vm2185 = vcmp.gt.s32.totalorder 0, %v2184
        %v2186 = vsel %vm2185, 0, %v2184
        %v2187 = vsub.s32 32, %v2186
        %v2188 = vshll.u32 %v2179, %v2186
        %v2189 = vshrl.u32 %v2171, %v2187
        %v2190 = vor.u32 %v2188, %v2189
        %v2191 = vsub.s32 4294967266, %v2186
        %v2192 = vadd.s32 %v2191, 127
        %v2193 = vshll.u32 %v2192, 23
        %v2194 = vor.u32 4788187, %v2193
        %v2195 = vand.u32 2147483647, %v2194
        %v2197 = vcvt.s32.f32 %v2190
        %v2198 = vmul.f32 %v2197, %v2195
        %v2199 = vxor.u32 %v2198, 2147483648
        %v2200 = vsel %vm2117, %v2199, %v2198
        %v2201 = vsub.s32 4, %v2177
        %v2202 = vsel %vm2117, %v2201, %v2177
        %v2203 = vsel %vm2116, %v651, %v2200
        %v2204 = vsel %vm2116, 0, %v2202
        %v2205 = vcosq.f32.pop %v2203
        %v2206 = vsinq.f32.pop %v2203
        %vm2207 = vweird.f32 %v651
        %v2208 = vadd.s32 %v2204, 3
        %v2209 = vand.u32 %v2208, 3
        %vm2210 = vcmp.lt.s32.totalorder %v2209, 2
        %vm2211 = vcmp.eq.s32.totalorder %v2209, 0
        %v2212 = vxor.u32 %v2206, 2147483648
        %v2213 = vsel %vm2211, %v2205, %v2212
        %vm2214 = vcmp.eq.s32.totalorder %v2209, 2
        %v2215 = vxor.u32 %v2205, 2147483648
        %v2216 = vsel %vm2214, %v2215, %v2206
        %v2217 = vsel %vm2210, %v2213, %v2216
        %v2218 = vsel %vm2207, nan, %v2217
        %v2219 = vand.u32 2147483647, %v656
        %vm2220 = vcmp.le.f32.partialorder %v2219, 0.7853982
        %vm2221 = vcmp.lt.s32.totalorder %v656, 0
        %v2222 = vand.u32 %v656, 2139095040
        %v2223 = vshrl.u32 %v2222, 23
        %v2224 = vsub.s32 %v2223, 127
        %v2225 = vand.u32 2147483647, %v656
        %v2226 = vand.u32 %v2225, 8388607
        %v2227 = vor.u32 %v2226, 8388608
        %v2228 = vsub.s32 0, %v2227
        %v2229 = vadd.s32 %v2224, 1
        %vm2230 = vcmp.gt.s32.totalorder %v2229, 0
        %v2231 = vsel %vm2230, %v2229, 0
        %v2232 = vshrl.u32 %v2231, 5
        %v2233 = vand.u32 %v2231, 31
        %v2234 = vsub.s32 32, %v2233
        %v2235 = vshrl.u32 683565275, %v2234
        %v2236 = vshll.u32 683565275, %v2233
        %v2237 = vshrl.u32 2475754826, %v2234
        %v2238 = vor.u32 %v2236, %v2237
        %v2239 = vshll.u32 2475754826, %v2233
        %v2240 = vshrl.u32 2131351028, %v2234
        %v2241 = vor.u32 %v2239, %v2240
        %v2242 = vshll.u32 2131351028, %v2233
        %v2243 = vshrl.u32 2102212464, %v2234
        %v2244 = vor.u32 %v2242, %v2243
        %v2245 = vshll.u32 2102212464, %v2233
        %v2246 = vshrl.u32 920167782, %v2234
        %v2247 = vor.u32 %v2245, %v2246
        %v2248 = vshll.u32 920167782, %v2233
        %v2249 = vshrl.u32 1326507024, %v2234
        %v2250 = vor.u32 %v2248, %v2249
        %vm2251 = vcmp.lt.s32.totalorder %v2232, 1
        %vm2252 = vcmp.lt.s32.totalorder %v2232, 2
        %vm2253 = vcmp.lt.s32.totalorder %v2232, 3
        %vm2254 = vcmp.lt.s32.totalorder %v2232, 4
        %v2255 = vsel %vm2251, %v2235, %v2238
        %v2256 = vsel %vm2254, %v2244, 2102212464
        %v2257 = vsel %vm2253, %v2241, %v2256
        %v2258 = vsel %vm2252, %v2255, %v2257
        %v2259 = vsel %vm2251, %v2238, %v2241
        %v2260 = vsel %vm2254, %v2247, 920167782
        %v2261 = vsel %vm2253, %v2244, %v2260
        %v2262 = vsel %vm2252, %v2259, %v2261
        %v2263 = vsel %vm2251, %v2241, %v2244
        %v2264 = vsel %vm2254, %v2250, 1326507024
        %v2265 = vsel %vm2253, %v2247, %v2264
        %v2266 = vsel %vm2252, %v2263, %v2265
        %v2267 = vshll.u32 %v2227, 8
        %v2268 = vmul.u32.u64.compose %v2267, %v2266
        %v2269 = vextract.low.u32 %v2268
        %v2270 = vextract.high.u32 %v2268
        %v2271 = vmul.u32.u64.compose %v2267, %v2262
        %v2272 = vextract.low.u32 %v2271
        %v2273 = vextract.high.u32 %v2271
        %v2274 = vmul.u32 %v2267, %v2258
        %v2275 = vadd.s32 %v2270, %v2272
        %vm2276 = vc.u32 %v2270, %v2272
        %v2277 = vadd.s32 %v2273, 1
        %v2278 = vsel %vm2276, %v2277, %v2273
        %v2279 = vadd.s32 %v2274, %v2278
        %v2280 = vadd.s32 %v2279, 536870912
        %v2281 = vshrl.u32 %v2280, 30
        %v2282 = vshll.u32 %v2281, 30
        %v2283 = vsub.s32 %v2279, %v2282
        %vm2284 = vcmp.lt.s32.totalorder %v2283, 0
        %v2285 = vsub.s32 0, %v2283
        %v2286 = vsel %vm2284, %v2285, %v2283
        %v2287 = vclz %v2286
        %v2288 = vsub.s32 %v2287, 2
        %vm2289 = vcmp.gt.s32.totalorder 0, %v2288
        %v2290 = vsel %vm2289, 0, %v2288
        %v2291 = vsub.s32 32, %v2290
        %v2292 = vshll.u32 %v2283, %v2290
        %v2293 = vshrl.u32 %v2275, %v2291
        %v2294 = vor.u32 %v2292, %v2293
        %v2295 = vsub.s32 4294967266, %v2290
        %v2296 = vadd.s32 %v2295, 127
        %v2297 = vshll.u32 %v2296, 23
        %v2298 = vor.u32 4788187, %v2297
        %v2299 = vand.u32 2147483647, %v2298
        %v2301 = vcvt.s32.f32 %v2294
        %v2302 = vmul.f32 %v2301, %v2299
        %v2303 = vxor.u32 %v2302, 2147483648
        %v2304 = vsel %vm2221, %v2303, %v2302
        %v2305 = vsub.s32 4, %v2281
        %v2306 = vsel %vm2221, %v2305, %v2281
        %v2307 = vsel %vm2220, %v656, %v2304
        %v2308 = vsel %vm2220, 0, %v2306
        %v2309 = vcosq.f32.pop %v2307
        %v2310 = vsinq.f32.pop %v2307
        %vm2311 = vweird.f32 %v656
        %v2312 = vadd.s32 %v2308, 3
        %v2313 = vand.u32 %v2312, 3
        %vm2314 = vcmp.lt.s32.totalorder %v2313, 2
        %vm2315 = vcmp.eq.s32.totalorder %v2313, 0
        %v2316 = vxor.u32 %v2310, 2147483648
        %v2317 = vsel %vm2315, %v2309, %v2316
        %vm2318 = vcmp.eq.s32.totalorder %v2313, 2
        %v2319 = vxor.u32 %v2309, 2147483648
        %v2320 = vsel %vm2318, %v2319, %v2310
        %v2321 = vsel %vm2314, %v2317, %v2320
        %v2322 = vsel %vm2311, nan, %v2321
        %v2323 = vld [vmem:[%s3] sm:$0xff]
        %v2324 = vld [vmem:[%s3 + $0x8] sm:$0xff]
        %v2325 = vld [vmem:[%s3 + $0x10] sm:$0xff]
        %v2326 = vld [vmem:[%s3 + $0x18] sm:$0xff]
        %v2327 = vld [vmem:[%s3 + $0x20] sm:$0xff]
        %v2328 = vld [vmem:[%s3 + $0x28] sm:$0xff]
        %v2329 = vld [vmem:[%s3 + $0x30] sm:$0xff]
        %v2330 = vld [vmem:[%s3 + $0x38] sm:$0xff]
        %v2331 = vld [vmem:[%s3 + $0x40] sm:$0xff]
        %v2332 = vld [vmem:[%s3 + $0x48] sm:$0xff]
        %v2333 = vld [vmem:[%s3 + $0x50] sm:$0xff]
        %v2334 = vld [vmem:[%s3 + $0x58] sm:$0xff]
        %v2335 = vld [vmem:[%s3 + $0x60] sm:$0xff]
        %v2336 = vld [vmem:[%s3 + $0x68] sm:$0xff]
        %v2337 = vld [vmem:[%s3 + $0x70] sm:$0xff]
        %v2338 = vld [vmem:[%s3 + $0x78] sm:$0xff]
        %v2339 = vld [vmem:[%s4] sm:$0x1]
        %v2341 = vlaneseq
        %v2342 = vshrl.u32 %v2341, 7
        %v2343 = vsub.s32 0, %v2342
        %v2344 = vrot.slane %v2339, %v2343
        %2346 = vmatprep.subr.mxu0 0.0
        %2347 = vmatpush1.msra.mxu0 %v2338
        %2348 = vmatprep.subr.mxu0 0.0
        %2349 = vmatpush1.msra.mxu0 %v2337
        %2350 = vmatprep.subr.mxu0 0.0
        %2351 = vmatpush1.msra.mxu0 %v2336
        %2352 = vmatprep.subr.mxu0 0.0
        %2353 = vmatpush1.msra.mxu0 %v2335
        %2354 = vmatprep.subr.mxu0 0.0
        %2355 = vmatpush1.msra.mxu0 %v2334
        %2356 = vmatprep.subr.mxu0 0.0
        %2357 = vmatpush1.msra.mxu0 %v2333
        %2358 = vmatprep.subr.mxu0 0.0
        %2359 = vmatpush1.msra.mxu0 %v2332
        %2360 = vmatprep.subr.mxu0 0.0
        %2361 = vmatpush1.msra.mxu0 %v2331
        %2362 = vmatprep.subr.mxu0 0.0
        %2363 = vmatpush1.msra.mxu0 %v2330
        %2364 = vmatprep.subr.mxu0 0.0
        %2365 = vmatpush1.msra.mxu0 %v2329
        %2366 = vmatprep.subr.mxu0 0.0
        %2367 = vmatpush1.msra.mxu0 %v2328
        %2368 = vmatprep.subr.mxu0 0.0
        %2369 = vmatpush1.msra.mxu0 %v2327
        %2370 = vmatprep.subr.mxu0 0.0
        %2371 = vmatpush1.msra.mxu0 %v2326
        %2372 = vmatprep.subr.mxu0 0.0
        %2373 = vmatpush1.msra.mxu0 %v2325
        %2374 = vmatprep.subr.mxu0 0.0
        %2375 = vmatpush1.msra.mxu0 %v2324
        %2376 = vmatprep.subr.mxu0 0.0
        %2377 = vmatpush1.msra.mxu0 %v2323
        %2378 = vmatprep.subr.mxu0 0.0
        %2379 = vmatpush2.msra.mxu0 0.0
        %2380 = vmatprep.subr.mxu0 0.0
        %2381 = vmatpush2.msra.mxu0 0.0
        %2382 = vmatprep.subr.mxu0 0.0
        %2383 = vmatpush2.msra.mxu0 0.0
        %2384 = vmatprep.subr.mxu0 0.0
        %2385 = vmatpush2.msra.mxu0 0.0
        %2386 = vmatprep.subr.mxu0 0.0
        %2387 = vmatpush2.msra.mxu0 0.0
        %2388 = vmatprep.subr.mxu0 0.0
        %2389 = vmatpush2.msra.mxu0 0.0
        %2390 = vmatprep.subr.mxu0 0.0
        %2391 = vmatpush2.msra.mxu0 0.0
        %2392 = vmatprep.subr.mxu0 0.0
        %2393 = vmatpush2.msra.mxu0 0.0
        %2394 = vmatprep.subr.mxu0 0.0
        %2395 = vmatpush2.msra.mxu0 0.0
        %2396 = vmatprep.subr.mxu0 0.0
        %2397 = vmatpush2.msra.mxu0 0.0
        %2398 = vmatprep.subr.mxu0 0.0
        %2399 = vmatpush2.msra.mxu0 0.0
        %2400 = vmatprep.subr.mxu0 0.0
        %2401 = vmatpush2.msra.mxu0 0.0
        %2402 = vmatprep.subr.mxu0 0.0
        %2403 = vmatpush2.msra.mxu0 0.0
        %2404 = vmatprep.subr.mxu0 0.0
        %2405 = vmatpush2.msra.mxu0 0.0
        %2406 = vmatprep.subr.mxu0 0.0
        %2407 = vmatpush2.msra.mxu0 0.0
        %2408 = vmatprep.subr.mxu0 0.0
        %2409 = vmatpush2.msra.mxu0 0.0
        %2410 = vmatprep.mubr.f32.mxu0 0.0
        %2411 = vmatmul.mubr.f32.gmra.mxu0 %v762
        %v2412 = vpop.f32.mrf.mxu0
        %v2413 = vadd.f32 %v2344, %v2412
        %v2414 = vpop.f32.mrf.mxu0
        %2415 = vmatprep.mubr.f32.mxu0 0.0
        %2416 = vmatmul.mubr.f32.gmra.mxu0 %v866
        %v2417 = vpop.f32.mrf.mxu0
        %v2418 = vadd.f32 %v2344, %v2417
        %v2419 = vpop.f32.mrf.mxu0
        %2420 = vmatprep.mubr.f32.mxu0 0.0
        %2421 = vmatmul.mubr.f32.gmra.mxu0 %v970
        %v2422 = vpop.f32.mrf.mxu0
        %v2423 = vadd.f32 %v2344, %v2422
        %v2424 = vpop.f32.mrf.mxu0
        %2425 = vmatprep.mubr.f32.mxu0 0.0
        %2426 = vmatmul.mubr.f32.gmra.mxu0 %v1074
        %v2427 = vpop.f32.mrf.mxu0
        %v2428 = vadd.f32 %v2344, %v2427
        %v2429 = vpop.f32.mrf.mxu0
        %2430 = vmatprep.mubr.f32.mxu0 0.0
        %2431 = vmatmul.mubr.f32.gmra.mxu0 %v1178
        %v2432 = vpop.f32.mrf.mxu0
        %v2433 = vadd.f32 %v2344, %v2432
        %v2434 = vpop.f32.mrf.mxu0
        %2435 = vmatprep.mubr.f32.mxu0 0.0
        %2436 = vmatmul.mubr.f32.gmra.mxu0 %v1282
        %v2437 = vpop.f32.mrf.mxu0
        %v2438 = vadd.f32 %v2344, %v2437
        %v2439 = vpop.f32.mrf.mxu0
        %2440 = vmatprep.mubr.f32.mxu0 0.0
        %2441 = vmatmul.mubr.f32.gmra.mxu0 %v1386
        %v2442 = vpop.f32.mrf.mxu0
        %v2443 = vadd.f32 %v2344, %v2442
        %v2444 = vpop.f32.mrf.mxu0
        %2445 = vmatprep.mubr.f32.mxu0 0.0
        %2446 = vmatmul.mubr.f32.gmra.mxu0 %v1490
        %v2447 = vpop.f32.mrf.mxu0
        %v2448 = vadd.f32 %v2344, %v2447
        %v2449 = vpop.f32.mrf.mxu0
        %2450 = vmatprep.mubr.f32.mxu0 0.0
        %2451 = vmatmul.mubr.f32.gmra.mxu0 %v1594
        %v2452 = vpop.f32.mrf.mxu0
        %v2453 = vadd.f32 %v2344, %v2452
        %v2454 = vpop.f32.mrf.mxu0
        %2455 = vmatprep.mubr.f32.mxu0 0.0
        %2456 = vmatmul.mubr.f32.gmra.mxu0 %v1698
        %v2457 = vpop.f32.mrf.mxu0
        %v2458 = vadd.f32 %v2344, %v2457
        %v2459 = vpop.f32.mrf.mxu0
        %2460 = vmatprep.mubr.f32.mxu0 0.0
        %2461 = vmatmul.mubr.f32.gmra.mxu0 %v1802
        %v2462 = vpop.f32.mrf.mxu0
        %v2463 = vadd.f32 %v2344, %v2462
        %v2464 = vpop.f32.mrf.mxu0
        %2465 = vmatprep.mubr.f32.mxu0 0.0
        %2466 = vmatmul.mubr.f32.gmra.mxu0 %v1906
        %v2467 = vpop.f32.mrf.mxu0
        %v2468 = vadd.f32 %v2344, %v2467
        %v2469 = vpop.f32.mrf.mxu0
        %2470 = vmatprep.mubr.f32.mxu0 0.0
        %2471 = vmatmul.mubr.f32.gmra.mxu0 %v2010
        %v2472 = vpop.f32.mrf.mxu0
        %v2473 = vadd.f32 %v2344, %v2472
        %v2474 = vpop.f32.mrf.mxu0
        %2475 = vmatprep.mubr.f32.mxu0 0.0
        %2476 = vmatmul.mubr.f32.gmra.mxu0 %v2114
        %v2477 = vpop.f32.mrf.mxu0
        %v2478 = vadd.f32 %v2344, %v2477
        %v2479 = vpop.f32.mrf.mxu0
        %2480 = vmatprep.mubr.f32.mxu0 0.0
        %2481 = vmatmul.mubr.f32.gmra.mxu0 %v2218
        %v2482 = vpop.f32.mrf.mxu0
        %v2483 = vadd.f32 %v2344, %v2482
        %v2484 = vpop.f32.mrf.mxu0
        %2485 = vmatprep.mubr.f32.mxu0 0.0
        %2486 = vmatmul.mubr.f32.gmra.mxu0 %v2322
        %v2487 = vpop.f32.mrf.mxu0
        %v2488 = vadd.f32 %v2344, %v2487
        %v2489 = vpop.f32.mrf.mxu0
        %2490 = vdwg.mxu0
        %v2491 = vand.u32 2147483647, %v2413
        %vm2492 = vcmp.le.f32.partialorder %v2491, 0.7853982
        %vm2493 = vcmp.lt.s32.totalorder %v2413, 0
        %v2494 = vand.u32 %v2413, 2139095040
        %v2495 = vshrl.u32 %v2494, 23
        %v2496 = vsub.s32 %v2495, 127
        %v2497 = vand.u32 2147483647, %v2413
        %v2498 = vand.u32 %v2497, 8388607
        %v2499 = vor.u32 %v2498, 8388608
        %v2500 = vsub.s32 0, %v2499
        %v2501 = vadd.s32 %v2496, 1
        %vm2502 = vcmp.gt.s32.totalorder %v2501, 0
        %v2503 = vsel %vm2502, %v2501, 0
        %v2504 = vshrl.u32 %v2503, 5
        %v2505 = vand.u32 %v2503, 31
        %v2506 = vsub.s32 32, %v2505
        %v2507 = vshrl.u32 683565275, %v2506
        %v2508 = vshll.u32 683565275, %v2505
        %v2509 = vshrl.u32 2475754826, %v2506
        %v2510 = vor.u32 %v2508, %v2509
        %v2511 = vshll.u32 2475754826, %v2505
        %v2512 = vshrl.u32 2131351028, %v2506
        %v2513 = vor.u32 %v2511, %v2512
        %v2514 = vshll.u32 2131351028, %v2505
        %v2515 = vshrl.u32 2102212464, %v2506
        %v2516 = vor.u32 %v2514, %v2515
        %v2517 = vshll.u32 2102212464, %v2505
        %v2518 = vshrl.u32 920167782, %v2506
        %v2519 = vor.u32 %v2517, %v2518
        %v2520 = vshll.u32 920167782, %v2505
        %v2521 = vshrl.u32 1326507024, %v2506
        %v2522 = vor.u32 %v2520, %v2521
        %vm2523 = vcmp.lt.s32.totalorder %v2504, 1
        %vm2524 = vcmp.lt.s32.totalorder %v2504, 2
        %vm2525 = vcmp.lt.s32.totalorder %v2504, 3
        %vm2526 = vcmp.lt.s32.totalorder %v2504, 4
        %v2527 = vsel %vm2523, %v2507, %v2510
        %v2528 = vsel %vm2526, %v2516, 2102212464
        %v2529 = vsel %vm2525, %v2513, %v2528
        %v2530 = vsel %vm2524, %v2527, %v2529
        %v2531 = vsel %vm2523, %v2510, %v2513
        %v2532 = vsel %vm2526, %v2519, 920167782
        %v2533 = vsel %vm2525, %v2516, %v2532
        %v2534 = vsel %vm2524, %v2531, %v2533
        %v2535 = vsel %vm2523, %v2513, %v2516
        %v2536 = vsel %vm2526, %v2522, 1326507024
        %v2537 = vsel %vm2525, %v2519, %v2536
        %v2538 = vsel %vm2524, %v2535, %v2537
        %v2539 = vshll.u32 %v2499, 8
        %v2540 = vmul.u32.u64.compose %v2539, %v2538
        %v2541 = vextract.low.u32 %v2540
        %v2542 = vextract.high.u32 %v2540
        %v2543 = vmul.u32.u64.compose %v2539, %v2534
        %v2544 = vextract.low.u32 %v2543
        %v2545 = vextract.high.u32 %v2543
        %v2546 = vmul.u32 %v2539, %v2530
        %v2547 = vadd.s32 %v2542, %v2544
        %vm2548 = vc.u32 %v2542, %v2544
        %v2549 = vadd.s32 %v2545, 1
        %v2550 = vsel %vm2548, %v2549, %v2545
        %v2551 = vadd.s32 %v2546, %v2550
        %v2552 = vadd.s32 %v2551, 536870912
        %v2553 = vshrl.u32 %v2552, 30
        %v2554 = vshll.u32 %v2553, 30
        %v2555 = vsub.s32 %v2551, %v2554
        %vm2556 = vcmp.lt.s32.totalorder %v2555, 0
        %v2557 = vsub.s32 0, %v2555
        %v2558 = vsel %vm2556, %v2557, %v2555
        %v2559 = vclz %v2558
        %v2560 = vsub.s32 %v2559, 2
        %vm2561 = vcmp.gt.s32.totalorder 0, %v2560
        %v2562 = vsel %vm2561, 0, %v2560
        %v2563 = vsub.s32 32, %v2562
        %v2564 = vshll.u32 %v2555, %v2562
        %v2565 = vshrl.u32 %v2547, %v2563
        %v2566 = vor.u32 %v2564, %v2565
        %v2567 = vsub.s32 4294967266, %v2562
        %v2568 = vadd.s32 %v2567, 127
        %v2569 = vshll.u32 %v2568, 23
        %v2570 = vor.u32 4788187, %v2569
        %v2571 = vand.u32 2147483647, %v2570
        %v2573 = vcvt.s32.f32 %v2566
        %v2574 = vmul.f32 %v2573, %v2571
        %v2575 = vxor.u32 %v2574, 2147483648
        %v2576 = vsel %vm2493, %v2575, %v2574
        %v2577 = vsub.s32 4, %v2553
        %v2578 = vsel %vm2493, %v2577, %v2553
        %v2579 = vsel %vm2492, %v2413, %v2576
        %v2580 = vsel %vm2492, 0, %v2578
        %v2581 = vcosq.f32.pop %v2579
        %v2582 = vsinq.f32.pop %v2579
        %vm2583 = vweird.f32 %v2413
        %v2584 = vadd.s32 %v2580, 3
        %v2585 = vand.u32 %v2584, 3
        %vm2586 = vcmp.lt.s32.totalorder %v2585, 2
        %vm2587 = vcmp.eq.s32.totalorder %v2585, 0
        %v2588 = vxor.u32 %v2582, 2147483648
        %v2589 = vsel %vm2587, %v2581, %v2588
        %vm2590 = vcmp.eq.s32.totalorder %v2585, 2
        %v2591 = vxor.u32 %v2581, 2147483648
        %v2592 = vsel %vm2590, %v2591, %v2582
        %v2593 = vsel %vm2586, %v2589, %v2592
        %v2594 = vsel %vm2583, nan, %v2593
        %v2595 = vand.u32 2147483647, %v2418
        %vm2596 = vcmp.le.f32.partialorder %v2595, 0.7853982
        %vm2597 = vcmp.lt.s32.totalorder %v2418, 0
        %v2598 = vand.u32 %v2418, 2139095040
        %v2599 = vshrl.u32 %v2598, 23
        %v2600 = vsub.s32 %v2599, 127
        %v2601 = vand.u32 2147483647, %v2418
        %v2602 = vand.u32 %v2601, 8388607
        %v2603 = vor.u32 %v2602, 8388608
        %v2604 = vsub.s32 0, %v2603
        %v2605 = vadd.s32 %v2600, 1
        %vm2606 = vcmp.gt.s32.totalorder %v2605, 0
        %v2607 = vsel %vm2606, %v2605, 0
        %v2608 = vshrl.u32 %v2607, 5
        %v2609 = vand.u32 %v2607, 31
        %v2610 = vsub.s32 32, %v2609
        %v2611 = vshrl.u32 683565275, %v2610
        %v2612 = vshll.u32 683565275, %v2609
        %v2613 = vshrl.u32 2475754826, %v2610
        %v2614 = vor.u32 %v2612, %v2613
        %v2615 = vshll.u32 2475754826, %v2609
        %v2616 = vshrl.u32 2131351028, %v2610
        %v2617 = vor.u32 %v2615, %v2616
        %v2618 = vshll.u32 2131351028, %v2609
        %v2619 = vshrl.u32 2102212464, %v2610
        %v2620 = vor.u32 %v2618, %v2619
        %v2621 = vshll.u32 2102212464, %v2609
        %v2622 = vshrl.u32 920167782, %v2610
        %v2623 = vor.u32 %v2621, %v2622
        %v2624 = vshll.u32 920167782, %v2609
        %v2625 = vshrl.u32 1326507024, %v2610
        %v2626 = vor.u32 %v2624, %v2625
        %vm2627 = vcmp.lt.s32.totalorder %v2608, 1
        %vm2628 = vcmp.lt.s32.totalorder %v2608, 2
        %vm2629 = vcmp.lt.s32.totalorder %v2608, 3
        %vm2630 = vcmp.lt.s32.totalorder %v2608, 4
        %v2631 = vsel %vm2627, %v2611, %v2614
        %v2632 = vsel %vm2630, %v2620, 2102212464
        %v2633 = vsel %vm2629, %v2617, %v2632
        %v2634 = vsel %vm2628, %v2631, %v2633
        %v2635 = vsel %vm2627, %v2614, %v2617
        %v2636 = vsel %vm2630, %v2623, 920167782
        %v2637 = vsel %vm2629, %v2620, %v2636
        %v2638 = vsel %vm2628, %v2635, %v2637
        %v2639 = vsel %vm2627, %v2617, %v2620
        %v2640 = vsel %vm2630, %v2626, 1326507024
        %v2641 = vsel %vm2629, %v2623, %v2640
        %v2642 = vsel %vm2628, %v2639, %v2641
        %v2643 = vshll.u32 %v2603, 8
        %v2644 = vmul.u32.u64.compose %v2643, %v2642
        %v2645 = vextract.low.u32 %v2644
        %v2646 = vextract.high.u32 %v2644
        %v2647 = vmul.u32.u64.compose %v2643, %v2638
        %v2648 = vextract.low.u32 %v2647
        %v2649 = vextract.high.u32 %v2647
        %v2650 = vmul.u32 %v2643, %v2634
        %v2651 = vadd.s32 %v2646, %v2648
        %vm2652 = vc.u32 %v2646, %v2648
        %v2653 = vadd.s32 %v2649, 1
        %v2654 = vsel %vm2652, %v2653, %v2649
        %v2655 = vadd.s32 %v2650, %v2654
        %v2656 = vadd.s32 %v2655, 536870912
        %v2657 = vshrl.u32 %v2656, 30
        %v2658 = vshll.u32 %v2657, 30
        %v2659 = vsub.s32 %v2655, %v2658
        %vm2660 = vcmp.lt.s32.totalorder %v2659, 0
        %v2661 = vsub.s32 0, %v2659
        %v2662 = vsel %vm2660, %v2661, %v2659
        %v2663 = vclz %v2662
        %v2664 = vsub.s32 %v2663, 2
        %vm2665 = vcmp.gt.s32.totalorder 0, %v2664
        %v2666 = vsel %vm2665, 0, %v2664
        %v2667 = vsub.s32 32, %v2666
        %v2668 = vshll.u32 %v2659, %v2666
        %v2669 = vshrl.u32 %v2651, %v2667
        %v2670 = vor.u32 %v2668, %v2669
        %v2671 = vsub.s32 4294967266, %v2666
        %v2672 = vadd.s32 %v2671, 127
        %v2673 = vshll.u32 %v2672, 23
        %v2674 = vor.u32 4788187, %v2673
        %v2675 = vand.u32 2147483647, %v2674
        %v2677 = vcvt.s32.f32 %v2670
        %v2678 = vmul.f32 %v2677, %v2675
        %v2679 = vxor.u32 %v2678, 2147483648
        %v2680 = vsel %vm2597, %v2679, %v2678
        %v2681 = vsub.s32 4, %v2657
        %v2682 = vsel %vm2597, %v2681, %v2657
        %v2683 = vsel %vm2596, %v2418, %v2680
        %v2684 = vsel %vm2596, 0, %v2682
        %v2685 = vcosq.f32.pop %v2683
        %v2686 = vsinq.f32.pop %v2683
        %vm2687 = vweird.f32 %v2418
        %v2688 = vadd.s32 %v2684, 3
        %v2689 = vand.u32 %v2688, 3
        %vm2690 = vcmp.lt.s32.totalorder %v2689, 2
        %vm2691 = vcmp.eq.s32.totalorder %v2689, 0
        %v2692 = vxor.u32 %v2686, 2147483648
        %v2693 = vsel %vm2691, %v2685, %v2692
        %vm2694 = vcmp.eq.s32.totalorder %v2689, 2
        %v2695 = vxor.u32 %v2685, 2147483648
        %v2696 = vsel %vm2694, %v2695, %v2686
        %v2697 = vsel %vm2690, %v2693, %v2696
        %v2698 = vsel %vm2687, nan, %v2697
        %v2699 = vand.u32 2147483647, %v2423
        %vm2700 = vcmp.le.f32.partialorder %v2699, 0.7853982
        %vm2701 = vcmp.lt.s32.totalorder %v2423, 0
        %v2702 = vand.u32 %v2423, 2139095040
        %v2703 = vshrl.u32 %v2702, 23
        %v2704 = vsub.s32 %v2703, 127
        %v2705 = vand.u32 2147483647, %v2423
        %v2706 = vand.u32 %v2705, 8388607
        %v2707 = vor.u32 %v2706, 8388608
        %v2708 = vsub.s32 0, %v2707
        %v2709 = vadd.s32 %v2704, 1
        %vm2710 = vcmp.gt.s32.totalorder %v2709, 0
        %v2711 = vsel %vm2710, %v2709, 0
        %v2712 = vshrl.u32 %v2711, 5
        %v2713 = vand.u32 %v2711, 31
        %v2714 = vsub.s32 32, %v2713
        %v2715 = vshrl.u32 683565275, %v2714
        %v2716 = vshll.u32 683565275, %v2713
        %v2717 = vshrl.u32 2475754826, %v2714
        %v2718 = vor.u32 %v2716, %v2717
        %v2719 = vshll.u32 2475754826, %v2713
        %v2720 = vshrl.u32 2131351028, %v2714
        %v2721 = vor.u32 %v2719, %v2720
        %v2722 = vshll.u32 2131351028, %v2713
        %v2723 = vshrl.u32 2102212464, %v2714
        %v2724 = vor.u32 %v2722, %v2723
        %v2725 = vshll.u32 2102212464, %v2713
        %v2726 = vshrl.u32 920167782, %v2714
        %v2727 = vor.u32 %v2725, %v2726
        %v2728 = vshll.u32 920167782, %v2713
        %v2729 = vshrl.u32 1326507024, %v2714
        %v2730 = vor.u32 %v2728, %v2729
        %vm2731 = vcmp.lt.s32.totalorder %v2712, 1
        %vm2732 = vcmp.lt.s32.totalorder %v2712, 2
        %vm2733 = vcmp.lt.s32.totalorder %v2712, 3
        %vm2734 = vcmp.lt.s32.totalorder %v2712, 4
        %v2735 = vsel %vm2731, %v2715, %v2718
        %v2736 = vsel %vm2734, %v2724, 2102212464
        %v2737 = vsel %vm2733, %v2721, %v2736
        %v2738 = vsel %vm2732, %v2735, %v2737
        %v2739 = vsel %vm2731, %v2718, %v2721
        %v2740 = vsel %vm2734, %v2727, 920167782
        %v2741 = vsel %vm2733, %v2724, %v2740
        %v2742 = vsel %vm2732, %v2739, %v2741
        %v2743 = vsel %vm2731, %v2721, %v2724
        %v2744 = vsel %vm2734, %v2730, 1326507024
        %v2745 = vsel %vm2733, %v2727, %v2744
        %v2746 = vsel %vm2732, %v2743, %v2745
        %v2747 = vshll.u32 %v2707, 8
        %v2748 = vmul.u32.u64.compose %v2747, %v2746
        %v2749 = vextract.low.u32 %v2748
        %v2750 = vextract.high.u32 %v2748
        %v2751 = vmul.u32.u64.compose %v2747, %v2742
        %v2752 = vextract.low.u32 %v2751
        %v2753 = vextract.high.u32 %v2751
        %v2754 = vmul.u32 %v2747, %v2738
        %v2755 = vadd.s32 %v2750, %v2752
        %vm2756 = vc.u32 %v2750, %v2752
        %v2757 = vadd.s32 %v2753, 1
        %v2758 = vsel %vm2756, %v2757, %v2753
        %v2759 = vadd.s32 %v2754, %v2758
        %v2760 = vadd.s32 %v2759, 536870912
        %v2761 = vshrl.u32 %v2760, 30
        %v2762 = vshll.u32 %v2761, 30
        %v2763 = vsub.s32 %v2759, %v2762
        %vm2764 = vcmp.lt.s32.totalorder %v2763, 0
        %v2765 = vsub.s32 0, %v2763
        %v2766 = vsel %vm2764, %v2765, %v2763
        %v2767 = vclz %v2766
        %v2768 = vsub.s32 %v2767, 2
        %vm2769 = vcmp.gt.s32.totalorder 0, %v2768
        %v2770 = vsel %vm2769, 0, %v2768
        %v2771 = vsub.s32 32, %v2770
        %v2772 = vshll.u32 %v2763, %v2770
        %v2773 = vshrl.u32 %v2755, %v2771
        %v2774 = vor.u32 %v2772, %v2773
        %v2775 = vsub.s32 4294967266, %v2770
        %v2776 = vadd.s32 %v2775, 127
        %v2777 = vshll.u32 %v2776, 23
        %v2778 = vor.u32 4788187, %v2777
        %v2779 = vand.u32 2147483647, %v2778
        %v2781 = vcvt.s32.f32 %v2774
        %v2782 = vmul.f32 %v2781, %v2779
        %v2783 = vxor.u32 %v2782, 2147483648
        %v2784 = vsel %vm2701, %v2783, %v2782
        %v2785 = vsub.s32 4, %v2761
        %v2786 = vsel %vm2701, %v2785, %v2761
        %v2787 = vsel %vm2700, %v2423, %v2784
        %v2788 = vsel %vm2700, 0, %v2786
        %v2789 = vcosq.f32.pop %v2787
        %v2790 = vsinq.f32.pop %v2787
        %vm2791 = vweird.f32 %v2423
        %v2792 = vadd.s32 %v2788, 3
        %v2793 = vand.u32 %v2792, 3
        %vm2794 = vcmp.lt.s32.totalorder %v2793, 2
        %vm2795 = vcmp.eq.s32.totalorder %v2793, 0
        %v2796 = vxor.u32 %v2790, 2147483648
        %v2797 = vsel %vm2795, %v2789, %v2796
        %vm2798 = vcmp.eq.s32.totalorder %v2793, 2
        %v2799 = vxor.u32 %v2789, 2147483648
        %v2800 = vsel %vm2798, %v2799, %v2790
        %v2801 = vsel %vm2794, %v2797, %v2800
        %v2802 = vsel %vm2791, nan, %v2801
        %v2803 = vand.u32 2147483647, %v2428
        %vm2804 = vcmp.le.f32.partialorder %v2803, 0.7853982
        %vm2805 = vcmp.lt.s32.totalorder %v2428, 0
        %v2806 = vand.u32 %v2428, 2139095040
        %v2807 = vshrl.u32 %v2806, 23
        %v2808 = vsub.s32 %v2807, 127
        %v2809 = vand.u32 2147483647, %v2428
        %v2810 = vand.u32 %v2809, 8388607
        %v2811 = vor.u32 %v2810, 8388608
        %v2812 = vsub.s32 0, %v2811
        %v2813 = vadd.s32 %v2808, 1
        %vm2814 = vcmp.gt.s32.totalorder %v2813, 0
        %v2815 = vsel %vm2814, %v2813, 0
        %v2816 = vshrl.u32 %v2815, 5
        %v2817 = vand.u32 %v2815, 31
        %v2818 = vsub.s32 32, %v2817
        %v2819 = vshrl.u32 683565275, %v2818
        %v2820 = vshll.u32 683565275, %v2817
        %v2821 = vshrl.u32 2475754826, %v2818
        %v2822 = vor.u32 %v2820, %v2821
        %v2823 = vshll.u32 2475754826, %v2817
        %v2824 = vshrl.u32 2131351028, %v2818
        %v2825 = vor.u32 %v2823, %v2824
        %v2826 = vshll.u32 2131351028, %v2817
        %v2827 = vshrl.u32 2102212464, %v2818
        %v2828 = vor.u32 %v2826, %v2827
        %v2829 = vshll.u32 2102212464, %v2817
        %v2830 = vshrl.u32 920167782, %v2818
        %v2831 = vor.u32 %v2829, %v2830
        %v2832 = vshll.u32 920167782, %v2817
        %v2833 = vshrl.u32 1326507024, %v2818
        %v2834 = vor.u32 %v2832, %v2833
        %vm2835 = vcmp.lt.s32.totalorder %v2816, 1
        %vm2836 = vcmp.lt.s32.totalorder %v2816, 2
        %vm2837 = vcmp.lt.s32.totalorder %v2816, 3
        %vm2838 = vcmp.lt.s32.totalorder %v2816, 4
        %v2839 = vsel %vm2835, %v2819, %v2822
        %v2840 = vsel %vm2838, %v2828, 2102212464
        %v2841 = vsel %vm2837, %v2825, %v2840
        %v2842 = vsel %vm2836, %v2839, %v2841
        %v2843 = vsel %vm2835, %v2822, %v2825
        %v2844 = vsel %vm2838, %v2831, 920167782
        %v2845 = vsel %vm2837, %v2828, %v2844
        %v2846 = vsel %vm2836, %v2843, %v2845
        %v2847 = vsel %vm2835, %v2825, %v2828
        %v2848 = vsel %vm2838, %v2834, 1326507024
        %v2849 = vsel %vm2837, %v2831, %v2848
        %v2850 = vsel %vm2836, %v2847, %v2849
        %v2851 = vshll.u32 %v2811, 8
        %v2852 = vmul.u32.u64.compose %v2851, %v2850
        %v2853 = vextract.low.u32 %v2852
        %v2854 = vextract.high.u32 %v2852
        %v2855 = vmul.u32.u64.compose %v2851, %v2846
        %v2856 = vextract.low.u32 %v2855
        %v2857 = vextract.high.u32 %v2855
        %v2858 = vmul.u32 %v2851, %v2842
        %v2859 = vadd.s32 %v2854, %v2856
        %vm2860 = vc.u32 %v2854, %v2856
        %v2861 = vadd.s32 %v2857, 1
        %v2862 = vsel %vm2860, %v2861, %v2857
        %v2863 = vadd.s32 %v2858, %v2862
        %v2864 = vadd.s32 %v2863, 536870912
        %v2865 = vshrl.u32 %v2864, 30
        %v2866 = vshll.u32 %v2865, 30
        %v2867 = vsub.s32 %v2863, %v2866
        %vm2868 = vcmp.lt.s32.totalorder %v2867, 0
        %v2869 = vsub.s32 0, %v2867
        %v2870 = vsel %vm2868, %v2869, %v2867
        %v2871 = vclz %v2870
        %v2872 = vsub.s32 %v2871, 2
        %vm2873 = vcmp.gt.s32.totalorder 0, %v2872
        %v2874 = vsel %vm2873, 0, %v2872
        %v2875 = vsub.s32 32, %v2874
        %v2876 = vshll.u32 %v2867, %v2874
        %v2877 = vshrl.u32 %v2859, %v2875
        %v2878 = vor.u32 %v2876, %v2877
        %v2879 = vsub.s32 4294967266, %v2874
        %v2880 = vadd.s32 %v2879, 127
        %v2881 = vshll.u32 %v2880, 23
        %v2882 = vor.u32 4788187, %v2881
        %v2883 = vand.u32 2147483647, %v2882
        %v2885 = vcvt.s32.f32 %v2878
        %v2886 = vmul.f32 %v2885, %v2883
        %v2887 = vxor.u32 %v2886, 2147483648
        %v2888 = vsel %vm2805, %v2887, %v2886
        %v2889 = vsub.s32 4, %v2865
        %v2890 = vsel %vm2805, %v2889, %v2865
        %v2891 = vsel %vm2804, %v2428, %v2888
        %v2892 = vsel %vm2804, 0, %v2890
        %v2893 = vcosq.f32.pop %v2891
        %v2894 = vsinq.f32.pop %v2891
        %vm2895 = vweird.f32 %v2428
        %v2896 = vadd.s32 %v2892, 3
        %v2897 = vand.u32 %v2896, 3
        %vm2898 = vcmp.lt.s32.totalorder %v2897, 2
        %vm2899 = vcmp.eq.s32.totalorder %v2897, 0
        %v2900 = vxor.u32 %v2894, 2147483648
        %v2901 = vsel %vm2899, %v2893, %v2900
        %vm2902 = vcmp.eq.s32.totalorder %v2897, 2
        %v2903 = vxor.u32 %v2893, 2147483648
        %v2904 = vsel %vm2902, %v2903, %v2894
        %v2905 = vsel %vm2898, %v2901, %v2904
        %v2906 = vsel %vm2895, nan, %v2905
        %v2907 = vand.u32 2147483647, %v2433
        %vm2908 = vcmp.le.f32.partialorder %v2907, 0.7853982
        %vm2909 = vcmp.lt.s32.totalorder %v2433, 0
        %v2910 = vand.u32 %v2433, 2139095040
        %v2911 = vshrl.u32 %v2910, 23
        %v2912 = vsub.s32 %v2911, 127
        %v2913 = vand.u32 2147483647, %v2433
        %v2914 = vand.u32 %v2913, 8388607
        %v2915 = vor.u32 %v2914, 8388608
        %v2916 = vsub.s32 0, %v2915
        %v2917 = vadd.s32 %v2912, 1
        %vm2918 = vcmp.gt.s32.totalorder %v2917, 0
        %v2919 = vsel %vm2918, %v2917, 0
        %v2920 = vshrl.u32 %v2919, 5
        %v2921 = vand.u32 %v2919, 31
        %v2922 = vsub.s32 32, %v2921
        %v2923 = vshrl.u32 683565275, %v2922
        %v2924 = vshll.u32 683565275, %v2921
        %v2925 = vshrl.u32 2475754826, %v2922
        %v2926 = vor.u32 %v2924, %v2925
        %v2927 = vshll.u32 2475754826, %v2921
        %v2928 = vshrl.u32 2131351028, %v2922
        %v2929 = vor.u32 %v2927, %v2928
        %v2930 = vshll.u32 2131351028, %v2921
        %v2931 = vshrl.u32 2102212464, %v2922
        %v2932 = vor.u32 %v2930, %v2931
        %v2933 = vshll.u32 2102212464, %v2921
        %v2934 = vshrl.u32 920167782, %v2922
        %v2935 = vor.u32 %v2933, %v2934
        %v2936 = vshll.u32 920167782, %v2921
        %v2937 = vshrl.u32 1326507024, %v2922
        %v2938 = vor.u32 %v2936, %v2937
        %vm2939 = vcmp.lt.s32.totalorder %v2920, 1
        %vm2940 = vcmp.lt.s32.totalorder %v2920, 2
        %vm2941 = vcmp.lt.s32.totalorder %v2920, 3
        %vm2942 = vcmp.lt.s32.totalorder %v2920, 4
        %v2943 = vsel %vm2939, %v2923, %v2926
        %v2944 = vsel %vm2942, %v2932, 2102212464
        %v2945 = vsel %vm2941, %v2929, %v2944
        %v2946 = vsel %vm2940, %v2943, %v2945
        %v2947 = vsel %vm2939, %v2926, %v2929
        %v2948 = vsel %vm2942, %v2935, 920167782
        %v2949 = vsel %vm2941, %v2932, %v2948
        %v2950 = vsel %vm2940, %v2947, %v2949
        %v2951 = vsel %vm2939, %v2929, %v2932
        %v2952 = vsel %vm2942, %v2938, 1326507024
        %v2953 = vsel %vm2941, %v2935, %v2952
        %v2954 = vsel %vm2940, %v2951, %v2953
        %v2955 = vshll.u32 %v2915, 8
        %v2956 = vmul.u32.u64.compose %v2955, %v2954
        %v2957 = vextract.low.u32 %v2956
        %v2958 = vextract.high.u32 %v2956
        %v2959 = vmul.u32.u64.compose %v2955, %v2950
        %v2960 = vextract.low.u32 %v2959
        %v2961 = vextract.high.u32 %v2959
        %v2962 = vmul.u32 %v2955, %v2946
        %v2963 = vadd.s32 %v2958, %v2960
        %vm2964 = vc.u32 %v2958, %v2960
        %v2965 = vadd.s32 %v2961, 1
        %v2966 = vsel %vm2964, %v2965, %v2961
        %v2967 = vadd.s32 %v2962, %v2966
        %v2968 = vadd.s32 %v2967, 536870912
        %v2969 = vshrl.u32 %v2968, 30
        %v2970 = vshll.u32 %v2969, 30
        %v2971 = vsub.s32 %v2967, %v2970
        %vm2972 = vcmp.lt.s32.totalorder %v2971, 0
        %v2973 = vsub.s32 0, %v2971
        %v2974 = vsel %vm2972, %v2973, %v2971
        %v2975 = vclz %v2974
        %v2976 = vsub.s32 %v2975, 2
        %vm2977 = vcmp.gt.s32.totalorder 0, %v2976
        %v2978 = vsel %vm2977, 0, %v2976
        %v2979 = vsub.s32 32, %v2978
        %v2980 = vshll.u32 %v2971, %v2978
        %v2981 = vshrl.u32 %v2963, %v2979
        %v2982 = vor.u32 %v2980, %v2981
        %v2983 = vsub.s32 4294967266, %v2978
        %v2984 = vadd.s32 %v2983, 127
        %v2985 = vshll.u32 %v2984, 23
        %v2986 = vor.u32 4788187, %v2985
        %v2987 = vand.u32 2147483647, %v2986
        %v2989 = vcvt.s32.f32 %v2982
        %v2990 = vmul.f32 %v2989, %v2987
        %v2991 = vxor.u32 %v2990, 2147483648
        %v2992 = vsel %vm2909, %v2991, %v2990
        %v2993 = vsub.s32 4, %v2969
        %v2994 = vsel %vm2909, %v2993, %v2969
        %v2995 = vsel %vm2908, %v2433, %v2992
        %v2996 = vsel %vm2908, 0, %v2994
        %v2997 = vcosq.f32.pop %v2995
        %v2998 = vsinq.f32.pop %v2995
        %vm2999 = vweird.f32 %v2433
        %v3000 = vadd.s32 %v2996, 3
        %v3001 = vand.u32 %v3000, 3
        %vm3002 = vcmp.lt.s32.totalorder %v3001, 2
        %vm3003 = vcmp.eq.s32.totalorder %v3001, 0
        %v3004 = vxor.u32 %v2998, 2147483648
        %v3005 = vsel %vm3003, %v2997, %v3004
        %vm3006 = vcmp.eq.s32.totalorder %v3001, 2
        %v3007 = vxor.u32 %v2997, 2147483648
        %v3008 = vsel %vm3006, %v3007, %v2998
        %v3009 = vsel %vm3002, %v3005, %v3008
        %v3010 = vsel %vm2999, nan, %v3009
        %v3011 = vand.u32 2147483647, %v2438
        %vm3012 = vcmp.le.f32.partialorder %v3011, 0.7853982
        %vm3013 = vcmp.lt.s32.totalorder %v2438, 0
        %v3014 = vand.u32 %v2438, 2139095040
        %v3015 = vshrl.u32 %v3014, 23
        %v3016 = vsub.s32 %v3015, 127
        %v3017 = vand.u32 2147483647, %v2438
        %v3018 = vand.u32 %v3017, 8388607
        %v3019 = vor.u32 %v3018, 8388608
        %v3020 = vsub.s32 0, %v3019
        %v3021 = vadd.s32 %v3016, 1
        %vm3022 = vcmp.gt.s32.totalorder %v3021, 0
        %v3023 = vsel %vm3022, %v3021, 0
        %v3024 = vshrl.u32 %v3023, 5
        %v3025 = vand.u32 %v3023, 31
        %v3026 = vsub.s32 32, %v3025
        %v3027 = vshrl.u32 683565275, %v3026
        %v3028 = vshll.u32 683565275, %v3025
        %v3029 = vshrl.u32 2475754826, %v3026
        %v3030 = vor.u32 %v3028, %v3029
        %v3031 = vshll.u32 2475754826, %v3025
        %v3032 = vshrl.u32 2131351028, %v3026
        %v3033 = vor.u32 %v3031, %v3032
        %v3034 = vshll.u32 2131351028, %v3025
        %v3035 = vshrl.u32 2102212464, %v3026
        %v3036 = vor.u32 %v3034, %v3035
        %v3037 = vshll.u32 2102212464, %v3025
        %v3038 = vshrl.u32 920167782, %v3026
        %v3039 = vor.u32 %v3037, %v3038
        %v3040 = vshll.u32 920167782, %v3025
        %v3041 = vshrl.u32 1326507024, %v3026
        %v3042 = vor.u32 %v3040, %v3041
        %vm3043 = vcmp.lt.s32.totalorder %v3024, 1
        %vm3044 = vcmp.lt.s32.totalorder %v3024, 2
        %vm3045 = vcmp.lt.s32.totalorder %v3024, 3
        %vm3046 = vcmp.lt.s32.totalorder %v3024, 4
        %v3047 = vsel %vm3043, %v3027, %v3030
        %v3048 = vsel %vm3046, %v3036, 2102212464
        %v3049 = vsel %vm3045, %v3033, %v3048
        %v3050 = vsel %vm3044, %v3047, %v3049
        %v3051 = vsel %vm3043, %v3030, %v3033
        %v3052 = vsel %vm3046, %v3039, 920167782
        %v3053 = vsel %vm3045, %v3036, %v3052
        %v3054 = vsel %vm3044, %v3051, %v3053
        %v3055 = vsel %vm3043, %v3033, %v3036
        %v3056 = vsel %vm3046, %v3042, 1326507024
        %v3057 = vsel %vm3045, %v3039, %v3056
        %v3058 = vsel %vm3044, %v3055, %v3057
        %v3059 = vshll.u32 %v3019, 8
        %v3060 = vmul.u32.u64.compose %v3059, %v3058
        %v3061 = vextract.low.u32 %v3060
        %v3062 = vextract.high.u32 %v3060
        %v3063 = vmul.u32.u64.compose %v3059, %v3054
        %v3064 = vextract.low.u32 %v3063
        %v3065 = vextract.high.u32 %v3063
        %v3066 = vmul.u32 %v3059, %v3050
        %v3067 = vadd.s32 %v3062, %v3064
        %vm3068 = vc.u32 %v3062, %v3064
        %v3069 = vadd.s32 %v3065, 1
        %v3070 = vsel %vm3068, %v3069, %v3065
        %v3071 = vadd.s32 %v3066, %v3070
        %v3072 = vadd.s32 %v3071, 536870912
        %v3073 = vshrl.u32 %v3072, 30
        %v3074 = vshll.u32 %v3073, 30
        %v3075 = vsub.s32 %v3071, %v3074
        %vm3076 = vcmp.lt.s32.totalorder %v3075, 0
        %v3077 = vsub.s32 0, %v3075
        %v3078 = vsel %vm3076, %v3077, %v3075
        %v3079 = vclz %v3078
        %v3080 = vsub.s32 %v3079, 2
        %vm3081 = vcmp.gt.s32.totalorder 0, %v3080
        %v3082 = vsel %vm3081, 0, %v3080
        %v3083 = vsub.s32 32, %v3082
        %v3084 = vshll.u32 %v3075, %v3082
        %v3085 = vshrl.u32 %v3067, %v3083
        %v3086 = vor.u32 %v3084, %v3085
        %v3087 = vsub.s32 4294967266, %v3082
        %v3088 = vadd.s32 %v3087, 127
        %v3089 = vshll.u32 %v3088, 23
        %v3090 = vor.u32 4788187, %v3089
        %v3091 = vand.u32 2147483647, %v3090
        %v3093 = vcvt.s32.f32 %v3086
        %v3094 = vmul.f32 %v3093, %v3091
        %v3095 = vxor.u32 %v3094, 2147483648
        %v3096 = vsel %vm3013, %v3095, %v3094
        %v3097 = vsub.s32 4, %v3073
        %v3098 = vsel %vm3013, %v3097, %v3073
        %v3099 = vsel %vm3012, %v2438, %v3096
        %v3100 = vsel %vm3012, 0, %v3098
        %v3101 = vcosq.f32.pop %v3099
        %v3102 = vsinq.f32.pop %v3099
        %vm3103 = vweird.f32 %v2438
        %v3104 = vadd.s32 %v3100, 3
        %v3105 = vand.u32 %v3104, 3
        %vm3106 = vcmp.lt.s32.totalorder %v3105, 2
        %vm3107 = vcmp.eq.s32.totalorder %v3105, 0
        %v3108 = vxor.u32 %v3102, 2147483648
        %v3109 = vsel %vm3107, %v3101, %v3108
        %vm3110 = vcmp.eq.s32.totalorder %v3105, 2
        %v3111 = vxor.u32 %v3101, 2147483648
        %v3112 = vsel %vm3110, %v3111, %v3102
        %v3113 = vsel %vm3106, %v3109, %v3112
        %v3114 = vsel %vm3103, nan, %v3113
        %v3115 = vand.u32 2147483647, %v2443
        %vm3116 = vcmp.le.f32.partialorder %v3115, 0.7853982
        %vm3117 = vcmp.lt.s32.totalorder %v2443, 0
        %v3118 = vand.u32 %v2443, 2139095040
        %v3119 = vshrl.u32 %v3118, 23
        %v3120 = vsub.s32 %v3119, 127
        %v3121 = vand.u32 2147483647, %v2443
        %v3122 = vand.u32 %v3121, 8388607
        %v3123 = vor.u32 %v3122, 8388608
        %v3124 = vsub.s32 0, %v3123
        %v3125 = vadd.s32 %v3120, 1
        %vm3126 = vcmp.gt.s32.totalorder %v3125, 0
        %v3127 = vsel %vm3126, %v3125, 0
        %v3128 = vshrl.u32 %v3127, 5
        %v3129 = vand.u32 %v3127, 31
        %v3130 = vsub.s32 32, %v3129
        %v3131 = vshrl.u32 683565275, %v3130
        %v3132 = vshll.u32 683565275, %v3129
        %v3133 = vshrl.u32 2475754826, %v3130
        %v3134 = vor.u32 %v3132, %v3133
        %v3135 = vshll.u32 2475754826, %v3129
        %v3136 = vshrl.u32 2131351028, %v3130
        %v3137 = vor.u32 %v3135, %v3136
        %v3138 = vshll.u32 2131351028, %v3129
        %v3139 = vshrl.u32 2102212464, %v3130
        %v3140 = vor.u32 %v3138, %v3139
        %v3141 = vshll.u32 2102212464, %v3129
        %v3142 = vshrl.u32 920167782, %v3130
        %v3143 = vor.u32 %v3141, %v3142
        %v3144 = vshll.u32 920167782, %v3129
        %v3145 = vshrl.u32 1326507024, %v3130
        %v3146 = vor.u32 %v3144, %v3145
        %vm3147 = vcmp.lt.s32.totalorder %v3128, 1
        %vm3148 = vcmp.lt.s32.totalorder %v3128, 2
        %vm3149 = vcmp.lt.s32.totalorder %v3128, 3
        %vm3150 = vcmp.lt.s32.totalorder %v3128, 4
        %v3151 = vsel %vm3147, %v3131, %v3134
        %v3152 = vsel %vm3150, %v3140, 2102212464
        %v3153 = vsel %vm3149, %v3137, %v3152
        %v3154 = vsel %vm3148, %v3151, %v3153
        %v3155 = vsel %vm3147, %v3134, %v3137
        %v3156 = vsel %vm3150, %v3143, 920167782
        %v3157 = vsel %vm3149, %v3140, %v3156
        %v3158 = vsel %vm3148, %v3155, %v3157
        %v3159 = vsel %vm3147, %v3137, %v3140
        %v3160 = vsel %vm3150, %v3146, 1326507024
        %v3161 = vsel %vm3149, %v3143, %v3160
        %v3162 = vsel %vm3148, %v3159, %v3161
        %v3163 = vshll.u32 %v3123, 8
        %v3164 = vmul.u32.u64.compose %v3163, %v3162
        %v3165 = vextract.low.u32 %v3164
        %v3166 = vextract.high.u32 %v3164
        %v3167 = vmul.u32.u64.compose %v3163, %v3158
        %v3168 = vextract.low.u32 %v3167
        %v3169 = vextract.high.u32 %v3167
        %v3170 = vmul.u32 %v3163, %v3154
        %v3171 = vadd.s32 %v3166, %v3168
        %vm3172 = vc.u32 %v3166, %v3168
        %v3173 = vadd.s32 %v3169, 1
        %v3174 = vsel %vm3172, %v3173, %v3169
        %v3175 = vadd.s32 %v3170, %v3174
        %v3176 = vadd.s32 %v3175, 536870912
        %v3177 = vshrl.u32 %v3176, 30
        %v3178 = vshll.u32 %v3177, 30
        %v3179 = vsub.s32 %v3175, %v3178
        %vm3180 = vcmp.lt.s32.totalorder %v3179, 0
        %v3181 = vsub.s32 0, %v3179
        %v3182 = vsel %vm3180, %v3181, %v3179
        %v3183 = vclz %v3182
        %v3184 = vsub.s32 %v3183, 2
        %vm3185 = vcmp.gt.s32.totalorder 0, %v3184
        %v3186 = vsel %vm3185, 0, %v3184
        %v3187 = vsub.s32 32, %v3186
        %v3188 = vshll.u32 %v3179, %v3186
        %v3189 = vshrl.u32 %v3171, %v3187
        %v3190 = vor.u32 %v3188, %v3189
        %v3191 = vsub.s32 4294967266, %v3186
        %v3192 = vadd.s32 %v3191, 127
        %v3193 = vshll.u32 %v3192, 23
        %v3194 = vor.u32 4788187, %v3193
        %v3195 = vand.u32 2147483647, %v3194
        %v3197 = vcvt.s32.f32 %v3190
        %v3198 = vmul.f32 %v3197, %v3195
        %v3199 = vxor.u32 %v3198, 2147483648
        %v3200 = vsel %vm3117, %v3199, %v3198
        %v3201 = vsub.s32 4, %v3177
        %v3202 = vsel %vm3117, %v3201, %v3177
        %v3203 = vsel %vm3116, %v2443, %v3200
        %v3204 = vsel %vm3116, 0, %v3202
        %v3205 = vcosq.f32.pop %v3203
        %v3206 = vsinq.f32.pop %v3203
        %vm3207 = vweird.f32 %v2443
        %v3208 = vadd.s32 %v3204, 3
        %v3209 = vand.u32 %v3208, 3
        %vm3210 = vcmp.lt.s32.totalorder %v3209, 2
        %vm3211 = vcmp.eq.s32.totalorder %v3209, 0
        %v3212 = vxor.u32 %v3206, 2147483648
        %v3213 = vsel %vm3211, %v3205, %v3212
        %vm3214 = vcmp.eq.s32.totalorder %v3209, 2
        %v3215 = vxor.u32 %v3205, 2147483648
        %v3216 = vsel %vm3214, %v3215, %v3206
        %v3217 = vsel %vm3210, %v3213, %v3216
        %v3218 = vsel %vm3207, nan, %v3217
        %v3219 = vand.u32 2147483647, %v2448
        %vm3220 = vcmp.le.f32.partialorder %v3219, 0.7853982
        %vm3221 = vcmp.lt.s32.totalorder %v2448, 0
        %v3222 = vand.u32 %v2448, 2139095040
        %v3223 = vshrl.u32 %v3222, 23
        %v3224 = vsub.s32 %v3223, 127
        %v3225 = vand.u32 2147483647, %v2448
        %v3226 = vand.u32 %v3225, 8388607
        %v3227 = vor.u32 %v3226, 8388608
        %v3228 = vsub.s32 0, %v3227
        %v3229 = vadd.s32 %v3224, 1
        %vm3230 = vcmp.gt.s32.totalorder %v3229, 0
        %v3231 = vsel %vm3230, %v3229, 0
        %v3232 = vshrl.u32 %v3231, 5
        %v3233 = vand.u32 %v3231, 31
        %v3234 = vsub.s32 32, %v3233
        %v3235 = vshrl.u32 683565275, %v3234
        %v3236 = vshll.u32 683565275, %v3233
        %v3237 = vshrl.u32 2475754826, %v3234
        %v3238 = vor.u32 %v3236, %v3237
        %v3239 = vshll.u32 2475754826, %v3233
        %v3240 = vshrl.u32 2131351028, %v3234
        %v3241 = vor.u32 %v3239, %v3240
        %v3242 = vshll.u32 2131351028, %v3233
        %v3243 = vshrl.u32 2102212464, %v3234
        %v3244 = vor.u32 %v3242, %v3243
        %v3245 = vshll.u32 2102212464, %v3233
        %v3246 = vshrl.u32 920167782, %v3234
        %v3247 = vor.u32 %v3245, %v3246
        %v3248 = vshll.u32 920167782, %v3233
        %v3249 = vshrl.u32 1326507024, %v3234
        %v3250 = vor.u32 %v3248, %v3249
        %vm3251 = vcmp.lt.s32.totalorder %v3232, 1
        %vm3252 = vcmp.lt.s32.totalorder %v3232, 2
        %vm3253 = vcmp.lt.s32.totalorder %v3232, 3
        %vm3254 = vcmp.lt.s32.totalorder %v3232, 4
        %v3255 = vsel %vm3251, %v3235, %v3238
        %v3256 = vsel %vm3254, %v3244, 2102212464
        %v3257 = vsel %vm3253, %v3241, %v3256
        %v3258 = vsel %vm3252, %v3255, %v3257
        %v3259 = vsel %vm3251, %v3238, %v3241
        %v3260 = vsel %vm3254, %v3247, 920167782
        %v3261 = vsel %vm3253, %v3244, %v3260
        %v3262 = vsel %vm3252, %v3259, %v3261
        %v3263 = vsel %vm3251, %v3241, %v3244
        %v3264 = vsel %vm3254, %v3250, 1326507024
        %v3265 = vsel %vm3253, %v3247, %v3264
        %v3266 = vsel %vm3252, %v3263, %v3265
        %v3267 = vshll.u32 %v3227, 8
        %v3268 = vmul.u32.u64.compose %v3267, %v3266
        %v3269 = vextract.low.u32 %v3268
        %v3270 = vextract.high.u32 %v3268
        %v3271 = vmul.u32.u64.compose %v3267, %v3262
        %v3272 = vextract.low.u32 %v3271
        %v3273 = vextract.high.u32 %v3271
        %v3274 = vmul.u32 %v3267, %v3258
        %v3275 = vadd.s32 %v3270, %v3272
        %vm3276 = vc.u32 %v3270, %v3272
        %v3277 = vadd.s32 %v3273, 1
        %v3278 = vsel %vm3276, %v3277, %v3273
        %v3279 = vadd.s32 %v3274, %v3278
        %v3280 = vadd.s32 %v3279, 536870912
        %v3281 = vshrl.u32 %v3280, 30
        %v3282 = vshll.u32 %v3281, 30
        %v3283 = vsub.s32 %v3279, %v3282
        %vm3284 = vcmp.lt.s32.totalorder %v3283, 0
        %v3285 = vsub.s32 0, %v3283
        %v3286 = vsel %vm3284, %v3285, %v3283
        %v3287 = vclz %v3286
        %v3288 = vsub.s32 %v3287, 2
        %vm3289 = vcmp.gt.s32.totalorder 0, %v3288
        %v3290 = vsel %vm3289, 0, %v3288
        %v3291 = vsub.s32 32, %v3290
        %v3292 = vshll.u32 %v3283, %v3290
        %v3293 = vshrl.u32 %v3275, %v3291
        %v3294 = vor.u32 %v3292, %v3293
        %v3295 = vsub.s32 4294967266, %v3290
        %v3296 = vadd.s32 %v3295, 127
        %v3297 = vshll.u32 %v3296, 23
        %v3298 = vor.u32 4788187, %v3297
        %v3299 = vand.u32 2147483647, %v3298
        %v3301 = vcvt.s32.f32 %v3294
        %v3302 = vmul.f32 %v3301, %v3299
        %v3303 = vxor.u32 %v3302, 2147483648
        %v3304 = vsel %vm3221, %v3303, %v3302
        %v3305 = vsub.s32 4, %v3281
        %v3306 = vsel %vm3221, %v3305, %v3281
        %v3307 = vsel %vm3220, %v2448, %v3304
        %v3308 = vsel %vm3220, 0, %v3306
        %v3309 = vcosq.f32.pop %v3307
        %v3310 = vsinq.f32.pop %v3307
        %vm3311 = vweird.f32 %v2448
        %v3312 = vadd.s32 %v3308, 3
        %v3313 = vand.u32 %v3312, 3
        %vm3314 = vcmp.lt.s32.totalorder %v3313, 2
        %vm3315 = vcmp.eq.s32.totalorder %v3313, 0
        %v3316 = vxor.u32 %v3310, 2147483648
        %v3317 = vsel %vm3315, %v3309, %v3316
        %vm3318 = vcmp.eq.s32.totalorder %v3313, 2
        %v3319 = vxor.u32 %v3309, 2147483648
        %v3320 = vsel %vm3318, %v3319, %v3310
        %v3321 = vsel %vm3314, %v3317, %v3320
        %v3322 = vsel %vm3311, nan, %v3321
        %v3323 = vand.u32 2147483647, %v2453
        %vm3324 = vcmp.le.f32.partialorder %v3323, 0.7853982
        %vm3325 = vcmp.lt.s32.totalorder %v2453, 0
        %v3326 = vand.u32 %v2453, 2139095040
        %v3327 = vshrl.u32 %v3326, 23
        %v3328 = vsub.s32 %v3327, 127
        %v3329 = vand.u32 2147483647, %v2453
        %v3330 = vand.u32 %v3329, 8388607
        %v3331 = vor.u32 %v3330, 8388608
        %v3332 = vsub.s32 0, %v3331
        %v3333 = vadd.s32 %v3328, 1
        %vm3334 = vcmp.gt.s32.totalorder %v3333, 0
        %v3335 = vsel %vm3334, %v3333, 0
        %v3336 = vshrl.u32 %v3335, 5
        %v3337 = vand.u32 %v3335, 31
        %v3338 = vsub.s32 32, %v3337
        %v3339 = vshrl.u32 683565275, %v3338
        %v3340 = vshll.u32 683565275, %v3337
        %v3341 = vshrl.u32 2475754826, %v3338
        %v3342 = vor.u32 %v3340, %v3341
        %v3343 = vshll.u32 2475754826, %v3337
        %v3344 = vshrl.u32 2131351028, %v3338
        %v3345 = vor.u32 %v3343, %v3344
        %v3346 = vshll.u32 2131351028, %v3337
        %v3347 = vshrl.u32 2102212464, %v3338
        %v3348 = vor.u32 %v3346, %v3347
        %v3349 = vshll.u32 2102212464, %v3337
        %v3350 = vshrl.u32 920167782, %v3338
        %v3351 = vor.u32 %v3349, %v3350
        %v3352 = vshll.u32 920167782, %v3337
        %v3353 = vshrl.u32 1326507024, %v3338
        %v3354 = vor.u32 %v3352, %v3353
        %vm3355 = vcmp.lt.s32.totalorder %v3336, 1
        %vm3356 = vcmp.lt.s32.totalorder %v3336, 2
        %vm3357 = vcmp.lt.s32.totalorder %v3336, 3
        %vm3358 = vcmp.lt.s32.totalorder %v3336, 4
        %v3359 = vsel %vm3355, %v3339, %v3342
        %v3360 = vsel %vm3358, %v3348, 2102212464
        %v3361 = vsel %vm3357, %v3345, %v3360
        %v3362 = vsel %vm3356, %v3359, %v3361
        %v3363 = vsel %vm3355, %v3342, %v3345
        %v3364 = vsel %vm3358, %v3351, 920167782
        %v3365 = vsel %vm3357, %v3348, %v3364
        %v3366 = vsel %vm3356, %v3363, %v3365
        %v3367 = vsel %vm3355, %v3345, %v3348
        %v3368 = vsel %vm3358, %v3354, 1326507024
        %v3369 = vsel %vm3357, %v3351, %v3368
        %v3370 = vsel %vm3356, %v3367, %v3369
        %v3371 = vshll.u32 %v3331, 8
        %v3372 = vmul.u32.u64.compose %v3371, %v3370
        %v3373 = vextract.low.u32 %v3372
        %v3374 = vextract.high.u32 %v3372
        %v3375 = vmul.u32.u64.compose %v3371, %v3366
        %v3376 = vextract.low.u32 %v3375
        %v3377 = vextract.high.u32 %v3375
        %v3378 = vmul.u32 %v3371, %v3362
        %v3379 = vadd.s32 %v3374, %v3376
        %vm3380 = vc.u32 %v3374, %v3376
        %v3381 = vadd.s32 %v3377, 1
        %v3382 = vsel %vm3380, %v3381, %v3377
        %v3383 = vadd.s32 %v3378, %v3382
        %v3384 = vadd.s32 %v3383, 536870912
        %v3385 = vshrl.u32 %v3384, 30
        %v3386 = vshll.u32 %v3385, 30
        %v3387 = vsub.s32 %v3383, %v3386
        %vm3388 = vcmp.lt.s32.totalorder %v3387, 0
        %v3389 = vsub.s32 0, %v3387
        %v3390 = vsel %vm3388, %v3389, %v3387
        %v3391 = vclz %v3390
        %v3392 = vsub.s32 %v3391, 2
        %vm3393 = vcmp.gt.s32.totalorder 0, %v3392
        %v3394 = vsel %vm3393, 0, %v3392
        %v3395 = vsub.s32 32, %v3394
        %v3396 = vshll.u32 %v3387, %v3394
        %v3397 = vshrl.u32 %v3379, %v3395
        %v3398 = vor.u32 %v3396, %v3397
        %v3399 = vsub.s32 4294967266, %v3394
        %v3400 = vadd.s32 %v3399, 127
        %v3401 = vshll.u32 %v3400, 23
        %v3402 = vor.u32 4788187, %v3401
        %v3403 = vand.u32 2147483647, %v3402
        %v3405 = vcvt.s32.f32 %v3398
        %v3406 = vmul.f32 %v3405, %v3403
        %v3407 = vxor.u32 %v3406, 2147483648
        %v3408 = vsel %vm3325, %v3407, %v3406
        %v3409 = vsub.s32 4, %v3385
        %v3410 = vsel %vm3325, %v3409, %v3385
        %v3411 = vsel %vm3324, %v2453, %v3408
        %v3412 = vsel %vm3324, 0, %v3410
        %v3413 = vcosq.f32.pop %v3411
        %v3414 = vsinq.f32.pop %v3411
        %vm3415 = vweird.f32 %v2453
        %v3416 = vadd.s32 %v3412, 3
        %v3417 = vand.u32 %v3416, 3
        %vm3418 = vcmp.lt.s32.totalorder %v3417, 2
        %vm3419 = vcmp.eq.s32.totalorder %v3417, 0
        %v3420 = vxor.u32 %v3414, 2147483648
        %v3421 = vsel %vm3419, %v3413, %v3420
        %vm3422 = vcmp.eq.s32.totalorder %v3417, 2
        %v3423 = vxor.u32 %v3413, 2147483648
        %v3424 = vsel %vm3422, %v3423, %v3414
        %v3425 = vsel %vm3418, %v3421, %v3424
        %v3426 = vsel %vm3415, nan, %v3425
        %v3427 = vand.u32 2147483647, %v2458
        %vm3428 = vcmp.le.f32.partialorder %v3427, 0.7853982
        %vm3429 = vcmp.lt.s32.totalorder %v2458, 0
        %v3430 = vand.u32 %v2458, 2139095040
        %v3431 = vshrl.u32 %v3430, 23
        %v3432 = vsub.s32 %v3431, 127
        %v3433 = vand.u32 2147483647, %v2458
        %v3434 = vand.u32 %v3433, 8388607
        %v3435 = vor.u32 %v3434, 8388608
        %v3436 = vsub.s32 0, %v3435
        %v3437 = vadd.s32 %v3432, 1
        %vm3438 = vcmp.gt.s32.totalorder %v3437, 0
        %v3439 = vsel %vm3438, %v3437, 0
        %v3440 = vshrl.u32 %v3439, 5
        %v3441 = vand.u32 %v3439, 31
        %v3442 = vsub.s32 32, %v3441
        %v3443 = vshrl.u32 683565275, %v3442
        %v3444 = vshll.u32 683565275, %v3441
        %v3445 = vshrl.u32 2475754826, %v3442
        %v3446 = vor.u32 %v3444, %v3445
        %v3447 = vshll.u32 2475754826, %v3441
        %v3448 = vshrl.u32 2131351028, %v3442
        %v3449 = vor.u32 %v3447, %v3448
        %v3450 = vshll.u32 2131351028, %v3441
        %v3451 = vshrl.u32 2102212464, %v3442
        %v3452 = vor.u32 %v3450, %v3451
        %v3453 = vshll.u32 2102212464, %v3441
        %v3454 = vshrl.u32 920167782, %v3442
        %v3455 = vor.u32 %v3453, %v3454
        %v3456 = vshll.u32 920167782, %v3441
        %v3457 = vshrl.u32 1326507024, %v3442
        %v3458 = vor.u32 %v3456, %v3457
        %vm3459 = vcmp.lt.s32.totalorder %v3440, 1
        %vm3460 = vcmp.lt.s32.totalorder %v3440, 2
        %vm3461 = vcmp.lt.s32.totalorder %v3440, 3
        %vm3462 = vcmp.lt.s32.totalorder %v3440, 4
        %v3463 = vsel %vm3459, %v3443, %v3446
        %v3464 = vsel %vm3462, %v3452, 2102212464
        %v3465 = vsel %vm3461, %v3449, %v3464
        %v3466 = vsel %vm3460, %v3463, %v3465
        %v3467 = vsel %vm3459, %v3446, %v3449
        %v3468 = vsel %vm3462, %v3455, 920167782
        %v3469 = vsel %vm3461, %v3452, %v3468
        %v3470 = vsel %vm3460, %v3467, %v3469
        %v3471 = vsel %vm3459, %v3449, %v3452
        %v3472 = vsel %vm3462, %v3458, 1326507024
        %v3473 = vsel %vm3461, %v3455, %v3472
        %v3474 = vsel %vm3460, %v3471, %v3473
        %v3475 = vshll.u32 %v3435, 8
        %v3476 = vmul.u32.u64.compose %v3475, %v3474
        %v3477 = vextract.low.u32 %v3476
        %v3478 = vextract.high.u32 %v3476
        %v3479 = vmul.u32.u64.compose %v3475, %v3470
        %v3480 = vextract.low.u32 %v3479
        %v3481 = vextract.high.u32 %v3479
        %v3482 = vmul.u32 %v3475, %v3466
        %v3483 = vadd.s32 %v3478, %v3480
        %vm3484 = vc.u32 %v3478, %v3480
        %v3485 = vadd.s32 %v3481, 1
        %v3486 = vsel %vm3484, %v3485, %v3481
        %v3487 = vadd.s32 %v3482, %v3486
        %v3488 = vadd.s32 %v3487, 536870912
        %v3489 = vshrl.u32 %v3488, 30
        %v3490 = vshll.u32 %v3489, 30
        %v3491 = vsub.s32 %v3487, %v3490
        %vm3492 = vcmp.lt.s32.totalorder %v3491, 0
        %v3493 = vsub.s32 0, %v3491
        %v3494 = vsel %vm3492, %v3493, %v3491
        %v3495 = vclz %v3494
        %v3496 = vsub.s32 %v3495, 2
        %vm3497 = vcmp.gt.s32.totalorder 0, %v3496
        %v3498 = vsel %vm3497, 0, %v3496
        %v3499 = vsub.s32 32, %v3498
        %v3500 = vshll.u32 %v3491, %v3498
        %v3501 = vshrl.u32 %v3483, %v3499
        %v3502 = vor.u32 %v3500, %v3501
        %v3503 = vsub.s32 4294967266, %v3498
        %v3504 = vadd.s32 %v3503, 127
        %v3505 = vshll.u32 %v3504, 23
        %v3506 = vor.u32 4788187, %v3505
        %v3507 = vand.u32 2147483647, %v3506
        %v3509 = vcvt.s32.f32 %v3502
        %v3510 = vmul.f32 %v3509, %v3507
        %v3511 = vxor.u32 %v3510, 2147483648
        %v3512 = vsel %vm3429, %v3511, %v3510
        %v3513 = vsub.s32 4, %v3489
        %v3514 = vsel %vm3429, %v3513, %v3489
        %v3515 = vsel %vm3428, %v2458, %v3512
        %v3516 = vsel %vm3428, 0, %v3514
        %v3517 = vcosq.f32.pop %v3515
        %v3518 = vsinq.f32.pop %v3515
        %vm3519 = vweird.f32 %v2458
        %v3520 = vadd.s32 %v3516, 3
        %v3521 = vand.u32 %v3520, 3
        %vm3522 = vcmp.lt.s32.totalorder %v3521, 2
        %vm3523 = vcmp.eq.s32.totalorder %v3521, 0
        %v3524 = vxor.u32 %v3518, 2147483648
        %v3525 = vsel %vm3523, %v3517, %v3524
        %vm3526 = vcmp.eq.s32.totalorder %v3521, 2
        %v3527 = vxor.u32 %v3517, 2147483648
        %v3528 = vsel %vm3526, %v3527, %v3518
        %v3529 = vsel %vm3522, %v3525, %v3528
        %v3530 = vsel %vm3519, nan, %v3529
        %v3531 = vand.u32 2147483647, %v2463
        %vm3532 = vcmp.le.f32.partialorder %v3531, 0.7853982
        %vm3533 = vcmp.lt.s32.totalorder %v2463, 0
        %v3534 = vand.u32 %v2463, 2139095040
        %v3535 = vshrl.u32 %v3534, 23
        %v3536 = vsub.s32 %v3535, 127
        %v3537 = vand.u32 2147483647, %v2463
        %v3538 = vand.u32 %v3537, 8388607
        %v3539 = vor.u32 %v3538, 8388608
        %v3540 = vsub.s32 0, %v3539
        %v3541 = vadd.s32 %v3536, 1
        %vm3542 = vcmp.gt.s32.totalorder %v3541, 0
        %v3543 = vsel %vm3542, %v3541, 0
        %v3544 = vshrl.u32 %v3543, 5
        %v3545 = vand.u32 %v3543, 31
        %v3546 = vsub.s32 32, %v3545
        %v3547 = vshrl.u32 683565275, %v3546
        %v3548 = vshll.u32 683565275, %v3545
        %v3549 = vshrl.u32 2475754826, %v3546
        %v3550 = vor.u32 %v3548, %v3549
        %v3551 = vshll.u32 2475754826, %v3545
        %v3552 = vshrl.u32 2131351028, %v3546
        %v3553 = vor.u32 %v3551, %v3552
        %v3554 = vshll.u32 2131351028, %v3545
        %v3555 = vshrl.u32 2102212464, %v3546
        %v3556 = vor.u32 %v3554, %v3555
        %v3557 = vshll.u32 2102212464, %v3545
        %v3558 = vshrl.u32 920167782, %v3546
        %v3559 = vor.u32 %v3557, %v3558
        %v3560 = vshll.u32 920167782, %v3545
        %v3561 = vshrl.u32 1326507024, %v3546
        %v3562 = vor.u32 %v3560, %v3561
        %vm3563 = vcmp.lt.s32.totalorder %v3544, 1
        %vm3564 = vcmp.lt.s32.totalorder %v3544, 2
        %vm3565 = vcmp.lt.s32.totalorder %v3544, 3
        %vm3566 = vcmp.lt.s32.totalorder %v3544, 4
        %v3567 = vsel %vm3563, %v3547, %v3550
        %v3568 = vsel %vm3566, %v3556, 2102212464
        %v3569 = vsel %vm3565, %v3553, %v3568
        %v3570 = vsel %vm3564, %v3567, %v3569
        %v3571 = vsel %vm3563, %v3550, %v3553
        %v3572 = vsel %vm3566, %v3559, 920167782
        %v3573 = vsel %vm3565, %v3556, %v3572
        %v3574 = vsel %vm3564, %v3571, %v3573
        %v3575 = vsel %vm3563, %v3553, %v3556
        %v3576 = vsel %vm3566, %v3562, 1326507024
        %v3577 = vsel %vm3565, %v3559, %v3576
        %v3578 = vsel %vm3564, %v3575, %v3577
        %v3579 = vshll.u32 %v3539, 8
        %v3580 = vmul.u32.u64.compose %v3579, %v3578
        %v3581 = vextract.low.u32 %v3580
        %v3582 = vextract.high.u32 %v3580
        %v3583 = vmul.u32.u64.compose %v3579, %v3574
        %v3584 = vextract.low.u32 %v3583
        %v3585 = vextract.high.u32 %v3583
        %v3586 = vmul.u32 %v3579, %v3570
        %v3587 = vadd.s32 %v3582, %v3584
        %vm3588 = vc.u32 %v3582, %v3584
        %v3589 = vadd.s32 %v3585, 1
        %v3590 = vsel %vm3588, %v3589, %v3585
        %v3591 = vadd.s32 %v3586, %v3590
        %v3592 = vadd.s32 %v3591, 536870912
        %v3593 = vshrl.u32 %v3592, 30
        %v3594 = vshll.u32 %v3593, 30
        %v3595 = vsub.s32 %v3591, %v3594
        %vm3596 = vcmp.lt.s32.totalorder %v3595, 0
        %v3597 = vsub.s32 0, %v3595
        %v3598 = vsel %vm3596, %v3597, %v3595
        %v3599 = vclz %v3598
        %v3600 = vsub.s32 %v3599, 2
        %vm3601 = vcmp.gt.s32.totalorder 0, %v3600
        %v3602 = vsel %vm3601, 0, %v3600
        %v3603 = vsub.s32 32, %v3602
        %v3604 = vshll.u32 %v3595, %v3602
        %v3605 = vshrl.u32 %v3587, %v3603
        %v3606 = vor.u32 %v3604, %v3605
        %v3607 = vsub.s32 4294967266, %v3602
        %v3608 = vadd.s32 %v3607, 127
        %v3609 = vshll.u32 %v3608, 23
        %v3610 = vor.u32 4788187, %v3609
        %v3611 = vand.u32 2147483647, %v3610
        %v3613 = vcvt.s32.f32 %v3606
        %v3614 = vmul.f32 %v3613, %v3611
        %v3615 = vxor.u32 %v3614, 2147483648
        %v3616 = vsel %vm3533, %v3615, %v3614
        %v3617 = vsub.s32 4, %v3593
        %v3618 = vsel %vm3533, %v3617, %v3593
        %v3619 = vsel %vm3532, %v2463, %v3616
        %v3620 = vsel %vm3532, 0, %v3618
        %v3621 = vcosq.f32.pop %v3619
        %v3622 = vsinq.f32.pop %v3619
        %vm3623 = vweird.f32 %v2463
        %v3624 = vadd.s32 %v3620, 3
        %v3625 = vand.u32 %v3624, 3
        %vm3626 = vcmp.lt.s32.totalorder %v3625, 2
        %vm3627 = vcmp.eq.s32.totalorder %v3625, 0
        %v3628 = vxor.u32 %v3622, 2147483648
        %v3629 = vsel %vm3627, %v3621, %v3628
        %vm3630 = vcmp.eq.s32.totalorder %v3625, 2
        %v3631 = vxor.u32 %v3621, 2147483648
        %v3632 = vsel %vm3630, %v3631, %v3622
        %v3633 = vsel %vm3626, %v3629, %v3632
        %v3634 = vsel %vm3623, nan, %v3633
        %v3635 = vand.u32 2147483647, %v2468
        %vm3636 = vcmp.le.f32.partialorder %v3635, 0.7853982
        %vm3637 = vcmp.lt.s32.totalorder %v2468, 0
        %v3638 = vand.u32 %v2468, 2139095040
        %v3639 = vshrl.u32 %v3638, 23
        %v3640 = vsub.s32 %v3639, 127
        %v3641 = vand.u32 2147483647, %v2468
        %v3642 = vand.u32 %v3641, 8388607
        %v3643 = vor.u32 %v3642, 8388608
        %v3644 = vsub.s32 0, %v3643
        %v3645 = vadd.s32 %v3640, 1
        %vm3646 = vcmp.gt.s32.totalorder %v3645, 0
        %v3647 = vsel %vm3646, %v3645, 0
        %v3648 = vshrl.u32 %v3647, 5
        %v3649 = vand.u32 %v3647, 31
        %v3650 = vsub.s32 32, %v3649
        %v3651 = vshrl.u32 683565275, %v3650
        %v3652 = vshll.u32 683565275, %v3649
        %v3653 = vshrl.u32 2475754826, %v3650
        %v3654 = vor.u32 %v3652, %v3653
        %v3655 = vshll.u32 2475754826, %v3649
        %v3656 = vshrl.u32 2131351028, %v3650
        %v3657 = vor.u32 %v3655, %v3656
        %v3658 = vshll.u32 2131351028, %v3649
        %v3659 = vshrl.u32 2102212464, %v3650
        %v3660 = vor.u32 %v3658, %v3659
        %v3661 = vshll.u32 2102212464, %v3649
        %v3662 = vshrl.u32 920167782, %v3650
        %v3663 = vor.u32 %v3661, %v3662
        %v3664 = vshll.u32 920167782, %v3649
        %v3665 = vshrl.u32 1326507024, %v3650
        %v3666 = vor.u32 %v3664, %v3665
        %vm3667 = vcmp.lt.s32.totalorder %v3648, 1
        %vm3668 = vcmp.lt.s32.totalorder %v3648, 2
        %vm3669 = vcmp.lt.s32.totalorder %v3648, 3
        %vm3670 = vcmp.lt.s32.totalorder %v3648, 4
        %v3671 = vsel %vm3667, %v3651, %v3654
        %v3672 = vsel %vm3670, %v3660, 2102212464
        %v3673 = vsel %vm3669, %v3657, %v3672
        %v3674 = vsel %vm3668, %v3671, %v3673
        %v3675 = vsel %vm3667, %v3654, %v3657
        %v3676 = vsel %vm3670, %v3663, 920167782
        %v3677 = vsel %vm3669, %v3660, %v3676
        %v3678 = vsel %vm3668, %v3675, %v3677
        %v3679 = vsel %vm3667, %v3657, %v3660
        %v3680 = vsel %vm3670, %v3666, 1326507024
        %v3681 = vsel %vm3669, %v3663, %v3680
        %v3682 = vsel %vm3668, %v3679, %v3681
        %v3683 = vshll.u32 %v3643, 8
        %v3684 = vmul.u32.u64.compose %v3683, %v3682
        %v3685 = vextract.low.u32 %v3684
        %v3686 = vextract.high.u32 %v3684
        %v3687 = vmul.u32.u64.compose %v3683, %v3678
        %v3688 = vextract.low.u32 %v3687
        %v3689 = vextract.high.u32 %v3687
        %v3690 = vmul.u32 %v3683, %v3674
        %v3691 = vadd.s32 %v3686, %v3688
        %vm3692 = vc.u32 %v3686, %v3688
        %v3693 = vadd.s32 %v3689, 1
        %v3694 = vsel %vm3692, %v3693, %v3689
        %v3695 = vadd.s32 %v3690, %v3694
        %v3696 = vadd.s32 %v3695, 536870912
        %v3697 = vshrl.u32 %v3696, 30
        %v3698 = vshll.u32 %v3697, 30
        %v3699 = vsub.s32 %v3695, %v3698
        %vm3700 = vcmp.lt.s32.totalorder %v3699, 0
        %v3701 = vsub.s32 0, %v3699
        %v3702 = vsel %vm3700, %v3701, %v3699
        %v3703 = vclz %v3702
        %v3704 = vsub.s32 %v3703, 2
        %vm3705 = vcmp.gt.s32.totalorder 0, %v3704
        %v3706 = vsel %vm3705, 0, %v3704
        %v3707 = vsub.s32 32, %v3706
        %v3708 = vshll.u32 %v3699, %v3706
        %v3709 = vshrl.u32 %v3691, %v3707
        %v3710 = vor.u32 %v3708, %v3709
        %v3711 = vsub.s32 4294967266, %v3706
        %v3712 = vadd.s32 %v3711, 127
        %v3713 = vshll.u32 %v3712, 23
        %v3714 = vor.u32 4788187, %v3713
        %v3715 = vand.u32 2147483647, %v3714
        %v3717 = vcvt.s32.f32 %v3710
        %v3718 = vmul.f32 %v3717, %v3715
        %v3719 = vxor.u32 %v3718, 2147483648
        %v3720 = vsel %vm3637, %v3719, %v3718
        %v3721 = vsub.s32 4, %v3697
        %v3722 = vsel %vm3637, %v3721, %v3697
        %v3723 = vsel %vm3636, %v2468, %v3720
        %v3724 = vsel %vm3636, 0, %v3722
        %v3725 = vcosq.f32.pop %v3723
        %v3726 = vsinq.f32.pop %v3723
        %vm3727 = vweird.f32 %v2468
        %v3728 = vadd.s32 %v3724, 3
        %v3729 = vand.u32 %v3728, 3
        %vm3730 = vcmp.lt.s32.totalorder %v3729, 2
        %vm3731 = vcmp.eq.s32.totalorder %v3729, 0
        %v3732 = vxor.u32 %v3726, 2147483648
        %v3733 = vsel %vm3731, %v3725, %v3732
        %vm3734 = vcmp.eq.s32.totalorder %v3729, 2
        %v3735 = vxor.u32 %v3725, 2147483648
        %v3736 = vsel %vm3734, %v3735, %v3726
        %v3737 = vsel %vm3730, %v3733, %v3736
        %v3738 = vsel %vm3727, nan, %v3737
        %v3739 = vand.u32 2147483647, %v2473
        %vm3740 = vcmp.le.f32.partialorder %v3739, 0.7853982
        %vm3741 = vcmp.lt.s32.totalorder %v2473, 0
        %v3742 = vand.u32 %v2473, 2139095040
        %v3743 = vshrl.u32 %v3742, 23
        %v3744 = vsub.s32 %v3743, 127
        %v3745 = vand.u32 2147483647, %v2473
        %v3746 = vand.u32 %v3745, 8388607
        %v3747 = vor.u32 %v3746, 8388608
        %v3748 = vsub.s32 0, %v3747
        %v3749 = vadd.s32 %v3744, 1
        %vm3750 = vcmp.gt.s32.totalorder %v3749, 0
        %v3751 = vsel %vm3750, %v3749, 0
        %v3752 = vshrl.u32 %v3751, 5
        %v3753 = vand.u32 %v3751, 31
        %v3754 = vsub.s32 32, %v3753
        %v3755 = vshrl.u32 683565275, %v3754
        %v3756 = vshll.u32 683565275, %v3753
        %v3757 = vshrl.u32 2475754826, %v3754
        %v3758 = vor.u32 %v3756, %v3757
        %v3759 = vshll.u32 2475754826, %v3753
        %v3760 = vshrl.u32 2131351028, %v3754
        %v3761 = vor.u32 %v3759, %v3760
        %v3762 = vshll.u32 2131351028, %v3753
        %v3763 = vshrl.u32 2102212464, %v3754
        %v3764 = vor.u32 %v3762, %v3763
        %v3765 = vshll.u32 2102212464, %v3753
        %v3766 = vshrl.u32 920167782, %v3754
        %v3767 = vor.u32 %v3765, %v3766
        %v3768 = vshll.u32 920167782, %v3753
        %v3769 = vshrl.u32 1326507024, %v3754
        %v3770 = vor.u32 %v3768, %v3769
        %vm3771 = vcmp.lt.s32.totalorder %v3752, 1
        %vm3772 = vcmp.lt.s32.totalorder %v3752, 2
        %vm3773 = vcmp.lt.s32.totalorder %v3752, 3
        %vm3774 = vcmp.lt.s32.totalorder %v3752, 4
        %v3775 = vsel %vm3771, %v3755, %v3758
        %v3776 = vsel %vm3774, %v3764, 2102212464
        %v3777 = vsel %vm3773, %v3761, %v3776
        %v3778 = vsel %vm3772, %v3775, %v3777
        %v3779 = vsel %vm3771, %v3758, %v3761
        %v3780 = vsel %vm3774, %v3767, 920167782
        %v3781 = vsel %vm3773, %v3764, %v3780
        %v3782 = vsel %vm3772, %v3779, %v3781
        %v3783 = vsel %vm3771, %v3761, %v3764
        %v3784 = vsel %vm3774, %v3770, 1326507024
        %v3785 = vsel %vm3773, %v3767, %v3784
        %v3786 = vsel %vm3772, %v3783, %v3785
        %v3787 = vshll.u32 %v3747, 8
        %v3788 = vmul.u32.u64.compose %v3787, %v3786
        %v3789 = vextract.low.u32 %v3788
        %v3790 = vextract.high.u32 %v3788
        %v3791 = vmul.u32.u64.compose %v3787, %v3782
        %v3792 = vextract.low.u32 %v3791
        %v3793 = vextract.high.u32 %v3791
        %v3794 = vmul.u32 %v3787, %v3778
        %v3795 = vadd.s32 %v3790, %v3792
        %vm3796 = vc.u32 %v3790, %v3792
        %v3797 = vadd.s32 %v3793, 1
        %v3798 = vsel %vm3796, %v3797, %v3793
        %v3799 = vadd.s32 %v3794, %v3798
        %v3800 = vadd.s32 %v3799, 536870912
        %v3801 = vshrl.u32 %v3800, 30
        %v3802 = vshll.u32 %v3801, 30
        %v3803 = vsub.s32 %v3799, %v3802
        %vm3804 = vcmp.lt.s32.totalorder %v3803, 0
        %v3805 = vsub.s32 0, %v3803
        %v3806 = vsel %vm3804, %v3805, %v3803
        %v3807 = vclz %v3806
        %v3808 = vsub.s32 %v3807, 2
        %vm3809 = vcmp.gt.s32.totalorder 0, %v3808
        %v3810 = vsel %vm3809, 0, %v3808
        %v3811 = vsub.s32 32, %v3810
        %v3812 = vshll.u32 %v3803, %v3810
        %v3813 = vshrl.u32 %v3795, %v3811
        %v3814 = vor.u32 %v3812, %v3813
        %v3815 = vsub.s32 4294967266, %v3810
        %v3816 = vadd.s32 %v3815, 127
        %v3817 = vshll.u32 %v3816, 23
        %v3818 = vor.u32 4788187, %v3817
        %v3819 = vand.u32 2147483647, %v3818
        %v3821 = vcvt.s32.f32 %v3814
        %v3822 = vmul.f32 %v3821, %v3819
        %v3823 = vxor.u32 %v3822, 2147483648
        %v3824 = vsel %vm3741, %v3823, %v3822
        %v3825 = vsub.s32 4, %v3801
        %v3826 = vsel %vm3741, %v3825, %v3801
        %v3827 = vsel %vm3740, %v2473, %v3824
        %v3828 = vsel %vm3740, 0, %v3826
        %v3829 = vcosq.f32.pop %v3827
        %v3830 = vsinq.f32.pop %v3827
        %vm3831 = vweird.f32 %v2473
        %v3832 = vadd.s32 %v3828, 3
        %v3833 = vand.u32 %v3832, 3
        %vm3834 = vcmp.lt.s32.totalorder %v3833, 2
        %vm3835 = vcmp.eq.s32.totalorder %v3833, 0
        %v3836 = vxor.u32 %v3830, 2147483648
        %v3837 = vsel %vm3835, %v3829, %v3836
        %vm3838 = vcmp.eq.s32.totalorder %v3833, 2
        %v3839 = vxor.u32 %v3829, 2147483648
        %v3840 = vsel %vm3838, %v3839, %v3830
        %v3841 = vsel %vm3834, %v3837, %v3840
        %v3842 = vsel %vm3831, nan, %v3841
        %v3843 = vand.u32 2147483647, %v2478
        %vm3844 = vcmp.le.f32.partialorder %v3843, 0.7853982
        %vm3845 = vcmp.lt.s32.totalorder %v2478, 0
        %v3846 = vand.u32 %v2478, 2139095040
        %v3847 = vshrl.u32 %v3846, 23
        %v3848 = vsub.s32 %v3847, 127
        %v3849 = vand.u32 2147483647, %v2478
        %v3850 = vand.u32 %v3849, 8388607
        %v3851 = vor.u32 %v3850, 8388608
        %v3852 = vsub.s32 0, %v3851
        %v3853 = vadd.s32 %v3848, 1
        %vm3854 = vcmp.gt.s32.totalorder %v3853, 0
        %v3855 = vsel %vm3854, %v3853, 0
        %v3856 = vshrl.u32 %v3855, 5
        %v3857 = vand.u32 %v3855, 31
        %v3858 = vsub.s32 32, %v3857
        %v3859 = vshrl.u32 683565275, %v3858
        %v3860 = vshll.u32 683565275, %v3857
        %v3861 = vshrl.u32 2475754826, %v3858
        %v3862 = vor.u32 %v3860, %v3861
        %v3863 = vshll.u32 2475754826, %v3857
        %v3864 = vshrl.u32 2131351028, %v3858
        %v3865 = vor.u32 %v3863, %v3864
        %v3866 = vshll.u32 2131351028, %v3857
        %v3867 = vshrl.u32 2102212464, %v3858
        %v3868 = vor.u32 %v3866, %v3867
        %v3869 = vshll.u32 2102212464, %v3857
        %v3870 = vshrl.u32 920167782, %v3858
        %v3871 = vor.u32 %v3869, %v3870
        %v3872 = vshll.u32 920167782, %v3857
        %v3873 = vshrl.u32 1326507024, %v3858
        %v3874 = vor.u32 %v3872, %v3873
        %vm3875 = vcmp.lt.s32.totalorder %v3856, 1
        %vm3876 = vcmp.lt.s32.totalorder %v3856, 2
        %vm3877 = vcmp.lt.s32.totalorder %v3856, 3
        %vm3878 = vcmp.lt.s32.totalorder %v3856, 4
        %v3879 = vsel %vm3875, %v3859, %v3862
        %v3880 = vsel %vm3878, %v3868, 2102212464
        %v3881 = vsel %vm3877, %v3865, %v3880
        %v3882 = vsel %vm3876, %v3879, %v3881
        %v3883 = vsel %vm3875, %v3862, %v3865
        %v3884 = vsel %vm3878, %v3871, 920167782
        %v3885 = vsel %vm3877, %v3868, %v3884
        %v3886 = vsel %vm3876, %v3883, %v3885
        %v3887 = vsel %vm3875, %v3865, %v3868
        %v3888 = vsel %vm3878, %v3874, 1326507024
        %v3889 = vsel %vm3877, %v3871, %v3888
        %v3890 = vsel %vm3876, %v3887, %v3889
        %v3891 = vshll.u32 %v3851, 8
        %v3892 = vmul.u32.u64.compose %v3891, %v3890
        %v3893 = vextract.low.u32 %v3892
        %v3894 = vextract.high.u32 %v3892
        %v3895 = vmul.u32.u64.compose %v3891, %v3886
        %v3896 = vextract.low.u32 %v3895
        %v3897 = vextract.high.u32 %v3895
        %v3898 = vmul.u32 %v3891, %v3882
        %v3899 = vadd.s32 %v3894, %v3896
        %vm3900 = vc.u32 %v3894, %v3896
        %v3901 = vadd.s32 %v3897, 1
        %v3902 = vsel %vm3900, %v3901, %v3897
        %v3903 = vadd.s32 %v3898, %v3902
        %v3904 = vadd.s32 %v3903, 536870912
        %v3905 = vshrl.u32 %v3904, 30
        %v3906 = vshll.u32 %v3905, 30
        %v3907 = vsub.s32 %v3903, %v3906
        %vm3908 = vcmp.lt.s32.totalorder %v3907, 0
        %v3909 = vsub.s32 0, %v3907
        %v3910 = vsel %vm3908, %v3909, %v3907
        %v3911 = vclz %v3910
        %v3912 = vsub.s32 %v3911, 2
        %vm3913 = vcmp.gt.s32.totalorder 0, %v3912
        %v3914 = vsel %vm3913, 0, %v3912
        %v3915 = vsub.s32 32, %v3914
        %v3916 = vshll.u32 %v3907, %v3914
        %v3917 = vshrl.u32 %v3899, %v3915
        %v3918 = vor.u32 %v3916, %v3917
        %v3919 = vsub.s32 4294967266, %v3914
        %v3920 = vadd.s32 %v3919, 127
        %v3921 = vshll.u32 %v3920, 23
        %v3922 = vor.u32 4788187, %v3921
        %v3923 = vand.u32 2147483647, %v3922
        %v3925 = vcvt.s32.f32 %v3918
        %v3926 = vmul.f32 %v3925, %v3923
        %v3927 = vxor.u32 %v3926, 2147483648
        %v3928 = vsel %vm3845, %v3927, %v3926
        %v3929 = vsub.s32 4, %v3905
        %v3930 = vsel %vm3845, %v3929, %v3905
        %v3931 = vsel %vm3844, %v2478, %v3928
        %v3932 = vsel %vm3844, 0, %v3930
        %v3933 = vcosq.f32.pop %v3931
        %v3934 = vsinq.f32.pop %v3931
        %vm3935 = vweird.f32 %v2478
        %v3936 = vadd.s32 %v3932, 3
        %v3937 = vand.u32 %v3936, 3
        %vm3938 = vcmp.lt.s32.totalorder %v3937, 2
        %vm3939 = vcmp.eq.s32.totalorder %v3937, 0
        %v3940 = vxor.u32 %v3934, 2147483648
        %v3941 = vsel %vm3939, %v3933, %v3940
        %vm3942 = vcmp.eq.s32.totalorder %v3937, 2
        %v3943 = vxor.u32 %v3933, 2147483648
        %v3944 = vsel %vm3942, %v3943, %v3934
        %v3945 = vsel %vm3938, %v3941, %v3944
        %v3946 = vsel %vm3935, nan, %v3945
        %v3947 = vand.u32 2147483647, %v2483
        %vm3948 = vcmp.le.f32.partialorder %v3947, 0.7853982
        %vm3949 = vcmp.lt.s32.totalorder %v2483, 0
        %v3950 = vand.u32 %v2483, 2139095040
        %v3951 = vshrl.u32 %v3950, 23
        %v3952 = vsub.s32 %v3951, 127
        %v3953 = vand.u32 2147483647, %v2483
        %v3954 = vand.u32 %v3953, 8388607
        %v3955 = vor.u32 %v3954, 8388608
        %v3956 = vsub.s32 0, %v3955
        %v3957 = vadd.s32 %v3952, 1
        %vm3958 = vcmp.gt.s32.totalorder %v3957, 0
        %v3959 = vsel %vm3958, %v3957, 0
        %v3960 = vshrl.u32 %v3959, 5
        %v3961 = vand.u32 %v3959, 31
        %v3962 = vsub.s32 32, %v3961
        %v3963 = vshrl.u32 683565275, %v3962
        %v3964 = vshll.u32 683565275, %v3961
        %v3965 = vshrl.u32 2475754826, %v3962
        %v3966 = vor.u32 %v3964, %v3965
        %v3967 = vshll.u32 2475754826, %v3961
        %v3968 = vshrl.u32 2131351028, %v3962
        %v3969 = vor.u32 %v3967, %v3968
        %v3970 = vshll.u32 2131351028, %v3961
        %v3971 = vshrl.u32 2102212464, %v3962
        %v3972 = vor.u32 %v3970, %v3971
        %v3973 = vshll.u32 2102212464, %v3961
        %v3974 = vshrl.u32 920167782, %v3962
        %v3975 = vor.u32 %v3973, %v3974
        %v3976 = vshll.u32 920167782, %v3961
        %v3977 = vshrl.u32 1326507024, %v3962
        %v3978 = vor.u32 %v3976, %v3977
        %vm3979 = vcmp.lt.s32.totalorder %v3960, 1
        %vm3980 = vcmp.lt.s32.totalorder %v3960, 2
        %vm3981 = vcmp.lt.s32.totalorder %v3960, 3
        %vm3982 = vcmp.lt.s32.totalorder %v3960, 4
        %v3983 = vsel %vm3979, %v3963, %v3966
        %v3984 = vsel %vm3982, %v3972, 2102212464
        %v3985 = vsel %vm3981, %v3969, %v3984
        %v3986 = vsel %vm3980, %v3983, %v3985
        %v3987 = vsel %vm3979, %v3966, %v3969
        %v3988 = vsel %vm3982, %v3975, 920167782
        %v3989 = vsel %vm3981, %v3972, %v3988
        %v3990 = vsel %vm3980, %v3987, %v3989
        %v3991 = vsel %vm3979, %v3969, %v3972
        %v3992 = vsel %vm3982, %v3978, 1326507024
        %v3993 = vsel %vm3981, %v3975, %v3992
        %v3994 = vsel %vm3980, %v3991, %v3993
        %v3995 = vshll.u32 %v3955, 8
        %v3996 = vmul.u32.u64.compose %v3995, %v3994
        %v3997 = vextract.low.u32 %v3996
        %v3998 = vextract.high.u32 %v3996
        %v3999 = vmul.u32.u64.compose %v3995, %v3990
        %v4000 = vextract.low.u32 %v3999
        %v4001 = vextract.high.u32 %v3999
        %v4002 = vmul.u32 %v3995, %v3986
        %v4003 = vadd.s32 %v3998, %v4000
        %vm4004 = vc.u32 %v3998, %v4000
        %v4005 = vadd.s32 %v4001, 1
        %v4006 = vsel %vm4004, %v4005, %v4001
        %v4007 = vadd.s32 %v4002, %v4006
        %v4008 = vadd.s32 %v4007, 536870912
        %v4009 = vshrl.u32 %v4008, 30
        %v4010 = vshll.u32 %v4009, 30
        %v4011 = vsub.s32 %v4007, %v4010
        %vm4012 = vcmp.lt.s32.totalorder %v4011, 0
        %v4013 = vsub.s32 0, %v4011
        %v4014 = vsel %vm4012, %v4013, %v4011
        %v4015 = vclz %v4014
        %v4016 = vsub.s32 %v4015, 2
        %vm4017 = vcmp.gt.s32.totalorder 0, %v4016
        %v4018 = vsel %vm4017, 0, %v4016
        %v4019 = vsub.s32 32, %v4018
        %v4020 = vshll.u32 %v4011, %v4018
        %v4021 = vshrl.u32 %v4003, %v4019
        %v4022 = vor.u32 %v4020, %v4021
        %v4023 = vsub.s32 4294967266, %v4018
        %v4024 = vadd.s32 %v4023, 127
        %v4025 = vshll.u32 %v4024, 23
        %v4026 = vor.u32 4788187, %v4025
        %v4027 = vand.u32 2147483647, %v4026
        %v4029 = vcvt.s32.f32 %v4022
        %v4030 = vmul.f32 %v4029, %v4027
        %v4031 = vxor.u32 %v4030, 2147483648
        %v4032 = vsel %vm3949, %v4031, %v4030
        %v4033 = vsub.s32 4, %v4009
        %v4034 = vsel %vm3949, %v4033, %v4009
        %v4035 = vsel %vm3948, %v2483, %v4032
        %v4036 = vsel %vm3948, 0, %v4034
        %v4037 = vcosq.f32.pop %v4035
        %v4038 = vsinq.f32.pop %v4035
        %vm4039 = vweird.f32 %v2483
        %v4040 = vadd.s32 %v4036, 3
        %v4041 = vand.u32 %v4040, 3
        %vm4042 = vcmp.lt.s32.totalorder %v4041, 2
        %vm4043 = vcmp.eq.s32.totalorder %v4041, 0
        %v4044 = vxor.u32 %v4038, 2147483648
        %v4045 = vsel %vm4043, %v4037, %v4044
        %vm4046 = vcmp.eq.s32.totalorder %v4041, 2
        %v4047 = vxor.u32 %v4037, 2147483648
        %v4048 = vsel %vm4046, %v4047, %v4038
        %v4049 = vsel %vm4042, %v4045, %v4048
        %v4050 = vsel %vm4039, nan, %v4049
        %v4051 = vand.u32 2147483647, %v2488
        %vm4052 = vcmp.le.f32.partialorder %v4051, 0.7853982
        %vm4053 = vcmp.lt.s32.totalorder %v2488, 0
        %v4054 = vand.u32 %v2488, 2139095040
        %v4055 = vshrl.u32 %v4054, 23
        %v4056 = vsub.s32 %v4055, 127
        %v4057 = vand.u32 2147483647, %v2488
        %v4058 = vand.u32 %v4057, 8388607
        %v4059 = vor.u32 %v4058, 8388608
        %v4060 = vsub.s32 0, %v4059
        %v4061 = vadd.s32 %v4056, 1
        %vm4062 = vcmp.gt.s32.totalorder %v4061, 0
        %v4063 = vsel %vm4062, %v4061, 0
        %v4064 = vshrl.u32 %v4063, 5
        %v4065 = vand.u32 %v4063, 31
        %v4066 = vsub.s32 32, %v4065
        %v4067 = vshrl.u32 683565275, %v4066
        %v4068 = vshll.u32 683565275, %v4065
        %v4069 = vshrl.u32 2475754826, %v4066
        %v4070 = vor.u32 %v4068, %v4069
        %v4071 = vshll.u32 2475754826, %v4065
        %v4072 = vshrl.u32 2131351028, %v4066
        %v4073 = vor.u32 %v4071, %v4072
        %v4074 = vshll.u32 2131351028, %v4065
        %v4075 = vshrl.u32 2102212464, %v4066
        %v4076 = vor.u32 %v4074, %v4075
        %v4077 = vshll.u32 2102212464, %v4065
        %v4078 = vshrl.u32 920167782, %v4066
        %v4079 = vor.u32 %v4077, %v4078
        %v4080 = vshll.u32 920167782, %v4065
        %v4081 = vshrl.u32 1326507024, %v4066
        %v4082 = vor.u32 %v4080, %v4081
        %vm4083 = vcmp.lt.s32.totalorder %v4064, 1
        %vm4084 = vcmp.lt.s32.totalorder %v4064, 2
        %vm4085 = vcmp.lt.s32.totalorder %v4064, 3
        %vm4086 = vcmp.lt.s32.totalorder %v4064, 4
        %v4087 = vsel %vm4083, %v4067, %v4070
        %v4088 = vsel %vm4086, %v4076, 2102212464
        %v4089 = vsel %vm4085, %v4073, %v4088
        %v4090 = vsel %vm4084, %v4087, %v4089
        %v4091 = vsel %vm4083, %v4070, %v4073
        %v4092 = vsel %vm4086, %v4079, 920167782
        %v4093 = vsel %vm4085, %v4076, %v4092
        %v4094 = vsel %vm4084, %v4091, %v4093
        %v4095 = vsel %vm4083, %v4073, %v4076
        %v4096 = vsel %vm4086, %v4082, 1326507024
        %v4097 = vsel %vm4085, %v4079, %v4096
        %v4098 = vsel %vm4084, %v4095, %v4097
        %v4099 = vshll.u32 %v4059, 8
        %v4100 = vmul.u32.u64.compose %v4099, %v4098
        %v4101 = vextract.low.u32 %v4100
        %v4102 = vextract.high.u32 %v4100
        %v4103 = vmul.u32.u64.compose %v4099, %v4094
        %v4104 = vextract.low.u32 %v4103
        %v4105 = vextract.high.u32 %v4103
        %v4106 = vmul.u32 %v4099, %v4090
        %v4107 = vadd.s32 %v4102, %v4104
        %vm4108 = vc.u32 %v4102, %v4104
        %v4109 = vadd.s32 %v4105, 1
        %v4110 = vsel %vm4108, %v4109, %v4105
        %v4111 = vadd.s32 %v4106, %v4110
        %v4112 = vadd.s32 %v4111, 536870912
        %v4113 = vshrl.u32 %v4112, 30
        %v4114 = vshll.u32 %v4113, 30
        %v4115 = vsub.s32 %v4111, %v4114
        %vm4116 = vcmp.lt.s32.totalorder %v4115, 0
        %v4117 = vsub.s32 0, %v4115
        %v4118 = vsel %vm4116, %v4117, %v4115
        %v4119 = vclz %v4118
        %v4120 = vsub.s32 %v4119, 2
        %vm4121 = vcmp.gt.s32.totalorder 0, %v4120
        %v4122 = vsel %vm4121, 0, %v4120
        %v4123 = vsub.s32 32, %v4122
        %v4124 = vshll.u32 %v4115, %v4122
        %v4125 = vshrl.u32 %v4107, %v4123
        %v4126 = vor.u32 %v4124, %v4125
        %v4127 = vsub.s32 4294967266, %v4122
        %v4128 = vadd.s32 %v4127, 127
        %v4129 = vshll.u32 %v4128, 23
        %v4130 = vor.u32 4788187, %v4129
        %v4131 = vand.u32 2147483647, %v4130
        %v4133 = vcvt.s32.f32 %v4126
        %v4134 = vmul.f32 %v4133, %v4131
        %v4135 = vxor.u32 %v4134, 2147483648
        %v4136 = vsel %vm4053, %v4135, %v4134
        %v4137 = vsub.s32 4, %v4113
        %v4138 = vsel %vm4053, %v4137, %v4113
        %v4139 = vsel %vm4052, %v2488, %v4136
        %v4140 = vsel %vm4052, 0, %v4138
        %v4141 = vcosq.f32.pop %v4139
        %v4142 = vsinq.f32.pop %v4139
        %vm4143 = vweird.f32 %v2488
        %v4144 = vadd.s32 %v4140, 3
        %v4145 = vand.u32 %v4144, 3
        %vm4146 = vcmp.lt.s32.totalorder %v4145, 2
        %vm4147 = vcmp.eq.s32.totalorder %v4145, 0
        %v4148 = vxor.u32 %v4142, 2147483648
        %v4149 = vsel %vm4147, %v4141, %v4148
        %vm4150 = vcmp.eq.s32.totalorder %v4145, 2
        %v4151 = vxor.u32 %v4141, 2147483648
        %v4152 = vsel %vm4150, %v4151, %v4142
        %v4153 = vsel %vm4146, %v4149, %v4152
        %v4154 = vsel %vm4143, nan, %v4153
        %v4155 = vld [vmem:[%s5] sm:$0xff]
        %v4156 = vld [vmem:[%s5 + $0x8] sm:$0xff]
        %v4157 = vld [vmem:[%s5 + $0x10] sm:$0xff]
        %v4158 = vld [vmem:[%s5 + $0x18] sm:$0xff]
        %v4159 = vld [vmem:[%s5 + $0x20] sm:$0xff]
        %v4160 = vld [vmem:[%s5 + $0x28] sm:$0xff]
        %v4161 = vld [vmem:[%s5 + $0x30] sm:$0xff]
        %v4162 = vld [vmem:[%s5 + $0x38] sm:$0xff]
        %v4163 = vld [vmem:[%s5 + $0x40] sm:$0xff]
        %v4164 = vld [vmem:[%s5 + $0x48] sm:$0xff]
        %v4165 = vld [vmem:[%s5 + $0x50] sm:$0xff]
        %v4166 = vld [vmem:[%s5 + $0x58] sm:$0xff]
        %v4167 = vld [vmem:[%s5 + $0x60] sm:$0xff]
        %v4168 = vld [vmem:[%s5 + $0x68] sm:$0xff]
        %v4169 = vld [vmem:[%s5 + $0x70] sm:$0xff]
        %v4170 = vld [vmem:[%s5 + $0x78] sm:$0xff]
        %v4171 = vld [vmem:[%s6] sm:$0xff]
        %v4172 = vld [vmem:[%s6 + $0x8] sm:$0xff]
        %v4173 = vld [vmem:[%s6 + $0x10] sm:$0x1f]
        %v4175 = vsel %vm510, %v4173, 0
        %4177 = vmatprep.subr.mxu0 0.0
        %4178 = vmatpush1.msra.mxu0 0.0
        %4179 = vmatprep.subr.mxu0 0.0
        %4180 = vmatpush1.msra.mxu0 0.0
        %4181 = vmatprep.subr.mxu0 0.0
        %4182 = vmatpush1.msra.mxu0 0.0
        %4183 = vmatprep.subr.mxu0 0.0
        %4184 = vmatpush1.msra.mxu0 0.0
        %4185 = vmatprep.subr.mxu0 0.0
        %4186 = vmatpush1.msra.mxu0 0.0
        %4187 = vmatprep.subr.mxu0 0.0
        %4188 = vmatpush1.msra.mxu0 0.0
        %4189 = vmatprep.subr.mxu0 0.0
        %4190 = vmatpush1.msra.mxu0 0.0
        %4191 = vmatprep.subr.mxu0 0.0
        %4192 = vmatpush1.msra.mxu0 0.0
        %4193 = vmatprep.subr.mxu0 0.0
        %4194 = vmatpush1.msra.mxu0 0.0
        %4195 = vmatprep.subr.mxu0 0.0
        %4196 = vmatpush1.msra.mxu0 0.0
        %4197 = vmatprep.subr.mxu0 0.0
        %4198 = vmatpush1.msra.mxu0 0.0
        %4199 = vmatprep.subr.mxu0 0.0
        %4200 = vmatpush1.msra.mxu0 0.0
        %4201 = vmatprep.subr.mxu0 0.0
        %4202 = vmatpush1.msra.mxu0 0.0
        %4203 = vmatprep.subr.mxu0 0.0
        %4204 = vmatpush1.msra.mxu0 %v4175
        %4205 = vmatprep.subr.mxu0 0.0
        %4206 = vmatpush1.msra.mxu0 %v4172
        %4207 = vmatprep.subr.mxu0 0.0
        %4208 = vmatpush1.msra.mxu0 %v4171
        %4209 = vmatprep.subr.mxu0 0.0
        %4210 = vmatpush2.msra.mxu0 0.0
        %4211 = vmatprep.subr.mxu0 0.0
        %4212 = vmatpush2.msra.mxu0 0.0
        %4213 = vmatprep.subr.mxu0 0.0
        %4214 = vmatpush2.msra.mxu0 0.0
        %4215 = vmatprep.subr.mxu0 0.0
        %4216 = vmatpush2.msra.mxu0 0.0
        %4217 = vmatprep.subr.mxu0 0.0
        %4218 = vmatpush2.msra.mxu0 0.0
        %4219 = vmatprep.subr.mxu0 0.0
        %4220 = vmatpush2.msra.mxu0 0.0
        %4221 = vmatprep.subr.mxu0 0.0
        %4222 = vmatpush2.msra.mxu0 0.0
        %4223 = vmatprep.subr.mxu0 0.0
        %4224 = vmatpush2.msra.mxu0 0.0
        %4225 = vmatprep.subr.mxu0 0.0
        %4226 = vmatpush2.msra.mxu0 0.0
        %4227 = vmatprep.subr.mxu0 0.0
        %4228 = vmatpush2.msra.mxu0 0.0
        %4229 = vmatprep.subr.mxu0 0.0
        %4230 = vmatpush2.msra.mxu0 0.0
        %4231 = vmatprep.subr.mxu0 0.0
        %4232 = vmatpush2.msra.mxu0 0.0
        %4233 = vmatprep.subr.mxu0 0.0
        %4234 = vmatpush2.msra.mxu0 0.0
        %4235 = vmatprep.subr.mxu0 0.0
        %4236 = vmatpush2.msra.mxu0 0.0
        %4237 = vmatprep.subr.mxu0 0.0
        %4238 = vmatpush2.msra.mxu0 0.0
        %4239 = vmatprep.subr.mxu0 0.0
        %4240 = vmatpush2.msra.mxu0 0.0
        %4241 = vmatprep.mubr.f32.mxu0 0.0
        %4242 = vmatmul.mubr.f32.gmra.mxu0 %v463
        %v4243 = vpop.f32.mrf.mxu0
        %v4244 = vadd.f32 0.0, %v4243
        %v4245 = vpop.f32.mrf.mxu0
        %4246 = vmatprep.mubr.f32.mxu0 0.0
        %4247 = vmatmul.mubr.f32.gmra.mxu0 %v466
        %v4248 = vpop.f32.mrf.mxu0
        %v4249 = vadd.f32 0.0, %v4248
        %v4250 = vpop.f32.mrf.mxu0
        %4251 = vmatprep.mubr.f32.mxu0 0.0
        %4252 = vmatmul.mubr.f32.gmra.mxu0 %v469
        %v4253 = vpop.f32.mrf.mxu0
        %v4254 = vadd.f32 0.0, %v4253
        %v4255 = vpop.f32.mrf.mxu0
        %4256 = vmatprep.mubr.f32.mxu0 0.0
        %4257 = vmatmul.mubr.f32.gmra.mxu0 %v472
        %v4258 = vpop.f32.mrf.mxu0
        %v4259 = vadd.f32 0.0, %v4258
        %v4260 = vpop.f32.mrf.mxu0
        %4261 = vmatprep.mubr.f32.mxu0 0.0
        %4262 = vmatmul.mubr.f32.gmra.mxu0 %v475
        %v4263 = vpop.f32.mrf.mxu0
        %v4264 = vadd.f32 0.0, %v4263
        %v4265 = vpop.f32.mrf.mxu0
        %4266 = vmatprep.mubr.f32.mxu0 0.0
        %4267 = vmatmul.mubr.f32.gmra.mxu0 %v478
        %v4268 = vpop.f32.mrf.mxu0
        %v4269 = vadd.f32 0.0, %v4268
        %v4270 = vpop.f32.mrf.mxu0
        %4271 = vmatprep.mubr.f32.mxu0 0.0
        %4272 = vmatmul.mubr.f32.gmra.mxu0 %v481
        %v4273 = vpop.f32.mrf.mxu0
        %v4274 = vadd.f32 0.0, %v4273
        %v4275 = vpop.f32.mrf.mxu0
        %4276 = vmatprep.mubr.f32.mxu0 0.0
        %4277 = vmatmul.mubr.f32.gmra.mxu0 %v484
        %v4278 = vpop.f32.mrf.mxu0
        %v4279 = vadd.f32 0.0, %v4278
        %v4280 = vpop.f32.mrf.mxu0
        %4281 = vmatprep.mubr.f32.mxu0 0.0
        %4282 = vmatmul.mubr.f32.gmra.mxu0 %v487
        %v4283 = vpop.f32.mrf.mxu0
        %v4284 = vadd.f32 0.0, %v4283
        %v4285 = vpop.f32.mrf.mxu0
        %4286 = vmatprep.mubr.f32.mxu0 0.0
        %4287 = vmatmul.mubr.f32.gmra.mxu0 %v490
        %v4288 = vpop.f32.mrf.mxu0
        %v4289 = vadd.f32 0.0, %v4288
        %v4290 = vpop.f32.mrf.mxu0
        %4291 = vmatprep.mubr.f32.mxu0 0.0
        %4292 = vmatmul.mubr.f32.gmra.mxu0 %v493
        %v4293 = vpop.f32.mrf.mxu0
        %v4294 = vadd.f32 0.0, %v4293
        %v4295 = vpop.f32.mrf.mxu0
        %4296 = vmatprep.mubr.f32.mxu0 0.0
        %4297 = vmatmul.mubr.f32.gmra.mxu0 %v496
        %v4298 = vpop.f32.mrf.mxu0
        %v4299 = vadd.f32 0.0, %v4298
        %v4300 = vpop.f32.mrf.mxu0
        %4301 = vmatprep.mubr.f32.mxu0 0.0
        %4302 = vmatmul.mubr.f32.gmra.mxu0 %v499
        %v4303 = vpop.f32.mrf.mxu0
        %v4304 = vadd.f32 0.0, %v4303
        %v4305 = vpop.f32.mrf.mxu0
        %4306 = vmatprep.mubr.f32.mxu0 0.0
        %4307 = vmatmul.mubr.f32.gmra.mxu0 %v502
        %v4308 = vpop.f32.mrf.mxu0
        %v4309 = vadd.f32 0.0, %v4308
        %v4310 = vpop.f32.mrf.mxu0
        %4311 = vmatprep.mubr.f32.mxu0 0.0
        %4312 = vmatmul.mubr.f32.gmra.mxu0 %v505
        %v4313 = vpop.f32.mrf.mxu0
        %v4314 = vadd.f32 0.0, %v4313
        %v4315 = vpop.f32.mrf.mxu0
        %4316 = vmatprep.mubr.f32.mxu0 0.0
        %4317 = vmatmul.mubr.f32.gmra.mxu0 %v508
        %v4318 = vpop.f32.mrf.mxu0
        %v4319 = vadd.f32 0.0, %v4318
        %v4320 = vpop.f32.mrf.mxu0
        %4321 = vdwg.mxu0
        %4322 = vmatprep.subr.mxu0 0.0
        %4323 = vmatpush1.msra.mxu0 %v4170
        %4324 = vmatprep.subr.mxu0 0.0
        %4325 = vmatpush1.msra.mxu0 %v4169
        %4326 = vmatprep.subr.mxu0 0.0
        %4327 = vmatpush1.msra.mxu0 %v4168
        %4328 = vmatprep.subr.mxu0 0.0
        %4329 = vmatpush1.msra.mxu0 %v4167
        %4330 = vmatprep.subr.mxu0 0.0
        %4331 = vmatpush1.msra.mxu0 %v4166
        %4332 = vmatprep.subr.mxu0 0.0
        %4333 = vmatpush1.msra.mxu0 %v4165
        %4334 = vmatprep.subr.mxu0 0.0
        %4335 = vmatpush1.msra.mxu0 %v4164
        %4336 = vmatprep.subr.mxu0 0.0
        %4337 = vmatpush1.msra.mxu0 %v4163
        %4338 = vmatprep.subr.mxu0 0.0
        %4339 = vmatpush1.msra.mxu0 %v4162
        %4340 = vmatprep.subr.mxu0 0.0
        %4341 = vmatpush1.msra.mxu0 %v4161
        %4342 = vmatprep.subr.mxu0 0.0
        %4343 = vmatpush1.msra.mxu0 %v4160
        %4344 = vmatprep.subr.mxu0 0.0
        %4345 = vmatpush1.msra.mxu0 %v4159
        %4346 = vmatprep.subr.mxu0 0.0
        %4347 = vmatpush1.msra.mxu0 %v4158
        %4348 = vmatprep.subr.mxu0 0.0
        %4349 = vmatpush1.msra.mxu0 %v4157
        %4350 = vmatprep.subr.mxu0 0.0
        %4351 = vmatpush1.msra.mxu0 %v4156
        %4352 = vmatprep.subr.mxu0 0.0
        %4353 = vmatpush1.msra.mxu0 %v4155
        %4354 = vmatprep.subr.mxu0 0.0
        %4355 = vmatpush2.msra.mxu0 0.0
        %4356 = vmatprep.subr.mxu0 0.0
        %4357 = vmatpush2.msra.mxu0 0.0
        %4358 = vmatprep.subr.mxu0 0.0
        %4359 = vmatpush2.msra.mxu0 0.0
        %4360 = vmatprep.subr.mxu0 0.0
        %4361 = vmatpush2.msra.mxu0 0.0
        %4362 = vmatprep.subr.mxu0 0.0
        %4363 = vmatpush2.msra.mxu0 0.0
        %4364 = vmatprep.subr.mxu0 0.0
        %4365 = vmatpush2.msra.mxu0 0.0
        %4366 = vmatprep.subr.mxu0 0.0
        %4367 = vmatpush2.msra.mxu0 0.0
        %4368 = vmatprep.subr.mxu0 0.0
        %4369 = vmatpush2.msra.mxu0 0.0
        %4370 = vmatprep.subr.mxu0 0.0
        %4371 = vmatpush2.msra.mxu0 0.0
        %4372 = vmatprep.subr.mxu0 0.0
        %4373 = vmatpush2.msra.mxu0 0.0
        %4374 = vmatprep.subr.mxu0 0.0
        %4375 = vmatpush2.msra.mxu0 0.0
        %4376 = vmatprep.subr.mxu0 0.0
        %4377 = vmatpush2.msra.mxu0 0.0
        %4378 = vmatprep.subr.mxu0 0.0
        %4379 = vmatpush2.msra.mxu0 0.0
        %4380 = vmatprep.subr.mxu0 0.0
        %4381 = vmatpush2.msra.mxu0 0.0
        %4382 = vmatprep.subr.mxu0 0.0
        %4383 = vmatpush2.msra.mxu0 0.0
        %4384 = vmatprep.subr.mxu0 0.0
        %4385 = vmatpush2.msra.mxu0 0.0
        %4386 = vmatprep.mubr.f32.mxu0 0.0
        %4387 = vmatmul.mubr.f32.gmra.mxu0 %v2594
        %v4388 = vpop.f32.mrf.mxu0
        %v4389 = vadd.f32 %v4244, %v4388
        %v4390 = vpop.f32.mrf.mxu0
        %4391 = vmatprep.mubr.f32.mxu0 0.0
        %4392 = vmatmul.mubr.f32.gmra.mxu0 %v2698
        %v4393 = vpop.f32.mrf.mxu0
        %v4394 = vadd.f32 %v4249, %v4393
        %v4395 = vpop.f32.mrf.mxu0
        %4396 = vmatprep.mubr.f32.mxu0 0.0
        %4397 = vmatmul.mubr.f32.gmra.mxu0 %v2802
        %v4398 = vpop.f32.mrf.mxu0
        %v4399 = vadd.f32 %v4254, %v4398
        %v4400 = vpop.f32.mrf.mxu0
        %4401 = vmatprep.mubr.f32.mxu0 0.0
        %4402 = vmatmul.mubr.f32.gmra.mxu0 %v2906
        %v4403 = vpop.f32.mrf.mxu0
        %v4404 = vadd.f32 %v4259, %v4403
        %v4405 = vpop.f32.mrf.mxu0
        %4406 = vmatprep.mubr.f32.mxu0 0.0
        %4407 = vmatmul.mubr.f32.gmra.mxu0 %v3010
        %v4408 = vpop.f32.mrf.mxu0
        %v4409 = vadd.f32 %v4264, %v4408
        %v4410 = vpop.f32.mrf.mxu0
        %4411 = vmatprep.mubr.f32.mxu0 0.0
        %4412 = vmatmul.mubr.f32.gmra.mxu0 %v3114
        %v4413 = vpop.f32.mrf.mxu0
        %v4414 = vadd.f32 %v4269, %v4413
        %v4415 = vpop.f32.mrf.mxu0
        %4416 = vmatprep.mubr.f32.mxu0 0.0
        %4417 = vmatmul.mubr.f32.gmra.mxu0 %v3218
        %v4418 = vpop.f32.mrf.mxu0
        %v4419 = vadd.f32 %v4274, %v4418
        %v4420 = vpop.f32.mrf.mxu0
        %4421 = vmatprep.mubr.f32.mxu0 0.0
        %4422 = vmatmul.mubr.f32.gmra.mxu0 %v3322
        %v4423 = vpop.f32.mrf.mxu0
        %v4424 = vadd.f32 %v4279, %v4423
        %v4425 = vpop.f32.mrf.mxu0
        %4426 = vmatprep.mubr.f32.mxu0 0.0
        %4427 = vmatmul.mubr.f32.gmra.mxu0 %v3426
        %v4428 = vpop.f32.mrf.mxu0
        %v4429 = vadd.f32 %v4284, %v4428
        %v4430 = vpop.f32.mrf.mxu0
        %4431 = vmatprep.mubr.f32.mxu0 0.0
        %4432 = vmatmul.mubr.f32.gmra.mxu0 %v3530
        %v4433 = vpop.f32.mrf.mxu0
        %v4434 = vadd.f32 %v4289, %v4433
        %v4435 = vpop.f32.mrf.mxu0
        %4436 = vmatprep.mubr.f32.mxu0 0.0
        %4437 = vmatmul.mubr.f32.gmra.mxu0 %v3634
        %v4438 = vpop.f32.mrf.mxu0
        %v4439 = vadd.f32 %v4294, %v4438
        %v4440 = vpop.f32.mrf.mxu0
        %4441 = vmatprep.mubr.f32.mxu0 0.0
        %4442 = vmatmul.mubr.f32.gmra.mxu0 %v3738
        %v4443 = vpop.f32.mrf.mxu0
        %v4444 = vadd.f32 %v4299, %v4443
        %v4445 = vpop.f32.mrf.mxu0
        %4446 = vmatprep.mubr.f32.mxu0 0.0
        %4447 = vmatmul.mubr.f32.gmra.mxu0 %v3842
        %v4448 = vpop.f32.mrf.mxu0
        %v4449 = vadd.f32 %v4304, %v4448
        %v4450 = vpop.f32.mrf.mxu0
        %4451 = vmatprep.mubr.f32.mxu0 0.0
        %4452 = vmatmul.mubr.f32.gmra.mxu0 %v3946
        %v4453 = vpop.f32.mrf.mxu0
        %v4454 = vadd.f32 %v4309, %v4453
        %v4455 = vpop.f32.mrf.mxu0
        %4456 = vmatprep.mubr.f32.mxu0 0.0
        %4457 = vmatmul.mubr.f32.gmra.mxu0 %v4050
        %v4458 = vpop.f32.mrf.mxu0
        %v4459 = vadd.f32 %v4314, %v4458
        %v4460 = vpop.f32.mrf.mxu0
        %4461 = vmatprep.mubr.f32.mxu0 0.0
        %4462 = vmatmul.mubr.f32.gmra.mxu0 %v4154
        %v4463 = vpop.f32.mrf.mxu0
        %v4464 = vadd.f32 %v4319, %v4463
        %v4465 = vpop.f32.mrf.mxu0
        %4466 = vdwg.mxu0
        %v4467 = vld [vmem:[%s7] sm:$0x1]
        %v4469 = vlaneseq
        %v4470 = vshrl.u32 %v4469, 7
        %v4471 = vsub.s32 0, %v4470
        %v4472 = vrot.slane %v4467, %v4471
        %v4474 = vadd.f32 %v4389, %v4472
        %v4475 = vadd.f32 %v4394, %v4472
        %v4476 = vadd.f32 %v4399, %v4472
        %v4477 = vadd.f32 %v4404, %v4472
        %v4478 = vadd.f32 %v4409, %v4472
        %v4479 = vadd.f32 %v4414, %v4472
        %v4480 = vadd.f32 %v4419, %v4472
        %v4481 = vadd.f32 %v4424, %v4472
        %v4482 = vadd.f32 %v4429, %v4472
        %v4483 = vadd.f32 %v4434, %v4472
        %v4484 = vadd.f32 %v4439, %v4472
        %v4485 = vadd.f32 %v4444, %v4472
        %v4486 = vadd.f32 %v4449, %v4472
        %v4487 = vadd.f32 %v4454, %v4472
        %v4488 = vadd.f32 %v4459, %v4472
        %v4489 = vadd.f32 %v4464, %v4472
        %v4490 = vand.u32 2147483647, %v4474
        %vm4491 = vcmp.le.f32.partialorder %v4490, 0.7853982
        %vm4492 = vcmp.lt.s32.totalorder %v4474, 0
        %v4493 = vand.u32 %v4474, 2139095040
        %v4494 = vshrl.u32 %v4493, 23
        %v4495 = vsub.s32 %v4494, 127
        %v4496 = vand.u32 2147483647, %v4474
        %v4497 = vand.u32 %v4496, 8388607
        %v4498 = vor.u32 %v4497, 8388608
        %v4499 = vsub.s32 0, %v4498
        %v4500 = vadd.s32 %v4495, 1
        %vm4501 = vcmp.gt.s32.totalorder %v4500, 0
        %v4502 = vsel %vm4501, %v4500, 0
        %v4503 = vshrl.u32 %v4502, 5
        %v4504 = vand.u32 %v4502, 31
        %v4505 = vsub.s32 32, %v4504
        %v4506 = vshrl.u32 683565275, %v4505
        %v4507 = vshll.u32 683565275, %v4504
        %v4508 = vshrl.u32 2475754826, %v4505
        %v4509 = vor.u32 %v4507, %v4508
        %v4510 = vshll.u32 2475754826, %v4504
        %v4511 = vshrl.u32 2131351028, %v4505
        %v4512 = vor.u32 %v4510, %v4511
        %v4513 = vshll.u32 2131351028, %v4504
        %v4514 = vshrl.u32 2102212464, %v4505
        %v4515 = vor.u32 %v4513, %v4514
        %v4516 = vshll.u32 2102212464, %v4504
        %v4517 = vshrl.u32 920167782, %v4505
        %v4518 = vor.u32 %v4516, %v4517
        %v4519 = vshll.u32 920167782, %v4504
        %v4520 = vshrl.u32 1326507024, %v4505
        %v4521 = vor.u32 %v4519, %v4520
        %vm4522 = vcmp.lt.s32.totalorder %v4503, 1
        %vm4523 = vcmp.lt.s32.totalorder %v4503, 2
        %vm4524 = vcmp.lt.s32.totalorder %v4503, 3
        %vm4525 = vcmp.lt.s32.totalorder %v4503, 4
        %v4526 = vsel %vm4522, %v4506, %v4509
        %v4527 = vsel %vm4525, %v4515, 2102212464
        %v4528 = vsel %vm4524, %v4512, %v4527
        %v4529 = vsel %vm4523, %v4526, %v4528
        %v4530 = vsel %vm4522, %v4509, %v4512
        %v4531 = vsel %vm4525, %v4518, 920167782
        %v4532 = vsel %vm4524, %v4515, %v4531
        %v4533 = vsel %vm4523, %v4530, %v4532
        %v4534 = vsel %vm4522, %v4512, %v4515
        %v4535 = vsel %vm4525, %v4521, 1326507024
        %v4536 = vsel %vm4524, %v4518, %v4535
        %v4537 = vsel %vm4523, %v4534, %v4536
        %v4538 = vshll.u32 %v4498, 8
        %v4539 = vmul.u32.u64.compose %v4538, %v4537
        %v4540 = vextract.low.u32 %v4539
        %v4541 = vextract.high.u32 %v4539
        %v4542 = vmul.u32.u64.compose %v4538, %v4533
        %v4543 = vextract.low.u32 %v4542
        %v4544 = vextract.high.u32 %v4542
        %v4545 = vmul.u32 %v4538, %v4529
        %v4546 = vadd.s32 %v4541, %v4543
        %vm4547 = vc.u32 %v4541, %v4543
        %v4548 = vadd.s32 %v4544, 1
        %v4549 = vsel %vm4547, %v4548, %v4544
        %v4550 = vadd.s32 %v4545, %v4549
        %v4551 = vadd.s32 %v4550, 536870912
        %v4552 = vshrl.u32 %v4551, 30
        %v4553 = vshll.u32 %v4552, 30
        %v4554 = vsub.s32 %v4550, %v4553
        %vm4555 = vcmp.lt.s32.totalorder %v4554, 0
        %v4556 = vsub.s32 0, %v4554
        %v4557 = vsel %vm4555, %v4556, %v4554
        %v4558 = vclz %v4557
        %v4559 = vsub.s32 %v4558, 2
        %vm4560 = vcmp.gt.s32.totalorder 0, %v4559
        %v4561 = vsel %vm4560, 0, %v4559
        %v4562 = vsub.s32 32, %v4561
        %v4563 = vshll.u32 %v4554, %v4561
        %v4564 = vshrl.u32 %v4546, %v4562
        %v4565 = vor.u32 %v4563, %v4564
        %v4566 = vsub.s32 4294967266, %v4561
        %v4567 = vadd.s32 %v4566, 127
        %v4568 = vshll.u32 %v4567, 23
        %v4569 = vor.u32 4788187, %v4568
        %v4570 = vand.u32 2147483647, %v4569
        %v4572 = vcvt.s32.f32 %v4565
        %v4573 = vmul.f32 %v4572, %v4570
        %v4574 = vxor.u32 %v4573, 2147483648
        %v4575 = vsel %vm4492, %v4574, %v4573
        %v4576 = vsub.s32 4, %v4552
        %v4577 = vsel %vm4492, %v4576, %v4552
        %v4578 = vsel %vm4491, %v4474, %v4575
        %v4579 = vsel %vm4491, 0, %v4577
        %v4580 = vcosq.f32.pop %v4578
        %v4581 = vsinq.f32.pop %v4578
        %vm4582 = vweird.f32 %v4474
        %v4583 = vadd.s32 %v4579, 3
        %v4584 = vand.u32 %v4583, 3
        %vm4585 = vcmp.lt.s32.totalorder %v4584, 2
        %vm4586 = vcmp.eq.s32.totalorder %v4584, 0
        %v4587 = vxor.u32 %v4581, 2147483648
        %v4588 = vsel %vm4586, %v4580, %v4587
        %vm4589 = vcmp.eq.s32.totalorder %v4584, 2
        %v4590 = vxor.u32 %v4580, 2147483648
        %v4591 = vsel %vm4589, %v4590, %v4581
        %v4592 = vsel %vm4585, %v4588, %v4591
        %v4593 = vsel %vm4582, nan, %v4592
        %v4594 = vand.u32 2147483647, %v4475
        %vm4595 = vcmp.le.f32.partialorder %v4594, 0.7853982
        %vm4596 = vcmp.lt.s32.totalorder %v4475, 0
        %v4597 = vand.u32 %v4475, 2139095040
        %v4598 = vshrl.u32 %v4597, 23
        %v4599 = vsub.s32 %v4598, 127
        %v4600 = vand.u32 2147483647, %v4475
        %v4601 = vand.u32 %v4600, 8388607
        %v4602 = vor.u32 %v4601, 8388608
        %v4603 = vsub.s32 0, %v4602
        %v4604 = vadd.s32 %v4599, 1
        %vm4605 = vcmp.gt.s32.totalorder %v4604, 0
        %v4606 = vsel %vm4605, %v4604, 0
        %v4607 = vshrl.u32 %v4606, 5
        %v4608 = vand.u32 %v4606, 31
        %v4609 = vsub.s32 32, %v4608
        %v4610 = vshrl.u32 683565275, %v4609
        %v4611 = vshll.u32 683565275, %v4608
        %v4612 = vshrl.u32 2475754826, %v4609
        %v4613 = vor.u32 %v4611, %v4612
        %v4614 = vshll.u32 2475754826, %v4608
        %v4615 = vshrl.u32 2131351028, %v4609
        %v4616 = vor.u32 %v4614, %v4615
        %v4617 = vshll.u32 2131351028, %v4608
        %v4618 = vshrl.u32 2102212464, %v4609
        %v4619 = vor.u32 %v4617, %v4618
        %v4620 = vshll.u32 2102212464, %v4608
        %v4621 = vshrl.u32 920167782, %v4609
        %v4622 = vor.u32 %v4620, %v4621
        %v4623 = vshll.u32 920167782, %v4608
        %v4624 = vshrl.u32 1326507024, %v4609
        %v4625 = vor.u32 %v4623, %v4624
        %vm4626 = vcmp.lt.s32.totalorder %v4607, 1
        %vm4627 = vcmp.lt.s32.totalorder %v4607, 2
        %vm4628 = vcmp.lt.s32.totalorder %v4607, 3
        %vm4629 = vcmp.lt.s32.totalorder %v4607, 4
        %v4630 = vsel %vm4626, %v4610, %v4613
        %v4631 = vsel %vm4629, %v4619, 2102212464
        %v4632 = vsel %vm4628, %v4616, %v4631
        %v4633 = vsel %vm4627, %v4630, %v4632
        %v4634 = vsel %vm4626, %v4613, %v4616
        %v4635 = vsel %vm4629, %v4622, 920167782
        %v4636 = vsel %vm4628, %v4619, %v4635
        %v4637 = vsel %vm4627, %v4634, %v4636
        %v4638 = vsel %vm4626, %v4616, %v4619
        %v4639 = vsel %vm4629, %v4625, 1326507024
        %v4640 = vsel %vm4628, %v4622, %v4639
        %v4641 = vsel %vm4627, %v4638, %v4640
        %v4642 = vshll.u32 %v4602, 8
        %v4643 = vmul.u32.u64.compose %v4642, %v4641
        %v4644 = vextract.low.u32 %v4643
        %v4645 = vextract.high.u32 %v4643
        %v4646 = vmul.u32.u64.compose %v4642, %v4637
        %v4647 = vextract.low.u32 %v4646
        %v4648 = vextract.high.u32 %v4646
        %v4649 = vmul.u32 %v4642, %v4633
        %v4650 = vadd.s32 %v4645, %v4647
        %vm4651 = vc.u32 %v4645, %v4647
        %v4652 = vadd.s32 %v4648, 1
        %v4653 = vsel %vm4651, %v4652, %v4648
        %v4654 = vadd.s32 %v4649, %v4653
        %v4655 = vadd.s32 %v4654, 536870912
        %v4656 = vshrl.u32 %v4655, 30
        %v4657 = vshll.u32 %v4656, 30
        %v4658 = vsub.s32 %v4654, %v4657
        %vm4659 = vcmp.lt.s32.totalorder %v4658, 0
        %v4660 = vsub.s32 0, %v4658
        %v4661 = vsel %vm4659, %v4660, %v4658
        %v4662 = vclz %v4661
        %v4663 = vsub.s32 %v4662, 2
        %vm4664 = vcmp.gt.s32.totalorder 0, %v4663
        %v4665 = vsel %vm4664, 0, %v4663
        %v4666 = vsub.s32 32, %v4665
        %v4667 = vshll.u32 %v4658, %v4665
        %v4668 = vshrl.u32 %v4650, %v4666
        %v4669 = vor.u32 %v4667, %v4668
        %v4670 = vsub.s32 4294967266, %v4665
        %v4671 = vadd.s32 %v4670, 127
        %v4672 = vshll.u32 %v4671, 23
        %v4673 = vor.u32 4788187, %v4672
        %v4674 = vand.u32 2147483647, %v4673
        %v4676 = vcvt.s32.f32 %v4669
        %v4677 = vmul.f32 %v4676, %v4674
        %v4678 = vxor.u32 %v4677, 2147483648
        %v4679 = vsel %vm4596, %v4678, %v4677
        %v4680 = vsub.s32 4, %v4656
        %v4681 = vsel %vm4596, %v4680, %v4656
        %v4682 = vsel %vm4595, %v4475, %v4679
        %v4683 = vsel %vm4595, 0, %v4681
        %v4684 = vcosq.f32.pop %v4682
        %v4685 = vsinq.f32.pop %v4682
        %vm4686 = vweird.f32 %v4475
        %v4687 = vadd.s32 %v4683, 3
        %v4688 = vand.u32 %v4687, 3
        %vm4689 = vcmp.lt.s32.totalorder %v4688, 2
        %vm4690 = vcmp.eq.s32.totalorder %v4688, 0
        %v4691 = vxor.u32 %v4685, 2147483648
        %v4692 = vsel %vm4690, %v4684, %v4691
        %vm4693 = vcmp.eq.s32.totalorder %v4688, 2
        %v4694 = vxor.u32 %v4684, 2147483648
        %v4695 = vsel %vm4693, %v4694, %v4685
        %v4696 = vsel %vm4689, %v4692, %v4695
        %v4697 = vsel %vm4686, nan, %v4696
        %v4698 = vand.u32 2147483647, %v4476
        %vm4699 = vcmp.le.f32.partialorder %v4698, 0.7853982
        %vm4700 = vcmp.lt.s32.totalorder %v4476, 0
        %v4701 = vand.u32 %v4476, 2139095040
        %v4702 = vshrl.u32 %v4701, 23
        %v4703 = vsub.s32 %v4702, 127
        %v4704 = vand.u32 2147483647, %v4476
        %v4705 = vand.u32 %v4704, 8388607
        %v4706 = vor.u32 %v4705, 8388608
        %v4707 = vsub.s32 0, %v4706
        %v4708 = vadd.s32 %v4703, 1
        %vm4709 = vcmp.gt.s32.totalorder %v4708, 0
        %v4710 = vsel %vm4709, %v4708, 0
        %v4711 = vshrl.u32 %v4710, 5
        %v4712 = vand.u32 %v4710, 31
        %v4713 = vsub.s32 32, %v4712
        %v4714 = vshrl.u32 683565275, %v4713
        %v4715 = vshll.u32 683565275, %v4712
        %v4716 = vshrl.u32 2475754826, %v4713
        %v4717 = vor.u32 %v4715, %v4716
        %v4718 = vshll.u32 2475754826, %v4712
        %v4719 = vshrl.u32 2131351028, %v4713
        %v4720 = vor.u32 %v4718, %v4719
        %v4721 = vshll.u32 2131351028, %v4712
        %v4722 = vshrl.u32 2102212464, %v4713
        %v4723 = vor.u32 %v4721, %v4722
        %v4724 = vshll.u32 2102212464, %v4712
        %v4725 = vshrl.u32 920167782, %v4713
        %v4726 = vor.u32 %v4724, %v4725
        %v4727 = vshll.u32 920167782, %v4712
        %v4728 = vshrl.u32 1326507024, %v4713
        %v4729 = vor.u32 %v4727, %v4728
        %vm4730 = vcmp.lt.s32.totalorder %v4711, 1
        %vm4731 = vcmp.lt.s32.totalorder %v4711, 2
        %vm4732 = vcmp.lt.s32.totalorder %v4711, 3
        %vm4733 = vcmp.lt.s32.totalorder %v4711, 4
        %v4734 = vsel %vm4730, %v4714, %v4717
        %v4735 = vsel %vm4733, %v4723, 2102212464
        %v4736 = vsel %vm4732, %v4720, %v4735
        %v4737 = vsel %vm4731, %v4734, %v4736
        %v4738 = vsel %vm4730, %v4717, %v4720
        %v4739 = vsel %vm4733, %v4726, 920167782
        %v4740 = vsel %vm4732, %v4723, %v4739
        %v4741 = vsel %vm4731, %v4738, %v4740
        %v4742 = vsel %vm4730, %v4720, %v4723
        %v4743 = vsel %vm4733, %v4729, 1326507024
        %v4744 = vsel %vm4732, %v4726, %v4743
        %v4745 = vsel %vm4731, %v4742, %v4744
        %v4746 = vshll.u32 %v4706, 8
        %v4747 = vmul.u32.u64.compose %v4746, %v4745
        %v4748 = vextract.low.u32 %v4747
        %v4749 = vextract.high.u32 %v4747
        %v4750 = vmul.u32.u64.compose %v4746, %v4741
        %v4751 = vextract.low.u32 %v4750
        %v4752 = vextract.high.u32 %v4750
        %v4753 = vmul.u32 %v4746, %v4737
        %v4754 = vadd.s32 %v4749, %v4751
        %vm4755 = vc.u32 %v4749, %v4751
        %v4756 = vadd.s32 %v4752, 1
        %v4757 = vsel %vm4755, %v4756, %v4752
        %v4758 = vadd.s32 %v4753, %v4757
        %v4759 = vadd.s32 %v4758, 536870912
        %v4760 = vshrl.u32 %v4759, 30
        %v4761 = vshll.u32 %v4760, 30
        %v4762 = vsub.s32 %v4758, %v4761
        %vm4763 = vcmp.lt.s32.totalorder %v4762, 0
        %v4764 = vsub.s32 0, %v4762
        %v4765 = vsel %vm4763, %v4764, %v4762
        %v4766 = vclz %v4765
        %v4767 = vsub.s32 %v4766, 2
        %vm4768 = vcmp.gt.s32.totalorder 0, %v4767
        %v4769 = vsel %vm4768, 0, %v4767
        %v4770 = vsub.s32 32, %v4769
        %v4771 = vshll.u32 %v4762, %v4769
        %v4772 = vshrl.u32 %v4754, %v4770
        %v4773 = vor.u32 %v4771, %v4772
        %v4774 = vsub.s32 4294967266, %v4769
        %v4775 = vadd.s32 %v4774, 127
        %v4776 = vshll.u32 %v4775, 23
        %v4777 = vor.u32 4788187, %v4776
        %v4778 = vand.u32 2147483647, %v4777
        %v4780 = vcvt.s32.f32 %v4773
        %v4781 = vmul.f32 %v4780, %v4778
        %v4782 = vxor.u32 %v4781, 2147483648
        %v4783 = vsel %vm4700, %v4782, %v4781
        %v4784 = vsub.s32 4, %v4760
        %v4785 = vsel %vm4700, %v4784, %v4760
        %v4786 = vsel %vm4699, %v4476, %v4783
        %v4787 = vsel %vm4699, 0, %v4785
        %v4788 = vcosq.f32.pop %v4786
        %v4789 = vsinq.f32.pop %v4786
        %vm4790 = vweird.f32 %v4476
        %v4791 = vadd.s32 %v4787, 3
        %v4792 = vand.u32 %v4791, 3
        %vm4793 = vcmp.lt.s32.totalorder %v4792, 2
        %vm4794 = vcmp.eq.s32.totalorder %v4792, 0
        %v4795 = vxor.u32 %v4789, 2147483648
        %v4796 = vsel %vm4794, %v4788, %v4795
        %vm4797 = vcmp.eq.s32.totalorder %v4792, 2
        %v4798 = vxor.u32 %v4788, 2147483648
        %v4799 = vsel %vm4797, %v4798, %v4789
        %v4800 = vsel %vm4793, %v4796, %v4799
        %v4801 = vsel %vm4790, nan, %v4800
        %v4802 = vand.u32 2147483647, %v4477
        %vm4803 = vcmp.le.f32.partialorder %v4802, 0.7853982
        %vm4804 = vcmp.lt.s32.totalorder %v4477, 0
        %v4805 = vand.u32 %v4477, 2139095040
        %v4806 = vshrl.u32 %v4805, 23
        %v4807 = vsub.s32 %v4806, 127
        %v4808 = vand.u32 2147483647, %v4477
        %v4809 = vand.u32 %v4808, 8388607
        %v4810 = vor.u32 %v4809, 8388608
        %v4811 = vsub.s32 0, %v4810
        %v4812 = vadd.s32 %v4807, 1
        %vm4813 = vcmp.gt.s32.totalorder %v4812, 0
        %v4814 = vsel %vm4813, %v4812, 0
        %v4815 = vshrl.u32 %v4814, 5
        %v4816 = vand.u32 %v4814, 31
        %v4817 = vsub.s32 32, %v4816
        %v4818 = vshrl.u32 683565275, %v4817
        %v4819 = vshll.u32 683565275, %v4816
        %v4820 = vshrl.u32 2475754826, %v4817
        %v4821 = vor.u32 %v4819, %v4820
        %v4822 = vshll.u32 2475754826, %v4816
        %v4823 = vshrl.u32 2131351028, %v4817
        %v4824 = vor.u32 %v4822, %v4823
        %v4825 = vshll.u32 2131351028, %v4816
        %v4826 = vshrl.u32 2102212464, %v4817
        %v4827 = vor.u32 %v4825, %v4826
        %v4828 = vshll.u32 2102212464, %v4816
        %v4829 = vshrl.u32 920167782, %v4817
        %v4830 = vor.u32 %v4828, %v4829
        %v4831 = vshll.u32 920167782, %v4816
        %v4832 = vshrl.u32 1326507024, %v4817
        %v4833 = vor.u32 %v4831, %v4832
        %vm4834 = vcmp.lt.s32.totalorder %v4815, 1
        %vm4835 = vcmp.lt.s32.totalorder %v4815, 2
        %vm4836 = vcmp.lt.s32.totalorder %v4815, 3
        %vm4837 = vcmp.lt.s32.totalorder %v4815, 4
        %v4838 = vsel %vm4834, %v4818, %v4821
        %v4839 = vsel %vm4837, %v4827, 2102212464
        %v4840 = vsel %vm4836, %v4824, %v4839
        %v4841 = vsel %vm4835, %v4838, %v4840
        %v4842 = vsel %vm4834, %v4821, %v4824
        %v4843 = vsel %vm4837, %v4830, 920167782
        %v4844 = vsel %vm4836, %v4827, %v4843
        %v4845 = vsel %vm4835, %v4842, %v4844
        %v4846 = vsel %vm4834, %v4824, %v4827
        %v4847 = vsel %vm4837, %v4833, 1326507024
        %v4848 = vsel %vm4836, %v4830, %v4847
        %v4849 = vsel %vm4835, %v4846, %v4848
        %v4850 = vshll.u32 %v4810, 8
        %v4851 = vmul.u32.u64.compose %v4850, %v4849
        %v4852 = vextract.low.u32 %v4851
        %v4853 = vextract.high.u32 %v4851
        %v4854 = vmul.u32.u64.compose %v4850, %v4845
        %v4855 = vextract.low.u32 %v4854
        %v4856 = vextract.high.u32 %v4854
        %v4857 = vmul.u32 %v4850, %v4841
        %v4858 = vadd.s32 %v4853, %v4855
        %vm4859 = vc.u32 %v4853, %v4855
        %v4860 = vadd.s32 %v4856, 1
        %v4861 = vsel %vm4859, %v4860, %v4856
        %v4862 = vadd.s32 %v4857, %v4861
        %v4863 = vadd.s32 %v4862, 536870912
        %v4864 = vshrl.u32 %v4863, 30
        %v4865 = vshll.u32 %v4864, 30
        %v4866 = vsub.s32 %v4862, %v4865
        %vm4867 = vcmp.lt.s32.totalorder %v4866, 0
        %v4868 = vsub.s32 0, %v4866
        %v4869 = vsel %vm4867, %v4868, %v4866
        %v4870 = vclz %v4869
        %v4871 = vsub.s32 %v4870, 2
        %vm4872 = vcmp.gt.s32.totalorder 0, %v4871
        %v4873 = vsel %vm4872, 0, %v4871
        %v4874 = vsub.s32 32, %v4873
        %v4875 = vshll.u32 %v4866, %v4873
        %v4876 = vshrl.u32 %v4858, %v4874
        %v4877 = vor.u32 %v4875, %v4876
        %v4878 = vsub.s32 4294967266, %v4873
        %v4879 = vadd.s32 %v4878, 127
        %v4880 = vshll.u32 %v4879, 23
        %v4881 = vor.u32 4788187, %v4880
        %v4882 = vand.u32 2147483647, %v4881
        %v4884 = vcvt.s32.f32 %v4877
        %v4885 = vmul.f32 %v4884, %v4882
        %v4886 = vxor.u32 %v4885, 2147483648
        %v4887 = vsel %vm4804, %v4886, %v4885
        %v4888 = vsub.s32 4, %v4864
        %v4889 = vsel %vm4804, %v4888, %v4864
        %v4890 = vsel %vm4803, %v4477, %v4887
        %v4891 = vsel %vm4803, 0, %v4889
        %v4892 = vcosq.f32.pop %v4890
        %v4893 = vsinq.f32.pop %v4890
        %vm4894 = vweird.f32 %v4477
        %v4895 = vadd.s32 %v4891, 3
        %v4896 = vand.u32 %v4895, 3
        %vm4897 = vcmp.lt.s32.totalorder %v4896, 2
        %vm4898 = vcmp.eq.s32.totalorder %v4896, 0
        %v4899 = vxor.u32 %v4893, 2147483648
        %v4900 = vsel %vm4898, %v4892, %v4899
        %vm4901 = vcmp.eq.s32.totalorder %v4896, 2
        %v4902 = vxor.u32 %v4892, 2147483648
        %v4903 = vsel %vm4901, %v4902, %v4893
        %v4904 = vsel %vm4897, %v4900, %v4903
        %v4905 = vsel %vm4894, nan, %v4904
        %v4906 = vand.u32 2147483647, %v4478
        %vm4907 = vcmp.le.f32.partialorder %v4906, 0.7853982
        %vm4908 = vcmp.lt.s32.totalorder %v4478, 0
        %v4909 = vand.u32 %v4478, 2139095040
        %v4910 = vshrl.u32 %v4909, 23
        %v4911 = vsub.s32 %v4910, 127
        %v4912 = vand.u32 2147483647, %v4478
        %v4913 = vand.u32 %v4912, 8388607
        %v4914 = vor.u32 %v4913, 8388608
        %v4915 = vsub.s32 0, %v4914
        %v4916 = vadd.s32 %v4911, 1
        %vm4917 = vcmp.gt.s32.totalorder %v4916, 0
        %v4918 = vsel %vm4917, %v4916, 0
        %v4919 = vshrl.u32 %v4918, 5
        %v4920 = vand.u32 %v4918, 31
        %v4921 = vsub.s32 32, %v4920
        %v4922 = vshrl.u32 683565275, %v4921
        %v4923 = vshll.u32 683565275, %v4920
        %v4924 = vshrl.u32 2475754826, %v4921
        %v4925 = vor.u32 %v4923, %v4924
        %v4926 = vshll.u32 2475754826, %v4920
        %v4927 = vshrl.u32 2131351028, %v4921
        %v4928 = vor.u32 %v4926, %v4927
        %v4929 = vshll.u32 2131351028, %v4920
        %v4930 = vshrl.u32 2102212464, %v4921
        %v4931 = vor.u32 %v4929, %v4930
        %v4932 = vshll.u32 2102212464, %v4920
        %v4933 = vshrl.u32 920167782, %v4921
        %v4934 = vor.u32 %v4932, %v4933
        %v4935 = vshll.u32 920167782, %v4920
        %v4936 = vshrl.u32 1326507024, %v4921
        %v4937 = vor.u32 %v4935, %v4936
        %vm4938 = vcmp.lt.s32.totalorder %v4919, 1
        %vm4939 = vcmp.lt.s32.totalorder %v4919, 2
        %vm4940 = vcmp.lt.s32.totalorder %v4919, 3
        %vm4941 = vcmp.lt.s32.totalorder %v4919, 4
        %v4942 = vsel %vm4938, %v4922, %v4925
        %v4943 = vsel %vm4941, %v4931, 2102212464
        %v4944 = vsel %vm4940, %v4928, %v4943
        %v4945 = vsel %vm4939, %v4942, %v4944
        %v4946 = vsel %vm4938, %v4925, %v4928
        %v4947 = vsel %vm4941, %v4934, 920167782
        %v4948 = vsel %vm4940, %v4931, %v4947
        %v4949 = vsel %vm4939, %v4946, %v4948
        %v4950 = vsel %vm4938, %v4928, %v4931
        %v4951 = vsel %vm4941, %v4937, 1326507024
        %v4952 = vsel %vm4940, %v4934, %v4951
        %v4953 = vsel %vm4939, %v4950, %v4952
        %v4954 = vshll.u32 %v4914, 8
        %v4955 = vmul.u32.u64.compose %v4954, %v4953
        %v4956 = vextract.low.u32 %v4955
        %v4957 = vextract.high.u32 %v4955
        %v4958 = vmul.u32.u64.compose %v4954, %v4949
        %v4959 = vextract.low.u32 %v4958
        %v4960 = vextract.high.u32 %v4958
        %v4961 = vmul.u32 %v4954, %v4945
        %v4962 = vadd.s32 %v4957, %v4959
        %vm4963 = vc.u32 %v4957, %v4959
        %v4964 = vadd.s32 %v4960, 1
        %v4965 = vsel %vm4963, %v4964, %v4960
        %v4966 = vadd.s32 %v4961, %v4965
        %v4967 = vadd.s32 %v4966, 536870912
        %v4968 = vshrl.u32 %v4967, 30
        %v4969 = vshll.u32 %v4968, 30
        %v4970 = vsub.s32 %v4966, %v4969
        %vm4971 = vcmp.lt.s32.totalorder %v4970, 0
        %v4972 = vsub.s32 0, %v4970
        %v4973 = vsel %vm4971, %v4972, %v4970
        %v4974 = vclz %v4973
        %v4975 = vsub.s32 %v4974, 2
        %vm4976 = vcmp.gt.s32.totalorder 0, %v4975
        %v4977 = vsel %vm4976, 0, %v4975
        %v4978 = vsub.s32 32, %v4977
        %v4979 = vshll.u32 %v4970, %v4977
        %v4980 = vshrl.u32 %v4962, %v4978
        %v4981 = vor.u32 %v4979, %v4980
        %v4982 = vsub.s32 4294967266, %v4977
        %v4983 = vadd.s32 %v4982, 127
        %v4984 = vshll.u32 %v4983, 23
        %v4985 = vor.u32 4788187, %v4984
        %v4986 = vand.u32 2147483647, %v4985
        %v4988 = vcvt.s32.f32 %v4981
        %v4989 = vmul.f32 %v4988, %v4986
        %v4990 = vxor.u32 %v4989, 2147483648
        %v4991 = vsel %vm4908, %v4990, %v4989
        %v4992 = vsub.s32 4, %v4968
        %v4993 = vsel %vm4908, %v4992, %v4968
        %v4994 = vsel %vm4907, %v4478, %v4991
        %v4995 = vsel %vm4907, 0, %v4993
        %v4996 = vcosq.f32.pop %v4994
        %v4997 = vsinq.f32.pop %v4994
        %vm4998 = vweird.f32 %v4478
        %v4999 = vadd.s32 %v4995, 3
        %v5000 = vand.u32 %v4999, 3
        %vm5001 = vcmp.lt.s32.totalorder %v5000, 2
        %vm5002 = vcmp.eq.s32.totalorder %v5000, 0
        %v5003 = vxor.u32 %v4997, 2147483648
        %v5004 = vsel %vm5002, %v4996, %v5003
        %vm5005 = vcmp.eq.s32.totalorder %v5000, 2
        %v5006 = vxor.u32 %v4996, 2147483648
        %v5007 = vsel %vm5005, %v5006, %v4997
        %v5008 = vsel %vm5001, %v5004, %v5007
        %v5009 = vsel %vm4998, nan, %v5008
        %v5010 = vand.u32 2147483647, %v4479
        %vm5011 = vcmp.le.f32.partialorder %v5010, 0.7853982
        %vm5012 = vcmp.lt.s32.totalorder %v4479, 0
        %v5013 = vand.u32 %v4479, 2139095040
        %v5014 = vshrl.u32 %v5013, 23
        %v5015 = vsub.s32 %v5014, 127
        %v5016 = vand.u32 2147483647, %v4479
        %v5017 = vand.u32 %v5016, 8388607
        %v5018 = vor.u32 %v5017, 8388608
        %v5019 = vsub.s32 0, %v5018
        %v5020 = vadd.s32 %v5015, 1
        %vm5021 = vcmp.gt.s32.totalorder %v5020, 0
        %v5022 = vsel %vm5021, %v5020, 0
        %v5023 = vshrl.u32 %v5022, 5
        %v5024 = vand.u32 %v5022, 31
        %v5025 = vsub.s32 32, %v5024
        %v5026 = vshrl.u32 683565275, %v5025
        %v5027 = vshll.u32 683565275, %v5024
        %v5028 = vshrl.u32 2475754826, %v5025
        %v5029 = vor.u32 %v5027, %v5028
        %v5030 = vshll.u32 2475754826, %v5024
        %v5031 = vshrl.u32 2131351028, %v5025
        %v5032 = vor.u32 %v5030, %v5031
        %v5033 = vshll.u32 2131351028, %v5024
        %v5034 = vshrl.u32 2102212464, %v5025
        %v5035 = vor.u32 %v5033, %v5034
        %v5036 = vshll.u32 2102212464, %v5024
        %v5037 = vshrl.u32 920167782, %v5025
        %v5038 = vor.u32 %v5036, %v5037
        %v5039 = vshll.u32 920167782, %v5024
        %v5040 = vshrl.u32 1326507024, %v5025
        %v5041 = vor.u32 %v5039, %v5040
        %vm5042 = vcmp.lt.s32.totalorder %v5023, 1
        %vm5043 = vcmp.lt.s32.totalorder %v5023, 2
        %vm5044 = vcmp.lt.s32.totalorder %v5023, 3
        %vm5045 = vcmp.lt.s32.totalorder %v5023, 4
        %v5046 = vsel %vm5042, %v5026, %v5029
        %v5047 = vsel %vm5045, %v5035, 2102212464
        %v5048 = vsel %vm5044, %v5032, %v5047
        %v5049 = vsel %vm5043, %v5046, %v5048
        %v5050 = vsel %vm5042, %v5029, %v5032
        %v5051 = vsel %vm5045, %v5038, 920167782
        %v5052 = vsel %vm5044, %v5035, %v5051
        %v5053 = vsel %vm5043, %v5050, %v5052
        %v5054 = vsel %vm5042, %v5032, %v5035
        %v5055 = vsel %vm5045, %v5041, 1326507024
        %v5056 = vsel %vm5044, %v5038, %v5055
        %v5057 = vsel %vm5043, %v5054, %v5056
        %v5058 = vshll.u32 %v5018, 8
        %v5059 = vmul.u32.u64.compose %v5058, %v5057
        %v5060 = vextract.low.u32 %v5059
        %v5061 = vextract.high.u32 %v5059
        %v5062 = vmul.u32.u64.compose %v5058, %v5053
        %v5063 = vextract.low.u32 %v5062
        %v5064 = vextract.high.u32 %v5062
        %v5065 = vmul.u32 %v5058, %v5049
        %v5066 = vadd.s32 %v5061, %v5063
        %vm5067 = vc.u32 %v5061, %v5063
        %v5068 = vadd.s32 %v5064, 1
        %v5069 = vsel %vm5067, %v5068, %v5064
        %v5070 = vadd.s32 %v5065, %v5069
        %v5071 = vadd.s32 %v5070, 536870912
        %v5072 = vshrl.u32 %v5071, 30
        %v5073 = vshll.u32 %v5072, 30
        %v5074 = vsub.s32 %v5070, %v5073
        %vm5075 = vcmp.lt.s32.totalorder %v5074, 0
        %v5076 = vsub.s32 0, %v5074
        %v5077 = vsel %vm5075, %v5076, %v5074
        %v5078 = vclz %v5077
        %v5079 = vsub.s32 %v5078, 2
        %vm5080 = vcmp.gt.s32.totalorder 0, %v5079
        %v5081 = vsel %vm5080, 0, %v5079
        %v5082 = vsub.s32 32, %v5081
        %v5083 = vshll.u32 %v5074, %v5081
        %v5084 = vshrl.u32 %v5066, %v5082
        %v5085 = vor.u32 %v5083, %v5084
        %v5086 = vsub.s32 4294967266, %v5081
        %v5087 = vadd.s32 %v5086, 127
        %v5088 = vshll.u32 %v5087, 23
        %v5089 = vor.u32 4788187, %v5088
        %v5090 = vand.u32 2147483647, %v5089
        %v5092 = vcvt.s32.f32 %v5085
        %v5093 = vmul.f32 %v5092, %v5090
        %v5094 = vxor.u32 %v5093, 2147483648
        %v5095 = vsel %vm5012, %v5094, %v5093
        %v5096 = vsub.s32 4, %v5072
        %v5097 = vsel %vm5012, %v5096, %v5072
        %v5098 = vsel %vm5011, %v4479, %v5095
        %v5099 = vsel %vm5011, 0, %v5097
        %v5100 = vcosq.f32.pop %v5098
        %v5101 = vsinq.f32.pop %v5098
        %vm5102 = vweird.f32 %v4479
        %v5103 = vadd.s32 %v5099, 3
        %v5104 = vand.u32 %v5103, 3
        %vm5105 = vcmp.lt.s32.totalorder %v5104, 2
        %vm5106 = vcmp.eq.s32.totalorder %v5104, 0
        %v5107 = vxor.u32 %v5101, 2147483648
        %v5108 = vsel %vm5106, %v5100, %v5107
        %vm5109 = vcmp.eq.s32.totalorder %v5104, 2
        %v5110 = vxor.u32 %v5100, 2147483648
        %v5111 = vsel %vm5109, %v5110, %v5101
        %v5112 = vsel %vm5105, %v5108, %v5111
        %v5113 = vsel %vm5102, nan, %v5112
        %v5114 = vand.u32 2147483647, %v4480
        %vm5115 = vcmp.le.f32.partialorder %v5114, 0.7853982
        %vm5116 = vcmp.lt.s32.totalorder %v4480, 0
        %v5117 = vand.u32 %v4480, 2139095040
        %v5118 = vshrl.u32 %v5117, 23
        %v5119 = vsub.s32 %v5118, 127
        %v5120 = vand.u32 2147483647, %v4480
        %v5121 = vand.u32 %v5120, 8388607
        %v5122 = vor.u32 %v5121, 8388608
        %v5123 = vsub.s32 0, %v5122
        %v5124 = vadd.s32 %v5119, 1
        %vm5125 = vcmp.gt.s32.totalorder %v5124, 0
        %v5126 = vsel %vm5125, %v5124, 0
        %v5127 = vshrl.u32 %v5126, 5
        %v5128 = vand.u32 %v5126, 31
        %v5129 = vsub.s32 32, %v5128
        %v5130 = vshrl.u32 683565275, %v5129
        %v5131 = vshll.u32 683565275, %v5128
        %v5132 = vshrl.u32 2475754826, %v5129
        %v5133 = vor.u32 %v5131, %v5132
        %v5134 = vshll.u32 2475754826, %v5128
        %v5135 = vshrl.u32 2131351028, %v5129
        %v5136 = vor.u32 %v5134, %v5135
        %v5137 = vshll.u32 2131351028, %v5128
        %v5138 = vshrl.u32 2102212464, %v5129
        %v5139 = vor.u32 %v5137, %v5138
        %v5140 = vshll.u32 2102212464, %v5128
        %v5141 = vshrl.u32 920167782, %v5129
        %v5142 = vor.u32 %v5140, %v5141
        %v5143 = vshll.u32 920167782, %v5128
        %v5144 = vshrl.u32 1326507024, %v5129
        %v5145 = vor.u32 %v5143, %v5144
        %vm5146 = vcmp.lt.s32.totalorder %v5127, 1
        %vm5147 = vcmp.lt.s32.totalorder %v5127, 2
        %vm5148 = vcmp.lt.s32.totalorder %v5127, 3
        %vm5149 = vcmp.lt.s32.totalorder %v5127, 4
        %v5150 = vsel %vm5146, %v5130, %v5133
        %v5151 = vsel %vm5149, %v5139, 2102212464
        %v5152 = vsel %vm5148, %v5136, %v5151
        %v5153 = vsel %vm5147, %v5150, %v5152
        %v5154 = vsel %vm5146, %v5133, %v5136
        %v5155 = vsel %vm5149, %v5142, 920167782
        %v5156 = vsel %vm5148, %v5139, %v5155
        %v5157 = vsel %vm5147, %v5154, %v5156
        %v5158 = vsel %vm5146, %v5136, %v5139
        %v5159 = vsel %vm5149, %v5145, 1326507024
        %v5160 = vsel %vm5148, %v5142, %v5159
        %v5161 = vsel %vm5147, %v5158, %v5160
        %v5162 = vshll.u32 %v5122, 8
        %v5163 = vmul.u32.u64.compose %v5162, %v5161
        %v5164 = vextract.low.u32 %v5163
        %v5165 = vextract.high.u32 %v5163
        %v5166 = vmul.u32.u64.compose %v5162, %v5157
        %v5167 = vextract.low.u32 %v5166
        %v5168 = vextract.high.u32 %v5166
        %v5169 = vmul.u32 %v5162, %v5153
        %v5170 = vadd.s32 %v5165, %v5167
        %vm5171 = vc.u32 %v5165, %v5167
        %v5172 = vadd.s32 %v5168, 1
        %v5173 = vsel %vm5171, %v5172, %v5168
        %v5174 = vadd.s32 %v5169, %v5173
        %v5175 = vadd.s32 %v5174, 536870912
        %v5176 = vshrl.u32 %v5175, 30
        %v5177 = vshll.u32 %v5176, 30
        %v5178 = vsub.s32 %v5174, %v5177
        %vm5179 = vcmp.lt.s32.totalorder %v5178, 0
        %v5180 = vsub.s32 0, %v5178
        %v5181 = vsel %vm5179, %v5180, %v5178
        %v5182 = vclz %v5181
        %v5183 = vsub.s32 %v5182, 2
        %vm5184 = vcmp.gt.s32.totalorder 0, %v5183
        %v5185 = vsel %vm5184, 0, %v5183
        %v5186 = vsub.s32 32, %v5185
        %v5187 = vshll.u32 %v5178, %v5185
        %v5188 = vshrl.u32 %v5170, %v5186
        %v5189 = vor.u32 %v5187, %v5188
        %v5190 = vsub.s32 4294967266, %v5185
        %v5191 = vadd.s32 %v5190, 127
        %v5192 = vshll.u32 %v5191, 23
        %v5193 = vor.u32 4788187, %v5192
        %v5194 = vand.u32 2147483647, %v5193
        %v5196 = vcvt.s32.f32 %v5189
        %v5197 = vmul.f32 %v5196, %v5194
        %v5198 = vxor.u32 %v5197, 2147483648
        %v5199 = vsel %vm5116, %v5198, %v5197
        %v5200 = vsub.s32 4, %v5176
        %v5201 = vsel %vm5116, %v5200, %v5176
        %v5202 = vsel %vm5115, %v4480, %v5199
        %v5203 = vsel %vm5115, 0, %v5201
        %v5204 = vcosq.f32.pop %v5202
        %v5205 = vsinq.f32.pop %v5202
        %vm5206 = vweird.f32 %v4480
        %v5207 = vadd.s32 %v5203, 3
        %v5208 = vand.u32 %v5207, 3
        %vm5209 = vcmp.lt.s32.totalorder %v5208, 2
        %vm5210 = vcmp.eq.s32.totalorder %v5208, 0
        %v5211 = vxor.u32 %v5205, 2147483648
        %v5212 = vsel %vm5210, %v5204, %v5211
        %vm5213 = vcmp.eq.s32.totalorder %v5208, 2
        %v5214 = vxor.u32 %v5204, 2147483648
        %v5215 = vsel %vm5213, %v5214, %v5205
        %v5216 = vsel %vm5209, %v5212, %v5215
        %v5217 = vsel %vm5206, nan, %v5216
        %v5218 = vand.u32 2147483647, %v4481
        %vm5219 = vcmp.le.f32.partialorder %v5218, 0.7853982
        %vm5220 = vcmp.lt.s32.totalorder %v4481, 0
        %v5221 = vand.u32 %v4481, 2139095040
        %v5222 = vshrl.u32 %v5221, 23
        %v5223 = vsub.s32 %v5222, 127
        %v5224 = vand.u32 2147483647, %v4481
        %v5225 = vand.u32 %v5224, 8388607
        %v5226 = vor.u32 %v5225, 8388608
        %v5227 = vsub.s32 0, %v5226
        %v5228 = vadd.s32 %v5223, 1
        %vm5229 = vcmp.gt.s32.totalorder %v5228, 0
        %v5230 = vsel %vm5229, %v5228, 0
        %v5231 = vshrl.u32 %v5230, 5
        %v5232 = vand.u32 %v5230, 31
        %v5233 = vsub.s32 32, %v5232
        %v5234 = vshrl.u32 683565275, %v5233
        %v5235 = vshll.u32 683565275, %v5232
        %v5236 = vshrl.u32 2475754826, %v5233
        %v5237 = vor.u32 %v5235, %v5236
        %v5238 = vshll.u32 2475754826, %v5232
        %v5239 = vshrl.u32 2131351028, %v5233
        %v5240 = vor.u32 %v5238, %v5239
        %v5241 = vshll.u32 2131351028, %v5232
        %v5242 = vshrl.u32 2102212464, %v5233
        %v5243 = vor.u32 %v5241, %v5242
        %v5244 = vshll.u32 2102212464, %v5232
        %v5245 = vshrl.u32 920167782, %v5233
        %v5246 = vor.u32 %v5244, %v5245
        %v5247 = vshll.u32 920167782, %v5232
        %v5248 = vshrl.u32 1326507024, %v5233
        %v5249 = vor.u32 %v5247, %v5248
        %vm5250 = vcmp.lt.s32.totalorder %v5231, 1
        %vm5251 = vcmp.lt.s32.totalorder %v5231, 2
        %vm5252 = vcmp.lt.s32.totalorder %v5231, 3
        %vm5253 = vcmp.lt.s32.totalorder %v5231, 4
        %v5254 = vsel %vm5250, %v5234, %v5237
        %v5255 = vsel %vm5253, %v5243, 2102212464
        %v5256 = vsel %vm5252, %v5240, %v5255
        %v5257 = vsel %vm5251, %v5254, %v5256
        %v5258 = vsel %vm5250, %v5237, %v5240
        %v5259 = vsel %vm5253, %v5246, 920167782
        %v5260 = vsel %vm5252, %v5243, %v5259
        %v5261 = vsel %vm5251, %v5258, %v5260
        %v5262 = vsel %vm5250, %v5240, %v5243
        %v5263 = vsel %vm5253, %v5249, 1326507024
        %v5264 = vsel %vm5252, %v5246, %v5263
        %v5265 = vsel %vm5251, %v5262, %v5264
        %v5266 = vshll.u32 %v5226, 8
        %v5267 = vmul.u32.u64.compose %v5266, %v5265
        %v5268 = vextract.low.u32 %v5267
        %v5269 = vextract.high.u32 %v5267
        %v5270 = vmul.u32.u64.compose %v5266, %v5261
        %v5271 = vextract.low.u32 %v5270
        %v5272 = vextract.high.u32 %v5270
        %v5273 = vmul.u32 %v5266, %v5257
        %v5274 = vadd.s32 %v5269, %v5271
        %vm5275 = vc.u32 %v5269, %v5271
        %v5276 = vadd.s32 %v5272, 1
        %v5277 = vsel %vm5275, %v5276, %v5272
        %v5278 = vadd.s32 %v5273, %v5277
        %v5279 = vadd.s32 %v5278, 536870912
        %v5280 = vshrl.u32 %v5279, 30
        %v5281 = vshll.u32 %v5280, 30
        %v5282 = vsub.s32 %v5278, %v5281
        %vm5283 = vcmp.lt.s32.totalorder %v5282, 0
        %v5284 = vsub.s32 0, %v5282
        %v5285 = vsel %vm5283, %v5284, %v5282
        %v5286 = vclz %v5285
        %v5287 = vsub.s32 %v5286, 2
        %vm5288 = vcmp.gt.s32.totalorder 0, %v5287
        %v5289 = vsel %vm5288, 0, %v5287
        %v5290 = vsub.s32 32, %v5289
        %v5291 = vshll.u32 %v5282, %v5289
        %v5292 = vshrl.u32 %v5274, %v5290
        %v5293 = vor.u32 %v5291, %v5292
        %v5294 = vsub.s32 4294967266, %v5289
        %v5295 = vadd.s32 %v5294, 127
        %v5296 = vshll.u32 %v5295, 23
        %v5297 = vor.u32 4788187, %v5296
        %v5298 = vand.u32 2147483647, %v5297
        %v5300 = vcvt.s32.f32 %v5293
        %v5301 = vmul.f32 %v5300, %v5298
        %v5302 = vxor.u32 %v5301, 2147483648
        %v5303 = vsel %vm5220, %v5302, %v5301
        %v5304 = vsub.s32 4, %v5280
        %v5305 = vsel %vm5220, %v5304, %v5280
        %v5306 = vsel %vm5219, %v4481, %v5303
        %v5307 = vsel %vm5219, 0, %v5305
        %v5308 = vcosq.f32.pop %v5306
        %v5309 = vsinq.f32.pop %v5306
        %vm5310 = vweird.f32 %v4481
        %v5311 = vadd.s32 %v5307, 3
        %v5312 = vand.u32 %v5311, 3
        %vm5313 = vcmp.lt.s32.totalorder %v5312, 2
        %vm5314 = vcmp.eq.s32.totalorder %v5312, 0
        %v5315 = vxor.u32 %v5309, 2147483648
        %v5316 = vsel %vm5314, %v5308, %v5315
        %vm5317 = vcmp.eq.s32.totalorder %v5312, 2
        %v5318 = vxor.u32 %v5308, 2147483648
        %v5319 = vsel %vm5317, %v5318, %v5309
        %v5320 = vsel %vm5313, %v5316, %v5319
        %v5321 = vsel %vm5310, nan, %v5320
        %v5322 = vand.u32 2147483647, %v4482
        %vm5323 = vcmp.le.f32.partialorder %v5322, 0.7853982
        %vm5324 = vcmp.lt.s32.totalorder %v4482, 0
        %v5325 = vand.u32 %v4482, 2139095040
        %v5326 = vshrl.u32 %v5325, 23
        %v5327 = vsub.s32 %v5326, 127
        %v5328 = vand.u32 2147483647, %v4482
        %v5329 = vand.u32 %v5328, 8388607
        %v5330 = vor.u32 %v5329, 8388608
        %v5331 = vsub.s32 0, %v5330
        %v5332 = vadd.s32 %v5327, 1
        %vm5333 = vcmp.gt.s32.totalorder %v5332, 0
        %v5334 = vsel %vm5333, %v5332, 0
        %v5335 = vshrl.u32 %v5334, 5
        %v5336 = vand.u32 %v5334, 31
        %v5337 = vsub.s32 32, %v5336
        %v5338 = vshrl.u32 683565275, %v5337
        %v5339 = vshll.u32 683565275, %v5336
        %v5340 = vshrl.u32 2475754826, %v5337
        %v5341 = vor.u32 %v5339, %v5340
        %v5342 = vshll.u32 2475754826, %v5336
        %v5343 = vshrl.u32 2131351028, %v5337
        %v5344 = vor.u32 %v5342, %v5343
        %v5345 = vshll.u32 2131351028, %v5336
        %v5346 = vshrl.u32 2102212464, %v5337
        %v5347 = vor.u32 %v5345, %v5346
        %v5348 = vshll.u32 2102212464, %v5336
        %v5349 = vshrl.u32 920167782, %v5337
        %v5350 = vor.u32 %v5348, %v5349
        %v5351 = vshll.u32 920167782, %v5336
        %v5352 = vshrl.u32 1326507024, %v5337
        %v5353 = vor.u32 %v5351, %v5352
        %vm5354 = vcmp.lt.s32.totalorder %v5335, 1
        %vm5355 = vcmp.lt.s32.totalorder %v5335, 2
        %vm5356 = vcmp.lt.s32.totalorder %v5335, 3
        %vm5357 = vcmp.lt.s32.totalorder %v5335, 4
        %v5358 = vsel %vm5354, %v5338, %v5341
        %v5359 = vsel %vm5357, %v5347, 2102212464
        %v5360 = vsel %vm5356, %v5344, %v5359
        %v5361 = vsel %vm5355, %v5358, %v5360
        %v5362 = vsel %vm5354, %v5341, %v5344
        %v5363 = vsel %vm5357, %v5350, 920167782
        %v5364 = vsel %vm5356, %v5347, %v5363
        %v5365 = vsel %vm5355, %v5362, %v5364
        %v5366 = vsel %vm5354, %v5344, %v5347
        %v5367 = vsel %vm5357, %v5353, 1326507024
        %v5368 = vsel %vm5356, %v5350, %v5367
        %v5369 = vsel %vm5355, %v5366, %v5368
        %v5370 = vshll.u32 %v5330, 8
        %v5371 = vmul.u32.u64.compose %v5370, %v5369
        %v5372 = vextract.low.u32 %v5371
        %v5373 = vextract.high.u32 %v5371
        %v5374 = vmul.u32.u64.compose %v5370, %v5365
        %v5375 = vextract.low.u32 %v5374
        %v5376 = vextract.high.u32 %v5374
        %v5377 = vmul.u32 %v5370, %v5361
        %v5378 = vadd.s32 %v5373, %v5375
        %vm5379 = vc.u32 %v5373, %v5375
        %v5380 = vadd.s32 %v5376, 1
        %v5381 = vsel %vm5379, %v5380, %v5376
        %v5382 = vadd.s32 %v5377, %v5381
        %v5383 = vadd.s32 %v5382, 536870912
        %v5384 = vshrl.u32 %v5383, 30
        %v5385 = vshll.u32 %v5384, 30
        %v5386 = vsub.s32 %v5382, %v5385
        %vm5387 = vcmp.lt.s32.totalorder %v5386, 0
        %v5388 = vsub.s32 0, %v5386
        %v5389 = vsel %vm5387, %v5388, %v5386
        %v5390 = vclz %v5389
        %v5391 = vsub.s32 %v5390, 2
        %vm5392 = vcmp.gt.s32.totalorder 0, %v5391
        %v5393 = vsel %vm5392, 0, %v5391
        %v5394 = vsub.s32 32, %v5393
        %v5395 = vshll.u32 %v5386, %v5393
        %v5396 = vshrl.u32 %v5378, %v5394
        %v5397 = vor.u32 %v5395, %v5396
        %v5398 = vsub.s32 4294967266, %v5393
        %v5399 = vadd.s32 %v5398, 127
        %v5400 = vshll.u32 %v5399, 23
        %v5401 = vor.u32 4788187, %v5400
        %v5402 = vand.u32 2147483647, %v5401
        %v5404 = vcvt.s32.f32 %v5397
        %v5405 = vmul.f32 %v5404, %v5402
        %v5406 = vxor.u32 %v5405, 2147483648
        %v5407 = vsel %vm5324, %v5406, %v5405
        %v5408 = vsub.s32 4, %v5384
        %v5409 = vsel %vm5324, %v5408, %v5384
        %v5410 = vsel %vm5323, %v4482, %v5407
        %v5411 = vsel %vm5323, 0, %v5409
        %v5412 = vcosq.f32.pop %v5410
        %v5413 = vsinq.f32.pop %v5410
        %vm5414 = vweird.f32 %v4482
        %v5415 = vadd.s32 %v5411, 3
        %v5416 = vand.u32 %v5415, 3
        %vm5417 = vcmp.lt.s32.totalorder %v5416, 2
        %vm5418 = vcmp.eq.s32.totalorder %v5416, 0
        %v5419 = vxor.u32 %v5413, 2147483648
        %v5420 = vsel %vm5418, %v5412, %v5419
        %vm5421 = vcmp.eq.s32.totalorder %v5416, 2
        %v5422 = vxor.u32 %v5412, 2147483648
        %v5423 = vsel %vm5421, %v5422, %v5413
        %v5424 = vsel %vm5417, %v5420, %v5423
        %v5425 = vsel %vm5414, nan, %v5424
        %v5426 = vand.u32 2147483647, %v4483
        %vm5427 = vcmp.le.f32.partialorder %v5426, 0.7853982
        %vm5428 = vcmp.lt.s32.totalorder %v4483, 0
        %v5429 = vand.u32 %v4483, 2139095040
        %v5430 = vshrl.u32 %v5429, 23
        %v5431 = vsub.s32 %v5430, 127
        %v5432 = vand.u32 2147483647, %v4483
        %v5433 = vand.u32 %v5432, 8388607
        %v5434 = vor.u32 %v5433, 8388608
        %v5435 = vsub.s32 0, %v5434
        %v5436 = vadd.s32 %v5431, 1
        %vm5437 = vcmp.gt.s32.totalorder %v5436, 0
        %v5438 = vsel %vm5437, %v5436, 0
        %v5439 = vshrl.u32 %v5438, 5
        %v5440 = vand.u32 %v5438, 31
        %v5441 = vsub.s32 32, %v5440
        %v5442 = vshrl.u32 683565275, %v5441
        %v5443 = vshll.u32 683565275, %v5440
        %v5444 = vshrl.u32 2475754826, %v5441
        %v5445 = vor.u32 %v5443, %v5444
        %v5446 = vshll.u32 2475754826, %v5440
        %v5447 = vshrl.u32 2131351028, %v5441
        %v5448 = vor.u32 %v5446, %v5447
        %v5449 = vshll.u32 2131351028, %v5440
        %v5450 = vshrl.u32 2102212464, %v5441
        %v5451 = vor.u32 %v5449, %v5450
        %v5452 = vshll.u32 2102212464, %v5440
        %v5453 = vshrl.u32 920167782, %v5441
        %v5454 = vor.u32 %v5452, %v5453
        %v5455 = vshll.u32 920167782, %v5440
        %v5456 = vshrl.u32 1326507024, %v5441
        %v5457 = vor.u32 %v5455, %v5456
        %vm5458 = vcmp.lt.s32.totalorder %v5439, 1
        %vm5459 = vcmp.lt.s32.totalorder %v5439, 2
        %vm5460 = vcmp.lt.s32.totalorder %v5439, 3
        %vm5461 = vcmp.lt.s32.totalorder %v5439, 4
        %v5462 = vsel %vm5458, %v5442, %v5445
        %v5463 = vsel %vm5461, %v5451, 2102212464
        %v5464 = vsel %vm5460, %v5448, %v5463
        %v5465 = vsel %vm5459, %v5462, %v5464
        %v5466 = vsel %vm5458, %v5445, %v5448
        %v5467 = vsel %vm5461, %v5454, 920167782
        %v5468 = vsel %vm5460, %v5451, %v5467
        %v5469 = vsel %vm5459, %v5466, %v5468
        %v5470 = vsel %vm5458, %v5448, %v5451
        %v5471 = vsel %vm5461, %v5457, 1326507024
        %v5472 = vsel %vm5460, %v5454, %v5471
        %v5473 = vsel %vm5459, %v5470, %v5472
        %v5474 = vshll.u32 %v5434, 8
        %v5475 = vmul.u32.u64.compose %v5474, %v5473
        %v5476 = vextract.low.u32 %v5475
        %v5477 = vextract.high.u32 %v5475
        %v5478 = vmul.u32.u64.compose %v5474, %v5469
        %v5479 = vextract.low.u32 %v5478
        %v5480 = vextract.high.u32 %v5478
        %v5481 = vmul.u32 %v5474, %v5465
        %v5482 = vadd.s32 %v5477, %v5479
        %vm5483 = vc.u32 %v5477, %v5479
        %v5484 = vadd.s32 %v5480, 1
        %v5485 = vsel %vm5483, %v5484, %v5480
        %v5486 = vadd.s32 %v5481, %v5485
        %v5487 = vadd.s32 %v5486, 536870912
        %v5488 = vshrl.u32 %v5487, 30
        %v5489 = vshll.u32 %v5488, 30
        %v5490 = vsub.s32 %v5486, %v5489
        %vm5491 = vcmp.lt.s32.totalorder %v5490, 0
        %v5492 = vsub.s32 0, %v5490
        %v5493 = vsel %vm5491, %v5492, %v5490
        %v5494 = vclz %v5493
        %v5495 = vsub.s32 %v5494, 2
        %vm5496 = vcmp.gt.s32.totalorder 0, %v5495
        %v5497 = vsel %vm5496, 0, %v5495
        %v5498 = vsub.s32 32, %v5497
        %v5499 = vshll.u32 %v5490, %v5497
        %v5500 = vshrl.u32 %v5482, %v5498
        %v5501 = vor.u32 %v5499, %v5500
        %v5502 = vsub.s32 4294967266, %v5497
        %v5503 = vadd.s32 %v5502, 127
        %v5504 = vshll.u32 %v5503, 23
        %v5505 = vor.u32 4788187, %v5504
        %v5506 = vand.u32 2147483647, %v5505
        %v5508 = vcvt.s32.f32 %v5501
        %v5509 = vmul.f32 %v5508, %v5506
        %v5510 = vxor.u32 %v5509, 2147483648
        %v5511 = vsel %vm5428, %v5510, %v5509
        %v5512 = vsub.s32 4, %v5488
        %v5513 = vsel %vm5428, %v5512, %v5488
        %v5514 = vsel %vm5427, %v4483, %v5511
        %v5515 = vsel %vm5427, 0, %v5513
        %v5516 = vcosq.f32.pop %v5514
        %v5517 = vsinq.f32.pop %v5514
        %vm5518 = vweird.f32 %v4483
        %v5519 = vadd.s32 %v5515, 3
        %v5520 = vand.u32 %v5519, 3
        %vm5521 = vcmp.lt.s32.totalorder %v5520, 2
        %vm5522 = vcmp.eq.s32.totalorder %v5520, 0
        %v5523 = vxor.u32 %v5517, 2147483648
        %v5524 = vsel %vm5522, %v5516, %v5523
        %vm5525 = vcmp.eq.s32.totalorder %v5520, 2
        %v5526 = vxor.u32 %v5516, 2147483648
        %v5527 = vsel %vm5525, %v5526, %v5517
        %v5528 = vsel %vm5521, %v5524, %v5527
        %v5529 = vsel %vm5518, nan, %v5528
        %v5530 = vand.u32 2147483647, %v4484
        %vm5531 = vcmp.le.f32.partialorder %v5530, 0.7853982
        %vm5532 = vcmp.lt.s32.totalorder %v4484, 0
        %v5533 = vand.u32 %v4484, 2139095040
        %v5534 = vshrl.u32 %v5533, 23
        %v5535 = vsub.s32 %v5534, 127
        %v5536 = vand.u32 2147483647, %v4484
        %v5537 = vand.u32 %v5536, 8388607
        %v5538 = vor.u32 %v5537, 8388608
        %v5539 = vsub.s32 0, %v5538
        %v5540 = vadd.s32 %v5535, 1
        %vm5541 = vcmp.gt.s32.totalorder %v5540, 0
        %v5542 = vsel %vm5541, %v5540, 0
        %v5543 = vshrl.u32 %v5542, 5
        %v5544 = vand.u32 %v5542, 31
        %v5545 = vsub.s32 32, %v5544
        %v5546 = vshrl.u32 683565275, %v5545
        %v5547 = vshll.u32 683565275, %v5544
        %v5548 = vshrl.u32 2475754826, %v5545
        %v5549 = vor.u32 %v5547, %v5548
        %v5550 = vshll.u32 2475754826, %v5544
        %v5551 = vshrl.u32 2131351028, %v5545
        %v5552 = vor.u32 %v5550, %v5551
        %v5553 = vshll.u32 2131351028, %v5544
        %v5554 = vshrl.u32 2102212464, %v5545
        %v5555 = vor.u32 %v5553, %v5554
        %v5556 = vshll.u32 2102212464, %v5544
        %v5557 = vshrl.u32 920167782, %v5545
        %v5558 = vor.u32 %v5556, %v5557
        %v5559 = vshll.u32 920167782, %v5544
        %v5560 = vshrl.u32 1326507024, %v5545
        %v5561 = vor.u32 %v5559, %v5560
        %vm5562 = vcmp.lt.s32.totalorder %v5543, 1
        %vm5563 = vcmp.lt.s32.totalorder %v5543, 2
        %vm5564 = vcmp.lt.s32.totalorder %v5543, 3
        %vm5565 = vcmp.lt.s32.totalorder %v5543, 4
        %v5566 = vsel %vm5562, %v5546, %v5549
        %v5567 = vsel %vm5565, %v5555, 2102212464
        %v5568 = vsel %vm5564, %v5552, %v5567
        %v5569 = vsel %vm5563, %v5566, %v5568
        %v5570 = vsel %vm5562, %v5549, %v5552
        %v5571 = vsel %vm5565, %v5558, 920167782
        %v5572 = vsel %vm5564, %v5555, %v5571
        %v5573 = vsel %vm5563, %v5570, %v5572
        %v5574 = vsel %vm5562, %v5552, %v5555
        %v5575 = vsel %vm5565, %v5561, 1326507024
        %v5576 = vsel %vm5564, %v5558, %v5575
        %v5577 = vsel %vm5563, %v5574, %v5576
        %v5578 = vshll.u32 %v5538, 8
        %v5579 = vmul.u32.u64.compose %v5578, %v5577
        %v5580 = vextract.low.u32 %v5579
        %v5581 = vextract.high.u32 %v5579
        %v5582 = vmul.u32.u64.compose %v5578, %v5573
        %v5583 = vextract.low.u32 %v5582
        %v5584 = vextract.high.u32 %v5582
        %v5585 = vmul.u32 %v5578, %v5569
        %v5586 = vadd.s32 %v5581, %v5583
        %vm5587 = vc.u32 %v5581, %v5583
        %v5588 = vadd.s32 %v5584, 1
        %v5589 = vsel %vm5587, %v5588, %v5584
        %v5590 = vadd.s32 %v5585, %v5589
        %v5591 = vadd.s32 %v5590, 536870912
        %v5592 = vshrl.u32 %v5591, 30
        %v5593 = vshll.u32 %v5592, 30
        %v5594 = vsub.s32 %v5590, %v5593
        %vm5595 = vcmp.lt.s32.totalorder %v5594, 0
        %v5596 = vsub.s32 0, %v5594
        %v5597 = vsel %vm5595, %v5596, %v5594
        %v5598 = vclz %v5597
        %v5599 = vsub.s32 %v5598, 2
        %vm5600 = vcmp.gt.s32.totalorder 0, %v5599
        %v5601 = vsel %vm5600, 0, %v5599
        %v5602 = vsub.s32 32, %v5601
        %v5603 = vshll.u32 %v5594, %v5601
        %v5604 = vshrl.u32 %v5586, %v5602
        %v5605 = vor.u32 %v5603, %v5604
        %v5606 = vsub.s32 4294967266, %v5601
        %v5607 = vadd.s32 %v5606, 127
        %v5608 = vshll.u32 %v5607, 23
        %v5609 = vor.u32 4788187, %v5608
        %v5610 = vand.u32 2147483647, %v5609
        %v5612 = vcvt.s32.f32 %v5605
        %v5613 = vmul.f32 %v5612, %v5610
        %v5614 = vxor.u32 %v5613, 2147483648
        %v5615 = vsel %vm5532, %v5614, %v5613
        %v5616 = vsub.s32 4, %v5592
        %v5617 = vsel %vm5532, %v5616, %v5592
        %v5618 = vsel %vm5531, %v4484, %v5615
        %v5619 = vsel %vm5531, 0, %v5617
        %v5620 = vcosq.f32.pop %v5618
        %v5621 = vsinq.f32.pop %v5618
        %vm5622 = vweird.f32 %v4484
        %v5623 = vadd.s32 %v5619, 3
        %v5624 = vand.u32 %v5623, 3
        %vm5625 = vcmp.lt.s32.totalorder %v5624, 2
        %vm5626 = vcmp.eq.s32.totalorder %v5624, 0
        %v5627 = vxor.u32 %v5621, 2147483648
        %v5628 = vsel %vm5626, %v5620, %v5627
        %vm5629 = vcmp.eq.s32.totalorder %v5624, 2
        %v5630 = vxor.u32 %v5620, 2147483648
        %v5631 = vsel %vm5629, %v5630, %v5621
        %v5632 = vsel %vm5625, %v5628, %v5631
        %v5633 = vsel %vm5622, nan, %v5632
        %v5634 = vand.u32 2147483647, %v4485
        %vm5635 = vcmp.le.f32.partialorder %v5634, 0.7853982
        %vm5636 = vcmp.lt.s32.totalorder %v4485, 0
        %v5637 = vand.u32 %v4485, 2139095040
        %v5638 = vshrl.u32 %v5637, 23
        %v5639 = vsub.s32 %v5638, 127
        %v5640 = vand.u32 2147483647, %v4485
        %v5641 = vand.u32 %v5640, 8388607
        %v5642 = vor.u32 %v5641, 8388608
        %v5643 = vsub.s32 0, %v5642
        %v5644 = vadd.s32 %v5639, 1
        %vm5645 = vcmp.gt.s32.totalorder %v5644, 0
        %v5646 = vsel %vm5645, %v5644, 0
        %v5647 = vshrl.u32 %v5646, 5
        %v5648 = vand.u32 %v5646, 31
        %v5649 = vsub.s32 32, %v5648
        %v5650 = vshrl.u32 683565275, %v5649
        %v5651 = vshll.u32 683565275, %v5648
        %v5652 = vshrl.u32 2475754826, %v5649
        %v5653 = vor.u32 %v5651, %v5652
        %v5654 = vshll.u32 2475754826, %v5648
        %v5655 = vshrl.u32 2131351028, %v5649
        %v5656 = vor.u32 %v5654, %v5655
        %v5657 = vshll.u32 2131351028, %v5648
        %v5658 = vshrl.u32 2102212464, %v5649
        %v5659 = vor.u32 %v5657, %v5658
        %v5660 = vshll.u32 2102212464, %v5648
        %v5661 = vshrl.u32 920167782, %v5649
        %v5662 = vor.u32 %v5660, %v5661
        %v5663 = vshll.u32 920167782, %v5648
        %v5664 = vshrl.u32 1326507024, %v5649
        %v5665 = vor.u32 %v5663, %v5664
        %vm5666 = vcmp.lt.s32.totalorder %v5647, 1
        %vm5667 = vcmp.lt.s32.totalorder %v5647, 2
        %vm5668 = vcmp.lt.s32.totalorder %v5647, 3
        %vm5669 = vcmp.lt.s32.totalorder %v5647, 4
        %v5670 = vsel %vm5666, %v5650, %v5653
        %v5671 = vsel %vm5669, %v5659, 2102212464
        %v5672 = vsel %vm5668, %v5656, %v5671
        %v5673 = vsel %vm5667, %v5670, %v5672
        %v5674 = vsel %vm5666, %v5653, %v5656
        %v5675 = vsel %vm5669, %v5662, 920167782
        %v5676 = vsel %vm5668, %v5659, %v5675
        %v5677 = vsel %vm5667, %v5674, %v5676
        %v5678 = vsel %vm5666, %v5656, %v5659
        %v5679 = vsel %vm5669, %v5665, 1326507024
        %v5680 = vsel %vm5668, %v5662, %v5679
        %v5681 = vsel %vm5667, %v5678, %v5680
        %v5682 = vshll.u32 %v5642, 8
        %v5683 = vmul.u32.u64.compose %v5682, %v5681
        %v5684 = vextract.low.u32 %v5683
        %v5685 = vextract.high.u32 %v5683
        %v5686 = vmul.u32.u64.compose %v5682, %v5677
        %v5687 = vextract.low.u32 %v5686
        %v5688 = vextract.high.u32 %v5686
        %v5689 = vmul.u32 %v5682, %v5673
        %v5690 = vadd.s32 %v5685, %v5687
        %vm5691 = vc.u32 %v5685, %v5687
        %v5692 = vadd.s32 %v5688, 1
        %v5693 = vsel %vm5691, %v5692, %v5688
        %v5694 = vadd.s32 %v5689, %v5693
        %v5695 = vadd.s32 %v5694, 536870912
        %v5696 = vshrl.u32 %v5695, 30
        %v5697 = vshll.u32 %v5696, 30
        %v5698 = vsub.s32 %v5694, %v5697
        %vm5699 = vcmp.lt.s32.totalorder %v5698, 0
        %v5700 = vsub.s32 0, %v5698
        %v5701 = vsel %vm5699, %v5700, %v5698
        %v5702 = vclz %v5701
        %v5703 = vsub.s32 %v5702, 2
        %vm5704 = vcmp.gt.s32.totalorder 0, %v5703
        %v5705 = vsel %vm5704, 0, %v5703
        %v5706 = vsub.s32 32, %v5705
        %v5707 = vshll.u32 %v5698, %v5705
        %v5708 = vshrl.u32 %v5690, %v5706
        %v5709 = vor.u32 %v5707, %v5708
        %v5710 = vsub.s32 4294967266, %v5705
        %v5711 = vadd.s32 %v5710, 127
        %v5712 = vshll.u32 %v5711, 23
        %v5713 = vor.u32 4788187, %v5712
        %v5714 = vand.u32 2147483647, %v5713
        %v5716 = vcvt.s32.f32 %v5709
        %v5717 = vmul.f32 %v5716, %v5714
        %v5718 = vxor.u32 %v5717, 2147483648
        %v5719 = vsel %vm5636, %v5718, %v5717
        %v5720 = vsub.s32 4, %v5696
        %v5721 = vsel %vm5636, %v5720, %v5696
        %v5722 = vsel %vm5635, %v4485, %v5719
        %v5723 = vsel %vm5635, 0, %v5721
        %v5724 = vcosq.f32.pop %v5722
        %v5725 = vsinq.f32.pop %v5722
        %vm5726 = vweird.f32 %v4485
        %v5727 = vadd.s32 %v5723, 3
        %v5728 = vand.u32 %v5727, 3
        %vm5729 = vcmp.lt.s32.totalorder %v5728, 2
        %vm5730 = vcmp.eq.s32.totalorder %v5728, 0
        %v5731 = vxor.u32 %v5725, 2147483648
        %v5732 = vsel %vm5730, %v5724, %v5731
        %vm5733 = vcmp.eq.s32.totalorder %v5728, 2
        %v5734 = vxor.u32 %v5724, 2147483648
        %v5735 = vsel %vm5733, %v5734, %v5725
        %v5736 = vsel %vm5729, %v5732, %v5735
        %v5737 = vsel %vm5726, nan, %v5736
        %v5738 = vand.u32 2147483647, %v4486
        %vm5739 = vcmp.le.f32.partialorder %v5738, 0.7853982
        %vm5740 = vcmp.lt.s32.totalorder %v4486, 0
        %v5741 = vand.u32 %v4486, 2139095040
        %v5742 = vshrl.u32 %v5741, 23
        %v5743 = vsub.s32 %v5742, 127
        %v5744 = vand.u32 2147483647, %v4486
        %v5745 = vand.u32 %v5744, 8388607
        %v5746 = vor.u32 %v5745, 8388608
        %v5747 = vsub.s32 0, %v5746
        %v5748 = vadd.s32 %v5743, 1
        %vm5749 = vcmp.gt.s32.totalorder %v5748, 0
        %v5750 = vsel %vm5749, %v5748, 0
        %v5751 = vshrl.u32 %v5750, 5
        %v5752 = vand.u32 %v5750, 31
        %v5753 = vsub.s32 32, %v5752
        %v5754 = vshrl.u32 683565275, %v5753
        %v5755 = vshll.u32 683565275, %v5752
        %v5756 = vshrl.u32 2475754826, %v5753
        %v5757 = vor.u32 %v5755, %v5756
        %v5758 = vshll.u32 2475754826, %v5752
        %v5759 = vshrl.u32 2131351028, %v5753
        %v5760 = vor.u32 %v5758, %v5759
        %v5761 = vshll.u32 2131351028, %v5752
        %v5762 = vshrl.u32 2102212464, %v5753
        %v5763 = vor.u32 %v5761, %v5762
        %v5764 = vshll.u32 2102212464, %v5752
        %v5765 = vshrl.u32 920167782, %v5753
        %v5766 = vor.u32 %v5764, %v5765
        %v5767 = vshll.u32 920167782, %v5752
        %v5768 = vshrl.u32 1326507024, %v5753
        %v5769 = vor.u32 %v5767, %v5768
        %vm5770 = vcmp.lt.s32.totalorder %v5751, 1
        %vm5771 = vcmp.lt.s32.totalorder %v5751, 2
        %vm5772 = vcmp.lt.s32.totalorder %v5751, 3
        %vm5773 = vcmp.lt.s32.totalorder %v5751, 4
        %v5774 = vsel %vm5770, %v5754, %v5757
        %v5775 = vsel %vm5773, %v5763, 2102212464
        %v5776 = vsel %vm5772, %v5760, %v5775
        %v5777 = vsel %vm5771, %v5774, %v5776
        %v5778 = vsel %vm5770, %v5757, %v5760
        %v5779 = vsel %vm5773, %v5766, 920167782
        %v5780 = vsel %vm5772, %v5763, %v5779
        %v5781 = vsel %vm5771, %v5778, %v5780
        %v5782 = vsel %vm5770, %v5760, %v5763
        %v5783 = vsel %vm5773, %v5769, 1326507024
        %v5784 = vsel %vm5772, %v5766, %v5783
        %v5785 = vsel %vm5771, %v5782, %v5784
        %v5786 = vshll.u32 %v5746, 8
        %v5787 = vmul.u32.u64.compose %v5786, %v5785
        %v5788 = vextract.low.u32 %v5787
        %v5789 = vextract.high.u32 %v5787
        %v5790 = vmul.u32.u64.compose %v5786, %v5781
        %v5791 = vextract.low.u32 %v5790
        %v5792 = vextract.high.u32 %v5790
        %v5793 = vmul.u32 %v5786, %v5777
        %v5794 = vadd.s32 %v5789, %v5791
        %vm5795 = vc.u32 %v5789, %v5791
        %v5796 = vadd.s32 %v5792, 1
        %v5797 = vsel %vm5795, %v5796, %v5792
        %v5798 = vadd.s32 %v5793, %v5797
        %v5799 = vadd.s32 %v5798, 536870912
        %v5800 = vshrl.u32 %v5799, 30
        %v5801 = vshll.u32 %v5800, 30
        %v5802 = vsub.s32 %v5798, %v5801
        %vm5803 = vcmp.lt.s32.totalorder %v5802, 0
        %v5804 = vsub.s32 0, %v5802
        %v5805 = vsel %vm5803, %v5804, %v5802
        %v5806 = vclz %v5805
        %v5807 = vsub.s32 %v5806, 2
        %vm5808 = vcmp.gt.s32.totalorder 0, %v5807
        %v5809 = vsel %vm5808, 0, %v5807
        %v5810 = vsub.s32 32, %v5809
        %v5811 = vshll.u32 %v5802, %v5809
        %v5812 = vshrl.u32 %v5794, %v5810
        %v5813 = vor.u32 %v5811, %v5812
        %v5814 = vsub.s32 4294967266, %v5809
        %v5815 = vadd.s32 %v5814, 127
        %v5816 = vshll.u32 %v5815, 23
        %v5817 = vor.u32 4788187, %v5816
        %v5818 = vand.u32 2147483647, %v5817
        %v5820 = vcvt.s32.f32 %v5813
        %v5821 = vmul.f32 %v5820, %v5818
        %v5822 = vxor.u32 %v5821, 2147483648
        %v5823 = vsel %vm5740, %v5822, %v5821
        %v5824 = vsub.s32 4, %v5800
        %v5825 = vsel %vm5740, %v5824, %v5800
        %v5826 = vsel %vm5739, %v4486, %v5823
        %v5827 = vsel %vm5739, 0, %v5825
        %v5828 = vcosq.f32.pop %v5826
        %v5829 = vsinq.f32.pop %v5826
        %vm5830 = vweird.f32 %v4486
        %v5831 = vadd.s32 %v5827, 3
        %v5832 = vand.u32 %v5831, 3
        %vm5833 = vcmp.lt.s32.totalorder %v5832, 2
        %vm5834 = vcmp.eq.s32.totalorder %v5832, 0
        %v5835 = vxor.u32 %v5829, 2147483648
        %v5836 = vsel %vm5834, %v5828, %v5835
        %vm5837 = vcmp.eq.s32.totalorder %v5832, 2
        %v5838 = vxor.u32 %v5828, 2147483648
        %v5839 = vsel %vm5837, %v5838, %v5829
        %v5840 = vsel %vm5833, %v5836, %v5839
        %v5841 = vsel %vm5830, nan, %v5840
        %v5842 = vand.u32 2147483647, %v4487
        %vm5843 = vcmp.le.f32.partialorder %v5842, 0.7853982
        %vm5844 = vcmp.lt.s32.totalorder %v4487, 0
        %v5845 = vand.u32 %v4487, 2139095040
        %v5846 = vshrl.u32 %v5845, 23
        %v5847 = vsub.s32 %v5846, 127
        %v5848 = vand.u32 2147483647, %v4487
        %v5849 = vand.u32 %v5848, 8388607
        %v5850 = vor.u32 %v5849, 8388608
        %v5851 = vsub.s32 0, %v5850
        %v5852 = vadd.s32 %v5847, 1
        %vm5853 = vcmp.gt.s32.totalorder %v5852, 0
        %v5854 = vsel %vm5853, %v5852, 0
        %v5855 = vshrl.u32 %v5854, 5
        %v5856 = vand.u32 %v5854, 31
        %v5857 = vsub.s32 32, %v5856
        %v5858 = vshrl.u32 683565275, %v5857
        %v5859 = vshll.u32 683565275, %v5856
        %v5860 = vshrl.u32 2475754826, %v5857
        %v5861 = vor.u32 %v5859, %v5860
        %v5862 = vshll.u32 2475754826, %v5856
        %v5863 = vshrl.u32 2131351028, %v5857
        %v5864 = vor.u32 %v5862, %v5863
        %v5865 = vshll.u32 2131351028, %v5856
        %v5866 = vshrl.u32 2102212464, %v5857
        %v5867 = vor.u32 %v5865, %v5866
        %v5868 = vshll.u32 2102212464, %v5856
        %v5869 = vshrl.u32 920167782, %v5857
        %v5870 = vor.u32 %v5868, %v5869
        %v5871 = vshll.u32 920167782, %v5856
        %v5872 = vshrl.u32 1326507024, %v5857
        %v5873 = vor.u32 %v5871, %v5872
        %vm5874 = vcmp.lt.s32.totalorder %v5855, 1
        %vm5875 = vcmp.lt.s32.totalorder %v5855, 2
        %vm5876 = vcmp.lt.s32.totalorder %v5855, 3
        %vm5877 = vcmp.lt.s32.totalorder %v5855, 4
        %v5878 = vsel %vm5874, %v5858, %v5861
        %v5879 = vsel %vm5877, %v5867, 2102212464
        %v5880 = vsel %vm5876, %v5864, %v5879
        %v5881 = vsel %vm5875, %v5878, %v5880
        %v5882 = vsel %vm5874, %v5861, %v5864
        %v5883 = vsel %vm5877, %v5870, 920167782
        %v5884 = vsel %vm5876, %v5867, %v5883
        %v5885 = vsel %vm5875, %v5882, %v5884
        %v5886 = vsel %vm5874, %v5864, %v5867
        %v5887 = vsel %vm5877, %v5873, 1326507024
        %v5888 = vsel %vm5876, %v5870, %v5887
        %v5889 = vsel %vm5875, %v5886, %v5888
        %v5890 = vshll.u32 %v5850, 8
        %v5891 = vmul.u32.u64.compose %v5890, %v5889
        %v5892 = vextract.low.u32 %v5891
        %v5893 = vextract.high.u32 %v5891
        %v5894 = vmul.u32.u64.compose %v5890, %v5885
        %v5895 = vextract.low.u32 %v5894
        %v5896 = vextract.high.u32 %v5894
        %v5897 = vmul.u32 %v5890, %v5881
        %v5898 = vadd.s32 %v5893, %v5895
        %vm5899 = vc.u32 %v5893, %v5895
        %v5900 = vadd.s32 %v5896, 1
        %v5901 = vsel %vm5899, %v5900, %v5896
        %v5902 = vadd.s32 %v5897, %v5901
        %v5903 = vadd.s32 %v5902, 536870912
        %v5904 = vshrl.u32 %v5903, 30
        %v5905 = vshll.u32 %v5904, 30
        %v5906 = vsub.s32 %v5902, %v5905
        %vm5907 = vcmp.lt.s32.totalorder %v5906, 0
        %v5908 = vsub.s32 0, %v5906
        %v5909 = vsel %vm5907, %v5908, %v5906
        %v5910 = vclz %v5909
        %v5911 = vsub.s32 %v5910, 2
        %vm5912 = vcmp.gt.s32.totalorder 0, %v5911
        %v5913 = vsel %vm5912, 0, %v5911
        %v5914 = vsub.s32 32, %v5913
        %v5915 = vshll.u32 %v5906, %v5913
        %v5916 = vshrl.u32 %v5898, %v5914
        %v5917 = vor.u32 %v5915, %v5916
        %v5918 = vsub.s32 4294967266, %v5913
        %v5919 = vadd.s32 %v5918, 127
        %v5920 = vshll.u32 %v5919, 23
        %v5921 = vor.u32 4788187, %v5920
        %v5922 = vand.u32 2147483647, %v5921
        %v5924 = vcvt.s32.f32 %v5917
        %v5925 = vmul.f32 %v5924, %v5922
        %v5926 = vxor.u32 %v5925, 2147483648
        %v5927 = vsel %vm5844, %v5926, %v5925
        %v5928 = vsub.s32 4, %v5904
        %v5929 = vsel %vm5844, %v5928, %v5904
        %v5930 = vsel %vm5843, %v4487, %v5927
        %v5931 = vsel %vm5843, 0, %v5929
        %v5932 = vcosq.f32.pop %v5930
        %v5933 = vsinq.f32.pop %v5930
        %vm5934 = vweird.f32 %v4487
        %v5935 = vadd.s32 %v5931, 3
        %v5936 = vand.u32 %v5935, 3
        %vm5937 = vcmp.lt.s32.totalorder %v5936, 2
        %vm5938 = vcmp.eq.s32.totalorder %v5936, 0
        %v5939 = vxor.u32 %v5933, 2147483648
        %v5940 = vsel %vm5938, %v5932, %v5939
        %vm5941 = vcmp.eq.s32.totalorder %v5936, 2
        %v5942 = vxor.u32 %v5932, 2147483648
        %v5943 = vsel %vm5941, %v5942, %v5933
        %v5944 = vsel %vm5937, %v5940, %v5943
        %v5945 = vsel %vm5934, nan, %v5944
        %v5946 = vand.u32 2147483647, %v4488
        %vm5947 = vcmp.le.f32.partialorder %v5946, 0.7853982
        %vm5948 = vcmp.lt.s32.totalorder %v4488, 0
        %v5949 = vand.u32 %v4488, 2139095040
        %v5950 = vshrl.u32 %v5949, 23
        %v5951 = vsub.s32 %v5950, 127
        %v5952 = vand.u32 2147483647, %v4488
        %v5953 = vand.u32 %v5952, 8388607
        %v5954 = vor.u32 %v5953, 8388608
        %v5955 = vsub.s32 0, %v5954
        %v5956 = vadd.s32 %v5951, 1
        %vm5957 = vcmp.gt.s32.totalorder %v5956, 0
        %v5958 = vsel %vm5957, %v5956, 0
        %v5959 = vshrl.u32 %v5958, 5
        %v5960 = vand.u32 %v5958, 31
        %v5961 = vsub.s32 32, %v5960
        %v5962 = vshrl.u32 683565275, %v5961
        %v5963 = vshll.u32 683565275, %v5960
        %v5964 = vshrl.u32 2475754826, %v5961
        %v5965 = vor.u32 %v5963, %v5964
        %v5966 = vshll.u32 2475754826, %v5960
        %v5967 = vshrl.u32 2131351028, %v5961
        %v5968 = vor.u32 %v5966, %v5967
        %v5969 = vshll.u32 2131351028, %v5960
        %v5970 = vshrl.u32 2102212464, %v5961
        %v5971 = vor.u32 %v5969, %v5970
        %v5972 = vshll.u32 2102212464, %v5960
        %v5973 = vshrl.u32 920167782, %v5961
        %v5974 = vor.u32 %v5972, %v5973
        %v5975 = vshll.u32 920167782, %v5960
        %v5976 = vshrl.u32 1326507024, %v5961
        %v5977 = vor.u32 %v5975, %v5976
        %vm5978 = vcmp.lt.s32.totalorder %v5959, 1
        %vm5979 = vcmp.lt.s32.totalorder %v5959, 2
        %vm5980 = vcmp.lt.s32.totalorder %v5959, 3
        %vm5981 = vcmp.lt.s32.totalorder %v5959, 4
        %v5982 = vsel %vm5978, %v5962, %v5965
        %v5983 = vsel %vm5981, %v5971, 2102212464
        %v5984 = vsel %vm5980, %v5968, %v5983
        %v5985 = vsel %vm5979, %v5982, %v5984
        %v5986 = vsel %vm5978, %v5965, %v5968
        %v5987 = vsel %vm5981, %v5974, 920167782
        %v5988 = vsel %vm5980, %v5971, %v5987
        %v5989 = vsel %vm5979, %v5986, %v5988
        %v5990 = vsel %vm5978, %v5968, %v5971
        %v5991 = vsel %vm5981, %v5977, 1326507024
        %v5992 = vsel %vm5980, %v5974, %v5991
        %v5993 = vsel %vm5979, %v5990, %v5992
        %v5994 = vshll.u32 %v5954, 8
        %v5995 = vmul.u32.u64.compose %v5994, %v5993
        %v5996 = vextract.low.u32 %v5995
        %v5997 = vextract.high.u32 %v5995
        %v5998 = vmul.u32.u64.compose %v5994, %v5989
        %v5999 = vextract.low.u32 %v5998
        %v6000 = vextract.high.u32 %v5998
        %v6001 = vmul.u32 %v5994, %v5985
        %v6002 = vadd.s32 %v5997, %v5999
        %vm6003 = vc.u32 %v5997, %v5999
        %v6004 = vadd.s32 %v6000, 1
        %v6005 = vsel %vm6003, %v6004, %v6000
        %v6006 = vadd.s32 %v6001, %v6005
        %v6007 = vadd.s32 %v6006, 536870912
        %v6008 = vshrl.u32 %v6007, 30
        %v6009 = vshll.u32 %v6008, 30
        %v6010 = vsub.s32 %v6006, %v6009
        %vm6011 = vcmp.lt.s32.totalorder %v6010, 0
        %v6012 = vsub.s32 0, %v6010
        %v6013 = vsel %vm6011, %v6012, %v6010
        %v6014 = vclz %v6013
        %v6015 = vsub.s32 %v6014, 2
        %vm6016 = vcmp.gt.s32.totalorder 0, %v6015
        %v6017 = vsel %vm6016, 0, %v6015
        %v6018 = vsub.s32 32, %v6017
        %v6019 = vshll.u32 %v6010, %v6017
        %v6020 = vshrl.u32 %v6002, %v6018
        %v6021 = vor.u32 %v6019, %v6020
        %v6022 = vsub.s32 4294967266, %v6017
        %v6023 = vadd.s32 %v6022, 127
        %v6024 = vshll.u32 %v6023, 23
        %v6025 = vor.u32 4788187, %v6024
        %v6026 = vand.u32 2147483647, %v6025
        %v6028 = vcvt.s32.f32 %v6021
        %v6029 = vmul.f32 %v6028, %v6026
        %v6030 = vxor.u32 %v6029, 2147483648
        %v6031 = vsel %vm5948, %v6030, %v6029
        %v6032 = vsub.s32 4, %v6008
        %v6033 = vsel %vm5948, %v6032, %v6008
        %v6034 = vsel %vm5947, %v4488, %v6031
        %v6035 = vsel %vm5947, 0, %v6033
        %v6036 = vcosq.f32.pop %v6034
        %v6037 = vsinq.f32.pop %v6034
        %vm6038 = vweird.f32 %v4488
        %v6039 = vadd.s32 %v6035, 3
        %v6040 = vand.u32 %v6039, 3
        %vm6041 = vcmp.lt.s32.totalorder %v6040, 2
        %vm6042 = vcmp.eq.s32.totalorder %v6040, 0
        %v6043 = vxor.u32 %v6037, 2147483648
        %v6044 = vsel %vm6042, %v6036, %v6043
        %vm6045 = vcmp.eq.s32.totalorder %v6040, 2
        %v6046 = vxor.u32 %v6036, 2147483648
        %v6047 = vsel %vm6045, %v6046, %v6037
        %v6048 = vsel %vm6041, %v6044, %v6047
        %v6049 = vsel %vm6038, nan, %v6048
        %v6050 = vand.u32 2147483647, %v4489
        %vm6051 = vcmp.le.f32.partialorder %v6050, 0.7853982
        %vm6052 = vcmp.lt.s32.totalorder %v4489, 0
        %v6053 = vand.u32 %v4489, 2139095040
        %v6054 = vshrl.u32 %v6053, 23
        %v6055 = vsub.s32 %v6054, 127
        %v6056 = vand.u32 2147483647, %v4489
        %v6057 = vand.u32 %v6056, 8388607
        %v6058 = vor.u32 %v6057, 8388608
        %v6059 = vsub.s32 0, %v6058
        %v6060 = vadd.s32 %v6055, 1
        %vm6061 = vcmp.gt.s32.totalorder %v6060, 0
        %v6062 = vsel %vm6061, %v6060, 0
        %v6063 = vshrl.u32 %v6062, 5
        %v6064 = vand.u32 %v6062, 31
        %v6065 = vsub.s32 32, %v6064
        %v6066 = vshrl.u32 683565275, %v6065
        %v6067 = vshll.u32 683565275, %v6064
        %v6068 = vshrl.u32 2475754826, %v6065
        %v6069 = vor.u32 %v6067, %v6068
        %v6070 = vshll.u32 2475754826, %v6064
        %v6071 = vshrl.u32 2131351028, %v6065
        %v6072 = vor.u32 %v6070, %v6071
        %v6073 = vshll.u32 2131351028, %v6064
        %v6074 = vshrl.u32 2102212464, %v6065
        %v6075 = vor.u32 %v6073, %v6074
        %v6076 = vshll.u32 2102212464, %v6064
        %v6077 = vshrl.u32 920167782, %v6065
        %v6078 = vor.u32 %v6076, %v6077
        %v6079 = vshll.u32 920167782, %v6064
        %v6080 = vshrl.u32 1326507024, %v6065
        %v6081 = vor.u32 %v6079, %v6080
        %vm6082 = vcmp.lt.s32.totalorder %v6063, 1
        %vm6083 = vcmp.lt.s32.totalorder %v6063, 2
        %vm6084 = vcmp.lt.s32.totalorder %v6063, 3
        %vm6085 = vcmp.lt.s32.totalorder %v6063, 4
        %v6086 = vsel %vm6082, %v6066, %v6069
        %v6087 = vsel %vm6085, %v6075, 2102212464
        %v6088 = vsel %vm6084, %v6072, %v6087
        %v6089 = vsel %vm6083, %v6086, %v6088
        %v6090 = vsel %vm6082, %v6069, %v6072
        %v6091 = vsel %vm6085, %v6078, 920167782
        %v6092 = vsel %vm6084, %v6075, %v6091
        %v6093 = vsel %vm6083, %v6090, %v6092
        %v6094 = vsel %vm6082, %v6072, %v6075
        %v6095 = vsel %vm6085, %v6081, 1326507024
        %v6096 = vsel %vm6084, %v6078, %v6095
        %v6097 = vsel %vm6083, %v6094, %v6096
        %v6098 = vshll.u32 %v6058, 8
        %v6099 = vmul.u32.u64.compose %v6098, %v6097
        %v6100 = vextract.low.u32 %v6099
        %v6101 = vextract.high.u32 %v6099
        %v6102 = vmul.u32.u64.compose %v6098, %v6093
        %v6103 = vextract.low.u32 %v6102
        %v6104 = vextract.high.u32 %v6102
        %v6105 = vmul.u32 %v6098, %v6089
        %v6106 = vadd.s32 %v6101, %v6103
        %vm6107 = vc.u32 %v6101, %v6103
        %v6108 = vadd.s32 %v6104, 1
        %v6109 = vsel %vm6107, %v6108, %v6104
        %v6110 = vadd.s32 %v6105, %v6109
        %v6111 = vadd.s32 %v6110, 536870912
        %v6112 = vshrl.u32 %v6111, 30
        %v6113 = vshll.u32 %v6112, 30
        %v6114 = vsub.s32 %v6110, %v6113
        %vm6115 = vcmp.lt.s32.totalorder %v6114, 0
        %v6116 = vsub.s32 0, %v6114
        %v6117 = vsel %vm6115, %v6116, %v6114
        %v6118 = vclz %v6117
        %v6119 = vsub.s32 %v6118, 2
        %vm6120 = vcmp.gt.s32.totalorder 0, %v6119
        %v6121 = vsel %vm6120, 0, %v6119
        %v6122 = vsub.s32 32, %v6121
        %v6123 = vshll.u32 %v6114, %v6121
        %v6124 = vshrl.u32 %v6106, %v6122
        %v6125 = vor.u32 %v6123, %v6124
        %v6126 = vsub.s32 4294967266, %v6121
        %v6127 = vadd.s32 %v6126, 127
        %v6128 = vshll.u32 %v6127, 23
        %v6129 = vor.u32 4788187, %v6128
        %v6130 = vand.u32 2147483647, %v6129
        %v6132 = vcvt.s32.f32 %v6125
        %v6133 = vmul.f32 %v6132, %v6130
        %v6134 = vxor.u32 %v6133, 2147483648
        %v6135 = vsel %vm6052, %v6134, %v6133
        %v6136 = vsub.s32 4, %v6112
        %v6137 = vsel %vm6052, %v6136, %v6112
        %v6138 = vsel %vm6051, %v4489, %v6135
        %v6139 = vsel %vm6051, 0, %v6137
        %v6140 = vcosq.f32.pop %v6138
        %v6141 = vsinq.f32.pop %v6138
        %vm6142 = vweird.f32 %v4489
        %v6143 = vadd.s32 %v6139, 3
        %v6144 = vand.u32 %v6143, 3
        %vm6145 = vcmp.lt.s32.totalorder %v6144, 2
        %vm6146 = vcmp.eq.s32.totalorder %v6144, 0
        %v6147 = vxor.u32 %v6141, 2147483648
        %v6148 = vsel %vm6146, %v6140, %v6147
        %vm6149 = vcmp.eq.s32.totalorder %v6144, 2
        %v6150 = vxor.u32 %v6140, 2147483648
        %v6151 = vsel %vm6149, %v6150, %v6141
        %v6152 = vsel %vm6145, %v6148, %v6151
        %v6153 = vsel %vm6142, nan, %v6152
        %v6154 = vld [vmem:[%s8] sm:$0xff]
        %v6155 = vld [vmem:[%s8 + $0x8] sm:$0xff]
        %v6156 = vld [vmem:[%s8 + $0x10] sm:$0xff]
        %v6157 = vld [vmem:[%s8 + $0x18] sm:$0xff]
        %v6158 = vld [vmem:[%s8 + $0x20] sm:$0xff]
        %v6159 = vld [vmem:[%s8 + $0x28] sm:$0xff]
        %v6160 = vld [vmem:[%s8 + $0x30] sm:$0xff]
        %v6161 = vld [vmem:[%s8 + $0x38] sm:$0xff]
        %v6162 = vld [vmem:[%s8 + $0x40] sm:$0xff]
        %v6163 = vld [vmem:[%s8 + $0x48] sm:$0xff]
        %v6164 = vld [vmem:[%s8 + $0x50] sm:$0xff]
        %v6165 = vld [vmem:[%s8 + $0x58] sm:$0xff]
        %v6166 = vld [vmem:[%s8 + $0x60] sm:$0xff]
        %v6167 = vld [vmem:[%s8 + $0x68] sm:$0xff]
        %v6168 = vld [vmem:[%s8 + $0x70] sm:$0xff]
        %v6169 = vld [vmem:[%s8 + $0x78] sm:$0xff]
        %v6170 = vld [vmem:[%s9] sm:$0x1]
        %v6172 = vlaneseq
        %v6173 = vshrl.u32 %v6172, 7
        %v6174 = vsub.s32 0, %v6173
        %v6175 = vrot.slane %v6170, %v6174
        %6177 = vmatprep.subr.mxu0 0.0
        %6178 = vmatpush1.msra.mxu0 %v6169
        %6179 = vmatprep.subr.mxu0 0.0
        %6180 = vmatpush1.msra.mxu0 %v6168
        %6181 = vmatprep.subr.mxu0 0.0
        %6182 = vmatpush1.msra.mxu0 %v6167
        %6183 = vmatprep.subr.mxu0 0.0
        %6184 = vmatpush1.msra.mxu0 %v6166
        %6185 = vmatprep.subr.mxu0 0.0
        %6186 = vmatpush1.msra.mxu0 %v6165
        %6187 = vmatprep.subr.mxu0 0.0
        %6188 = vmatpush1.msra.mxu0 %v6164
        %6189 = vmatprep.subr.mxu0 0.0
        %6190 = vmatpush1.msra.mxu0 %v6163
        %6191 = vmatprep.subr.mxu0 0.0
        %6192 = vmatpush1.msra.mxu0 %v6162
        %6193 = vmatprep.subr.mxu0 0.0
        %6194 = vmatpush1.msra.mxu0 %v6161
        %6195 = vmatprep.subr.mxu0 0.0
        %6196 = vmatpush1.msra.mxu0 %v6160
        %6197 = vmatprep.subr.mxu0 0.0
        %6198 = vmatpush1.msra.mxu0 %v6159
        %6199 = vmatprep.subr.mxu0 0.0
        %6200 = vmatpush1.msra.mxu0 %v6158
        %6201 = vmatprep.subr.mxu0 0.0
        %6202 = vmatpush1.msra.mxu0 %v6157
        %6203 = vmatprep.subr.mxu0 0.0
        %6204 = vmatpush1.msra.mxu0 %v6156
        %6205 = vmatprep.subr.mxu0 0.0
        %6206 = vmatpush1.msra.mxu0 %v6155
        %6207 = vmatprep.subr.mxu0 0.0
        %6208 = vmatpush1.msra.mxu0 %v6154
        %6209 = vmatprep.subr.mxu0 0.0
        %6210 = vmatpush2.msra.mxu0 0.0
        %6211 = vmatprep.subr.mxu0 0.0
        %6212 = vmatpush2.msra.mxu0 0.0
        %6213 = vmatprep.subr.mxu0 0.0
        %6214 = vmatpush2.msra.mxu0 0.0
        %6215 = vmatprep.subr.mxu0 0.0
        %6216 = vmatpush2.msra.mxu0 0.0
        %6217 = vmatprep.subr.mxu0 0.0
        %6218 = vmatpush2.msra.mxu0 0.0
        %6219 = vmatprep.subr.mxu0 0.0
        %6220 = vmatpush2.msra.mxu0 0.0
        %6221 = vmatprep.subr.mxu0 0.0
        %6222 = vmatpush2.msra.mxu0 0.0
        %6223 = vmatprep.subr.mxu0 0.0
        %6224 = vmatpush2.msra.mxu0 0.0
        %6225 = vmatprep.subr.mxu0 0.0
        %6226 = vmatpush2.msra.mxu0 0.0
        %6227 = vmatprep.subr.mxu0 0.0
        %6228 = vmatpush2.msra.mxu0 0.0
        %6229 = vmatprep.subr.mxu0 0.0
        %6230 = vmatpush2.msra.mxu0 0.0
        %6231 = vmatprep.subr.mxu0 0.0
        %6232 = vmatpush2.msra.mxu0 0.0
        %6233 = vmatprep.subr.mxu0 0.0
        %6234 = vmatpush2.msra.mxu0 0.0
        %6235 = vmatprep.subr.mxu0 0.0
        %6236 = vmatpush2.msra.mxu0 0.0
        %6237 = vmatprep.subr.mxu0 0.0
        %6238 = vmatpush2.msra.mxu0 0.0
        %6239 = vmatprep.subr.mxu0 0.0
        %6240 = vmatpush2.msra.mxu0 0.0
        %6241 = vmatprep.mubr.f32.mxu0 0.0
        %6242 = vmatmul.mubr.f32.gmra.mxu0 %v4593
        %v6243 = vpop.f32.mrf.mxu0
        %v6244 = vadd.f32 %v6175, %v6243
        %v6245 = vpop.f32.mrf.mxu0
        %6246 = vmatprep.mubr.f32.mxu0 0.0
        %6247 = vmatmul.mubr.f32.gmra.mxu0 %v4697
        %v6248 = vpop.f32.mrf.mxu0
        %v6249 = vadd.f32 %v6175, %v6248
        %v6250 = vpop.f32.mrf.mxu0
        %6251 = vmatprep.mubr.f32.mxu0 0.0
        %6252 = vmatmul.mubr.f32.gmra.mxu0 %v4801
        %v6253 = vpop.f32.mrf.mxu0
        %v6254 = vadd.f32 %v6175, %v6253
        %v6255 = vpop.f32.mrf.mxu0
        %6256 = vmatprep.mubr.f32.mxu0 0.0
        %6257 = vmatmul.mubr.f32.gmra.mxu0 %v4905
        %v6258 = vpop.f32.mrf.mxu0
        %v6259 = vadd.f32 %v6175, %v6258
        %v6260 = vpop.f32.mrf.mxu0
        %6261 = vmatprep.mubr.f32.mxu0 0.0
        %6262 = vmatmul.mubr.f32.gmra.mxu0 %v5009
        %v6263 = vpop.f32.mrf.mxu0
        %v6264 = vadd.f32 %v6175, %v6263
        %v6265 = vpop.f32.mrf.mxu0
        %6266 = vmatprep.mubr.f32.mxu0 0.0
        %6267 = vmatmul.mubr.f32.gmra.mxu0 %v5113
        %v6268 = vpop.f32.mrf.mxu0
        %v6269 = vadd.f32 %v6175, %v6268
        %v6270 = vpop.f32.mrf.mxu0
        %6271 = vmatprep.mubr.f32.mxu0 0.0
        %6272 = vmatmul.mubr.f32.gmra.mxu0 %v5217
        %v6273 = vpop.f32.mrf.mxu0
        %v6274 = vadd.f32 %v6175, %v6273
        %v6275 = vpop.f32.mrf.mxu0
        %6276 = vmatprep.mubr.f32.mxu0 0.0
        %6277 = vmatmul.mubr.f32.gmra.mxu0 %v5321
        %v6278 = vpop.f32.mrf.mxu0
        %v6279 = vadd.f32 %v6175, %v6278
        %v6280 = vpop.f32.mrf.mxu0
        %6281 = vmatprep.mubr.f32.mxu0 0.0
        %6282 = vmatmul.mubr.f32.gmra.mxu0 %v5425
        %v6283 = vpop.f32.mrf.mxu0
        %v6284 = vadd.f32 %v6175, %v6283
        %v6285 = vpop.f32.mrf.mxu0
        %6286 = vmatprep.mubr.f32.mxu0 0.0
        %6287 = vmatmul.mubr.f32.gmra.mxu0 %v5529
        %v6288 = vpop.f32.mrf.mxu0
        %v6289 = vadd.f32 %v6175, %v6288
        %v6290 = vpop.f32.mrf.mxu0
        %6291 = vmatprep.mubr.f32.mxu0 0.0
        %6292 = vmatmul.mubr.f32.gmra.mxu0 %v5633
        %v6293 = vpop.f32.mrf.mxu0
        %v6294 = vadd.f32 %v6175, %v6293
        %v6295 = vpop.f32.mrf.mxu0
        %6296 = vmatprep.mubr.f32.mxu0 0.0
        %6297 = vmatmul.mubr.f32.gmra.mxu0 %v5737
        %v6298 = vpop.f32.mrf.mxu0
        %v6299 = vadd.f32 %v6175, %v6298
        %v6300 = vpop.f32.mrf.mxu0
        %6301 = vmatprep.mubr.f32.mxu0 0.0
        %6302 = vmatmul.mubr.f32.gmra.mxu0 %v5841
        %v6303 = vpop.f32.mrf.mxu0
        %v6304 = vadd.f32 %v6175, %v6303
        %v6305 = vpop.f32.mrf.mxu0
        %6306 = vmatprep.mubr.f32.mxu0 0.0
        %6307 = vmatmul.mubr.f32.gmra.mxu0 %v5945
        %v6308 = vpop.f32.mrf.mxu0
        %v6309 = vadd.f32 %v6175, %v6308
        %v6310 = vpop.f32.mrf.mxu0
        %6311 = vmatprep.mubr.f32.mxu0 0.0
        %6312 = vmatmul.mubr.f32.gmra.mxu0 %v6049
        %v6313 = vpop.f32.mrf.mxu0
        %v6314 = vadd.f32 %v6175, %v6313
        %v6315 = vpop.f32.mrf.mxu0
        %6316 = vmatprep.mubr.f32.mxu0 0.0
        %6317 = vmatmul.mubr.f32.gmra.mxu0 %v6153
        %v6318 = vpop.f32.mrf.mxu0
        %v6319 = vadd.f32 %v6175, %v6318
        %v6320 = vpop.f32.mrf.mxu0
        %6321 = vdwg.mxu0
        %v6322 = vand.u32 2147483647, %v6244
        %vm6323 = vcmp.le.f32.partialorder %v6322, 0.7853982
        %vm6324 = vcmp.lt.s32.totalorder %v6244, 0
        %v6325 = vand.u32 %v6244, 2139095040
        %v6326 = vshrl.u32 %v6325, 23
        %v6327 = vsub.s32 %v6326, 127
        %v6328 = vand.u32 2147483647, %v6244
        %v6329 = vand.u32 %v6328, 8388607
        %v6330 = vor.u32 %v6329, 8388608
        %v6331 = vsub.s32 0, %v6330
        %v6332 = vadd.s32 %v6327, 1
        %vm6333 = vcmp.gt.s32.totalorder %v6332, 0
        %v6334 = vsel %vm6333, %v6332, 0
        %v6335 = vshrl.u32 %v6334, 5
        %v6336 = vand.u32 %v6334, 31
        %v6337 = vsub.s32 32, %v6336
        %v6338 = vshrl.u32 683565275, %v6337
        %v6339 = vshll.u32 683565275, %v6336
        %v6340 = vshrl.u32 2475754826, %v6337
        %v6341 = vor.u32 %v6339, %v6340
        %v6342 = vshll.u32 2475754826, %v6336
        %v6343 = vshrl.u32 2131351028, %v6337
        %v6344 = vor.u32 %v6342, %v6343
        %v6345 = vshll.u32 2131351028, %v6336
        %v6346 = vshrl.u32 2102212464, %v6337
        %v6347 = vor.u32 %v6345, %v6346
        %v6348 = vshll.u32 2102212464, %v6336
        %v6349 = vshrl.u32 920167782, %v6337
        %v6350 = vor.u32 %v6348, %v6349
        %v6351 = vshll.u32 920167782, %v6336
        %v6352 = vshrl.u32 1326507024, %v6337
        %v6353 = vor.u32 %v6351, %v6352
        %vm6354 = vcmp.lt.s32.totalorder %v6335, 1
        %vm6355 = vcmp.lt.s32.totalorder %v6335, 2
        %vm6356 = vcmp.lt.s32.totalorder %v6335, 3
        %vm6357 = vcmp.lt.s32.totalorder %v6335, 4
        %v6358 = vsel %vm6354, %v6338, %v6341
        %v6359 = vsel %vm6357, %v6347, 2102212464
        %v6360 = vsel %vm6356, %v6344, %v6359
        %v6361 = vsel %vm6355, %v6358, %v6360
        %v6362 = vsel %vm6354, %v6341, %v6344
        %v6363 = vsel %vm6357, %v6350, 920167782
        %v6364 = vsel %vm6356, %v6347, %v6363
        %v6365 = vsel %vm6355, %v6362, %v6364
        %v6366 = vsel %vm6354, %v6344, %v6347
        %v6367 = vsel %vm6357, %v6353, 1326507024
        %v6368 = vsel %vm6356, %v6350, %v6367
        %v6369 = vsel %vm6355, %v6366, %v6368
        %v6370 = vshll.u32 %v6330, 8
        %v6371 = vmul.u32.u64.compose %v6370, %v6369
        %v6372 = vextract.low.u32 %v6371
        %v6373 = vextract.high.u32 %v6371
        %v6374 = vmul.u32.u64.compose %v6370, %v6365
        %v6375 = vextract.low.u32 %v6374
        %v6376 = vextract.high.u32 %v6374
        %v6377 = vmul.u32 %v6370, %v6361
        %v6378 = vadd.s32 %v6373, %v6375
        %vm6379 = vc.u32 %v6373, %v6375
        %v6380 = vadd.s32 %v6376, 1
        %v6381 = vsel %vm6379, %v6380, %v6376
        %v6382 = vadd.s32 %v6377, %v6381
        %v6383 = vadd.s32 %v6382, 536870912
        %v6384 = vshrl.u32 %v6383, 30
        %v6385 = vshll.u32 %v6384, 30
        %v6386 = vsub.s32 %v6382, %v6385
        %vm6387 = vcmp.lt.s32.totalorder %v6386, 0
        %v6388 = vsub.s32 0, %v6386
        %v6389 = vsel %vm6387, %v6388, %v6386
        %v6390 = vclz %v6389
        %v6391 = vsub.s32 %v6390, 2
        %vm6392 = vcmp.gt.s32.totalorder 0, %v6391
        %v6393 = vsel %vm6392, 0, %v6391
        %v6394 = vsub.s32 32, %v6393
        %v6395 = vshll.u32 %v6386, %v6393
        %v6396 = vshrl.u32 %v6378, %v6394
        %v6397 = vor.u32 %v6395, %v6396
        %v6398 = vsub.s32 4294967266, %v6393
        %v6399 = vadd.s32 %v6398, 127
        %v6400 = vshll.u32 %v6399, 23
        %v6401 = vor.u32 4788187, %v6400
        %v6402 = vand.u32 2147483647, %v6401
        %v6404 = vcvt.s32.f32 %v6397
        %v6405 = vmul.f32 %v6404, %v6402
        %v6406 = vxor.u32 %v6405, 2147483648
        %v6407 = vsel %vm6324, %v6406, %v6405
        %v6408 = vsub.s32 4, %v6384
        %v6409 = vsel %vm6324, %v6408, %v6384
        %v6410 = vsel %vm6323, %v6244, %v6407
        %v6411 = vsel %vm6323, 0, %v6409
        %v6412 = vcosq.f32.pop %v6410
        %v6413 = vsinq.f32.pop %v6410
        %vm6414 = vweird.f32 %v6244
        %v6415 = vadd.s32 %v6411, 3
        %v6416 = vand.u32 %v6415, 3
        %vm6417 = vcmp.lt.s32.totalorder %v6416, 2
        %vm6418 = vcmp.eq.s32.totalorder %v6416, 0
        %v6419 = vxor.u32 %v6413, 2147483648
        %v6420 = vsel %vm6418, %v6412, %v6419
        %vm6421 = vcmp.eq.s32.totalorder %v6416, 2
        %v6422 = vxor.u32 %v6412, 2147483648
        %v6423 = vsel %vm6421, %v6422, %v6413
        %v6424 = vsel %vm6417, %v6420, %v6423
        %v6425 = vsel %vm6414, nan, %v6424
        %v6426 = vand.u32 2147483647, %v6249
        %vm6427 = vcmp.le.f32.partialorder %v6426, 0.7853982
        %vm6428 = vcmp.lt.s32.totalorder %v6249, 0
        %v6429 = vand.u32 %v6249, 2139095040
        %v6430 = vshrl.u32 %v6429, 23
        %v6431 = vsub.s32 %v6430, 127
        %v6432 = vand.u32 2147483647, %v6249
        %v6433 = vand.u32 %v6432, 8388607
        %v6434 = vor.u32 %v6433, 8388608
        %v6435 = vsub.s32 0, %v6434
        %v6436 = vadd.s32 %v6431, 1
        %vm6437 = vcmp.gt.s32.totalorder %v6436, 0
        %v6438 = vsel %vm6437, %v6436, 0
        %v6439 = vshrl.u32 %v6438, 5
        %v6440 = vand.u32 %v6438, 31
        %v6441 = vsub.s32 32, %v6440
        %v6442 = vshrl.u32 683565275, %v6441
        %v6443 = vshll.u32 683565275, %v6440
        %v6444 = vshrl.u32 2475754826, %v6441
        %v6445 = vor.u32 %v6443, %v6444
        %v6446 = vshll.u32 2475754826, %v6440
        %v6447 = vshrl.u32 2131351028, %v6441
        %v6448 = vor.u32 %v6446, %v6447
        %v6449 = vshll.u32 2131351028, %v6440
        %v6450 = vshrl.u32 2102212464, %v6441
        %v6451 = vor.u32 %v6449, %v6450
        %v6452 = vshll.u32 2102212464, %v6440
        %v6453 = vshrl.u32 920167782, %v6441
        %v6454 = vor.u32 %v6452, %v6453
        %v6455 = vshll.u32 920167782, %v6440
        %v6456 = vshrl.u32 1326507024, %v6441
        %v6457 = vor.u32 %v6455, %v6456
        %vm6458 = vcmp.lt.s32.totalorder %v6439, 1
        %vm6459 = vcmp.lt.s32.totalorder %v6439, 2
        %vm6460 = vcmp.lt.s32.totalorder %v6439, 3
        %vm6461 = vcmp.lt.s32.totalorder %v6439, 4
        %v6462 = vsel %vm6458, %v6442, %v6445
        %v6463 = vsel %vm6461, %v6451, 2102212464
        %v6464 = vsel %vm6460, %v6448, %v6463
        %v6465 = vsel %vm6459, %v6462, %v6464
        %v6466 = vsel %vm6458, %v6445, %v6448
        %v6467 = vsel %vm6461, %v6454, 920167782
        %v6468 = vsel %vm6460, %v6451, %v6467
        %v6469 = vsel %vm6459, %v6466, %v6468
        %v6470 = vsel %vm6458, %v6448, %v6451
        %v6471 = vsel %vm6461, %v6457, 1326507024
        %v6472 = vsel %vm6460, %v6454, %v6471
        %v6473 = vsel %vm6459, %v6470, %v6472
        %v6474 = vshll.u32 %v6434, 8
        %v6475 = vmul.u32.u64.compose %v6474, %v6473
        %v6476 = vextract.low.u32 %v6475
        %v6477 = vextract.high.u32 %v6475
        %v6478 = vmul.u32.u64.compose %v6474, %v6469
        %v6479 = vextract.low.u32 %v6478
        %v6480 = vextract.high.u32 %v6478
        %v6481 = vmul.u32 %v6474, %v6465
        %v6482 = vadd.s32 %v6477, %v6479
        %vm6483 = vc.u32 %v6477, %v6479
        %v6484 = vadd.s32 %v6480, 1
        %v6485 = vsel %vm6483, %v6484, %v6480
        %v6486 = vadd.s32 %v6481, %v6485
        %v6487 = vadd.s32 %v6486, 536870912
        %v6488 = vshrl.u32 %v6487, 30
        %v6489 = vshll.u32 %v6488, 30
        %v6490 = vsub.s32 %v6486, %v6489
        %vm6491 = vcmp.lt.s32.totalorder %v6490, 0
        %v6492 = vsub.s32 0, %v6490
        %v6493 = vsel %vm6491, %v6492, %v6490
        %v6494 = vclz %v6493
        %v6495 = vsub.s32 %v6494, 2
        %vm6496 = vcmp.gt.s32.totalorder 0, %v6495
        %v6497 = vsel %vm6496, 0, %v6495
        %v6498 = vsub.s32 32, %v6497
        %v6499 = vshll.u32 %v6490, %v6497
        %v6500 = vshrl.u32 %v6482, %v6498
        %v6501 = vor.u32 %v6499, %v6500
        %v6502 = vsub.s32 4294967266, %v6497
        %v6503 = vadd.s32 %v6502, 127
        %v6504 = vshll.u32 %v6503, 23
        %v6505 = vor.u32 4788187, %v6504
        %v6506 = vand.u32 2147483647, %v6505
        %v6508 = vcvt.s32.f32 %v6501
        %v6509 = vmul.f32 %v6508, %v6506
        %v6510 = vxor.u32 %v6509, 2147483648
        %v6511 = vsel %vm6428, %v6510, %v6509
        %v6512 = vsub.s32 4, %v6488
        %v6513 = vsel %vm6428, %v6512, %v6488
        %v6514 = vsel %vm6427, %v6249, %v6511
        %v6515 = vsel %vm6427, 0, %v6513
        %v6516 = vcosq.f32.pop %v6514
        %v6517 = vsinq.f32.pop %v6514
        %vm6518 = vweird.f32 %v6249
        %v6519 = vadd.s32 %v6515, 3
        %v6520 = vand.u32 %v6519, 3
        %vm6521 = vcmp.lt.s32.totalorder %v6520, 2
        %vm6522 = vcmp.eq.s32.totalorder %v6520, 0
        %v6523 = vxor.u32 %v6517, 2147483648
        %v6524 = vsel %vm6522, %v6516, %v6523
        %vm6525 = vcmp.eq.s32.totalorder %v6520, 2
        %v6526 = vxor.u32 %v6516, 2147483648
        %v6527 = vsel %vm6525, %v6526, %v6517
        %v6528 = vsel %vm6521, %v6524, %v6527
        %v6529 = vsel %vm6518, nan, %v6528
        %v6530 = vand.u32 2147483647, %v6254
        %vm6531 = vcmp.le.f32.partialorder %v6530, 0.7853982
        %vm6532 = vcmp.lt.s32.totalorder %v6254, 0
        %v6533 = vand.u32 %v6254, 2139095040
        %v6534 = vshrl.u32 %v6533, 23
        %v6535 = vsub.s32 %v6534, 127
        %v6536 = vand.u32 2147483647, %v6254
        %v6537 = vand.u32 %v6536, 8388607
        %v6538 = vor.u32 %v6537, 8388608
        %v6539 = vsub.s32 0, %v6538
        %v6540 = vadd.s32 %v6535, 1
        %vm6541 = vcmp.gt.s32.totalorder %v6540, 0
        %v6542 = vsel %vm6541, %v6540, 0
        %v6543 = vshrl.u32 %v6542, 5
        %v6544 = vand.u32 %v6542, 31
        %v6545 = vsub.s32 32, %v6544
        %v6546 = vshrl.u32 683565275, %v6545
        %v6547 = vshll.u32 683565275, %v6544
        %v6548 = vshrl.u32 2475754826, %v6545
        %v6549 = vor.u32 %v6547, %v6548
        %v6550 = vshll.u32 2475754826, %v6544
        %v6551 = vshrl.u32 2131351028, %v6545
        %v6552 = vor.u32 %v6550, %v6551
        %v6553 = vshll.u32 2131351028, %v6544
        %v6554 = vshrl.u32 2102212464, %v6545
        %v6555 = vor.u32 %v6553, %v6554
        %v6556 = vshll.u32 2102212464, %v6544
        %v6557 = vshrl.u32 920167782, %v6545
        %v6558 = vor.u32 %v6556, %v6557
        %v6559 = vshll.u32 920167782, %v6544
        %v6560 = vshrl.u32 1326507024, %v6545
        %v6561 = vor.u32 %v6559, %v6560
        %vm6562 = vcmp.lt.s32.totalorder %v6543, 1
        %vm6563 = vcmp.lt.s32.totalorder %v6543, 2
        %vm6564 = vcmp.lt.s32.totalorder %v6543, 3
        %vm6565 = vcmp.lt.s32.totalorder %v6543, 4
        %v6566 = vsel %vm6562, %v6546, %v6549
        %v6567 = vsel %vm6565, %v6555, 2102212464
        %v6568 = vsel %vm6564, %v6552, %v6567
        %v6569 = vsel %vm6563, %v6566, %v6568
        %v6570 = vsel %vm6562, %v6549, %v6552
        %v6571 = vsel %vm6565, %v6558, 920167782
        %v6572 = vsel %vm6564, %v6555, %v6571
        %v6573 = vsel %vm6563, %v6570, %v6572
        %v6574 = vsel %vm6562, %v6552, %v6555
        %v6575 = vsel %vm6565, %v6561, 1326507024
        %v6576 = vsel %vm6564, %v6558, %v6575
        %v6577 = vsel %vm6563, %v6574, %v6576
        %v6578 = vshll.u32 %v6538, 8
        %v6579 = vmul.u32.u64.compose %v6578, %v6577
        %v6580 = vextract.low.u32 %v6579
        %v6581 = vextract.high.u32 %v6579
        %v6582 = vmul.u32.u64.compose %v6578, %v6573
        %v6583 = vextract.low.u32 %v6582
        %v6584 = vextract.high.u32 %v6582
        %v6585 = vmul.u32 %v6578, %v6569
        %v6586 = vadd.s32 %v6581, %v6583
        %vm6587 = vc.u32 %v6581, %v6583
        %v6588 = vadd.s32 %v6584, 1
        %v6589 = vsel %vm6587, %v6588, %v6584
        %v6590 = vadd.s32 %v6585, %v6589
        %v6591 = vadd.s32 %v6590, 536870912
        %v6592 = vshrl.u32 %v6591, 30
        %v6593 = vshll.u32 %v6592, 30
        %v6594 = vsub.s32 %v6590, %v6593
        %vm6595 = vcmp.lt.s32.totalorder %v6594, 0
        %v6596 = vsub.s32 0, %v6594
        %v6597 = vsel %vm6595, %v6596, %v6594
        %v6598 = vclz %v6597
        %v6599 = vsub.s32 %v6598, 2
        %vm6600 = vcmp.gt.s32.totalorder 0, %v6599
        %v6601 = vsel %vm6600, 0, %v6599
        %v6602 = vsub.s32 32, %v6601
        %v6603 = vshll.u32 %v6594, %v6601
        %v6604 = vshrl.u32 %v6586, %v6602
        %v6605 = vor.u32 %v6603, %v6604
        %v6606 = vsub.s32 4294967266, %v6601
        %v6607 = vadd.s32 %v6606, 127
        %v6608 = vshll.u32 %v6607, 23
        %v6609 = vor.u32 4788187, %v6608
        %v6610 = vand.u32 2147483647, %v6609
        %v6612 = vcvt.s32.f32 %v6605
        %v6613 = vmul.f32 %v6612, %v6610
        %v6614 = vxor.u32 %v6613, 2147483648
        %v6615 = vsel %vm6532, %v6614, %v6613
        %v6616 = vsub.s32 4, %v6592
        %v6617 = vsel %vm6532, %v6616, %v6592
        %v6618 = vsel %vm6531, %v6254, %v6615
        %v6619 = vsel %vm6531, 0, %v6617
        %v6620 = vcosq.f32.pop %v6618
        %v6621 = vsinq.f32.pop %v6618
        %vm6622 = vweird.f32 %v6254
        %v6623 = vadd.s32 %v6619, 3
        %v6624 = vand.u32 %v6623, 3
        %vm6625 = vcmp.lt.s32.totalorder %v6624, 2
        %vm6626 = vcmp.eq.s32.totalorder %v6624, 0
        %v6627 = vxor.u32 %v6621, 2147483648
        %v6628 = vsel %vm6626, %v6620, %v6627
        %vm6629 = vcmp.eq.s32.totalorder %v6624, 2
        %v6630 = vxor.u32 %v6620, 2147483648
        %v6631 = vsel %vm6629, %v6630, %v6621
        %v6632 = vsel %vm6625, %v6628, %v6631
        %v6633 = vsel %vm6622, nan, %v6632
        %v6634 = vand.u32 2147483647, %v6259
        %vm6635 = vcmp.le.f32.partialorder %v6634, 0.7853982
        %vm6636 = vcmp.lt.s32.totalorder %v6259, 0
        %v6637 = vand.u32 %v6259, 2139095040
        %v6638 = vshrl.u32 %v6637, 23
        %v6639 = vsub.s32 %v6638, 127
        %v6640 = vand.u32 2147483647, %v6259
        %v6641 = vand.u32 %v6640, 8388607
        %v6642 = vor.u32 %v6641, 8388608
        %v6643 = vsub.s32 0, %v6642
        %v6644 = vadd.s32 %v6639, 1
        %vm6645 = vcmp.gt.s32.totalorder %v6644, 0
        %v6646 = vsel %vm6645, %v6644, 0
        %v6647 = vshrl.u32 %v6646, 5
        %v6648 = vand.u32 %v6646, 31
        %v6649 = vsub.s32 32, %v6648
        %v6650 = vshrl.u32 683565275, %v6649
        %v6651 = vshll.u32 683565275, %v6648
        %v6652 = vshrl.u32 2475754826, %v6649
        %v6653 = vor.u32 %v6651, %v6652
        %v6654 = vshll.u32 2475754826, %v6648
        %v6655 = vshrl.u32 2131351028, %v6649
        %v6656 = vor.u32 %v6654, %v6655
        %v6657 = vshll.u32 2131351028, %v6648
        %v6658 = vshrl.u32 2102212464, %v6649
        %v6659 = vor.u32 %v6657, %v6658
        %v6660 = vshll.u32 2102212464, %v6648
        %v6661 = vshrl.u32 920167782, %v6649
        %v6662 = vor.u32 %v6660, %v6661
        %v6663 = vshll.u32 920167782, %v6648
        %v6664 = vshrl.u32 1326507024, %v6649
        %v6665 = vor.u32 %v6663, %v6664
        %vm6666 = vcmp.lt.s32.totalorder %v6647, 1
        %vm6667 = vcmp.lt.s32.totalorder %v6647, 2
        %vm6668 = vcmp.lt.s32.totalorder %v6647, 3
        %vm6669 = vcmp.lt.s32.totalorder %v6647, 4
        %v6670 = vsel %vm6666, %v6650, %v6653
        %v6671 = vsel %vm6669, %v6659, 2102212464
        %v6672 = vsel %vm6668, %v6656, %v6671
        %v6673 = vsel %vm6667, %v6670, %v6672
        %v6674 = vsel %vm6666, %v6653, %v6656
        %v6675 = vsel %vm6669, %v6662, 920167782
        %v6676 = vsel %vm6668, %v6659, %v6675
        %v6677 = vsel %vm6667, %v6674, %v6676
        %v6678 = vsel %vm6666, %v6656, %v6659
        %v6679 = vsel %vm6669, %v6665, 1326507024
        %v6680 = vsel %vm6668, %v6662, %v6679
        %v6681 = vsel %vm6667, %v6678, %v6680
        %v6682 = vshll.u32 %v6642, 8
        %v6683 = vmul.u32.u64.compose %v6682, %v6681
        %v6684 = vextract.low.u32 %v6683
        %v6685 = vextract.high.u32 %v6683
        %v6686 = vmul.u32.u64.compose %v6682, %v6677
        %v6687 = vextract.low.u32 %v6686
        %v6688 = vextract.high.u32 %v6686
        %v6689 = vmul.u32 %v6682, %v6673
        %v6690 = vadd.s32 %v6685, %v6687
        %vm6691 = vc.u32 %v6685, %v6687
        %v6692 = vadd.s32 %v6688, 1
        %v6693 = vsel %vm6691, %v6692, %v6688
        %v6694 = vadd.s32 %v6689, %v6693
        %v6695 = vadd.s32 %v6694, 536870912
        %v6696 = vshrl.u32 %v6695, 30
        %v6697 = vshll.u32 %v6696, 30
        %v6698 = vsub.s32 %v6694, %v6697
        %vm6699 = vcmp.lt.s32.totalorder %v6698, 0
        %v6700 = vsub.s32 0, %v6698
        %v6701 = vsel %vm6699, %v6700, %v6698
        %v6702 = vclz %v6701
        %v6703 = vsub.s32 %v6702, 2
        %vm6704 = vcmp.gt.s32.totalorder 0, %v6703
        %v6705 = vsel %vm6704, 0, %v6703
        %v6706 = vsub.s32 32, %v6705
        %v6707 = vshll.u32 %v6698, %v6705
        %v6708 = vshrl.u32 %v6690, %v6706
        %v6709 = vor.u32 %v6707, %v6708
        %v6710 = vsub.s32 4294967266, %v6705
        %v6711 = vadd.s32 %v6710, 127
        %v6712 = vshll.u32 %v6711, 23
        %v6713 = vor.u32 4788187, %v6712
        %v6714 = vand.u32 2147483647, %v6713
        %v6716 = vcvt.s32.f32 %v6709
        %v6717 = vmul.f32 %v6716, %v6714
        %v6718 = vxor.u32 %v6717, 2147483648
        %v6719 = vsel %vm6636, %v6718, %v6717
        %v6720 = vsub.s32 4, %v6696
        %v6721 = vsel %vm6636, %v6720, %v6696
        %v6722 = vsel %vm6635, %v6259, %v6719
        %v6723 = vsel %vm6635, 0, %v6721
        %v6724 = vcosq.f32.pop %v6722
        %v6725 = vsinq.f32.pop %v6722
        %vm6726 = vweird.f32 %v6259
        %v6727 = vadd.s32 %v6723, 3
        %v6728 = vand.u32 %v6727, 3
        %vm6729 = vcmp.lt.s32.totalorder %v6728, 2
        %vm6730 = vcmp.eq.s32.totalorder %v6728, 0
        %v6731 = vxor.u32 %v6725, 2147483648
        %v6732 = vsel %vm6730, %v6724, %v6731
        %vm6733 = vcmp.eq.s32.totalorder %v6728, 2
        %v6734 = vxor.u32 %v6724, 2147483648
        %v6735 = vsel %vm6733, %v6734, %v6725
        %v6736 = vsel %vm6729, %v6732, %v6735
        %v6737 = vsel %vm6726, nan, %v6736
        %v6738 = vand.u32 2147483647, %v6264
        %vm6739 = vcmp.le.f32.partialorder %v6738, 0.7853982
        %vm6740 = vcmp.lt.s32.totalorder %v6264, 0
        %v6741 = vand.u32 %v6264, 2139095040
        %v6742 = vshrl.u32 %v6741, 23
        %v6743 = vsub.s32 %v6742, 127
        %v6744 = vand.u32 2147483647, %v6264
        %v6745 = vand.u32 %v6744, 8388607
        %v6746 = vor.u32 %v6745, 8388608
        %v6747 = vsub.s32 0, %v6746
        %v6748 = vadd.s32 %v6743, 1
        %vm6749 = vcmp.gt.s32.totalorder %v6748, 0
        %v6750 = vsel %vm6749, %v6748, 0
        %v6751 = vshrl.u32 %v6750, 5
        %v6752 = vand.u32 %v6750, 31
        %v6753 = vsub.s32 32, %v6752
        %v6754 = vshrl.u32 683565275, %v6753
        %v6755 = vshll.u32 683565275, %v6752
        %v6756 = vshrl.u32 2475754826, %v6753
        %v6757 = vor.u32 %v6755, %v6756
        %v6758 = vshll.u32 2475754826, %v6752
        %v6759 = vshrl.u32 2131351028, %v6753
        %v6760 = vor.u32 %v6758, %v6759
        %v6761 = vshll.u32 2131351028, %v6752
        %v6762 = vshrl.u32 2102212464, %v6753
        %v6763 = vor.u32 %v6761, %v6762
        %v6764 = vshll.u32 2102212464, %v6752
        %v6765 = vshrl.u32 920167782, %v6753
        %v6766 = vor.u32 %v6764, %v6765
        %v6767 = vshll.u32 920167782, %v6752
        %v6768 = vshrl.u32 1326507024, %v6753
        %v6769 = vor.u32 %v6767, %v6768
        %vm6770 = vcmp.lt.s32.totalorder %v6751, 1
        %vm6771 = vcmp.lt.s32.totalorder %v6751, 2
        %vm6772 = vcmp.lt.s32.totalorder %v6751, 3
        %vm6773 = vcmp.lt.s32.totalorder %v6751, 4
        %v6774 = vsel %vm6770, %v6754, %v6757
        %v6775 = vsel %vm6773, %v6763, 2102212464
        %v6776 = vsel %vm6772, %v6760, %v6775
        %v6777 = vsel %vm6771, %v6774, %v6776
        %v6778 = vsel %vm6770, %v6757, %v6760
        %v6779 = vsel %vm6773, %v6766, 920167782
        %v6780 = vsel %vm6772, %v6763, %v6779
        %v6781 = vsel %vm6771, %v6778, %v6780
        %v6782 = vsel %vm6770, %v6760, %v6763
        %v6783 = vsel %vm6773, %v6769, 1326507024
        %v6784 = vsel %vm6772, %v6766, %v6783
        %v6785 = vsel %vm6771, %v6782, %v6784
        %v6786 = vshll.u32 %v6746, 8
        %v6787 = vmul.u32.u64.compose %v6786, %v6785
        %v6788 = vextract.low.u32 %v6787
        %v6789 = vextract.high.u32 %v6787
        %v6790 = vmul.u32.u64.compose %v6786, %v6781
        %v6791 = vextract.low.u32 %v6790
        %v6792 = vextract.high.u32 %v6790
        %v6793 = vmul.u32 %v6786, %v6777
        %v6794 = vadd.s32 %v6789, %v6791
        %vm6795 = vc.u32 %v6789, %v6791
        %v6796 = vadd.s32 %v6792, 1
        %v6797 = vsel %vm6795, %v6796, %v6792
        %v6798 = vadd.s32 %v6793, %v6797
        %v6799 = vadd.s32 %v6798, 536870912
        %v6800 = vshrl.u32 %v6799, 30
        %v6801 = vshll.u32 %v6800, 30
        %v6802 = vsub.s32 %v6798, %v6801
        %vm6803 = vcmp.lt.s32.totalorder %v6802, 0
        %v6804 = vsub.s32 0, %v6802
        %v6805 = vsel %vm6803, %v6804, %v6802
        %v6806 = vclz %v6805
        %v6807 = vsub.s32 %v6806, 2
        %vm6808 = vcmp.gt.s32.totalorder 0, %v6807
        %v6809 = vsel %vm6808, 0, %v6807
        %v6810 = vsub.s32 32, %v6809
        %v6811 = vshll.u32 %v6802, %v6809
        %v6812 = vshrl.u32 %v6794, %v6810
        %v6813 = vor.u32 %v6811, %v6812
        %v6814 = vsub.s32 4294967266, %v6809
        %v6815 = vadd.s32 %v6814, 127
        %v6816 = vshll.u32 %v6815, 23
        %v6817 = vor.u32 4788187, %v6816
        %v6818 = vand.u32 2147483647, %v6817
        %v6820 = vcvt.s32.f32 %v6813
        %v6821 = vmul.f32 %v6820, %v6818
        %v6822 = vxor.u32 %v6821, 2147483648
        %v6823 = vsel %vm6740, %v6822, %v6821
        %v6824 = vsub.s32 4, %v6800
        %v6825 = vsel %vm6740, %v6824, %v6800
        %v6826 = vsel %vm6739, %v6264, %v6823
        %v6827 = vsel %vm6739, 0, %v6825
        %v6828 = vcosq.f32.pop %v6826
        %v6829 = vsinq.f32.pop %v6826
        %vm6830 = vweird.f32 %v6264
        %v6831 = vadd.s32 %v6827, 3
        %v6832 = vand.u32 %v6831, 3
        %vm6833 = vcmp.lt.s32.totalorder %v6832, 2
        %vm6834 = vcmp.eq.s32.totalorder %v6832, 0
        %v6835 = vxor.u32 %v6829, 2147483648
        %v6836 = vsel %vm6834, %v6828, %v6835
        %vm6837 = vcmp.eq.s32.totalorder %v6832, 2
        %v6838 = vxor.u32 %v6828, 2147483648
        %v6839 = vsel %vm6837, %v6838, %v6829
        %v6840 = vsel %vm6833, %v6836, %v6839
        %v6841 = vsel %vm6830, nan, %v6840
        %v6842 = vand.u32 2147483647, %v6269
        %vm6843 = vcmp.le.f32.partialorder %v6842, 0.7853982
        %vm6844 = vcmp.lt.s32.totalorder %v6269, 0
        %v6845 = vand.u32 %v6269, 2139095040
        %v6846 = vshrl.u32 %v6845, 23
        %v6847 = vsub.s32 %v6846, 127
        %v6848 = vand.u32 2147483647, %v6269
        %v6849 = vand.u32 %v6848, 8388607
        %v6850 = vor.u32 %v6849, 8388608
        %v6851 = vsub.s32 0, %v6850
        %v6852 = vadd.s32 %v6847, 1
        %vm6853 = vcmp.gt.s32.totalorder %v6852, 0
        %v6854 = vsel %vm6853, %v6852, 0
        %v6855 = vshrl.u32 %v6854, 5
        %v6856 = vand.u32 %v6854, 31
        %v6857 = vsub.s32 32, %v6856
        %v6858 = vshrl.u32 683565275, %v6857
        %v6859 = vshll.u32 683565275, %v6856
        %v6860 = vshrl.u32 2475754826, %v6857
        %v6861 = vor.u32 %v6859, %v6860
        %v6862 = vshll.u32 2475754826, %v6856
        %v6863 = vshrl.u32 2131351028, %v6857
        %v6864 = vor.u32 %v6862, %v6863
        %v6865 = vshll.u32 2131351028, %v6856
        %v6866 = vshrl.u32 2102212464, %v6857
        %v6867 = vor.u32 %v6865, %v6866
        %v6868 = vshll.u32 2102212464, %v6856
        %v6869 = vshrl.u32 920167782, %v6857
        %v6870 = vor.u32 %v6868, %v6869
        %v6871 = vshll.u32 920167782, %v6856
        %v6872 = vshrl.u32 1326507024, %v6857
        %v6873 = vor.u32 %v6871, %v6872
        %vm6874 = vcmp.lt.s32.totalorder %v6855, 1
        %vm6875 = vcmp.lt.s32.totalorder %v6855, 2
        %vm6876 = vcmp.lt.s32.totalorder %v6855, 3
        %vm6877 = vcmp.lt.s32.totalorder %v6855, 4
        %v6878 = vsel %vm6874, %v6858, %v6861
        %v6879 = vsel %vm6877, %v6867, 2102212464
        %v6880 = vsel %vm6876, %v6864, %v6879
        %v6881 = vsel %vm6875, %v6878, %v6880
        %v6882 = vsel %vm6874, %v6861, %v6864
        %v6883 = vsel %vm6877, %v6870, 920167782
        %v6884 = vsel %vm6876, %v6867, %v6883
        %v6885 = vsel %vm6875, %v6882, %v6884
        %v6886 = vsel %vm6874, %v6864, %v6867
        %v6887 = vsel %vm6877, %v6873, 1326507024
        %v6888 = vsel %vm6876, %v6870, %v6887
        %v6889 = vsel %vm6875, %v6886, %v6888
        %v6890 = vshll.u32 %v6850, 8
        %v6891 = vmul.u32.u64.compose %v6890, %v6889
        %v6892 = vextract.low.u32 %v6891
        %v6893 = vextract.high.u32 %v6891
        %v6894 = vmul.u32.u64.compose %v6890, %v6885
        %v6895 = vextract.low.u32 %v6894
        %v6896 = vextract.high.u32 %v6894
        %v6897 = vmul.u32 %v6890, %v6881
        %v6898 = vadd.s32 %v6893, %v6895
        %vm6899 = vc.u32 %v6893, %v6895
        %v6900 = vadd.s32 %v6896, 1
        %v6901 = vsel %vm6899, %v6900, %v6896
        %v6902 = vadd.s32 %v6897, %v6901
        %v6903 = vadd.s32 %v6902, 536870912
        %v6904 = vshrl.u32 %v6903, 30
        %v6905 = vshll.u32 %v6904, 30
        %v6906 = vsub.s32 %v6902, %v6905
        %vm6907 = vcmp.lt.s32.totalorder %v6906, 0
        %v6908 = vsub.s32 0, %v6906
        %v6909 = vsel %vm6907, %v6908, %v6906
        %v6910 = vclz %v6909
        %v6911 = vsub.s32 %v6910, 2
        %vm6912 = vcmp.gt.s32.totalorder 0, %v6911
        %v6913 = vsel %vm6912, 0, %v6911
        %v6914 = vsub.s32 32, %v6913
        %v6915 = vshll.u32 %v6906, %v6913
        %v6916 = vshrl.u32 %v6898, %v6914
        %v6917 = vor.u32 %v6915, %v6916
        %v6918 = vsub.s32 4294967266, %v6913
        %v6919 = vadd.s32 %v6918, 127
        %v6920 = vshll.u32 %v6919, 23
        %v6921 = vor.u32 4788187, %v6920
        %v6922 = vand.u32 2147483647, %v6921
        %v6924 = vcvt.s32.f32 %v6917
        %v6925 = vmul.f32 %v6924, %v6922
        %v6926 = vxor.u32 %v6925, 2147483648
        %v6927 = vsel %vm6844, %v6926, %v6925
        %v6928 = vsub.s32 4, %v6904
        %v6929 = vsel %vm6844, %v6928, %v6904
        %v6930 = vsel %vm6843, %v6269, %v6927
        %v6931 = vsel %vm6843, 0, %v6929
        %v6932 = vcosq.f32.pop %v6930
        %v6933 = vsinq.f32.pop %v6930
        %vm6934 = vweird.f32 %v6269
        %v6935 = vadd.s32 %v6931, 3
        %v6936 = vand.u32 %v6935, 3
        %vm6937 = vcmp.lt.s32.totalorder %v6936, 2
        %vm6938 = vcmp.eq.s32.totalorder %v6936, 0
        %v6939 = vxor.u32 %v6933, 2147483648
        %v6940 = vsel %vm6938, %v6932, %v6939
        %vm6941 = vcmp.eq.s32.totalorder %v6936, 2
        %v6942 = vxor.u32 %v6932, 2147483648
        %v6943 = vsel %vm6941, %v6942, %v6933
        %v6944 = vsel %vm6937, %v6940, %v6943
        %v6945 = vsel %vm6934, nan, %v6944
        %v6946 = vand.u32 2147483647, %v6274
        %vm6947 = vcmp.le.f32.partialorder %v6946, 0.7853982
        %vm6948 = vcmp.lt.s32.totalorder %v6274, 0
        %v6949 = vand.u32 %v6274, 2139095040
        %v6950 = vshrl.u32 %v6949, 23
        %v6951 = vsub.s32 %v6950, 127
        %v6952 = vand.u32 2147483647, %v6274
        %v6953 = vand.u32 %v6952, 8388607
        %v6954 = vor.u32 %v6953, 8388608
        %v6955 = vsub.s32 0, %v6954
        %v6956 = vadd.s32 %v6951, 1
        %vm6957 = vcmp.gt.s32.totalorder %v6956, 0
        %v6958 = vsel %vm6957, %v6956, 0
        %v6959 = vshrl.u32 %v6958, 5
        %v6960 = vand.u32 %v6958, 31
        %v6961 = vsub.s32 32, %v6960
        %v6962 = vshrl.u32 683565275, %v6961
        %v6963 = vshll.u32 683565275, %v6960
        %v6964 = vshrl.u32 2475754826, %v6961
        %v6965 = vor.u32 %v6963, %v6964
        %v6966 = vshll.u32 2475754826, %v6960
        %v6967 = vshrl.u32 2131351028, %v6961
        %v6968 = vor.u32 %v6966, %v6967
        %v6969 = vshll.u32 2131351028, %v6960
        %v6970 = vshrl.u32 2102212464, %v6961
        %v6971 = vor.u32 %v6969, %v6970
        %v6972 = vshll.u32 2102212464, %v6960
        %v6973 = vshrl.u32 920167782, %v6961
        %v6974 = vor.u32 %v6972, %v6973
        %v6975 = vshll.u32 920167782, %v6960
        %v6976 = vshrl.u32 1326507024, %v6961
        %v6977 = vor.u32 %v6975, %v6976
        %vm6978 = vcmp.lt.s32.totalorder %v6959, 1
        %vm6979 = vcmp.lt.s32.totalorder %v6959, 2
        %vm6980 = vcmp.lt.s32.totalorder %v6959, 3
        %vm6981 = vcmp.lt.s32.totalorder %v6959, 4
        %v6982 = vsel %vm6978, %v6962, %v6965
        %v6983 = vsel %vm6981, %v6971, 2102212464
        %v6984 = vsel %vm6980, %v6968, %v6983
        %v6985 = vsel %vm6979, %v6982, %v6984
        %v6986 = vsel %vm6978, %v6965, %v6968
        %v6987 = vsel %vm6981, %v6974, 920167782
        %v6988 = vsel %vm6980, %v6971, %v6987
        %v6989 = vsel %vm6979, %v6986, %v6988
        %v6990 = vsel %vm6978, %v6968, %v6971
        %v6991 = vsel %vm6981, %v6977, 1326507024
        %v6992 = vsel %vm6980, %v6974, %v6991
        %v6993 = vsel %vm6979, %v6990, %v6992
        %v6994 = vshll.u32 %v6954, 8
        %v6995 = vmul.u32.u64.compose %v6994, %v6993
        %v6996 = vextract.low.u32 %v6995
        %v6997 = vextract.high.u32 %v6995
        %v6998 = vmul.u32.u64.compose %v6994, %v6989
        %v6999 = vextract.low.u32 %v6998
        %v7000 = vextract.high.u32 %v6998
        %v7001 = vmul.u32 %v6994, %v6985
        %v7002 = vadd.s32 %v6997, %v6999
        %vm7003 = vc.u32 %v6997, %v6999
        %v7004 = vadd.s32 %v7000, 1
        %v7005 = vsel %vm7003, %v7004, %v7000
        %v7006 = vadd.s32 %v7001, %v7005
        %v7007 = vadd.s32 %v7006, 536870912
        %v7008 = vshrl.u32 %v7007, 30
        %v7009 = vshll.u32 %v7008, 30
        %v7010 = vsub.s32 %v7006, %v7009
        %vm7011 = vcmp.lt.s32.totalorder %v7010, 0
        %v7012 = vsub.s32 0, %v7010
        %v7013 = vsel %vm7011, %v7012, %v7010
        %v7014 = vclz %v7013
        %v7015 = vsub.s32 %v7014, 2
        %vm7016 = vcmp.gt.s32.totalorder 0, %v7015
        %v7017 = vsel %vm7016, 0, %v7015
        %v7018 = vsub.s32 32, %v7017
        %v7019 = vshll.u32 %v7010, %v7017
        %v7020 = vshrl.u32 %v7002, %v7018
        %v7021 = vor.u32 %v7019, %v7020
        %v7022 = vsub.s32 4294967266, %v7017
        %v7023 = vadd.s32 %v7022, 127
        %v7024 = vshll.u32 %v7023, 23
        %v7025 = vor.u32 4788187, %v7024
        %v7026 = vand.u32 2147483647, %v7025
        %v7028 = vcvt.s32.f32 %v7021
        %v7029 = vmul.f32 %v7028, %v7026
        %v7030 = vxor.u32 %v7029, 2147483648
        %v7031 = vsel %vm6948, %v7030, %v7029
        %v7032 = vsub.s32 4, %v7008
        %v7033 = vsel %vm6948, %v7032, %v7008
        %v7034 = vsel %vm6947, %v6274, %v7031
        %v7035 = vsel %vm6947, 0, %v7033
        %v7036 = vcosq.f32.pop %v7034
        %v7037 = vsinq.f32.pop %v7034
        %vm7038 = vweird.f32 %v6274
        %v7039 = vadd.s32 %v7035, 3
        %v7040 = vand.u32 %v7039, 3
        %vm7041 = vcmp.lt.s32.totalorder %v7040, 2
        %vm7042 = vcmp.eq.s32.totalorder %v7040, 0
        %v7043 = vxor.u32 %v7037, 2147483648
        %v7044 = vsel %vm7042, %v7036, %v7043
        %vm7045 = vcmp.eq.s32.totalorder %v7040, 2
        %v7046 = vxor.u32 %v7036, 2147483648
        %v7047 = vsel %vm7045, %v7046, %v7037
        %v7048 = vsel %vm7041, %v7044, %v7047
        %v7049 = vsel %vm7038, nan, %v7048
        %v7050 = vand.u32 2147483647, %v6279
        %vm7051 = vcmp.le.f32.partialorder %v7050, 0.7853982
        %vm7052 = vcmp.lt.s32.totalorder %v6279, 0
        %v7053 = vand.u32 %v6279, 2139095040
        %v7054 = vshrl.u32 %v7053, 23
        %v7055 = vsub.s32 %v7054, 127
        %v7056 = vand.u32 2147483647, %v6279
        %v7057 = vand.u32 %v7056, 8388607
        %v7058 = vor.u32 %v7057, 8388608
        %v7059 = vsub.s32 0, %v7058
        %v7060 = vadd.s32 %v7055, 1
        %vm7061 = vcmp.gt.s32.totalorder %v7060, 0
        %v7062 = vsel %vm7061, %v7060, 0
        %v7063 = vshrl.u32 %v7062, 5
        %v7064 = vand.u32 %v7062, 31
        %v7065 = vsub.s32 32, %v7064
        %v7066 = vshrl.u32 683565275, %v7065
        %v7067 = vshll.u32 683565275, %v7064
        %v7068 = vshrl.u32 2475754826, %v7065
        %v7069 = vor.u32 %v7067, %v7068
        %v7070 = vshll.u32 2475754826, %v7064
        %v7071 = vshrl.u32 2131351028, %v7065
        %v7072 = vor.u32 %v7070, %v7071
        %v7073 = vshll.u32 2131351028, %v7064
        %v7074 = vshrl.u32 2102212464, %v7065
        %v7075 = vor.u32 %v7073, %v7074
        %v7076 = vshll.u32 2102212464, %v7064
        %v7077 = vshrl.u32 920167782, %v7065
        %v7078 = vor.u32 %v7076, %v7077
        %v7079 = vshll.u32 920167782, %v7064
        %v7080 = vshrl.u32 1326507024, %v7065
        %v7081 = vor.u32 %v7079, %v7080
        %vm7082 = vcmp.lt.s32.totalorder %v7063, 1
        %vm7083 = vcmp.lt.s32.totalorder %v7063, 2
        %vm7084 = vcmp.lt.s32.totalorder %v7063, 3
        %vm7085 = vcmp.lt.s32.totalorder %v7063, 4
        %v7086 = vsel %vm7082, %v7066, %v7069
        %v7087 = vsel %vm7085, %v7075, 2102212464
        %v7088 = vsel %vm7084, %v7072, %v7087
        %v7089 = vsel %vm7083, %v7086, %v7088
        %v7090 = vsel %vm7082, %v7069, %v7072
        %v7091 = vsel %vm7085, %v7078, 920167782
        %v7092 = vsel %vm7084, %v7075, %v7091
        %v7093 = vsel %vm7083, %v7090, %v7092
        %v7094 = vsel %vm7082, %v7072, %v7075
        %v7095 = vsel %vm7085, %v7081, 1326507024
        %v7096 = vsel %vm7084, %v7078, %v7095
        %v7097 = vsel %vm7083, %v7094, %v7096
        %v7098 = vshll.u32 %v7058, 8
        %v7099 = vmul.u32.u64.compose %v7098, %v7097
        %v7100 = vextract.low.u32 %v7099
        %v7101 = vextract.high.u32 %v7099
        %v7102 = vmul.u32.u64.compose %v7098, %v7093
        %v7103 = vextract.low.u32 %v7102
        %v7104 = vextract.high.u32 %v7102
        %v7105 = vmul.u32 %v7098, %v7089
        %v7106 = vadd.s32 %v7101, %v7103
        %vm7107 = vc.u32 %v7101, %v7103
        %v7108 = vadd.s32 %v7104, 1
        %v7109 = vsel %vm7107, %v7108, %v7104
        %v7110 = vadd.s32 %v7105, %v7109
        %v7111 = vadd.s32 %v7110, 536870912
        %v7112 = vshrl.u32 %v7111, 30
        %v7113 = vshll.u32 %v7112, 30
        %v7114 = vsub.s32 %v7110, %v7113
        %vm7115 = vcmp.lt.s32.totalorder %v7114, 0
        %v7116 = vsub.s32 0, %v7114
        %v7117 = vsel %vm7115, %v7116, %v7114
        %v7118 = vclz %v7117
        %v7119 = vsub.s32 %v7118, 2
        %vm7120 = vcmp.gt.s32.totalorder 0, %v7119
        %v7121 = vsel %vm7120, 0, %v7119
        %v7122 = vsub.s32 32, %v7121
        %v7123 = vshll.u32 %v7114, %v7121
        %v7124 = vshrl.u32 %v7106, %v7122
        %v7125 = vor.u32 %v7123, %v7124
        %v7126 = vsub.s32 4294967266, %v7121
        %v7127 = vadd.s32 %v7126, 127
        %v7128 = vshll.u32 %v7127, 23
        %v7129 = vor.u32 4788187, %v7128
        %v7130 = vand.u32 2147483647, %v7129
        %v7132 = vcvt.s32.f32 %v7125
        %v7133 = vmul.f32 %v7132, %v7130
        %v7134 = vxor.u32 %v7133, 2147483648
        %v7135 = vsel %vm7052, %v7134, %v7133
        %v7136 = vsub.s32 4, %v7112
        %v7137 = vsel %vm7052, %v7136, %v7112
        %v7138 = vsel %vm7051, %v6279, %v7135
        %v7139 = vsel %vm7051, 0, %v7137
        %v7140 = vcosq.f32.pop %v7138
        %v7141 = vsinq.f32.pop %v7138
        %vm7142 = vweird.f32 %v6279
        %v7143 = vadd.s32 %v7139, 3
        %v7144 = vand.u32 %v7143, 3
        %vm7145 = vcmp.lt.s32.totalorder %v7144, 2
        %vm7146 = vcmp.eq.s32.totalorder %v7144, 0
        %v7147 = vxor.u32 %v7141, 2147483648
        %v7148 = vsel %vm7146, %v7140, %v7147
        %vm7149 = vcmp.eq.s32.totalorder %v7144, 2
        %v7150 = vxor.u32 %v7140, 2147483648
        %v7151 = vsel %vm7149, %v7150, %v7141
        %v7152 = vsel %vm7145, %v7148, %v7151
        %v7153 = vsel %vm7142, nan, %v7152
        %v7154 = vand.u32 2147483647, %v6284
        %vm7155 = vcmp.le.f32.partialorder %v7154, 0.7853982
        %vm7156 = vcmp.lt.s32.totalorder %v6284, 0
        %v7157 = vand.u32 %v6284, 2139095040
        %v7158 = vshrl.u32 %v7157, 23
        %v7159 = vsub.s32 %v7158, 127
        %v7160 = vand.u32 2147483647, %v6284
        %v7161 = vand.u32 %v7160, 8388607
        %v7162 = vor.u32 %v7161, 8388608
        %v7163 = vsub.s32 0, %v7162
        %v7164 = vadd.s32 %v7159, 1
        %vm7165 = vcmp.gt.s32.totalorder %v7164, 0
        %v7166 = vsel %vm7165, %v7164, 0
        %v7167 = vshrl.u32 %v7166, 5
        %v7168 = vand.u32 %v7166, 31
        %v7169 = vsub.s32 32, %v7168
        %v7170 = vshrl.u32 683565275, %v7169
        %v7171 = vshll.u32 683565275, %v7168
        %v7172 = vshrl.u32 2475754826, %v7169
        %v7173 = vor.u32 %v7171, %v7172
        %v7174 = vshll.u32 2475754826, %v7168
        %v7175 = vshrl.u32 2131351028, %v7169
        %v7176 = vor.u32 %v7174, %v7175
        %v7177 = vshll.u32 2131351028, %v7168
        %v7178 = vshrl.u32 2102212464, %v7169
        %v7179 = vor.u32 %v7177, %v7178
        %v7180 = vshll.u32 2102212464, %v7168
        %v7181 = vshrl.u32 920167782, %v7169
        %v7182 = vor.u32 %v7180, %v7181
        %v7183 = vshll.u32 920167782, %v7168
        %v7184 = vshrl.u32 1326507024, %v7169
        %v7185 = vor.u32 %v7183, %v7184
        %vm7186 = vcmp.lt.s32.totalorder %v7167, 1
        %vm7187 = vcmp.lt.s32.totalorder %v7167, 2
        %vm7188 = vcmp.lt.s32.totalorder %v7167, 3
        %vm7189 = vcmp.lt.s32.totalorder %v7167, 4
        %v7190 = vsel %vm7186, %v7170, %v7173
        %v7191 = vsel %vm7189, %v7179, 2102212464
        %v7192 = vsel %vm7188, %v7176, %v7191
        %v7193 = vsel %vm7187, %v7190, %v7192
        %v7194 = vsel %vm7186, %v7173, %v7176
        %v7195 = vsel %vm7189, %v7182, 920167782
        %v7196 = vsel %vm7188, %v7179, %v7195
        %v7197 = vsel %vm7187, %v7194, %v7196
        %v7198 = vsel %vm7186, %v7176, %v7179
        %v7199 = vsel %vm7189, %v7185, 1326507024
        %v7200 = vsel %vm7188, %v7182, %v7199
        %v7201 = vsel %vm7187, %v7198, %v7200
        %v7202 = vshll.u32 %v7162, 8
        %v7203 = vmul.u32.u64.compose %v7202, %v7201
        %v7204 = vextract.low.u32 %v7203
        %v7205 = vextract.high.u32 %v7203
        %v7206 = vmul.u32.u64.compose %v7202, %v7197
        %v7207 = vextract.low.u32 %v7206
        %v7208 = vextract.high.u32 %v7206
        %v7209 = vmul.u32 %v7202, %v7193
        %v7210 = vadd.s32 %v7205, %v7207
        %vm7211 = vc.u32 %v7205, %v7207
        %v7212 = vadd.s32 %v7208, 1
        %v7213 = vsel %vm7211, %v7212, %v7208
        %v7214 = vadd.s32 %v7209, %v7213
        %v7215 = vadd.s32 %v7214, 536870912
        %v7216 = vshrl.u32 %v7215, 30
        %v7217 = vshll.u32 %v7216, 30
        %v7218 = vsub.s32 %v7214, %v7217
        %vm7219 = vcmp.lt.s32.totalorder %v7218, 0
        %v7220 = vsub.s32 0, %v7218
        %v7221 = vsel %vm7219, %v7220, %v7218
        %v7222 = vclz %v7221
        %v7223 = vsub.s32 %v7222, 2
        %vm7224 = vcmp.gt.s32.totalorder 0, %v7223
        %v7225 = vsel %vm7224, 0, %v7223
        %v7226 = vsub.s32 32, %v7225
        %v7227 = vshll.u32 %v7218, %v7225
        %v7228 = vshrl.u32 %v7210, %v7226
        %v7229 = vor.u32 %v7227, %v7228
        %v7230 = vsub.s32 4294967266, %v7225
        %v7231 = vadd.s32 %v7230, 127
        %v7232 = vshll.u32 %v7231, 23
        %v7233 = vor.u32 4788187, %v7232
        %v7234 = vand.u32 2147483647, %v7233
        %v7236 = vcvt.s32.f32 %v7229
        %v7237 = vmul.f32 %v7236, %v7234
        %v7238 = vxor.u32 %v7237, 2147483648
        %v7239 = vsel %vm7156, %v7238, %v7237
        %v7240 = vsub.s32 4, %v7216
        %v7241 = vsel %vm7156, %v7240, %v7216
        %v7242 = vsel %vm7155, %v6284, %v7239
        %v7243 = vsel %vm7155, 0, %v7241
        %v7244 = vcosq.f32.pop %v7242
        %v7245 = vsinq.f32.pop %v7242
        %vm7246 = vweird.f32 %v6284
        %v7247 = vadd.s32 %v7243, 3
        %v7248 = vand.u32 %v7247, 3
        %vm7249 = vcmp.lt.s32.totalorder %v7248, 2
        %vm7250 = vcmp.eq.s32.totalorder %v7248, 0
        %v7251 = vxor.u32 %v7245, 2147483648
        %v7252 = vsel %vm7250, %v7244, %v7251
        %vm7253 = vcmp.eq.s32.totalorder %v7248, 2
        %v7254 = vxor.u32 %v7244, 2147483648
        %v7255 = vsel %vm7253, %v7254, %v7245
        %v7256 = vsel %vm7249, %v7252, %v7255
        %v7257 = vsel %vm7246, nan, %v7256
        %v7258 = vand.u32 2147483647, %v6289
        %vm7259 = vcmp.le.f32.partialorder %v7258, 0.7853982
        %vm7260 = vcmp.lt.s32.totalorder %v6289, 0
        %v7261 = vand.u32 %v6289, 2139095040
        %v7262 = vshrl.u32 %v7261, 23
        %v7263 = vsub.s32 %v7262, 127
        %v7264 = vand.u32 2147483647, %v6289
        %v7265 = vand.u32 %v7264, 8388607
        %v7266 = vor.u32 %v7265, 8388608
        %v7267 = vsub.s32 0, %v7266
        %v7268 = vadd.s32 %v7263, 1
        %vm7269 = vcmp.gt.s32.totalorder %v7268, 0
        %v7270 = vsel %vm7269, %v7268, 0
        %v7271 = vshrl.u32 %v7270, 5
        %v7272 = vand.u32 %v7270, 31
        %v7273 = vsub.s32 32, %v7272
        %v7274 = vshrl.u32 683565275, %v7273
        %v7275 = vshll.u32 683565275, %v7272
        %v7276 = vshrl.u32 2475754826, %v7273
        %v7277 = vor.u32 %v7275, %v7276
        %v7278 = vshll.u32 2475754826, %v7272
        %v7279 = vshrl.u32 2131351028, %v7273
        %v7280 = vor.u32 %v7278, %v7279
        %v7281 = vshll.u32 2131351028, %v7272
        %v7282 = vshrl.u32 2102212464, %v7273
        %v7283 = vor.u32 %v7281, %v7282
        %v7284 = vshll.u32 2102212464, %v7272
        %v7285 = vshrl.u32 920167782, %v7273
        %v7286 = vor.u32 %v7284, %v7285
        %v7287 = vshll.u32 920167782, %v7272
        %v7288 = vshrl.u32 1326507024, %v7273
        %v7289 = vor.u32 %v7287, %v7288
        %vm7290 = vcmp.lt.s32.totalorder %v7271, 1
        %vm7291 = vcmp.lt.s32.totalorder %v7271, 2
        %vm7292 = vcmp.lt.s32.totalorder %v7271, 3
        %vm7293 = vcmp.lt.s32.totalorder %v7271, 4
        %v7294 = vsel %vm7290, %v7274, %v7277
        %v7295 = vsel %vm7293, %v7283, 2102212464
        %v7296 = vsel %vm7292, %v7280, %v7295
        %v7297 = vsel %vm7291, %v7294, %v7296
        %v7298 = vsel %vm7290, %v7277, %v7280
        %v7299 = vsel %vm7293, %v7286, 920167782
        %v7300 = vsel %vm7292, %v7283, %v7299
        %v7301 = vsel %vm7291, %v7298, %v7300
        %v7302 = vsel %vm7290, %v7280, %v7283
        %v7303 = vsel %vm7293, %v7289, 1326507024
        %v7304 = vsel %vm7292, %v7286, %v7303
        %v7305 = vsel %vm7291, %v7302, %v7304
        %v7306 = vshll.u32 %v7266, 8
        %v7307 = vmul.u32.u64.compose %v7306, %v7305
        %v7308 = vextract.low.u32 %v7307
        %v7309 = vextract.high.u32 %v7307
        %v7310 = vmul.u32.u64.compose %v7306, %v7301
        %v7311 = vextract.low.u32 %v7310
        %v7312 = vextract.high.u32 %v7310
        %v7313 = vmul.u32 %v7306, %v7297
        %v7314 = vadd.s32 %v7309, %v7311
        %vm7315 = vc.u32 %v7309, %v7311
        %v7316 = vadd.s32 %v7312, 1
        %v7317 = vsel %vm7315, %v7316, %v7312
        %v7318 = vadd.s32 %v7313, %v7317
        %v7319 = vadd.s32 %v7318, 536870912
        %v7320 = vshrl.u32 %v7319, 30
        %v7321 = vshll.u32 %v7320, 30
        %v7322 = vsub.s32 %v7318, %v7321
        %vm7323 = vcmp.lt.s32.totalorder %v7322, 0
        %v7324 = vsub.s32 0, %v7322
        %v7325 = vsel %vm7323, %v7324, %v7322
        %v7326 = vclz %v7325
        %v7327 = vsub.s32 %v7326, 2
        %vm7328 = vcmp.gt.s32.totalorder 0, %v7327
        %v7329 = vsel %vm7328, 0, %v7327
        %v7330 = vsub.s32 32, %v7329
        %v7331 = vshll.u32 %v7322, %v7329
        %v7332 = vshrl.u32 %v7314, %v7330
        %v7333 = vor.u32 %v7331, %v7332
        %v7334 = vsub.s32 4294967266, %v7329
        %v7335 = vadd.s32 %v7334, 127
        %v7336 = vshll.u32 %v7335, 23
        %v7337 = vor.u32 4788187, %v7336
        %v7338 = vand.u32 2147483647, %v7337
        %v7340 = vcvt.s32.f32 %v7333
        %v7341 = vmul.f32 %v7340, %v7338
        %v7342 = vxor.u32 %v7341, 2147483648
        %v7343 = vsel %vm7260, %v7342, %v7341
        %v7344 = vsub.s32 4, %v7320
        %v7345 = vsel %vm7260, %v7344, %v7320
        %v7346 = vsel %vm7259, %v6289, %v7343
        %v7347 = vsel %vm7259, 0, %v7345
        %v7348 = vcosq.f32.pop %v7346
        %v7349 = vsinq.f32.pop %v7346
        %vm7350 = vweird.f32 %v6289
        %v7351 = vadd.s32 %v7347, 3
        %v7352 = vand.u32 %v7351, 3
        %vm7353 = vcmp.lt.s32.totalorder %v7352, 2
        %vm7354 = vcmp.eq.s32.totalorder %v7352, 0
        %v7355 = vxor.u32 %v7349, 2147483648
        %v7356 = vsel %vm7354, %v7348, %v7355
        %vm7357 = vcmp.eq.s32.totalorder %v7352, 2
        %v7358 = vxor.u32 %v7348, 2147483648
        %v7359 = vsel %vm7357, %v7358, %v7349
        %v7360 = vsel %vm7353, %v7356, %v7359
        %v7361 = vsel %vm7350, nan, %v7360
        %v7362 = vand.u32 2147483647, %v6294
        %vm7363 = vcmp.le.f32.partialorder %v7362, 0.7853982
        %vm7364 = vcmp.lt.s32.totalorder %v6294, 0
        %v7365 = vand.u32 %v6294, 2139095040
        %v7366 = vshrl.u32 %v7365, 23
        %v7367 = vsub.s32 %v7366, 127
        %v7368 = vand.u32 2147483647, %v6294
        %v7369 = vand.u32 %v7368, 8388607
        %v7370 = vor.u32 %v7369, 8388608
        %v7371 = vsub.s32 0, %v7370
        %v7372 = vadd.s32 %v7367, 1
        %vm7373 = vcmp.gt.s32.totalorder %v7372, 0
        %v7374 = vsel %vm7373, %v7372, 0
        %v7375 = vshrl.u32 %v7374, 5
        %v7376 = vand.u32 %v7374, 31
        %v7377 = vsub.s32 32, %v7376
        %v7378 = vshrl.u32 683565275, %v7377
        %v7379 = vshll.u32 683565275, %v7376
        %v7380 = vshrl.u32 2475754826, %v7377
        %v7381 = vor.u32 %v7379, %v7380
        %v7382 = vshll.u32 2475754826, %v7376
        %v7383 = vshrl.u32 2131351028, %v7377
        %v7384 = vor.u32 %v7382, %v7383
        %v7385 = vshll.u32 2131351028, %v7376
        %v7386 = vshrl.u32 2102212464, %v7377
        %v7387 = vor.u32 %v7385, %v7386
        %v7388 = vshll.u32 2102212464, %v7376
        %v7389 = vshrl.u32 920167782, %v7377
        %v7390 = vor.u32 %v7388, %v7389
        %v7391 = vshll.u32 920167782, %v7376
        %v7392 = vshrl.u32 1326507024, %v7377
        %v7393 = vor.u32 %v7391, %v7392
        %vm7394 = vcmp.lt.s32.totalorder %v7375, 1
        %vm7395 = vcmp.lt.s32.totalorder %v7375, 2
        %vm7396 = vcmp.lt.s32.totalorder %v7375, 3
        %vm7397 = vcmp.lt.s32.totalorder %v7375, 4
        %v7398 = vsel %vm7394, %v7378, %v7381
        %v7399 = vsel %vm7397, %v7387, 2102212464
        %v7400 = vsel %vm7396, %v7384, %v7399
        %v7401 = vsel %vm7395, %v7398, %v7400
        %v7402 = vsel %vm7394, %v7381, %v7384
        %v7403 = vsel %vm7397, %v7390, 920167782
        %v7404 = vsel %vm7396, %v7387, %v7403
        %v7405 = vsel %vm7395, %v7402, %v7404
        %v7406 = vsel %vm7394, %v7384, %v7387
        %v7407 = vsel %vm7397, %v7393, 1326507024
        %v7408 = vsel %vm7396, %v7390, %v7407
        %v7409 = vsel %vm7395, %v7406, %v7408
        %v7410 = vshll.u32 %v7370, 8
        %v7411 = vmul.u32.u64.compose %v7410, %v7409
        %v7412 = vextract.low.u32 %v7411
        %v7413 = vextract.high.u32 %v7411
        %v7414 = vmul.u32.u64.compose %v7410, %v7405
        %v7415 = vextract.low.u32 %v7414
        %v7416 = vextract.high.u32 %v7414
        %v7417 = vmul.u32 %v7410, %v7401
        %v7418 = vadd.s32 %v7413, %v7415
        %vm7419 = vc.u32 %v7413, %v7415
        %v7420 = vadd.s32 %v7416, 1
        %v7421 = vsel %vm7419, %v7420, %v7416
        %v7422 = vadd.s32 %v7417, %v7421
        %v7423 = vadd.s32 %v7422, 536870912
        %v7424 = vshrl.u32 %v7423, 30
        %v7425 = vshll.u32 %v7424, 30
        %v7426 = vsub.s32 %v7422, %v7425
        %vm7427 = vcmp.lt.s32.totalorder %v7426, 0
        %v7428 = vsub.s32 0, %v7426
        %v7429 = vsel %vm7427, %v7428, %v7426
        %v7430 = vclz %v7429
        %v7431 = vsub.s32 %v7430, 2
        %vm7432 = vcmp.gt.s32.totalorder 0, %v7431
        %v7433 = vsel %vm7432, 0, %v7431
        %v7434 = vsub.s32 32, %v7433
        %v7435 = vshll.u32 %v7426, %v7433
        %v7436 = vshrl.u32 %v7418, %v7434
        %v7437 = vor.u32 %v7435, %v7436
        %v7438 = vsub.s32 4294967266, %v7433
        %v7439 = vadd.s32 %v7438, 127
        %v7440 = vshll.u32 %v7439, 23
        %v7441 = vor.u32 4788187, %v7440
        %v7442 = vand.u32 2147483647, %v7441
        %v7444 = vcvt.s32.f32 %v7437
        %v7445 = vmul.f32 %v7444, %v7442
        %v7446 = vxor.u32 %v7445, 2147483648
        %v7447 = vsel %vm7364, %v7446, %v7445
        %v7448 = vsub.s32 4, %v7424
        %v7449 = vsel %vm7364, %v7448, %v7424
        %v7450 = vsel %vm7363, %v6294, %v7447
        %v7451 = vsel %vm7363, 0, %v7449
        %v7452 = vcosq.f32.pop %v7450
        %v7453 = vsinq.f32.pop %v7450
        %vm7454 = vweird.f32 %v6294
        %v7455 = vadd.s32 %v7451, 3
        %v7456 = vand.u32 %v7455, 3
        %vm7457 = vcmp.lt.s32.totalorder %v7456, 2
        %vm7458 = vcmp.eq.s32.totalorder %v7456, 0
        %v7459 = vxor.u32 %v7453, 2147483648
        %v7460 = vsel %vm7458, %v7452, %v7459
        %vm7461 = vcmp.eq.s32.totalorder %v7456, 2
        %v7462 = vxor.u32 %v7452, 2147483648
        %v7463 = vsel %vm7461, %v7462, %v7453
        %v7464 = vsel %vm7457, %v7460, %v7463
        %v7465 = vsel %vm7454, nan, %v7464
        %v7466 = vand.u32 2147483647, %v6299
        %vm7467 = vcmp.le.f32.partialorder %v7466, 0.7853982
        %vm7468 = vcmp.lt.s32.totalorder %v6299, 0
        %v7469 = vand.u32 %v6299, 2139095040
        %v7470 = vshrl.u32 %v7469, 23
        %v7471 = vsub.s32 %v7470, 127
        %v7472 = vand.u32 2147483647, %v6299
        %v7473 = vand.u32 %v7472, 8388607
        %v7474 = vor.u32 %v7473, 8388608
        %v7475 = vsub.s32 0, %v7474
        %v7476 = vadd.s32 %v7471, 1
        %vm7477 = vcmp.gt.s32.totalorder %v7476, 0
        %v7478 = vsel %vm7477, %v7476, 0
        %v7479 = vshrl.u32 %v7478, 5
        %v7480 = vand.u32 %v7478, 31
        %v7481 = vsub.s32 32, %v7480
        %v7482 = vshrl.u32 683565275, %v7481
        %v7483 = vshll.u32 683565275, %v7480
        %v7484 = vshrl.u32 2475754826, %v7481
        %v7485 = vor.u32 %v7483, %v7484
        %v7486 = vshll.u32 2475754826, %v7480
        %v7487 = vshrl.u32 2131351028, %v7481
        %v7488 = vor.u32 %v7486, %v7487
        %v7489 = vshll.u32 2131351028, %v7480
        %v7490 = vshrl.u32 2102212464, %v7481
        %v7491 = vor.u32 %v7489, %v7490
        %v7492 = vshll.u32 2102212464, %v7480
        %v7493 = vshrl.u32 920167782, %v7481
        %v7494 = vor.u32 %v7492, %v7493
        %v7495 = vshll.u32 920167782, %v7480
        %v7496 = vshrl.u32 1326507024, %v7481
        %v7497 = vor.u32 %v7495, %v7496
        %vm7498 = vcmp.lt.s32.totalorder %v7479, 1
        %vm7499 = vcmp.lt.s32.totalorder %v7479, 2
        %vm7500 = vcmp.lt.s32.totalorder %v7479, 3
        %vm7501 = vcmp.lt.s32.totalorder %v7479, 4
        %v7502 = vsel %vm7498, %v7482, %v7485
        %v7503 = vsel %vm7501, %v7491, 2102212464
        %v7504 = vsel %vm7500, %v7488, %v7503
        %v7505 = vsel %vm7499, %v7502, %v7504
        %v7506 = vsel %vm7498, %v7485, %v7488
        %v7507 = vsel %vm7501, %v7494, 920167782
        %v7508 = vsel %vm7500, %v7491, %v7507
        %v7509 = vsel %vm7499, %v7506, %v7508
        %v7510 = vsel %vm7498, %v7488, %v7491
        %v7511 = vsel %vm7501, %v7497, 1326507024
        %v7512 = vsel %vm7500, %v7494, %v7511
        %v7513 = vsel %vm7499, %v7510, %v7512
        %v7514 = vshll.u32 %v7474, 8
        %v7515 = vmul.u32.u64.compose %v7514, %v7513
        %v7516 = vextract.low.u32 %v7515
        %v7517 = vextract.high.u32 %v7515
        %v7518 = vmul.u32.u64.compose %v7514, %v7509
        %v7519 = vextract.low.u32 %v7518
        %v7520 = vextract.high.u32 %v7518
        %v7521 = vmul.u32 %v7514, %v7505
        %v7522 = vadd.s32 %v7517, %v7519
        %vm7523 = vc.u32 %v7517, %v7519
        %v7524 = vadd.s32 %v7520, 1
        %v7525 = vsel %vm7523, %v7524, %v7520
        %v7526 = vadd.s32 %v7521, %v7525
        %v7527 = vadd.s32 %v7526, 536870912
        %v7528 = vshrl.u32 %v7527, 30
        %v7529 = vshll.u32 %v7528, 30
        %v7530 = vsub.s32 %v7526, %v7529
        %vm7531 = vcmp.lt.s32.totalorder %v7530, 0
        %v7532 = vsub.s32 0, %v7530
        %v7533 = vsel %vm7531, %v7532, %v7530
        %v7534 = vclz %v7533
        %v7535 = vsub.s32 %v7534, 2
        %vm7536 = vcmp.gt.s32.totalorder 0, %v7535
        %v7537 = vsel %vm7536, 0, %v7535
        %v7538 = vsub.s32 32, %v7537
        %v7539 = vshll.u32 %v7530, %v7537
        %v7540 = vshrl.u32 %v7522, %v7538
        %v7541 = vor.u32 %v7539, %v7540
        %v7542 = vsub.s32 4294967266, %v7537
        %v7543 = vadd.s32 %v7542, 127
        %v7544 = vshll.u32 %v7543, 23
        %v7545 = vor.u32 4788187, %v7544
        %v7546 = vand.u32 2147483647, %v7545
        %v7548 = vcvt.s32.f32 %v7541
        %v7549 = vmul.f32 %v7548, %v7546
        %v7550 = vxor.u32 %v7549, 2147483648
        %v7551 = vsel %vm7468, %v7550, %v7549
        %v7552 = vsub.s32 4, %v7528
        %v7553 = vsel %vm7468, %v7552, %v7528
        %v7554 = vsel %vm7467, %v6299, %v7551
        %v7555 = vsel %vm7467, 0, %v7553
        %v7556 = vcosq.f32.pop %v7554
        %v7557 = vsinq.f32.pop %v7554
        %vm7558 = vweird.f32 %v6299
        %v7559 = vadd.s32 %v7555, 3
        %v7560 = vand.u32 %v7559, 3
        %vm7561 = vcmp.lt.s32.totalorder %v7560, 2
        %vm7562 = vcmp.eq.s32.totalorder %v7560, 0
        %v7563 = vxor.u32 %v7557, 2147483648
        %v7564 = vsel %vm7562, %v7556, %v7563
        %vm7565 = vcmp.eq.s32.totalorder %v7560, 2
        %v7566 = vxor.u32 %v7556, 2147483648
        %v7567 = vsel %vm7565, %v7566, %v7557
        %v7568 = vsel %vm7561, %v7564, %v7567
        %v7569 = vsel %vm7558, nan, %v7568
        %v7570 = vand.u32 2147483647, %v6304
        %vm7571 = vcmp.le.f32.partialorder %v7570, 0.7853982
        %vm7572 = vcmp.lt.s32.totalorder %v6304, 0
        %v7573 = vand.u32 %v6304, 2139095040
        %v7574 = vshrl.u32 %v7573, 23
        %v7575 = vsub.s32 %v7574, 127
        %v7576 = vand.u32 2147483647, %v6304
        %v7577 = vand.u32 %v7576, 8388607
        %v7578 = vor.u32 %v7577, 8388608
        %v7579 = vsub.s32 0, %v7578
        %v7580 = vadd.s32 %v7575, 1
        %vm7581 = vcmp.gt.s32.totalorder %v7580, 0
        %v7582 = vsel %vm7581, %v7580, 0
        %v7583 = vshrl.u32 %v7582, 5
        %v7584 = vand.u32 %v7582, 31
        %v7585 = vsub.s32 32, %v7584
        %v7586 = vshrl.u32 683565275, %v7585
        %v7587 = vshll.u32 683565275, %v7584
        %v7588 = vshrl.u32 2475754826, %v7585
        %v7589 = vor.u32 %v7587, %v7588
        %v7590 = vshll.u32 2475754826, %v7584
        %v7591 = vshrl.u32 2131351028, %v7585
        %v7592 = vor.u32 %v7590, %v7591
        %v7593 = vshll.u32 2131351028, %v7584
        %v7594 = vshrl.u32 2102212464, %v7585
        %v7595 = vor.u32 %v7593, %v7594
        %v7596 = vshll.u32 2102212464, %v7584
        %v7597 = vshrl.u32 920167782, %v7585
        %v7598 = vor.u32 %v7596, %v7597
        %v7599 = vshll.u32 920167782, %v7584
        %v7600 = vshrl.u32 1326507024, %v7585
        %v7601 = vor.u32 %v7599, %v7600
        %vm7602 = vcmp.lt.s32.totalorder %v7583, 1
        %vm7603 = vcmp.lt.s32.totalorder %v7583, 2
        %vm7604 = vcmp.lt.s32.totalorder %v7583, 3
        %vm7605 = vcmp.lt.s32.totalorder %v7583, 4
        %v7606 = vsel %vm7602, %v7586, %v7589
        %v7607 = vsel %vm7605, %v7595, 2102212464
        %v7608 = vsel %vm7604, %v7592, %v7607
        %v7609 = vsel %vm7603, %v7606, %v7608
        %v7610 = vsel %vm7602, %v7589, %v7592
        %v7611 = vsel %vm7605, %v7598, 920167782
        %v7612 = vsel %vm7604, %v7595, %v7611
        %v7613 = vsel %vm7603, %v7610, %v7612
        %v7614 = vsel %vm7602, %v7592, %v7595
        %v7615 = vsel %vm7605, %v7601, 1326507024
        %v7616 = vsel %vm7604, %v7598, %v7615
        %v7617 = vsel %vm7603, %v7614, %v7616
        %v7618 = vshll.u32 %v7578, 8
        %v7619 = vmul.u32.u64.compose %v7618, %v7617
        %v7620 = vextract.low.u32 %v7619
        %v7621 = vextract.high.u32 %v7619
        %v7622 = vmul.u32.u64.compose %v7618, %v7613
        %v7623 = vextract.low.u32 %v7622
        %v7624 = vextract.high.u32 %v7622
        %v7625 = vmul.u32 %v7618, %v7609
        %v7626 = vadd.s32 %v7621, %v7623
        %vm7627 = vc.u32 %v7621, %v7623
        %v7628 = vadd.s32 %v7624, 1
        %v7629 = vsel %vm7627, %v7628, %v7624
        %v7630 = vadd.s32 %v7625, %v7629
        %v7631 = vadd.s32 %v7630, 536870912
        %v7632 = vshrl.u32 %v7631, 30
        %v7633 = vshll.u32 %v7632, 30
        %v7634 = vsub.s32 %v7630, %v7633
        %vm7635 = vcmp.lt.s32.totalorder %v7634, 0
        %v7636 = vsub.s32 0, %v7634
        %v7637 = vsel %vm7635, %v7636, %v7634
        %v7638 = vclz %v7637
        %v7639 = vsub.s32 %v7638, 2
        %vm7640 = vcmp.gt.s32.totalorder 0, %v7639
        %v7641 = vsel %vm7640, 0, %v7639
        %v7642 = vsub.s32 32, %v7641
        %v7643 = vshll.u32 %v7634, %v7641
        %v7644 = vshrl.u32 %v7626, %v7642
        %v7645 = vor.u32 %v7643, %v7644
        %v7646 = vsub.s32 4294967266, %v7641
        %v7647 = vadd.s32 %v7646, 127
        %v7648 = vshll.u32 %v7647, 23
        %v7649 = vor.u32 4788187, %v7648
        %v7650 = vand.u32 2147483647, %v7649
        %v7652 = vcvt.s32.f32 %v7645
        %v7653 = vmul.f32 %v7652, %v7650
        %v7654 = vxor.u32 %v7653, 2147483648
        %v7655 = vsel %vm7572, %v7654, %v7653
        %v7656 = vsub.s32 4, %v7632
        %v7657 = vsel %vm7572, %v7656, %v7632
        %v7658 = vsel %vm7571, %v6304, %v7655
        %v7659 = vsel %vm7571, 0, %v7657
        %v7660 = vcosq.f32.pop %v7658
        %v7661 = vsinq.f32.pop %v7658
        %vm7662 = vweird.f32 %v6304
        %v7663 = vadd.s32 %v7659, 3
        %v7664 = vand.u32 %v7663, 3
        %vm7665 = vcmp.lt.s32.totalorder %v7664, 2
        %vm7666 = vcmp.eq.s32.totalorder %v7664, 0
        %v7667 = vxor.u32 %v7661, 2147483648
        %v7668 = vsel %vm7666, %v7660, %v7667
        %vm7669 = vcmp.eq.s32.totalorder %v7664, 2
        %v7670 = vxor.u32 %v7660, 2147483648
        %v7671 = vsel %vm7669, %v7670, %v7661
        %v7672 = vsel %vm7665, %v7668, %v7671
        %v7673 = vsel %vm7662, nan, %v7672
        %v7674 = vand.u32 2147483647, %v6309
        %vm7675 = vcmp.le.f32.partialorder %v7674, 0.7853982
        %vm7676 = vcmp.lt.s32.totalorder %v6309, 0
        %v7677 = vand.u32 %v6309, 2139095040
        %v7678 = vshrl.u32 %v7677, 23
        %v7679 = vsub.s32 %v7678, 127
        %v7680 = vand.u32 2147483647, %v6309
        %v7681 = vand.u32 %v7680, 8388607
        %v7682 = vor.u32 %v7681, 8388608
        %v7683 = vsub.s32 0, %v7682
        %v7684 = vadd.s32 %v7679, 1
        %vm7685 = vcmp.gt.s32.totalorder %v7684, 0
        %v7686 = vsel %vm7685, %v7684, 0
        %v7687 = vshrl.u32 %v7686, 5
        %v7688 = vand.u32 %v7686, 31
        %v7689 = vsub.s32 32, %v7688
        %v7690 = vshrl.u32 683565275, %v7689
        %v7691 = vshll.u32 683565275, %v7688
        %v7692 = vshrl.u32 2475754826, %v7689
        %v7693 = vor.u32 %v7691, %v7692
        %v7694 = vshll.u32 2475754826, %v7688
        %v7695 = vshrl.u32 2131351028, %v7689
        %v7696 = vor.u32 %v7694, %v7695
        %v7697 = vshll.u32 2131351028, %v7688
        %v7698 = vshrl.u32 2102212464, %v7689
        %v7699 = vor.u32 %v7697, %v7698
        %v7700 = vshll.u32 2102212464, %v7688
        %v7701 = vshrl.u32 920167782, %v7689
        %v7702 = vor.u32 %v7700, %v7701
        %v7703 = vshll.u32 920167782, %v7688
        %v7704 = vshrl.u32 1326507024, %v7689
        %v7705 = vor.u32 %v7703, %v7704
        %vm7706 = vcmp.lt.s32.totalorder %v7687, 1
        %vm7707 = vcmp.lt.s32.totalorder %v7687, 2
        %vm7708 = vcmp.lt.s32.totalorder %v7687, 3
        %vm7709 = vcmp.lt.s32.totalorder %v7687, 4
        %v7710 = vsel %vm7706, %v7690, %v7693
        %v7711 = vsel %vm7709, %v7699, 2102212464
        %v7712 = vsel %vm7708, %v7696, %v7711
        %v7713 = vsel %vm7707, %v7710, %v7712
        %v7714 = vsel %vm7706, %v7693, %v7696
        %v7715 = vsel %vm7709, %v7702, 920167782
        %v7716 = vsel %vm7708, %v7699, %v7715
        %v7717 = vsel %vm7707, %v7714, %v7716
        %v7718 = vsel %vm7706, %v7696, %v7699
        %v7719 = vsel %vm7709, %v7705, 1326507024
        %v7720 = vsel %vm7708, %v7702, %v7719
        %v7721 = vsel %vm7707, %v7718, %v7720
        %v7722 = vshll.u32 %v7682, 8
        %v7723 = vmul.u32.u64.compose %v7722, %v7721
        %v7724 = vextract.low.u32 %v7723
        %v7725 = vextract.high.u32 %v7723
        %v7726 = vmul.u32.u64.compose %v7722, %v7717
        %v7727 = vextract.low.u32 %v7726
        %v7728 = vextract.high.u32 %v7726
        %v7729 = vmul.u32 %v7722, %v7713
        %v7730 = vadd.s32 %v7725, %v7727
        %vm7731 = vc.u32 %v7725, %v7727
        %v7732 = vadd.s32 %v7728, 1
        %v7733 = vsel %vm7731, %v7732, %v7728
        %v7734 = vadd.s32 %v7729, %v7733
        %v7735 = vadd.s32 %v7734, 536870912
        %v7736 = vshrl.u32 %v7735, 30
        %v7737 = vshll.u32 %v7736, 30
        %v7738 = vsub.s32 %v7734, %v7737
        %vm7739 = vcmp.lt.s32.totalorder %v7738, 0
        %v7740 = vsub.s32 0, %v7738
        %v7741 = vsel %vm7739, %v7740, %v7738
        %v7742 = vclz %v7741
        %v7743 = vsub.s32 %v7742, 2
        %vm7744 = vcmp.gt.s32.totalorder 0, %v7743
        %v7745 = vsel %vm7744, 0, %v7743
        %v7746 = vsub.s32 32, %v7745
        %v7747 = vshll.u32 %v7738, %v7745
        %v7748 = vshrl.u32 %v7730, %v7746
        %v7749 = vor.u32 %v7747, %v7748
        %v7750 = vsub.s32 4294967266, %v7745
        %v7751 = vadd.s32 %v7750, 127
        %v7752 = vshll.u32 %v7751, 23
        %v7753 = vor.u32 4788187, %v7752
        %v7754 = vand.u32 2147483647, %v7753
        %v7756 = vcvt.s32.f32 %v7749
        %v7757 = vmul.f32 %v7756, %v7754
        %v7758 = vxor.u32 %v7757, 2147483648
        %v7759 = vsel %vm7676, %v7758, %v7757
        %v7760 = vsub.s32 4, %v7736
        %v7761 = vsel %vm7676, %v7760, %v7736
        %v7762 = vsel %vm7675, %v6309, %v7759
        %v7763 = vsel %vm7675, 0, %v7761
        %v7764 = vcosq.f32.pop %v7762
        %v7765 = vsinq.f32.pop %v7762
        %vm7766 = vweird.f32 %v6309
        %v7767 = vadd.s32 %v7763, 3
        %v7768 = vand.u32 %v7767, 3
        %vm7769 = vcmp.lt.s32.totalorder %v7768, 2
        %vm7770 = vcmp.eq.s32.totalorder %v7768, 0
        %v7771 = vxor.u32 %v7765, 2147483648
        %v7772 = vsel %vm7770, %v7764, %v7771
        %vm7773 = vcmp.eq.s32.totalorder %v7768, 2
        %v7774 = vxor.u32 %v7764, 2147483648
        %v7775 = vsel %vm7773, %v7774, %v7765
        %v7776 = vsel %vm7769, %v7772, %v7775
        %v7777 = vsel %vm7766, nan, %v7776
        %v7778 = vand.u32 2147483647, %v6314
        %vm7779 = vcmp.le.f32.partialorder %v7778, 0.7853982
        %vm7780 = vcmp.lt.s32.totalorder %v6314, 0
        %v7781 = vand.u32 %v6314, 2139095040
        %v7782 = vshrl.u32 %v7781, 23
        %v7783 = vsub.s32 %v7782, 127
        %v7784 = vand.u32 2147483647, %v6314
        %v7785 = vand.u32 %v7784, 8388607
        %v7786 = vor.u32 %v7785, 8388608
        %v7787 = vsub.s32 0, %v7786
        %v7788 = vadd.s32 %v7783, 1
        %vm7789 = vcmp.gt.s32.totalorder %v7788, 0
        %v7790 = vsel %vm7789, %v7788, 0
        %v7791 = vshrl.u32 %v7790, 5
        %v7792 = vand.u32 %v7790, 31
        %v7793 = vsub.s32 32, %v7792
        %v7794 = vshrl.u32 683565275, %v7793
        %v7795 = vshll.u32 683565275, %v7792
        %v7796 = vshrl.u32 2475754826, %v7793
        %v7797 = vor.u32 %v7795, %v7796
        %v7798 = vshll.u32 2475754826, %v7792
        %v7799 = vshrl.u32 2131351028, %v7793
        %v7800 = vor.u32 %v7798, %v7799
        %v7801 = vshll.u32 2131351028, %v7792
        %v7802 = vshrl.u32 2102212464, %v7793
        %v7803 = vor.u32 %v7801, %v7802
        %v7804 = vshll.u32 2102212464, %v7792
        %v7805 = vshrl.u32 920167782, %v7793
        %v7806 = vor.u32 %v7804, %v7805
        %v7807 = vshll.u32 920167782, %v7792
        %v7808 = vshrl.u32 1326507024, %v7793
        %v7809 = vor.u32 %v7807, %v7808
        %vm7810 = vcmp.lt.s32.totalorder %v7791, 1
        %vm7811 = vcmp.lt.s32.totalorder %v7791, 2
        %vm7812 = vcmp.lt.s32.totalorder %v7791, 3
        %vm7813 = vcmp.lt.s32.totalorder %v7791, 4
        %v7814 = vsel %vm7810, %v7794, %v7797
        %v7815 = vsel %vm7813, %v7803, 2102212464
        %v7816 = vsel %vm7812, %v7800, %v7815
        %v7817 = vsel %vm7811, %v7814, %v7816
        %v7818 = vsel %vm7810, %v7797, %v7800
        %v7819 = vsel %vm7813, %v7806, 920167782
        %v7820 = vsel %vm7812, %v7803, %v7819
        %v7821 = vsel %vm7811, %v7818, %v7820
        %v7822 = vsel %vm7810, %v7800, %v7803
        %v7823 = vsel %vm7813, %v7809, 1326507024
        %v7824 = vsel %vm7812, %v7806, %v7823
        %v7825 = vsel %vm7811, %v7822, %v7824
        %v7826 = vshll.u32 %v7786, 8
        %v7827 = vmul.u32.u64.compose %v7826, %v7825
        %v7828 = vextract.low.u32 %v7827
        %v7829 = vextract.high.u32 %v7827
        %v7830 = vmul.u32.u64.compose %v7826, %v7821
        %v7831 = vextract.low.u32 %v7830
        %v7832 = vextract.high.u32 %v7830
        %v7833 = vmul.u32 %v7826, %v7817
        %v7834 = vadd.s32 %v7829, %v7831
        %vm7835 = vc.u32 %v7829, %v7831
        %v7836 = vadd.s32 %v7832, 1
        %v7837 = vsel %vm7835, %v7836, %v7832
        %v7838 = vadd.s32 %v7833, %v7837
        %v7839 = vadd.s32 %v7838, 536870912
        %v7840 = vshrl.u32 %v7839, 30
        %v7841 = vshll.u32 %v7840, 30
        %v7842 = vsub.s32 %v7838, %v7841
        %vm7843 = vcmp.lt.s32.totalorder %v7842, 0
        %v7844 = vsub.s32 0, %v7842
        %v7845 = vsel %vm7843, %v7844, %v7842
        %v7846 = vclz %v7845
        %v7847 = vsub.s32 %v7846, 2
        %vm7848 = vcmp.gt.s32.totalorder 0, %v7847
        %v7849 = vsel %vm7848, 0, %v7847
        %v7850 = vsub.s32 32, %v7849
        %v7851 = vshll.u32 %v7842, %v7849
        %v7852 = vshrl.u32 %v7834, %v7850
        %v7853 = vor.u32 %v7851, %v7852
        %v7854 = vsub.s32 4294967266, %v7849
        %v7855 = vadd.s32 %v7854, 127
        %v7856 = vshll.u32 %v7855, 23
        %v7857 = vor.u32 4788187, %v7856
        %v7858 = vand.u32 2147483647, %v7857
        %v7860 = vcvt.s32.f32 %v7853
        %v7861 = vmul.f32 %v7860, %v7858
        %v7862 = vxor.u32 %v7861, 2147483648
        %v7863 = vsel %vm7780, %v7862, %v7861
        %v7864 = vsub.s32 4, %v7840
        %v7865 = vsel %vm7780, %v7864, %v7840
        %v7866 = vsel %vm7779, %v6314, %v7863
        %v7867 = vsel %vm7779, 0, %v7865
        %v7868 = vcosq.f32.pop %v7866
        %v7869 = vsinq.f32.pop %v7866
        %vm7870 = vweird.f32 %v6314
        %v7871 = vadd.s32 %v7867, 3
        %v7872 = vand.u32 %v7871, 3
        %vm7873 = vcmp.lt.s32.totalorder %v7872, 2
        %vm7874 = vcmp.eq.s32.totalorder %v7872, 0
        %v7875 = vxor.u32 %v7869, 2147483648
        %v7876 = vsel %vm7874, %v7868, %v7875
        %vm7877 = vcmp.eq.s32.totalorder %v7872, 2
        %v7878 = vxor.u32 %v7868, 2147483648
        %v7879 = vsel %vm7877, %v7878, %v7869
        %v7880 = vsel %vm7873, %v7876, %v7879
        %v7881 = vsel %vm7870, nan, %v7880
        %v7882 = vand.u32 2147483647, %v6319
        %vm7883 = vcmp.le.f32.partialorder %v7882, 0.7853982
        %vm7884 = vcmp.lt.s32.totalorder %v6319, 0
        %v7885 = vand.u32 %v6319, 2139095040
        %v7886 = vshrl.u32 %v7885, 23
        %v7887 = vsub.s32 %v7886, 127
        %v7888 = vand.u32 2147483647, %v6319
        %v7889 = vand.u32 %v7888, 8388607
        %v7890 = vor.u32 %v7889, 8388608
        %v7891 = vsub.s32 0, %v7890
        %v7892 = vadd.s32 %v7887, 1
        %vm7893 = vcmp.gt.s32.totalorder %v7892, 0
        %v7894 = vsel %vm7893, %v7892, 0
        %v7895 = vshrl.u32 %v7894, 5
        %v7896 = vand.u32 %v7894, 31
        %v7897 = vsub.s32 32, %v7896
        %v7898 = vshrl.u32 683565275, %v7897
        %v7899 = vshll.u32 683565275, %v7896
        %v7900 = vshrl.u32 2475754826, %v7897
        %v7901 = vor.u32 %v7899, %v7900
        %v7902 = vshll.u32 2475754826, %v7896
        %v7903 = vshrl.u32 2131351028, %v7897
        %v7904 = vor.u32 %v7902, %v7903
        %v7905 = vshll.u32 2131351028, %v7896
        %v7906 = vshrl.u32 2102212464, %v7897
        %v7907 = vor.u32 %v7905, %v7906
        %v7908 = vshll.u32 2102212464, %v7896
        %v7909 = vshrl.u32 920167782, %v7897
        %v7910 = vor.u32 %v7908, %v7909
        %v7911 = vshll.u32 920167782, %v7896
        %v7912 = vshrl.u32 1326507024, %v7897
        %v7913 = vor.u32 %v7911, %v7912
        %vm7914 = vcmp.lt.s32.totalorder %v7895, 1
        %vm7915 = vcmp.lt.s32.totalorder %v7895, 2
        %vm7916 = vcmp.lt.s32.totalorder %v7895, 3
        %vm7917 = vcmp.lt.s32.totalorder %v7895, 4
        %v7918 = vsel %vm7914, %v7898, %v7901
        %v7919 = vsel %vm7917, %v7907, 2102212464
        %v7920 = vsel %vm7916, %v7904, %v7919
        %v7921 = vsel %vm7915, %v7918, %v7920
        %v7922 = vsel %vm7914, %v7901, %v7904
        %v7923 = vsel %vm7917, %v7910, 920167782
        %v7924 = vsel %vm7916, %v7907, %v7923
        %v7925 = vsel %vm7915, %v7922, %v7924
        %v7926 = vsel %vm7914, %v7904, %v7907
        %v7927 = vsel %vm7917, %v7913, 1326507024
        %v7928 = vsel %vm7916, %v7910, %v7927
        %v7929 = vsel %vm7915, %v7926, %v7928
        %v7930 = vshll.u32 %v7890, 8
        %v7931 = vmul.u32.u64.compose %v7930, %v7929
        %v7932 = vextract.low.u32 %v7931
        %v7933 = vextract.high.u32 %v7931
        %v7934 = vmul.u32.u64.compose %v7930, %v7925
        %v7935 = vextract.low.u32 %v7934
        %v7936 = vextract.high.u32 %v7934
        %v7937 = vmul.u32 %v7930, %v7921
        %v7938 = vadd.s32 %v7933, %v7935
        %vm7939 = vc.u32 %v7933, %v7935
        %v7940 = vadd.s32 %v7936, 1
        %v7941 = vsel %vm7939, %v7940, %v7936
        %v7942 = vadd.s32 %v7937, %v7941
        %v7943 = vadd.s32 %v7942, 536870912
        %v7944 = vshrl.u32 %v7943, 30
        %v7945 = vshll.u32 %v7944, 30
        %v7946 = vsub.s32 %v7942, %v7945
        %vm7947 = vcmp.lt.s32.totalorder %v7946, 0
        %v7948 = vsub.s32 0, %v7946
        %v7949 = vsel %vm7947, %v7948, %v7946
        %v7950 = vclz %v7949
        %v7951 = vsub.s32 %v7950, 2
        %vm7952 = vcmp.gt.s32.totalorder 0, %v7951
        %v7953 = vsel %vm7952, 0, %v7951
        %v7954 = vsub.s32 32, %v7953
        %v7955 = vshll.u32 %v7946, %v7953
        %v7956 = vshrl.u32 %v7938, %v7954
        %v7957 = vor.u32 %v7955, %v7956
        %v7958 = vsub.s32 4294967266, %v7953
        %v7959 = vadd.s32 %v7958, 127
        %v7960 = vshll.u32 %v7959, 23
        %v7961 = vor.u32 4788187, %v7960
        %v7962 = vand.u32 2147483647, %v7961
        %v7964 = vcvt.s32.f32 %v7957
        %v7965 = vmul.f32 %v7964, %v7962
        %v7966 = vxor.u32 %v7965, 2147483648
        %v7967 = vsel %vm7884, %v7966, %v7965
        %v7968 = vsub.s32 4, %v7944
        %v7969 = vsel %vm7884, %v7968, %v7944
        %v7970 = vsel %vm7883, %v6319, %v7967
        %v7971 = vsel %vm7883, 0, %v7969
        %v7972 = vcosq.f32.pop %v7970
        %v7973 = vsinq.f32.pop %v7970
        %vm7974 = vweird.f32 %v6319
        %v7975 = vadd.s32 %v7971, 3
        %v7976 = vand.u32 %v7975, 3
        %vm7977 = vcmp.lt.s32.totalorder %v7976, 2
        %vm7978 = vcmp.eq.s32.totalorder %v7976, 0
        %v7979 = vxor.u32 %v7973, 2147483648
        %v7980 = vsel %vm7978, %v7972, %v7979
        %vm7981 = vcmp.eq.s32.totalorder %v7976, 2
        %v7982 = vxor.u32 %v7972, 2147483648
        %v7983 = vsel %vm7981, %v7982, %v7973
        %v7984 = vsel %vm7977, %v7980, %v7983
        %v7985 = vsel %vm7974, nan, %v7984
        %v7986 = vld [vmem:[%s10] sm:$0xff]
        %v7987 = vld [vmem:[%s10 + $0x8] sm:$0xff]
        %v7988 = vld [vmem:[%s10 + $0x10] sm:$0xff]
        %v7989 = vld [vmem:[%s10 + $0x18] sm:$0xff]
        %v7990 = vld [vmem:[%s10 + $0x20] sm:$0xff]
        %v7991 = vld [vmem:[%s10 + $0x28] sm:$0xff]
        %v7992 = vld [vmem:[%s10 + $0x30] sm:$0xff]
        %v7993 = vld [vmem:[%s10 + $0x38] sm:$0xff]
        %v7994 = vld [vmem:[%s10 + $0x40] sm:$0xff]
        %v7995 = vld [vmem:[%s10 + $0x48] sm:$0xff]
        %v7996 = vld [vmem:[%s10 + $0x50] sm:$0xff]
        %v7997 = vld [vmem:[%s10 + $0x58] sm:$0xff]
        %v7998 = vld [vmem:[%s10 + $0x60] sm:$0xff]
        %v7999 = vld [vmem:[%s10 + $0x68] sm:$0xff]
        %v8000 = vld [vmem:[%s10 + $0x70] sm:$0xff]
        %v8001 = vld [vmem:[%s10 + $0x78] sm:$0xff]
        %v8002 = vld [vmem:[%s11] sm:$0x1]
        %v8004 = vlaneseq
        %v8005 = vshrl.u32 %v8004, 7
        %v8006 = vsub.s32 0, %v8005
        %v8007 = vrot.slane %v8002, %v8006
        %8009 = vmatprep.subr.mxu0 0.0
        %8010 = vmatpush1.msra.mxu0 %v8001
        %8011 = vmatprep.subr.mxu0 0.0
        %8012 = vmatpush1.msra.mxu0 %v8000
        %8013 = vmatprep.subr.mxu0 0.0
        %8014 = vmatpush1.msra.mxu0 %v7999
        %8015 = vmatprep.subr.mxu0 0.0
        %8016 = vmatpush1.msra.mxu0 %v7998
        %8017 = vmatprep.subr.mxu0 0.0
        %8018 = vmatpush1.msra.mxu0 %v7997
        %8019 = vmatprep.subr.mxu0 0.0
        %8020 = vmatpush1.msra.mxu0 %v7996
        %8021 = vmatprep.subr.mxu0 0.0
        %8022 = vmatpush1.msra.mxu0 %v7995
        %8023 = vmatprep.subr.mxu0 0.0
        %8024 = vmatpush1.msra.mxu0 %v7994
        %8025 = vmatprep.subr.mxu0 0.0
        %8026 = vmatpush1.msra.mxu0 %v7993
        %8027 = vmatprep.subr.mxu0 0.0
        %8028 = vmatpush1.msra.mxu0 %v7992
        %8029 = vmatprep.subr.mxu0 0.0
        %8030 = vmatpush1.msra.mxu0 %v7991
        %8031 = vmatprep.subr.mxu0 0.0
        %8032 = vmatpush1.msra.mxu0 %v7990
        %8033 = vmatprep.subr.mxu0 0.0
        %8034 = vmatpush1.msra.mxu0 %v7989
        %8035 = vmatprep.subr.mxu0 0.0
        %8036 = vmatpush1.msra.mxu0 %v7988
        %8037 = vmatprep.subr.mxu0 0.0
        %8038 = vmatpush1.msra.mxu0 %v7987
        %8039 = vmatprep.subr.mxu0 0.0
        %8040 = vmatpush1.msra.mxu0 %v7986
        %8041 = vmatprep.subr.mxu0 0.0
        %8042 = vmatpush2.msra.mxu0 0.0
        %8043 = vmatprep.subr.mxu0 0.0
        %8044 = vmatpush2.msra.mxu0 0.0
        %8045 = vmatprep.subr.mxu0 0.0
        %8046 = vmatpush2.msra.mxu0 0.0
        %8047 = vmatprep.subr.mxu0 0.0
        %8048 = vmatpush2.msra.mxu0 0.0
        %8049 = vmatprep.subr.mxu0 0.0
        %8050 = vmatpush2.msra.mxu0 0.0
        %8051 = vmatprep.subr.mxu0 0.0
        %8052 = vmatpush2.msra.mxu0 0.0
        %8053 = vmatprep.subr.mxu0 0.0
        %8054 = vmatpush2.msra.mxu0 0.0
        %8055 = vmatprep.subr.mxu0 0.0
        %8056 = vmatpush2.msra.mxu0 0.0
        %8057 = vmatprep.subr.mxu0 0.0
        %8058 = vmatpush2.msra.mxu0 0.0
        %8059 = vmatprep.subr.mxu0 0.0
        %8060 = vmatpush2.msra.mxu0 0.0
        %8061 = vmatprep.subr.mxu0 0.0
        %8062 = vmatpush2.msra.mxu0 0.0
        %8063 = vmatprep.subr.mxu0 0.0
        %8064 = vmatpush2.msra.mxu0 0.0
        %8065 = vmatprep.subr.mxu0 0.0
        %8066 = vmatpush2.msra.mxu0 0.0
        %8067 = vmatprep.subr.mxu0 0.0
        %8068 = vmatpush2.msra.mxu0 0.0
        %8069 = vmatprep.subr.mxu0 0.0
        %8070 = vmatpush2.msra.mxu0 0.0
        %8071 = vmatprep.subr.mxu0 0.0
        %8072 = vmatpush2.msra.mxu0 0.0
        %8073 = vmatprep.mubr.f32.mxu0 0.0
        %8074 = vmatmul.mubr.f32.gmra.mxu0 %v6425
        %v8075 = vpop.f32.mrf.mxu0
        %v8076 = vadd.f32 %v8007, %v8075
        %v8077 = vpop.f32.mrf.mxu0
        %8078 = vmatprep.mubr.f32.mxu0 0.0
        %8079 = vmatmul.mubr.f32.gmra.mxu0 %v6529
        %v8080 = vpop.f32.mrf.mxu0
        %v8081 = vadd.f32 %v8007, %v8080
        %v8082 = vpop.f32.mrf.mxu0
        %8083 = vmatprep.mubr.f32.mxu0 0.0
        %8084 = vmatmul.mubr.f32.gmra.mxu0 %v6633
        %v8085 = vpop.f32.mrf.mxu0
        %v8086 = vadd.f32 %v8007, %v8085
        %v8087 = vpop.f32.mrf.mxu0
        %8088 = vmatprep.mubr.f32.mxu0 0.0
        %8089 = vmatmul.mubr.f32.gmra.mxu0 %v6737
        %v8090 = vpop.f32.mrf.mxu0
        %v8091 = vadd.f32 %v8007, %v8090
        %v8092 = vpop.f32.mrf.mxu0
        %8093 = vmatprep.mubr.f32.mxu0 0.0
        %8094 = vmatmul.mubr.f32.gmra.mxu0 %v6841
        %v8095 = vpop.f32.mrf.mxu0
        %v8096 = vadd.f32 %v8007, %v8095
        %v8097 = vpop.f32.mrf.mxu0
        %8098 = vmatprep.mubr.f32.mxu0 0.0
        %8099 = vmatmul.mubr.f32.gmra.mxu0 %v6945
        %v8100 = vpop.f32.mrf.mxu0
        %v8101 = vadd.f32 %v8007, %v8100
        %v8102 = vpop.f32.mrf.mxu0
        %8103 = vmatprep.mubr.f32.mxu0 0.0
        %8104 = vmatmul.mubr.f32.gmra.mxu0 %v7049
        %v8105 = vpop.f32.mrf.mxu0
        %v8106 = vadd.f32 %v8007, %v8105
        %v8107 = vpop.f32.mrf.mxu0
        %8108 = vmatprep.mubr.f32.mxu0 0.0
        %8109 = vmatmul.mubr.f32.gmra.mxu0 %v7153
        %v8110 = vpop.f32.mrf.mxu0
        %v8111 = vadd.f32 %v8007, %v8110
        %v8112 = vpop.f32.mrf.mxu0
        %8113 = vmatprep.mubr.f32.mxu0 0.0
        %8114 = vmatmul.mubr.f32.gmra.mxu0 %v7257
        %v8115 = vpop.f32.mrf.mxu0
        %v8116 = vadd.f32 %v8007, %v8115
        %v8117 = vpop.f32.mrf.mxu0
        %8118 = vmatprep.mubr.f32.mxu0 0.0
        %8119 = vmatmul.mubr.f32.gmra.mxu0 %v7361
        %v8120 = vpop.f32.mrf.mxu0
        %v8121 = vadd.f32 %v8007, %v8120
        %v8122 = vpop.f32.mrf.mxu0
        %8123 = vmatprep.mubr.f32.mxu0 0.0
        %8124 = vmatmul.mubr.f32.gmra.mxu0 %v7465
        %v8125 = vpop.f32.mrf.mxu0
        %v8126 = vadd.f32 %v8007, %v8125
        %v8127 = vpop.f32.mrf.mxu0
        %8128 = vmatprep.mubr.f32.mxu0 0.0
        %8129 = vmatmul.mubr.f32.gmra.mxu0 %v7569
        %v8130 = vpop.f32.mrf.mxu0
        %v8131 = vadd.f32 %v8007, %v8130
        %v8132 = vpop.f32.mrf.mxu0
        %8133 = vmatprep.mubr.f32.mxu0 0.0
        %8134 = vmatmul.mubr.f32.gmra.mxu0 %v7673
        %v8135 = vpop.f32.mrf.mxu0
        %v8136 = vadd.f32 %v8007, %v8135
        %v8137 = vpop.f32.mrf.mxu0
        %8138 = vmatprep.mubr.f32.mxu0 0.0
        %8139 = vmatmul.mubr.f32.gmra.mxu0 %v7777
        %v8140 = vpop.f32.mrf.mxu0
        %v8141 = vadd.f32 %v8007, %v8140
        %v8142 = vpop.f32.mrf.mxu0
        %8143 = vmatprep.mubr.f32.mxu0 0.0
        %8144 = vmatmul.mubr.f32.gmra.mxu0 %v7881
        %v8145 = vpop.f32.mrf.mxu0
        %v8146 = vadd.f32 %v8007, %v8145
        %v8147 = vpop.f32.mrf.mxu0
        %8148 = vmatprep.mubr.f32.mxu0 0.0
        %8149 = vmatmul.mubr.f32.gmra.mxu0 %v7985
        %v8150 = vpop.f32.mrf.mxu0
        %v8151 = vadd.f32 %v8007, %v8150
        %v8152 = vpop.f32.mrf.mxu0
        %8153 = vdwg.mxu0
        %vm8154 = vcmask 15360
        %8155 = vst.msk [vmem:[%s415] sm:$0xff] %vm8154, %v8076
        %8156 = vst.msk [vmem:[%s415 + $0x8] sm:$0xff] %vm8154, %v8081
        %8157 = vst.msk [vmem:[%s415 + $0x10] sm:$0xff] %vm8154, %v8086
        %8158 = vst.msk [vmem:[%s415 + $0x18] sm:$0xff] %vm8154, %v8091
        %8159 = vst.msk [vmem:[%s415 + $0x20] sm:$0xff] %vm8154, %v8096
        %8160 = vst.msk [vmem:[%s415 + $0x28] sm:$0xff] %vm8154, %v8101
        %8161 = vst.msk [vmem:[%s415 + $0x30] sm:$0xff] %vm8154, %v8106
        %8162 = vst.msk [vmem:[%s415 + $0x38] sm:$0xff] %vm8154, %v8111
        %8163 = vst.msk [vmem:[%s415 + $0x40] sm:$0xff] %vm8154, %v8116
        %8164 = vst.msk [vmem:[%s415 + $0x48] sm:$0xff] %vm8154, %v8121
        %8165 = vst.msk [vmem:[%s415 + $0x50] sm:$0xff] %vm8154, %v8126
        %8166 = vst.msk [vmem:[%s415 + $0x58] sm:$0xff] %vm8154, %v8131
        %8167 = vst.msk [vmem:[%s415 + $0x60] sm:$0xff] %vm8154, %v8136
        %8168 = vst.msk [vmem:[%s415 + $0x68] sm:$0xff] %vm8154, %v8141
        %8169 = vst.msk [vmem:[%s415 + $0x70] sm:$0xff] %vm8154, %v8146
        %8170 = vst.msk [vmem:[%s415 + $0x78] sm:$0xff] %vm8154, %v8151
        %s8171 = sand.u32 %s288, 1
        %s8172 = sand.u32 %s288, 1
        %s8173 = smul.addr %s8172, 128
        %s8174 = scalar_lea.vmem [#allocation2], %s8173
        // Predicated region
        $region69: #{tpu_custom_call.1} parent=67 // pred_check
          %p8175 = pneg %p298
        $region70: #{tpu_custom_call.1} parent=67 // pred_check_branch
          %8177 = sbr.rel (%p8175) target = $region72
        $region71: #{tpu_custom_call.1} parent=67 // pred_region
          %s8178 = smul.u32 16, %s23
          %s8179 = ssub.s32 125, %s8178
          %p8180 = scmp.lt.s32.totalorder %s8179, 16
          %s8181 = scalar_select %p8180, %s8179, 16
          %s8182 = smul.u32 128, %s8181
          %p8183 = scmp.ne.s32.totalorder 0, %s8182
          %s8184 = smul.addr %s8178, 8
          %s8185 = scalar_lea.vmem %s12, %s8184
          // Predicated region
          $region73: #{tpu_custom_call.1} parent=71 // pred_check
            %p8186 = pneg %p8183
          $region74: #{tpu_custom_call.1} parent=71 // pred_check_branch
            %8188 = sbr.rel (%p8186) target = $region76
          $region75: #{tpu_custom_call.1} parent=71 // pred_region
            // Predicated region
            $region77: #{tpu_custom_call.1} parent=75 // pred_check
              _
            $region78: #{tpu_custom_call.1} parent=75 // pred_check_branch
              %8190 = sbr.rel (0) target = $region80
            $region79: #{tpu_custom_call.1} parent=75 // pred_region
              // Predicated region
              $region99: #{tpu_custom_call.1} parent=79 // pred_check
                _
              $region100: #{tpu_custom_call.1} parent=79 // pred_check_branch
                %8270 = sbr.rel (0) target = $region102
              $region101: #{tpu_custom_call.1} parent=79 // pred_region
                %s8271 = sshrl.u32 %s8181, 4
                // While loop
                $region103: #{tpu_custom_call.1} parent=101 // loop_pre_header
                  _
                $region104: #{tpu_custom_call.1} parent=101 // loop_header
                  %s8273 = sphi 0, %s8275
                  %p8274 = scmp.ge.s32.totalorder %s8273, %s8271
                  %s8278 = sphi 0, %s8315
                  %s8279 = sphi %s8174, %s8318
                  %s8280 = sphi %s8185, %s8319
                $region105: #{tpu_custom_call.1} parent=101 // loop_header_branch
                  %8277 = sbr.rel (%p8274) target = $region109
                $region106: #{tpu_custom_call.1} parent=101 // loop_body
                  %v8281 = vld [vmem:[%s8279] sm:$0xff]
                  %8282 = vst [vmem:[%s8280] sm:$0xff] %v8281
                  %v8283 = vld [vmem:[%s8279 + $0x8] sm:$0xff]
                  %8284 = vst [vmem:[%s8280 + $0x8] sm:$0xff] %v8283
                  %v8285 = vld [vmem:[%s8279 + $0x10] sm:$0xff]
                  %8286 = vst [vmem:[%s8280 + $0x10] sm:$0xff] %v8285
                  %v8287 = vld [vmem:[%s8279 + $0x18] sm:$0xff]
                  %8288 = vst [vmem:[%s8280 + $0x18] sm:$0xff] %v8287
                  %v8289 = vld [vmem:[%s8279 + $0x20] sm:$0xff]
                  %8290 = vst [vmem:[%s8280 + $0x20] sm:$0xff] %v8289
                  %v8291 = vld [vmem:[%s8279 + $0x28] sm:$0xff]
                  %8292 = vst [vmem:[%s8280 + $0x28] sm:$0xff] %v8291
                  %v8293 = vld [vmem:[%s8279 + $0x30] sm:$0xff]
                  %8294 = vst [vmem:[%s8280 + $0x30] sm:$0xff] %v8293
                  %v8295 = vld [vmem:[%s8279 + $0x38] sm:$0xff]
                  %8296 = vst [vmem:[%s8280 + $0x38] sm:$0xff] %v8295
                  %v8297 = vld [vmem:[%s8279 + $0x40] sm:$0xff]
                  %8298 = vst [vmem:[%s8280 + $0x40] sm:$0xff] %v8297
                  %v8299 = vld [vmem:[%s8279 + $0x48] sm:$0xff]
                  %8300 = vst [vmem:[%s8280 + $0x48] sm:$0xff] %v8299
                  %v8301 = vld [vmem:[%s8279 + $0x50] sm:$0xff]
                  %8302 = vst [vmem:[%s8280 + $0x50] sm:$0xff] %v8301
                  %v8303 = vld [vmem:[%s8279 + $0x58] sm:$0xff]
                  %8304 = vst [vmem:[%s8280 + $0x58] sm:$0xff] %v8303
                  %v8305 = vld [vmem:[%s8279 + $0x60] sm:$0xff]
                  %8306 = vst [vmem:[%s8280 + $0x60] sm:$0xff] %v8305
                  %v8307 = vld [vmem:[%s8279 + $0x68] sm:$0xff]
                  %8308 = vst [vmem:[%s8280 + $0x68] sm:$0xff] %v8307
                  %v8309 = vld [vmem:[%s8279 + $0x70] sm:$0xff]
                  %8310 = vst [vmem:[%s8280 + $0x70] sm:$0xff] %v8309
                  %v8311 = vld [vmem:[%s8279 + $0x78] sm:$0xff]
                  %8312 = vst [vmem:[%s8280 + $0x78] sm:$0xff] %v8311
                  %s8313 = sadd.s32 1, %s8278
                  %p8314 = scmp.ge.s32.totalorder %s8313, %s8271
                  %s8315 = scalar_select %p8314, 0, %s8313
                  %s8316 = smul.u32 %s8315, 128
                  %s8317 = smul.u32 %s8315, 128
                  %s8318 = scalar_lea.vmem %s8174, %s8316 [#allocation2]
                  %s8319 = scalar_lea.vmem %s8185, %s8317
                $region107: #{tpu_custom_call.1} parent=101 // loop_footer
                  %s8275 = sadd.s32 %s8273, 1
                $region108: #{tpu_custom_call.1} parent=101 // loop_footer_branch
                  %8272 = sbr.rel target = $region104
                $region109: #{tpu_custom_call.1} parent=101 // loop_exit
                  _
                %s8320 = sshrl.u32 %s8181, 4
                %s8321 = sand.u32 %s8181, 15
                %s8322 = smul.u32 %s8320, 16
                %s8323 = smul.u32 8, %s8322
                %s8324 = scalar_lea.vmem %s8174, %s8323 [#allocation2]
                %s8325 = smul.u32 8, %s8322
                %s8326 = scalar_lea.vmem %s8185, %s8325
                // While loop
                $region110: #{tpu_custom_call.1} parent=101 // loop_pre_header
                  _
                $region111: #{tpu_custom_call.1} parent=101 // loop_header
                  %s8328 = sphi 0, %s8330
                  %p8329 = scmp.ge.s32.totalorder %s8328, %s8321
                  %s8333 = sphi 0, %s8340
                  %s8334 = sphi %s8324, %s8343
                  %s8335 = sphi %s8326, %s8344
                $region112: #{tpu_custom_call.1} parent=101 // loop_header_branch
                  %8332 = sbr.rel (%p8329) target = $region116
                $region113: #{tpu_custom_call.1} parent=101 // loop_body
                  %v8336 = vld [vmem:[%s8334] sm:$0xff]
                  %8337 = vst [vmem:[%s8335] sm:$0xff] %v8336
                  %s8338 = sadd.s32 1, %s8333
                  %p8339 = scmp.ge.s32.totalorder %s8338, %s8321
                  %s8340 = scalar_select %p8339, 0, %s8338
                  %s8341 = smul.u32 %s8340, 8
                  %s8342 = smul.u32 %s8340, 8
                  %s8343 = scalar_lea.vmem %s8324, %s8341 [#allocation2]
                  %s8344 = scalar_lea.vmem %s8326, %s8342
                $region114: #{tpu_custom_call.1} parent=101 // loop_footer
                  %s8330 = sadd.s32 %s8328, 1
                $region115: #{tpu_custom_call.1} parent=101 // loop_footer_branch
                  %8327 = sbr.rel target = $region111
                $region116: #{tpu_custom_call.1} parent=101 // loop_exit
                  _
              $region102: #{tpu_custom_call.1} parent=79 // pred_fallthru
                _
              // Predicated region
              $region117: #{tpu_custom_call.1} parent=79 // pred_check
                _
              $region118: #{tpu_custom_call.1} parent=79 // pred_check_branch
                %8346 = sbr.rel target = $region120
              $region119: #{tpu_custom_call.1} parent=79 // pred_region
                _
              $region120: #{tpu_custom_call.1} parent=79 // pred_fallthru
                _
            $region80: #{tpu_custom_call.1} parent=75 // pred_fallthru
              _
            // Predicated region
            $region81: #{tpu_custom_call.1} parent=75 // pred_check
              _
            $region82: #{tpu_custom_call.1} parent=75 // pred_check_branch
              %8192 = sbr.rel target = $region84
            $region83: #{tpu_custom_call.1} parent=75 // pred_region
              %s8194 = ssub.s32 256, 1
              %s8195 = sshrl.u32 %s8181, 4
              // While loop
              $region85: #{tpu_custom_call.1} parent=83 // loop_pre_header
                _
              $region86: #{tpu_custom_call.1} parent=83 // loop_header
                %s8197 = sphi 0, %s8199
                %p8198 = scmp.ge.s32.totalorder %s8197, %s8195
                %s8202 = sphi 0, %s8239
                %s8203 = sphi %s8174, %s8242
                %s8204 = sphi %s8185, %s8243
              $region87: #{tpu_custom_call.1} parent=83 // loop_header_branch
                %8201 = sbr.rel (%p8198) target = $region91
              $region88: #{tpu_custom_call.1} parent=83 // loop_body
                %v8205 = vld [vmem:[%s8203] sm:%s8194]
                %8206 = vst [vmem:[%s8204] sm:%s8194] %v8205
                %v8207 = vld [vmem:[%s8203 + $0x8] sm:%s8194]
                %8208 = vst [vmem:[%s8204 + $0x8] sm:%s8194] %v8207
                %v8209 = vld [vmem:[%s8203 + $0x10] sm:%s8194]
                %8210 = vst [vmem:[%s8204 + $0x10] sm:%s8194] %v8209
                %v8211 = vld [vmem:[%s8203 + $0x18] sm:%s8194]
                %8212 = vst [vmem:[%s8204 + $0x18] sm:%s8194] %v8211
                %v8213 = vld [vmem:[%s8203 + $0x20] sm:%s8194]
                %8214 = vst [vmem:[%s8204 + $0x20] sm:%s8194] %v8213
                %v8215 = vld [vmem:[%s8203 + $0x28] sm:%s8194]
                %8216 = vst [vmem:[%s8204 + $0x28] sm:%s8194] %v8215
                %v8217 = vld [vmem:[%s8203 + $0x30] sm:%s8194]
                %8218 = vst [vmem:[%s8204 + $0x30] sm:%s8194] %v8217
                %v8219 = vld [vmem:[%s8203 + $0x38] sm:%s8194]
                %8220 = vst [vmem:[%s8204 + $0x38] sm:%s8194] %v8219
                %v8221 = vld [vmem:[%s8203 + $0x40] sm:%s8194]
                %8222 = vst [vmem:[%s8204 + $0x40] sm:%s8194] %v8221
                %v8223 = vld [vmem:[%s8203 + $0x48] sm:%s8194]
                %8224 = vst [vmem:[%s8204 + $0x48] sm:%s8194] %v8223
                %v8225 = vld [vmem:[%s8203 + $0x50] sm:%s8194]
                %8226 = vst [vmem:[%s8204 + $0x50] sm:%s8194] %v8225
                %v8227 = vld [vmem:[%s8203 + $0x58] sm:%s8194]
                %8228 = vst [vmem:[%s8204 + $0x58] sm:%s8194] %v8227
                %v8229 = vld [vmem:[%s8203 + $0x60] sm:%s8194]
                %8230 = vst [vmem:[%s8204 + $0x60] sm:%s8194] %v8229
                %v8231 = vld [vmem:[%s8203 + $0x68] sm:%s8194]
                %8232 = vst [vmem:[%s8204 + $0x68] sm:%s8194] %v8231
                %v8233 = vld [vmem:[%s8203 + $0x70] sm:%s8194]
                %8234 = vst [vmem:[%s8204 + $0x70] sm:%s8194] %v8233
                %v8235 = vld [vmem:[%s8203 + $0x78] sm:%s8194]
                %8236 = vst [vmem:[%s8204 + $0x78] sm:%s8194] %v8235
                %s8237 = sadd.s32 1, %s8202
                %p8238 = scmp.ge.s32.totalorder %s8237, %s8195
                %s8239 = scalar_select %p8238, 0, %s8237
                %s8240 = smul.u32 %s8239, 128
                %s8241 = smul.u32 %s8239, 128
                %s8242 = scalar_lea.vmem %s8174, %s8240 [#allocation2]
                %s8243 = scalar_lea.vmem %s8185, %s8241
              $region89: #{tpu_custom_call.1} parent=83 // loop_footer
                %s8199 = sadd.s32 %s8197, 1
              $region90: #{tpu_custom_call.1} parent=83 // loop_footer_branch
                %8196 = sbr.rel target = $region86
              $region91: #{tpu_custom_call.1} parent=83 // loop_exit
                _
              %s8244 = sshrl.u32 %s8181, 4
              %s8245 = sand.u32 %s8181, 15
              %s8246 = smul.u32 %s8244, 16
              %s8247 = smul.u32 8, %s8246
              %s8248 = scalar_lea.vmem %s8174, %s8247 [#allocation2]
              %s8249 = smul.u32 8, %s8246
              %s8250 = scalar_lea.vmem %s8185, %s8249
              // While loop
              $region92: #{tpu_custom_call.1} parent=83 // loop_pre_header
                _
              $region93: #{tpu_custom_call.1} parent=83 // loop_header
                %s8252 = sphi 0, %s8254
                %p8253 = scmp.ge.s32.totalorder %s8252, %s8245
                %s8257 = sphi 0, %s8264
                %s8258 = sphi %s8248, %s8267
                %s8259 = sphi %s8250, %s8268
              $region94: #{tpu_custom_call.1} parent=83 // loop_header_branch
                %8256 = sbr.rel (%p8253) target = $region98
              $region95: #{tpu_custom_call.1} parent=83 // loop_body
                %v8260 = vld [vmem:[%s8258] sm:%s8194]
                %8261 = vst [vmem:[%s8259] sm:%s8194] %v8260
                %s8262 = sadd.s32 1, %s8257
                %p8263 = scmp.ge.s32.totalorder %s8262, %s8245
                %s8264 = scalar_select %p8263, 0, %s8262
                %s8265 = smul.u32 %s8264, 8
                %s8266 = smul.u32 %s8264, 8
                %s8267 = scalar_lea.vmem %s8248, %s8265 [#allocation2]
                %s8268 = scalar_lea.vmem %s8250, %s8266
              $region96: #{tpu_custom_call.1} parent=83 // loop_footer
                %s8254 = sadd.s32 %s8252, 1
              $region97: #{tpu_custom_call.1} parent=83 // loop_footer_branch
                %8251 = sbr.rel target = $region93
              $region98: #{tpu_custom_call.1} parent=83 // loop_exit
                _
            $region84: #{tpu_custom_call.1} parent=75 // pred_fallthru
              _
          $region76: #{tpu_custom_call.1} parent=71 // pred_fallthru
            _
          %8347 = vnop
        $region72: #{tpu_custom_call.1} parent=67 // pred_fallthru
          _
      $region68: #{tpu_custom_call.1} parent=5 // pred_fallthru
        _
      %p8348 = scmp.le.s32.totalorder 2, %s18
      // Predicated region
      $region121: #{tpu_custom_call.1} parent=5 // pred_check
        %p8349 = pneg %p8348
      $region122: #{tpu_custom_call.1} parent=5 // pred_check_branch
        %8351 = sbr.rel (%p8349) target = $region124
      $region123: #{tpu_custom_call.1} parent=5 // pred_region
        %s8352 = ssub.s32 %s18, 2
        // Predicated region
        $region125: #{tpu_custom_call.1} parent=123 // pred_check
          %p8353 = pneg %p304
        $region126: #{tpu_custom_call.1} parent=123 // pred_check_branch
          %8355 = sbr.rel (%p8353) target = $region128
        $region127: #{tpu_custom_call.1} parent=123 // pred_region
          %s8356 = sand.u32 %s289, 1
          %s8357 = sand.u32 %s289, 1
          %s8358 = smul.addr %s8357, 128
          %s8359 = scalar_lea.vmem [#allocation2], %s8358
        $region128: #{tpu_custom_call.1} parent=123 // pred_fallthru
          _
      $region124: #{tpu_custom_call.1} parent=5 // pred_fallthru
        _
    $region6: #{tpu_custom_call.1} parent=1 // loop_footer
      %s22 = sadd.s32 1, %s18
    $region7: #{tpu_custom_call.1} parent=1 // loop_footer_branch
      %17 = sbr.rel target = $region3
    $region8: #{tpu_custom_call.1} parent=1 // loop_exit
      _

</llo_original>
